<compile_context>
chip_gen: v6e
topology: v6e:2x2x1
jax: 0.10.0
libtpu: 0.0.40
codegen_flags: <defaults>
</compile_context>

<pallas_src>
import jax
import jax.numpy as jnp
import numpy as np
from jax.experimental import pallas as pl
from jax.experimental.pallas import tpu as pltpu

EPS = 1e-5


# ----------------------------------------------------------------------------
# Fused Bottle2neck kernel (one grid step == one group / "batch" element)
# ----------------------------------------------------------------------------
def make_fused_kernel(cfg, H, W):
    scale = cfg["scale"]
    hidden = cfg["hidden_planes"]
    conv_cfgs = cfg["conv_cfgs"]
    nums = 1 if scale == 1 else scale - 1
    HW = H * W
    inv_hw = 1.0 / float(HW)

    def bn_act(y, gamma, beta, relu):
        # One-pass train-mode BN over the spatial (lane) axis, folded into scale+bias.
        mean = jnp.sum(y, axis=1, keepdims=True) * inv_hw
        ex2 = jnp.sum(y * y, axis=1, keepdims=True) * inv_hw
        var = ex2 - mean * mean
        s = gamma * jax.lax.rsqrt(var + EPS)
        b = beta - mean * s
        out = y * s + b
        return jnp.maximum(out, 0.0) if relu else out

    def spatial_conv(sp, w_ref, pad_ref, K, D, P):
        # sp: (hidden, HW) ; w_ref block: (1, K*K, hidden, hidden)
        if K == 1:
            return jnp.dot(w_ref[0, 0], sp, preferred_element_type=jnp.float32)
        # Zero the padded scratch, scatter the interior, then accumulate K*K taps,
        # each tap a contiguous (Cout, Cin) weight slab x (Cin, HW) patch matmul.
        pad_ref[...] = jnp.zeros_like(pad_ref)
        pad_ref[:, P:P + H, P:P + W] = sp.reshape(hidden, H, W)
        xp = pad_ref[...]
        y = None
        for kh in range(K):
            for kw in range(K):
                patch = jax.lax.slice(
                    xp, (0, kh * D, kw * D),
                    (hidden, kh * D + H, kw * D + W)).reshape(hidden, HW)
                t = jnp.dot(w_ref[0, kh * K + kw], patch,
                            preferred_element_type=jnp.float32)
                y = t if y is None else y + t
        return y

    def kernel(*refs):
        idx = 0
        x_ref = refs[idx]; idx += 1
        w1_ref = refs[idx]; idx += 1
        g1_ref = refs[idx]; idx += 1
        b1_ref = refs[idx]; idx += 1
        wc_refs, biasc_refs, gc_refs, bc_refs = [], [], [], []
        for _ in range(nums):
            wc_refs.append(refs[idx]); idx += 1
            biasc_refs.append(refs[idx]); idx += 1
            gc_refs.append(refs[idx]); idx += 1
            bc_refs.append(refs[idx]); idx += 1
        w3_ref = refs[idx]; idx += 1
        g3_ref = refs[idx]; idx += 1
        b3_ref = refs[idx]; idx += 1
        o_ref = refs[idx]; idx += 1
        pad_ref = refs[idx]; idx += 1

        # ---- conv1 (1x1 grouped) + BN1 + ReLU ----
        y1 = jnp.dot(w1_ref[0], x_ref[0], preferred_element_type=jnp.float32)
        out1 = bn_act(y1, g1_ref[0], b1_ref[0], relu=True)        # (scale*hidden, HW)

        # ---- res2net hierarchical branches (all in VMEM/vregs) ----
        outs = []
        sp = None
        for i in range(nums):
            branch = out1[i * hidden:(i + 1) * hidden]
            sp = branch if i == 0 else sp + branch
            K, D, P = conv_cfgs[i]
            y = spatial_conv(sp, wc_refs[i], pad_ref, K, D, P)
            y = y + biasc_refs[i][0]
            sp = bn_act(y, gc_refs[i][0], bc_refs[i][0], relu=True)
            outs.append(sp)
        if scale != 1:
            outs.append(out1[nums * hidden:scale * hidden])

        # ---- channel re-interleave + conv3 (1x1 grouped) + BN3 ----
        # Per-group conv3 input channel order is (scale, hidden); instead of
        # concatenating, accumulate per-scale slabs of the (scale, planes, hidden)
        # weight layout: y3 = sum_s W3[s] @ outs[s].
        y3 = None
        for s in range(len(outs)):
            t = jnp.dot(w3_ref[0, s], outs[s], preferred_element_type=jnp.float32)
            y3 = t if y3 is None else y3 + t
        o_ref[0] = bn_act(y3, g3_ref[0], b3_ref[0], relu=False)

    return kernel


# ----------------------------------------------------------------------------
# Wrapper: NCHW <-> grouped lane-dense layout + single pallas_call
# ----------------------------------------------------------------------------
def bottle2neck_forward(x, params, cfg):
    G = cfg["batch_size"]
    scale = cfg["scale"]
    hidden = cfg["hidden_planes"]
    inplanes = cfg["inplanes"]
    planes = cfg["planes"]
    stride = cfg["stride"]
    nums = 1 if scale == 1 else scale - 1

    # TODO(synk): stride != 1 is not supported (the torch module's trailing
    # .view(1, scale, batch, hidden, H, W) also assumes the spatial size is unchanged).
    assert stride == 1
    N, C, H, W = x.shape
    assert N == 1 and C == inplanes * G   # torch .view(1, batch_size, ...) requires N==1
    HW = H * W
    xg = x.reshape(G, inplanes, HW).astype(jnp.float32)

    P_max = max([P for (K, D, P) in cfg["conv_cfgs"][:nums] if K > 1], default=0)

    in_specs = [
        pl.BlockSpec((1, inplanes, HW), lambda g: (g, 0, 0)),
        pl.BlockSpec((1, scale * hidden, inplanes), lambda g: (g, 0, 0)),
        pl.BlockSpec((1, scale * hidden, 1), lambda g: (g, 0, 0)),
        pl.BlockSpec((1, scale * hidden, 1), lambda g: (g, 0, 0)),
    ]
    inputs = [xg, params["w1"], params["g1"], params["b1"]]
    for i in range(nums):
        K, D, P = cfg["conv_cfgs"][i]
        in_specs += [
            pl.BlockSpec((1, K * K, hidden, hidden), lambda g: (g, 0, 0, 0)),
            pl.BlockSpec((1, hidden, 1), lambda g: (g, 0, 0)),
            pl.BlockSpec((1, hidden, 1), lambda g: (g, 0, 0)),
            pl.BlockSpec((1, hidden, 1), lambda g: (g, 0, 0)),
        ]
        inputs += [params["wc"][i], params["biasc"][i], params["gc"][i], params["bc"][i]]
    in_specs += [
        pl.BlockSpec((1, scale, planes, hidden), lambda g: (g, 0, 0, 0)),
        pl.BlockSpec((1, planes, 1), lambda g: (g, 0, 0)),
        pl.BlockSpec((1, planes, 1), lambda g: (g, 0, 0)),
    ]
    inputs += [params["w3"], params["g3"], params["b3"]]

    kernel = make_fused_kernel(cfg, H, W)
    out = pl.pallas_call(
        kernel,
        out_shape=jax.ShapeDtypeStruct((G, planes, HW), jnp.float32),
        grid=(G,),
        in_specs=in_specs,
        out_specs=pl.BlockSpec((1, planes, HW), lambda g: (g, 0, 0)),
        scratch_shapes=[pltpu.VMEM((hidden, H + 2 * P_max, W + 2 * P_max), jnp.float32)],
        compiler_params=pltpu.CompilerParams(
            dimension_semantics=("parallel",)),   # v7x: 2 TCs split the groups
    )(*inputs)
    return out.reshape(1, G * planes, H, W)


# ----------------------------------------------------------------------------
# Deterministic parameter init (shapes follow the torch module's __init__,
# but stored in the kernel-friendly layouts described above)
# ----------------------------------------------------------------------------
def init_params(key, cfg):
    G = cfg["batch_size"]
    scale = cfg["scale"]
    hidden = cfg["hidden_planes"]
    inplanes = cfg["inplanes"]
    planes = cfg["planes"]
    nums = 1 if scale == 1 else scale - 1
    keys = jax.random.split(key, 16)
    p = {}
    p["w1"] = 0.2 * jax.random.normal(keys[0], (G, scale * hidden, inplanes), jnp.float32)
    p["g1"] = 1.0 + 0.1 * jax.random.normal(keys[1], (G, scale * hidden, 1), jnp.float32)
    p["b1"] = 0.1 * jax.random.normal(keys[2], (G, scale * hidden, 1), jnp.float32)
    p["wc"], p["biasc"], p["gc"], p["bc"] = [], [], [], []
    for i in range(nums):
        K, D, P = cfg["conv_cfgs"][i]
        k = jax.random.split(keys[3 + i], 4)
        # per-tap contiguous slabs: (G, K*K, Cout, Cin)
        p["wc"].append(0.2 * jax.random.normal(k[0], (G, K * K, hidden, hidden), jnp.float32))
        p["biasc"].append(0.1 * jax.random.normal(k[1], (G, hidden, 1), jnp.float32))
        p["gc"].append(1.0 + 0.1 * jax.random.normal(k[2], (G, hidden, 1), jnp.float32))
        p["bc"].append(0.1 * jax.random.normal(k[3], (G, hidden, 1), jnp.float32))
    # per-scale contiguous slabs: (G, scale, planes, hidden)
    p["w3"] = 0.2 * jax.random.normal(keys[10], (G, scale, planes, hidden), jnp.float32)
    p["g3"] = 1.0 + 0.1 * jax.random.normal(keys[11], (G, planes, 1), jnp.float32)
    p["b3"] = 0.1 * jax.random.normal(keys[12], (G, planes, 1), jnp.float32)
    return p


# ----------------------------------------------------------------------------
# Pure-JAX reference mirroring the torch forward exactly (for correctness check)
# ----------------------------------------------------------------------------
def _conv_nchw(x, w, stride, padding, dilation, groups, bias=None):
    out = jax.lax.conv_general_dilated(
        x, w, window_strides=(stride, stride),
        padding=((padding, padding), (padding, padding)),
        rhs_dilation=(dilation, dilation),
        dimension_numbers=("NCHW", "OIHW", "NCHW"),
        feature_group_count=groups,
        precision=jax.lax.Precision.HIGHEST)
    if bias is not None:
        out = out + bias[None, :, None, None]
    return out


def _bn_train(x, gamma, beta):
    mean = jnp.mean(x, axis=(0, 2, 3), keepdims=True)
    var = jnp.mean((x - mean) ** 2, axis=(0, 2, 3), keepdims=True)
    return ((x - mean) * jax.lax.rsqrt(var + EPS)
            * gamma[None, :, None, None] + beta[None, :, None, None])


def reference_forward(x, params, cfg):
    G, scale, hidden = cfg["batch_size"], cfg["scale"], cfg["hidden_planes"]
    inplanes, planes, stride = cfg["inplanes"], cfg["planes"], cfg["stride"]
    nums = 1 if scale == 1 else scale - 1
    width = hidden * G
    _, _, H, W = x.shape
    w1 = params["w1"].reshape(G * scale * hidden, inplanes, 1, 1)
    out = _conv_nchw(x, w1, 1, 0, 1, G)
    out = jax.nn.relu(_bn_train(out, params["g1"].reshape(-1), params["b1"].reshape(-1)))
    out = out.reshape(1, G, scale, hidden, H, W)
    out = jnp.swapaxes(out, 1, 2).reshape(1, scale * width, H, W)
    spx = jnp.split(out, scale, axis=1)
    outc, sp = None, None
    for i in range(nums):
        sp = spx[i] if i == 0 else sp + spx[i]
        K, D, P = cfg["conv_cfgs"][i]
        wi = jnp.transpose(params["wc"][i], (0, 2, 3, 1)).reshape(G * hidden, hidden, K, K)
        sp = _conv_nchw(sp, wi, stride, P, D, G, bias=params["biasc"][i].reshape(-1))
        sp = jax.nn.relu(_bn_train(sp, params["gc"][i].reshape(-1), params["bc"][i].reshape(-1)))
        outc = sp if i == 0 else jnp.concatenate([outc, sp], axis=1)
    if scale != 1:
        outc = jnp.concatenate([outc, spx[nums]], axis=1)
    OH, OW = outc.shape[-2:]
    outc = outc.reshape(1, scale, G, hidden, OH, OW)
    outc = jnp.swapaxes(outc, 1, 2).reshape(1, G * scale * hidden, OH, OW)
    w3 = jnp.transpose(params["w3"], (0, 2, 1, 3)).reshape(G * planes, scale * hidden, 1, 1)
    outc = _conv_nchw(outc, w3, 1, 0, 1, G)
    return _bn_train(outc, params["g3"].reshape(-1), params["b3"].reshape(-1))


if __name__ == "__main__":
    # Small, module-consistent config. torch's random.choice of K/D made deterministic.
    # H=W=16 so the flattened spatial (lane) dim is 256 — lane-dense stores/loads.
    cfg = dict(inplanes=4, planes=4, hidden_planes=4, scale=4, batch_size=2,
               stride=1, conv_cfgs=[(3, 1, 1), (1, 1, 0), (3, 2, 2)])  # (K, D, P=(K-1)//2*D)
    H = W = 16

    key = jax.random.PRNGKey(0)
    kx, kp = jax.random.split(key)
    x = jax.random.normal(kx, (1, cfg["inplanes"] * cfg["batch_size"], H, W), jnp.float32)
    params = init_params(kp, cfg)

    fwd = jax.jit(lambda xx, pp: bottle2neck_forward(xx, pp, cfg))
    out = jax.block_until_ready(fwd(x, params))

    assert out.shape == (1, cfg["batch_size"] * cfg["planes"], H, W)
    ref = reference_forward(x, params, cfg)
    np.testing.assert_allclose(np.asarray(out), np.asarray(ref), atol=2e-3, rtol=2e-3)
    print("KERNEL_OK")
</pallas_src>

<mosaic_0001>
module attributes {stable_mosaic.version = 11 : i64} {
  func.func @kernel(%arg0: i32, %arg1: memref<1x4x256xf32, #tpu.memory_space<vmem>>, %arg2: memref<1x16x4xf32, #tpu.memory_space<vmem>>, %arg3: memref<1x16x1xf32, #tpu.memory_space<vmem>>, %arg4: memref<1x16x1xf32, #tpu.memory_space<vmem>>, %arg5: memref<1x9x4x4xf32, #tpu.memory_space<vmem>>, %arg6: memref<1x4x1xf32, #tpu.memory_space<vmem>>, %arg7: memref<1x4x1xf32, #tpu.memory_space<vmem>>, %arg8: memref<1x4x1xf32, #tpu.memory_space<vmem>>, %arg9: memref<1x1x4x4xf32, #tpu.memory_space<vmem>>, %arg10: memref<1x4x1xf32, #tpu.memory_space<vmem>>, %arg11: memref<1x4x1xf32, #tpu.memory_space<vmem>>, %arg12: memref<1x4x1xf32, #tpu.memory_space<vmem>>, %arg13: memref<1x9x4x4xf32, #tpu.memory_space<vmem>>, %arg14: memref<1x4x1xf32, #tpu.memory_space<vmem>>, %arg15: memref<1x4x1xf32, #tpu.memory_space<vmem>>, %arg16: memref<1x4x1xf32, #tpu.memory_space<vmem>>, %arg17: memref<1x4x4x4xf32, #tpu.memory_space<vmem>>, %arg18: memref<1x4x1xf32, #tpu.memory_space<vmem>>, %arg19: memref<1x4x1xf32, #tpu.memory_space<vmem>>, %arg20: memref<1x4x256xf32, #tpu.memory_space<vmem>>, %arg21: memref<4x20x20xf32, #tpu.memory_space<vmem>>) attributes {dimension_semantics = [#tpu.dimension_semantics<parallel>], iteration_bounds = array<i64: 2>, scalar_prefetch = 0 : i64, scratch_operands = 1 : i64, tpu.core_type = #tpu.core_type<tc>, window_params = [{transform_indices = @transform_0, window_bounds = array<i64: 1, 4, 256>}, {transform_indices = @transform_1, window_bounds = array<i64: 1, 16, 4>}, {transform_indices = @transform_2, window_bounds = array<i64: 1, 16, 1>}, {transform_indices = @transform_3, window_bounds = array<i64: 1, 16, 1>}, {transform_indices = @transform_4, window_bounds = array<i64: 1, 9, 4, 4>}, {transform_indices = @transform_5, window_bounds = array<i64: 1, 4, 1>}, {transform_indices = @transform_6, window_bounds = array<i64: 1, 4, 1>}, {transform_indices = @transform_7, window_bounds = array<i64: 1, 4, 1>}, {transform_indices = @transform_8, window_bounds = array<i64: 1, 1, 4, 4>}, {transform_indices = @transform_9, window_bounds = array<i64: 1, 4, 1>}, {transform_indices = @transform_10, window_bounds = array<i64: 1, 4, 1>}, {transform_indices = @transform_11, window_bounds = array<i64: 1, 4, 1>}, {transform_indices = @transform_12, window_bounds = array<i64: 1, 9, 4, 4>}, {transform_indices = @transform_13, window_bounds = array<i64: 1, 4, 1>}, {transform_indices = @transform_14, window_bounds = array<i64: 1, 4, 1>}, {transform_indices = @transform_15, window_bounds = array<i64: 1, 4, 1>}, {transform_indices = @transform_16, window_bounds = array<i64: 1, 4, 4, 4>}, {transform_indices = @transform_17, window_bounds = array<i64: 1, 4, 1>}, {transform_indices = @transform_18, window_bounds = array<i64: 1, 4, 1>}, {transform_indices = @transform_19, window_bounds = array<i64: 1, 4, 256>}]} {
    %c0 = arith.constant 0 : index
    %c0_0 = arith.constant 0 : index
    %c0_1 = arith.constant 0 : index
    %0 = vector.load %arg2[%c0, %c0_0, %c0_1] : memref<1x16x4xf32, #tpu.memory_space<vmem>>, vector<1x16x4xf32>
    %1 = vector.shape_cast %0 : vector<1x16x4xf32> to vector<16x4xf32>
    %c0_2 = arith.constant 0 : index
    %c0_3 = arith.constant 0 : index
    %c0_4 = arith.constant 0 : index
    %2 = vector.load %arg1[%c0_2, %c0_3, %c0_4] : memref<1x4x256xf32, #tpu.memory_space<vmem>>, vector<1x4x256xf32>
    %3 = vector.shape_cast %2 : vector<1x4x256xf32> to vector<4x256xf32>
    %cst = arith.constant dense<0.000000e+00> : vector<16x256xf32>
    %4 = tpu.matmul %1, %3, %cst {dimension_numbers = #tpu.dot_dimension_numbers<[1], [0], [0], [1], [0, 0, 1, 1], [], []>} : vector<16x4xf32>, vector<4x256xf32>, vector<16x256xf32> -> vector<16x256xf32>
    %c0_5 = arith.constant 0 : index
    %c0_6 = arith.constant 0 : index
    %c0_7 = arith.constant 0 : index
    %5 = vector.load %arg3[%c0_5, %c0_6, %c0_7] : memref<1x16x1xf32, #tpu.memory_space<vmem>>, vector<1x16x1xf32>
    %6 = vector.shape_cast %5 : vector<1x16x1xf32> to vector<16x1xf32>
    %c0_8 = arith.constant 0 : index
    %c0_9 = arith.constant 0 : index
    %c0_10 = arith.constant 0 : index
    %7 = vector.load %arg4[%c0_8, %c0_9, %c0_10] : memref<1x16x1xf32, #tpu.memory_space<vmem>>, vector<1x16x1xf32>
    %8 = vector.shape_cast %7 : vector<1x16x1xf32> to vector<16x1xf32>
    %cst_11 = arith.constant dense<0.000000e+00> : vector<16xf32>
    %9 = vector.multi_reduction <add>, %4, %cst_11 [1] : vector<16x256xf32> to vector<16xf32>
    %10 = vector.shape_cast %9 : vector<16xf32> to vector<16x1xf32>
    %cst_12 = arith.constant 3.906250e-03 : f32
    %11 = vector.broadcast %cst_12 : f32 to vector<16x1xf32>
    %12 = arith.mulf %10, %11 : vector<16x1xf32>
    %13 = arith.mulf %4, %4 : vector<16x256xf32>
    %cst_13 = arith.constant dense<0.000000e+00> : vector<16xf32>
    %14 = vector.multi_reduction <add>, %13, %cst_13 [1] : vector<16x256xf32> to vector<16xf32>
    %15 = vector.shape_cast %14 : vector<16xf32> to vector<16x1xf32>
    %cst_14 = arith.constant 3.906250e-03 : f32
    %16 = vector.broadcast %cst_14 : f32 to vector<16x1xf32>
    %17 = arith.mulf %15, %16 : vector<16x1xf32>
    %18 = arith.mulf %12, %12 : vector<16x1xf32>
    %19 = arith.subf %17, %18 : vector<16x1xf32>
    %cst_15 = arith.constant 9.99999974E-6 : f32
    %20 = vector.broadcast %cst_15 : f32 to vector<16x1xf32>
    %21 = arith.addf %19, %20 : vector<16x1xf32>
    %22 = math.rsqrt %21 : vector<16x1xf32>
    %23 = arith.mulf %6, %22 : vector<16x1xf32>
    %24 = arith.mulf %12, %23 : vector<16x1xf32>
    %25 = arith.subf %8, %24 : vector<16x1xf32>
    %26 = vector.broadcast %23 : vector<16x1xf32> to vector<16x256xf32>
    %27 = arith.mulf %4, %26 : vector<16x256xf32>
    %28 = vector.broadcast %25 : vector<16x1xf32> to vector<16x256xf32>
    %29 = arith.addf %27, %28 : vector<16x256xf32>
    %cst_16 = arith.constant 0.000000e+00 : f32
    %30 = vector.broadcast %cst_16 : f32 to vector<16x256xf32>
    %31 = arith.maximumf %29, %30 : vector<16x256xf32>
    %32 = vector.extract_strided_slice %31 {offsets = [0, 0], sizes = [4, 256], strides = [1, 1]} : vector<16x256xf32> to vector<4x256xf32>
    %cst_17 = arith.constant 0.000000e+00 : f32
    %33 = vector.broadcast %cst_17 : f32 to vector<4x20x20xf32>
    %c0_18 = arith.constant 0 : index
    %c0_19 = arith.constant 0 : index
    %c0_20 = arith.constant 0 : index
    %34 = vector.load %arg21[%c0_18, %c0_19, %c0_20] : memref<4x20x20xf32, #tpu.memory_space<vmem>>, vector<4x20x20xf32>
    tpu.vector_store %arg21[%c0_18, %c0_19, %c0_20], %33 {strides = array<i32>} : memref<4x20x20xf32, #tpu.memory_space<vmem>>, vector<4x20x20xf32>,
    %35 = vector.shape_cast %32 : vector<4x256xf32> to vector<4x16x16xf32>
    %c0_21 = arith.constant 0 : index
    %c1 = arith.constant 1 : index
    %c1_22 = arith.constant 1 : index
    %36 = vector.load %arg21[%c0_21, %c1, %c1_22] : memref<4x20x20xf32, #tpu.memory_space<vmem>>, vector<4x16x16xf32>
    tpu.vector_store %arg21[%c0_21, %c1, %c1_22], %35 {strides = array<i32>} : memref<4x20x20xf32, #tpu.memory_space<vmem>>, vector<4x16x16xf32>,
    %c0_23 = arith.constant 0 : index
    %c0_24 = arith.constant 0 : index
    %c0_25 = arith.constant 0 : index
    %37 = vector.load %arg21[%c0_23, %c0_24, %c0_25] : memref<4x20x20xf32, #tpu.memory_space<vmem>>, vector<4x20x20xf32>
    %38 = vector.extract_strided_slice %37 {offsets = [0, 0, 0], sizes = [4, 16, 16], strides = [1, 1, 1]} : vector<4x20x20xf32> to vector<4x16x16xf32>
    %39 = vector.shape_cast %38 : vector<4x16x16xf32> to vector<4x256xf32>
    %c0_26 = arith.constant 0 : index
    %c0_27 = arith.constant 0 : index
    %c0_28 = arith.constant 0 : index
    %c0_29 = arith.constant 0 : index
    %40 = vector.load %arg5[%c0_26, %c0_27, %c0_28, %c0_29] : memref<1x9x4x4xf32, #tpu.memory_space<vmem>>, vector<1x1x4x4xf32>
    %41 = vector.shape_cast %40 : vector<1x1x4x4xf32> to vector<4x4xf32>
    %cst_30 = arith.constant dense<0.000000e+00> : vector<4x256xf32>
    %42 = tpu.matmul %41, %39, %cst_30 {dimension_numbers = #tpu.dot_dimension_numbers<[1], [0], [0], [1], [0, 0, 1, 1], [], []>} : vector<4x4xf32>, vector<4x256xf32>, vector<4x256xf32> -> vector<4x256xf32>
    %43 = vector.extract_strided_slice %37 {offsets = [0, 0, 1], sizes = [4, 16, 16], strides = [1, 1, 1]} : vector<4x20x20xf32> to vector<4x16x16xf32>
    %44 = vector.shape_cast %43 : vector<4x16x16xf32> to vector<4x256xf32>
    %c0_31 = arith.constant 0 : index
    %c1_32 = arith.constant 1 : index
    %c0_33 = arith.constant 0 : index
    %c0_34 = arith.constant 0 : index
    %45 = vector.load %arg5[%c0_31, %c1_32, %c0_33, %c0_34] : memref<1x9x4x4xf32, #tpu.memory_space<vmem>>, vector<1x1x4x4xf32>
    %46 = vector.shape_cast %45 : vector<1x1x4x4xf32> to vector<4x4xf32>
    %cst_35 = arith.constant dense<0.000000e+00> : vector<4x256xf32>
    %47 = tpu.matmul %46, %44, %cst_35 {dimension_numbers = #tpu.dot_dimension_numbers<[1], [0], [0], [1], [0, 0, 1, 1], [], []>} : vector<4x4xf32>, vector<4x256xf32>, vector<4x256xf32> -> vector<4x256xf32>
    %48 = arith.addf %42, %47 : vector<4x256xf32>
    %49 = vector.extract_strided_slice %37 {offsets = [0, 0, 2], sizes = [4, 16, 16], strides = [1, 1, 1]} : vector<4x20x20xf32> to vector<4x16x16xf32>
    %50 = vector.shape_cast %49 : vector<4x16x16xf32> to vector<4x256xf32>
    %c0_36 = arith.constant 0 : index
    %c2 = arith.constant 2 : index
    %c0_37 = arith.constant 0 : index
    %c0_38 = arith.constant 0 : index
    %51 = vector.load %arg5[%c0_36, %c2, %c0_37, %c0_38] : memref<1x9x4x4xf32, #tpu.memory_space<vmem>>, vector<1x1x4x4xf32>
    %52 = vector.shape_cast %51 : vector<1x1x4x4xf32> to vector<4x4xf32>
    %cst_39 = arith.constant dense<0.000000e+00> : vector<4x256xf32>
    %53 = tpu.matmul %52, %50, %cst_39 {dimension_numbers = #tpu.dot_dimension_numbers<[1], [0], [0], [1], [0, 0, 1, 1], [], []>} : vector<4x4xf32>, vector<4x256xf32>, vector<4x256xf32> -> vector<4x256xf32>
    %54 = arith.addf %48, %53 : vector<4x256xf32>
    %55 = vector.extract_strided_slice %37 {offsets = [0, 1, 0], sizes = [4, 16, 16], strides = [1, 1, 1]} : vector<4x20x20xf32> to vector<4x16x16xf32>
    %56 = vector.shape_cast %55 : vector<4x16x16xf32> to vector<4x256xf32>
    %c0_40 = arith.constant 0 : index
    %c3 = arith.constant 3 : index
    %c0_41 = arith.constant 0 : index
    %c0_42 = arith.constant 0 : index
    %57 = vector.load %arg5[%c0_40, %c3, %c0_41, %c0_42] : memref<1x9x4x4xf32, #tpu.memory_space<vmem>>, vector<1x1x4x4xf32>
    %58 = vector.shape_cast %57 : vector<1x1x4x4xf32> to vector<4x4xf32>
    %cst_43 = arith.constant dense<0.000000e+00> : vector<4x256xf32>
    %59 = tpu.matmul %58, %56, %cst_43 {dimension_numbers = #tpu.dot_dimension_numbers<[1], [0], [0], [1], [0, 0, 1, 1], [], []>} : vector<4x4xf32>, vector<4x256xf32>, vector<4x256xf32> -> vector<4x256xf32>
    %60 = arith.addf %54, %59 : vector<4x256xf32>
    %61 = vector.extract_strided_slice %37 {offsets = [0, 1, 1], sizes = [4, 16, 16], strides = [1, 1, 1]} : vector<4x20x20xf32> to vector<4x16x16xf32>
    %62 = vector.shape_cast %61 : vector<4x16x16xf32> to vector<4x256xf32>
    %c0_44 = arith.constant 0 : index
    %c4 = arith.constant 4 : index
    %c0_45 = arith.constant 0 : index
    %c0_46 = arith.constant 0 : index
    %63 = vector.load %arg5[%c0_44, %c4, %c0_45, %c0_46] : memref<1x9x4x4xf32, #tpu.memory_space<vmem>>, vector<1x1x4x4xf32>
    %64 = vector.shape_cast %63 : vector<1x1x4x4xf32> to vector<4x4xf32>
    %cst_47 = arith.constant dense<0.000000e+00> : vector<4x256xf32>
    %65 = tpu.matmul %64, %62, %cst_47 {dimension_numbers = #tpu.dot_dimension_numbers<[1], [0], [0], [1], [0, 0, 1, 1], [], []>} : vector<4x4xf32>, vector<4x256xf32>, vector<4x256xf32> -> vector<4x256xf32>
    %66 = arith.addf %60, %65 : vector<4x256xf32>
    %67 = vector.extract_strided_slice %37 {offsets = [0, 1, 2], sizes = [4, 16, 16], strides = [1, 1, 1]} : vector<4x20x20xf32> to vector<4x16x16xf32>
    %68 = vector.shape_cast %67 : vector<4x16x16xf32> to vector<4x256xf32>
    %c0_48 = arith.constant 0 : index
    %c5 = arith.constant 5 : index
    %c0_49 = arith.constant 0 : index
    %c0_50 = arith.constant 0 : index
    %69 = vector.load %arg5[%c0_48, %c5, %c0_49, %c0_50] : memref<1x9x4x4xf32, #tpu.memory_space<vmem>>, vector<1x1x4x4xf32>
    %70 = vector.shape_cast %69 : vector<1x1x4x4xf32> to vector<4x4xf32>
    %cst_51 = arith.constant dense<0.000000e+00> : vector<4x256xf32>
    %71 = tpu.matmul %70, %68, %cst_51 {dimension_numbers = #tpu.dot_dimension_numbers<[1], [0], [0], [1], [0, 0, 1, 1], [], []>} : vector<4x4xf32>, vector<4x256xf32>, vector<4x256xf32> -> vector<4x256xf32>
    %72 = arith.addf %66, %71 : vector<4x256xf32>
    %73 = vector.extract_strided_slice %37 {offsets = [0, 2, 0], sizes = [4, 16, 16], strides = [1, 1, 1]} : vector<4x20x20xf32> to vector<4x16x16xf32>
    %74 = vector.shape_cast %73 : vector<4x16x16xf32> to vector<4x256xf32>
    %c0_52 = arith.constant 0 : index
    %c6 = arith.constant 6 : index
    %c0_53 = arith.constant 0 : index
    %c0_54 = arith.constant 0 : index
    %75 = vector.load %arg5[%c0_52, %c6, %c0_53, %c0_54] : memref<1x9x4x4xf32, #tpu.memory_space<vmem>>, vector<1x1x4x4xf32>
    %76 = vector.shape_cast %75 : vector<1x1x4x4xf32> to vector<4x4xf32>
    %cst_55 = arith.constant dense<0.000000e+00> : vector<4x256xf32>
    %77 = tpu.matmul %76, %74, %cst_55 {dimension_numbers = #tpu.dot_dimension_numbers<[1], [0], [0], [1], [0, 0, 1, 1], [], []>} : vector<4x4xf32>, vector<4x256xf32>, vector<4x256xf32> -> vector<4x256xf32>
    %78 = arith.addf %72, %77 : vector<4x256xf32>
    %79 = vector.extract_strided_slice %37 {offsets = [0, 2, 1], sizes = [4, 16, 16], strides = [1, 1, 1]} : vector<4x20x20xf32> to vector<4x16x16xf32>
    %80 = vector.shape_cast %79 : vector<4x16x16xf32> to vector<4x256xf32>
    %c0_56 = arith.constant 0 : index
    %c7 = arith.constant 7 : index
    %c0_57 = arith.constant 0 : index
    %c0_58 = arith.constant 0 : index
    %81 = vector.load %arg5[%c0_56, %c7, %c0_57, %c0_58] : memref<1x9x4x4xf32, #tpu.memory_space<vmem>>, vector<1x1x4x4xf32>
    %82 = vector.shape_cast %81 : vector<1x1x4x4xf32> to vector<4x4xf32>
    %cst_59 = arith.constant dense<0.000000e+00> : vector<4x256xf32>
    %83 = tpu.matmul %82, %80, %cst_59 {dimension_numbers = #tpu.dot_dimension_numbers<[1], [0], [0], [1], [0, 0, 1, 1], [], []>} : vector<4x4xf32>, vector<4x256xf32>, vector<4x256xf32> -> vector<4x256xf32>
    %84 = arith.addf %78, %83 : vector<4x256xf32>
    %85 = vector.extract_strided_slice %37 {offsets = [0, 2, 2], sizes = [4, 16, 16], strides = [1, 1, 1]} : vector<4x20x20xf32> to vector<4x16x16xf32>
    %86 = vector.shape_cast %85 : vector<4x16x16xf32> to vector<4x256xf32>
    %c0_60 = arith.constant 0 : index
    %c8 = arith.constant 8 : index
    %c0_61 = arith.constant 0 : index
    %c0_62 = arith.constant 0 : index
    %87 = vector.load %arg5[%c0_60, %c8, %c0_61, %c0_62] : memref<1x9x4x4xf32, #tpu.memory_space<vmem>>, vector<1x1x4x4xf32>
    %88 = vector.shape_cast %87 : vector<1x1x4x4xf32> to vector<4x4xf32>
    %cst_63 = arith.constant dense<0.000000e+00> : vector<4x256xf32>
    %89 = tpu.matmul %88, %86, %cst_63 {dimension_numbers = #tpu.dot_dimension_numbers<[1], [0], [0], [1], [0, 0, 1, 1], [], []>} : vector<4x4xf32>, vector<4x256xf32>, vector<4x256xf32> -> vector<4x256xf32>
    %90 = arith.addf %84, %89 : vector<4x256xf32>
    %c0_64 = arith.constant 0 : index
    %c0_65 = arith.constant 0 : index
    %c0_66 = arith.constant 0 : index
    %91 = vector.load %arg6[%c0_64, %c0_65, %c0_66] : memref<1x4x1xf32, #tpu.memory_space<vmem>>, vector<1x4x1xf32>
    %92 = vector.shape_cast %91 : vector<1x4x1xf32> to vector<4x1xf32>
    %93 = vector.broadcast %92 : vector<4x1xf32> to vector<4x256xf32>
    %94 = arith.addf %90, %93 : vector<4x256xf32>
    %c0_67 = arith.constant 0 : index
    %c0_68 = arith.constant 0 : index
    %c0_69 = arith.constant 0 : index
    %95 = vector.load %arg7[%c0_67, %c0_68, %c0_69] : memref<1x4x1xf32, #tpu.memory_space<vmem>>, vector<1x4x1xf32>
    %96 = vector.shape_cast %95 : vector<1x4x1xf32> to vector<4x1xf32>
    %c0_70 = arith.constant 0 : index
    %c0_71 = arith.constant 0 : index
    %c0_72 = arith.constant 0 : index
    %97 = vector.load %arg8[%c0_70, %c0_71, %c0_72] : memref<1x4x1xf32, #tpu.memory_space<vmem>>, vector<1x4x1xf32>
    %98 = vector.shape_cast %97 : vector<1x4x1xf32> to vector<4x1xf32>
    %cst_73 = arith.constant dense<0.000000e+00> : vector<4xf32>
    %99 = vector.multi_reduction <add>, %94, %cst_73 [1] : vector<4x256xf32> to vector<4xf32>
    %100 = vector.shape_cast %99 : vector<4xf32> to vector<4x1xf32>
    %cst_74 = arith.constant 3.906250e-03 : f32
    %101 = vector.broadcast %cst_74 : f32 to vector<4x1xf32>
    %102 = arith.mulf %100, %101 : vector<4x1xf32>
    %103 = arith.mulf %94, %94 : vector<4x256xf32>
    %cst_75 = arith.constant dense<0.000000e+00> : vector<4xf32>
    %104 = vector.multi_reduction <add>, %103, %cst_75 [1] : vector<4x256xf32> to vector<4xf32>
    %105 = vector.shape_cast %104 : vector<4xf32> to vector<4x1xf32>
    %cst_76 = arith.constant 3.906250e-03 : f32
    %106 = vector.broadcast %cst_76 : f32 to vector<4x1xf32>
    %107 = arith.mulf %105, %106 : vector<4x1xf32>
    %108 = arith.mulf %102, %102 : vector<4x1xf32>
    %109 = arith.subf %107, %108 : vector<4x1xf32>
    %cst_77 = arith.constant 9.99999974E-6 : f32
    %110 = vector.broadcast %cst_77 : f32 to vector<4x1xf32>
    %111 = arith.addf %109, %110 : vector<4x1xf32>
    %112 = math.rsqrt %111 : vector<4x1xf32>
    %113 = arith.mulf %96, %112 : vector<4x1xf32>
    %114 = arith.mulf %102, %113 : vector<4x1xf32>
    %115 = arith.subf %98, %114 : vector<4x1xf32>
    %116 = vector.broadcast %113 : vector<4x1xf32> to vector<4x256xf32>
    %117 = arith.mulf %94, %116 : vector<4x256xf32>
    %118 = vector.broadcast %115 : vector<4x1xf32> to vector<4x256xf32>
    %119 = arith.addf %117, %118 : vector<4x256xf32>
    %cst_78 = arith.constant 0.000000e+00 : f32
    %120 = vector.broadcast %cst_78 : f32 to vector<4x256xf32>
    %121 = arith.maximumf %119, %120 : vector<4x256xf32>
    %122 = vector.extract_strided_slice %31 {offsets = [4, 0], sizes = [4, 256], strides = [1, 1]} : vector<16x256xf32> to vector<4x256xf32>
    %123 = arith.addf %121, %122 : vector<4x256xf32>
    %c0_79 = arith.constant 0 : index
    %c0_80 = arith.constant 0 : index
    %c0_81 = arith.constant 0 : index
    %c0_82 = arith.constant 0 : index
    %124 = vector.load %arg9[%c0_79, %c0_80, %c0_81, %c0_82] : memref<1x1x4x4xf32, #tpu.memory_space<vmem>>, vector<1x1x4x4xf32>
    %125 = vector.shape_cast %124 : vector<1x1x4x4xf32> to vector<4x4xf32>
    %cst_83 = arith.constant dense<0.000000e+00> : vector<4x256xf32>
    %126 = tpu.matmul %125, %123, %cst_83 {dimension_numbers = #tpu.dot_dimension_numbers<[1], [0], [0], [1], [0, 0, 1, 1], [], []>} : vector<4x4xf32>, vector<4x256xf32>, vector<4x256xf32> -> vector<4x256xf32>
    %c0_84 = arith.constant 0 : index
    %c0_85 = arith.constant 0 : index
    %c0_86 = arith.constant 0 : index
    %127 = vector.load %arg10[%c0_84, %c0_85, %c0_86] : memref<1x4x1xf32, #tpu.memory_space<vmem>>, vector<1x4x1xf32>
    %128 = vector.shape_cast %127 : vector<1x4x1xf32> to vector<4x1xf32>
    %129 = vector.broadcast %128 : vector<4x1xf32> to vector<4x256xf32>
    %130 = arith.addf %126, %129 : vector<4x256xf32>
    %c0_87 = arith.constant 0 : index
    %c0_88 = arith.constant 0 : index
    %c0_89 = arith.constant 0 : index
    %131 = vector.load %arg11[%c0_87, %c0_88, %c0_89] : memref<1x4x1xf32, #tpu.memory_space<vmem>>, vector<1x4x1xf32>
    %132 = vector.shape_cast %131 : vector<1x4x1xf32> to vector<4x1xf32>
    %c0_90 = arith.constant 0 : index
    %c0_91 = arith.constant 0 : index
    %c0_92 = arith.constant 0 : index
    %133 = vector.load %arg12[%c0_90, %c0_91, %c0_92] : memref<1x4x1xf32, #tpu.memory_space<vmem>>, vector<1x4x1xf32>
    %134 = vector.shape_cast %133 : vector<1x4x1xf32> to vector<4x1xf32>
    %cst_93 = arith.constant dense<0.000000e+00> : vector<4xf32>
    %135 = vector.multi_reduction <add>, %130, %cst_93 [1] : vector<4x256xf32> to vector<4xf32>
    %136 = vector.shape_cast %135 : vector<4xf32> to vector<4x1xf32>
    %cst_94 = arith.constant 3.906250e-03 : f32
    %137 = vector.broadcast %cst_94 : f32 to vector<4x1xf32>
    %138 = arith.mulf %136, %137 : vector<4x1xf32>
    %139 = arith.mulf %130, %130 : vector<4x256xf32>
    %cst_95 = arith.constant dense<0.000000e+00> : vector<4xf32>
    %140 = vector.multi_reduction <add>, %139, %cst_95 [1] : vector<4x256xf32> to vector<4xf32>
    %141 = vector.shape_cast %140 : vector<4xf32> to vector<4x1xf32>
    %cst_96 = arith.constant 3.906250e-03 : f32
    %142 = vector.broadcast %cst_96 : f32 to vector<4x1xf32>
    %143 = arith.mulf %141, %142 : vector<4x1xf32>
    %144 = arith.mulf %138, %138 : vector<4x1xf32>
    %145 = arith.subf %143, %144 : vector<4x1xf32>
    %cst_97 = arith.constant 9.99999974E-6 : f32
    %146 = vector.broadcast %cst_97 : f32 to vector<4x1xf32>
    %147 = arith.addf %145, %146 : vector<4x1xf32>
    %148 = math.rsqrt %147 : vector<4x1xf32>
    %149 = arith.mulf %132, %148 : vector<4x1xf32>
    %150 = arith.mulf %138, %149 : vector<4x1xf32>
    %151 = arith.subf %134, %150 : vector<4x1xf32>
    %152 = vector.broadcast %149 : vector<4x1xf32> to vector<4x256xf32>
    %153 = arith.mulf %130, %152 : vector<4x256xf32>
    %154 = vector.broadcast %151 : vector<4x1xf32> to vector<4x256xf32>
    %155 = arith.addf %153, %154 : vector<4x256xf32>
    %cst_98 = arith.constant 0.000000e+00 : f32
    %156 = vector.broadcast %cst_98 : f32 to vector<4x256xf32>
    %157 = arith.maximumf %155, %156 : vector<4x256xf32>
    %158 = vector.extract_strided_slice %31 {offsets = [8, 0], sizes = [4, 256], strides = [1, 1]} : vector<16x256xf32> to vector<4x256xf32>
    %159 = arith.addf %157, %158 : vector<4x256xf32>
    %cst_99 = arith.constant 0.000000e+00 : f32
    %160 = vector.broadcast %cst_99 : f32 to vector<4x20x20xf32>
    %c0_100 = arith.constant 0 : index
    %c0_101 = arith.constant 0 : index
    %c0_102 = arith.constant 0 : index
    %161 = vector.load %arg21[%c0_100, %c0_101, %c0_102] : memref<4x20x20xf32, #tpu.memory_space<vmem>>, vector<4x20x20xf32>
    tpu.vector_store %arg21[%c0_100, %c0_101, %c0_102], %160 {strides = array<i32>} : memref<4x20x20xf32, #tpu.memory_space<vmem>>, vector<4x20x20xf32>,
    %162 = vector.shape_cast %159 : vector<4x256xf32> to vector<4x16x16xf32>
    %c0_103 = arith.constant 0 : index
    %c2_104 = arith.constant 2 : index
    %c2_105 = arith.constant 2 : index
    %163 = vector.load %arg21[%c0_103, %c2_104, %c2_105] : memref<4x20x20xf32, #tpu.memory_space<vmem>>, vector<4x16x16xf32>
    tpu.vector_store %arg21[%c0_103, %c2_104, %c2_105], %162 {strides = array<i32>} : memref<4x20x20xf32, #tpu.memory_space<vmem>>, vector<4x16x16xf32>,
    %c0_106 = arith.constant 0 : index
    %c0_107 = arith.constant 0 : index
    %c0_108 = arith.constant 0 : index
    %164 = vector.load %arg21[%c0_106, %c0_107, %c0_108] : memref<4x20x20xf32, #tpu.memory_space<vmem>>, vector<4x20x20xf32>
    %165 = vector.extract_strided_slice %164 {offsets = [0, 0, 0], sizes = [4, 16, 16], strides = [1, 1, 1]} : vector<4x20x20xf32> to vector<4x16x16xf32>
    %166 = vector.shape_cast %165 : vector<4x16x16xf32> to vector<4x256xf32>
    %c0_109 = arith.constant 0 : index
    %c0_110 = arith.constant 0 : index
    %c0_111 = arith.constant 0 : index
    %c0_112 = arith.constant 0 : index
    %167 = vector.load %arg13[%c0_109, %c0_110, %c0_111, %c0_112] : memref<1x9x4x4xf32, #tpu.memory_space<vmem>>, vector<1x1x4x4xf32>
    %168 = vector.shape_cast %167 : vector<1x1x4x4xf32> to vector<4x4xf32>
    %cst_113 = arith.constant dense<0.000000e+00> : vector<4x256xf32>
    %169 = tpu.matmul %168, %166, %cst_113 {dimension_numbers = #tpu.dot_dimension_numbers<[1], [0], [0], [1], [0, 0, 1, 1], [], []>} : vector<4x4xf32>, vector<4x256xf32>, vector<4x256xf32> -> vector<4x256xf32>
    %170 = vector.extract_strided_slice %164 {offsets = [0, 0, 2], sizes = [4, 16, 16], strides = [1, 1, 1]} : vector<4x20x20xf32> to vector<4x16x16xf32>
    %171 = vector.shape_cast %170 : vector<4x16x16xf32> to vector<4x256xf32>
    %c0_114 = arith.constant 0 : index
    %c1_115 = arith.constant 1 : index
    %c0_116 = arith.constant 0 : index
    %c0_117 = arith.constant 0 : index
    %172 = vector.load %arg13[%c0_114, %c1_115, %c0_116, %c0_117] : memref<1x9x4x4xf32, #tpu.memory_space<vmem>>, vector<1x1x4x4xf32>
    %173 = vector.shape_cast %172 : vector<1x1x4x4xf32> to vector<4x4xf32>
    %cst_118 = arith.constant dense<0.000000e+00> : vector<4x256xf32>
    %174 = tpu.matmul %173, %171, %cst_118 {dimension_numbers = #tpu.dot_dimension_numbers<[1], [0], [0], [1], [0, 0, 1, 1], [], []>} : vector<4x4xf32>, vector<4x256xf32>, vector<4x256xf32> -> vector<4x256xf32>
    %175 = arith.addf %169, %174 : vector<4x256xf32>
    %176 = vector.extract_strided_slice %164 {offsets = [0, 0, 4], sizes = [4, 16, 16], strides = [1, 1, 1]} : vector<4x20x20xf32> to vector<4x16x16xf32>
    %177 = vector.shape_cast %176 : vector<4x16x16xf32> to vector<4x256xf32>
    %c0_119 = arith.constant 0 : index
    %c2_120 = arith.constant 2 : index
    %c0_121 = arith.constant 0 : index
    %c0_122 = arith.constant 0 : index
    %178 = vector.load %arg13[%c0_119, %c2_120, %c0_121, %c0_122] : memref<1x9x4x4xf32, #tpu.memory_space<vmem>>, vector<1x1x4x4xf32>
    %179 = vector.shape_cast %178 : vector<1x1x4x4xf32> to vector<4x4xf32>
    %cst_123 = arith.constant dense<0.000000e+00> : vector<4x256xf32>
    %180 = tpu.matmul %179, %177, %cst_123 {dimension_numbers = #tpu.dot_dimension_numbers<[1], [0], [0], [1], [0, 0, 1, 1], [], []>} : vector<4x4xf32>, vector<4x256xf32>, vector<4x256xf32> -> vector<4x256xf32>
    %181 = arith.addf %175, %180 : vector<4x256xf32>
    %182 = vector.extract_strided_slice %164 {offsets = [0, 2, 0], sizes = [4, 16, 16], strides = [1, 1, 1]} : vector<4x20x20xf32> to vector<4x16x16xf32>
    %183 = vector.shape_cast %182 : vector<4x16x16xf32> to vector<4x256xf32>
    %c0_124 = arith.constant 0 : index
    %c3_125 = arith.constant 3 : index
    %c0_126 = arith.constant 0 : index
    %c0_127 = arith.constant 0 : index
    %184 = vector.load %arg13[%c0_124, %c3_125, %c0_126, %c0_127] : memref<1x9x4x4xf32, #tpu.memory_space<vmem>>, vector<1x1x4x4xf32>
    %185 = vector.shape_cast %184 : vector<1x1x4x4xf32> to vector<4x4xf32>
    %cst_128 = arith.constant dense<0.000000e+00> : vector<4x256xf32>
    %186 = tpu.matmul %185, %183, %cst_128 {dimension_numbers = #tpu.dot_dimension_numbers<[1], [0], [0], [1], [0, 0, 1, 1], [], []>} : vector<4x4xf32>, vector<4x256xf32>, vector<4x256xf32> -> vector<4x256xf32>
    %187 = arith.addf %181, %186 : vector<4x256xf32>
    %188 = vector.extract_strided_slice %164 {offsets = [0, 2, 2], sizes = [4, 16, 16], strides = [1, 1, 1]} : vector<4x20x20xf32> to vector<4x16x16xf32>
    %189 = vector.shape_cast %188 : vector<4x16x16xf32> to vector<4x256xf32>
    %c0_129 = arith.constant 0 : index
    %c4_130 = arith.constant 4 : index
    %c0_131 = arith.constant 0 : index
    %c0_132 = arith.constant 0 : index
    %190 = vector.load %arg13[%c0_129, %c4_130, %c0_131, %c0_132] : memref<1x9x4x4xf32, #tpu.memory_space<vmem>>, vector<1x1x4x4xf32>
    %191 = vector.shape_cast %190 : vector<1x1x4x4xf32> to vector<4x4xf32>
    %cst_133 = arith.constant dense<0.000000e+00> : vector<4x256xf32>
    %192 = tpu.matmul %191, %189, %cst_133 {dimension_numbers = #tpu.dot_dimension_numbers<[1], [0], [0], [1], [0, 0, 1, 1], [], []>} : vector<4x4xf32>, vector<4x256xf32>, vector<4x256xf32> -> vector<4x256xf32>
    %193 = arith.addf %187, %192 : vector<4x256xf32>
    %194 = vector.extract_strided_slice %164 {offsets = [0, 2, 4], sizes = [4, 16, 16], strides = [1, 1, 1]} : vector<4x20x20xf32> to vector<4x16x16xf32>
    %195 = vector.shape_cast %194 : vector<4x16x16xf32> to vector<4x256xf32>
    %c0_134 = arith.constant 0 : index
    %c5_135 = arith.constant 5 : index
    %c0_136 = arith.constant 0 : index
    %c0_137 = arith.constant 0 : index
    %196 = vector.load %arg13[%c0_134, %c5_135, %c0_136, %c0_137] : memref<1x9x4x4xf32, #tpu.memory_space<vmem>>, vector<1x1x4x4xf32>
    %197 = vector.shape_cast %196 : vector<1x1x4x4xf32> to vector<4x4xf32>
    %cst_138 = arith.constant dense<0.000000e+00> : vector<4x256xf32>
    %198 = tpu.matmul %197, %195, %cst_138 {dimension_numbers = #tpu.dot_dimension_numbers<[1], [0], [0], [1], [0, 0, 1, 1], [], []>} : vector<4x4xf32>, vector<4x256xf32>, vector<4x256xf32> -> vector<4x256xf32>
    %199 = arith.addf %193, %198 : vector<4x256xf32>
    %200 = vector.extract_strided_slice %164 {offsets = [0, 4, 0], sizes = [4, 16, 16], strides = [1, 1, 1]} : vector<4x20x20xf32> to vector<4x16x16xf32>
    %201 = vector.shape_cast %200 : vector<4x16x16xf32> to vector<4x256xf32>
    %c0_139 = arith.constant 0 : index
    %c6_140 = arith.constant 6 : index
    %c0_141 = arith.constant 0 : index
    %c0_142 = arith.constant 0 : index
    %202 = vector.load %arg13[%c0_139, %c6_140, %c0_141, %c0_142] : memref<1x9x4x4xf32, #tpu.memory_space<vmem>>, vector<1x1x4x4xf32>
    %203 = vector.shape_cast %202 : vector<1x1x4x4xf32> to vector<4x4xf32>
    %cst_143 = arith.constant dense<0.000000e+00> : vector<4x256xf32>
    %204 = tpu.matmul %203, %201, %cst_143 {dimension_numbers = #tpu.dot_dimension_numbers<[1], [0], [0], [1], [0, 0, 1, 1], [], []>} : vector<4x4xf32>, vector<4x256xf32>, vector<4x256xf32> -> vector<4x256xf32>
    %205 = arith.addf %199, %204 : vector<4x256xf32>
    %206 = vector.extract_strided_slice %164 {offsets = [0, 4, 2], sizes = [4, 16, 16], strides = [1, 1, 1]} : vector<4x20x20xf32> to vector<4x16x16xf32>
    %207 = vector.shape_cast %206 : vector<4x16x16xf32> to vector<4x256xf32>
    %c0_144 = arith.constant 0 : index
    %c7_145 = arith.constant 7 : index
    %c0_146 = arith.constant 0 : index
    %c0_147 = arith.constant 0 : index
    %208 = vector.load %arg13[%c0_144, %c7_145, %c0_146, %c0_147] : memref<1x9x4x4xf32, #tpu.memory_space<vmem>>, vector<1x1x4x4xf32>
    %209 = vector.shape_cast %208 : vector<1x1x4x4xf32> to vector<4x4xf32>
    %cst_148 = arith.constant dense<0.000000e+00> : vector<4x256xf32>
    %210 = tpu.matmul %209, %207, %cst_148 {dimension_numbers = #tpu.dot_dimension_numbers<[1], [0], [0], [1], [0, 0, 1, 1], [], []>} : vector<4x4xf32>, vector<4x256xf32>, vector<4x256xf32> -> vector<4x256xf32>
    %211 = arith.addf %205, %210 : vector<4x256xf32>
    %212 = vector.extract_strided_slice %164 {offsets = [0, 4, 4], sizes = [4, 16, 16], strides = [1, 1, 1]} : vector<4x20x20xf32> to vector<4x16x16xf32>
    %213 = vector.shape_cast %212 : vector<4x16x16xf32> to vector<4x256xf32>
    %c0_149 = arith.constant 0 : index
    %c8_150 = arith.constant 8 : index
    %c0_151 = arith.constant 0 : index
    %c0_152 = arith.constant 0 : index
    %214 = vector.load %arg13[%c0_149, %c8_150, %c0_151, %c0_152] : memref<1x9x4x4xf32, #tpu.memory_space<vmem>>, vector<1x1x4x4xf32>
    %215 = vector.shape_cast %214 : vector<1x1x4x4xf32> to vector<4x4xf32>
    %cst_153 = arith.constant dense<0.000000e+00> : vector<4x256xf32>
    %216 = tpu.matmul %215, %213, %cst_153 {dimension_numbers = #tpu.dot_dimension_numbers<[1], [0], [0], [1], [0, 0, 1, 1], [], []>} : vector<4x4xf32>, vector<4x256xf32>, vector<4x256xf32> -> vector<4x256xf32>
    %217 = arith.addf %211, %216 : vector<4x256xf32>
    %c0_154 = arith.constant 0 : index
    %c0_155 = arith.constant 0 : index
    %c0_156 = arith.constant 0 : index
    %218 = vector.load %arg14[%c0_154, %c0_155, %c0_156] : memref<1x4x1xf32, #tpu.memory_space<vmem>>, vector<1x4x1xf32>
    %219 = vector.shape_cast %218 : vector<1x4x1xf32> to vector<4x1xf32>
    %220 = vector.broadcast %219 : vector<4x1xf32> to vector<4x256xf32>
    %221 = arith.addf %217, %220 : vector<4x256xf32>
    %c0_157 = arith.constant 0 : index
    %c0_158 = arith.constant 0 : index
    %c0_159 = arith.constant 0 : index
    %222 = vector.load %arg15[%c0_157, %c0_158, %c0_159] : memref<1x4x1xf32, #tpu.memory_space<vmem>>, vector<1x4x1xf32>
    %223 = vector.shape_cast %222 : vector<1x4x1xf32> to vector<4x1xf32>
    %c0_160 = arith.constant 0 : index
    %c0_161 = arith.constant 0 : index
    %c0_162 = arith.constant 0 : index
    %224 = vector.load %arg16[%c0_160, %c0_161, %c0_162] : memref<1x4x1xf32, #tpu.memory_space<vmem>>, vector<1x4x1xf32>
    %225 = vector.shape_cast %224 : vector<1x4x1xf32> to vector<4x1xf32>
    %cst_163 = arith.constant dense<0.000000e+00> : vector<4xf32>
    %226 = vector.multi_reduction <add>, %221, %cst_163 [1] : vector<4x256xf32> to vector<4xf32>
    %227 = vector.shape_cast %226 : vector<4xf32> to vector<4x1xf32>
    %cst_164 = arith.constant 3.906250e-03 : f32
    %228 = vector.broadcast %cst_164 : f32 to vector<4x1xf32>
    %229 = arith.mulf %227, %228 : vector<4x1xf32>
    %230 = arith.mulf %221, %221 : vector<4x256xf32>
    %cst_165 = arith.constant dense<0.000000e+00> : vector<4xf32>
    %231 = vector.multi_reduction <add>, %230, %cst_165 [1] : vector<4x256xf32> to vector<4xf32>
    %232 = vector.shape_cast %231 : vector<4xf32> to vector<4x1xf32>
    %cst_166 = arith.constant 3.906250e-03 : f32
    %233 = vector.broadcast %cst_166 : f32 to vector<4x1xf32>
    %234 = arith.mulf %232, %233 : vector<4x1xf32>
    %235 = arith.mulf %229, %229 : vector<4x1xf32>
    %236 = arith.subf %234, %235 : vector<4x1xf32>
    %cst_167 = arith.constant 9.99999974E-6 : f32
    %237 = vector.broadcast %cst_167 : f32 to vector<4x1xf32>
    %238 = arith.addf %236, %237 : vector<4x1xf32>
    %239 = math.rsqrt %238 : vector<4x1xf32>
    %240 = arith.mulf %223, %239 : vector<4x1xf32>
    %241 = arith.mulf %229, %240 : vector<4x1xf32>
    %242 = arith.subf %225, %241 : vector<4x1xf32>
    %243 = vector.broadcast %240 : vector<4x1xf32> to vector<4x256xf32>
    %244 = arith.mulf %221, %243 : vector<4x256xf32>
    %245 = vector.broadcast %242 : vector<4x1xf32> to vector<4x256xf32>
    %246 = arith.addf %244, %245 : vector<4x256xf32>
    %cst_168 = arith.constant 0.000000e+00 : f32
    %247 = vector.broadcast %cst_168 : f32 to vector<4x256xf32>
    %248 = arith.maximumf %246, %247 : vector<4x256xf32>
    %249 = vector.extract_strided_slice %31 {offsets = [12, 0], sizes = [4, 256], strides = [1, 1]} : vector<16x256xf32> to vector<4x256xf32>
    %c0_169 = arith.constant 0 : index
    %c0_170 = arith.constant 0 : index
    %c0_171 = arith.constant 0 : index
    %c0_172 = arith.constant 0 : index
    %250 = vector.load %arg17[%c0_169, %c0_170, %c0_171, %c0_172] : memref<1x4x4x4xf32, #tpu.memory_space<vmem>>, vector<1x1x4x4xf32>
    %251 = vector.shape_cast %250 : vector<1x1x4x4xf32> to vector<4x4xf32>
    %cst_173 = arith.constant dense<0.000000e+00> : vector<4x256xf32>
    %252 = tpu.matmul %251, %121, %cst_173 {dimension_numbers = #tpu.dot_dimension_numbers<[1], [0], [0], [1], [0, 0, 1, 1], [], []>} : vector<4x4xf32>, vector<4x256xf32>, vector<4x256xf32> -> vector<4x256xf32>
    %c0_174 = arith.constant 0 : index
    %c1_175 = arith.constant 1 : index
    %c0_176 = arith.constant 0 : index
    %c0_177 = arith.constant 0 : index
    %253 = vector.load %arg17[%c0_174, %c1_175, %c0_176, %c0_177] : memref<1x4x4x4xf32, #tpu.memory_space<vmem>>, vector<1x1x4x4xf32>
    %254 = vector.shape_cast %253 : vector<1x1x4x4xf32> to vector<4x4xf32>
    %cst_178 = arith.constant dense<0.000000e+00> : vector<4x256xf32>
    %255 = tpu.matmul %254, %157, %cst_178 {dimension_numbers = #tpu.dot_dimension_numbers<[1], [0], [0], [1], [0, 0, 1, 1], [], []>} : vector<4x4xf32>, vector<4x256xf32>, vector<4x256xf32> -> vector<4x256xf32>
    %256 = arith.addf %252, %255 : vector<4x256xf32>
    %c0_179 = arith.constant 0 : index
    %c2_180 = arith.constant 2 : index
    %c0_181 = arith.constant 0 : index
    %c0_182 = arith.constant 0 : index
    %257 = vector.load %arg17[%c0_179, %c2_180, %c0_181, %c0_182] : memref<1x4x4x4xf32, #tpu.memory_space<vmem>>, vector<1x1x4x4xf32>
    %258 = vector.shape_cast %257 : vector<1x1x4x4xf32> to vector<4x4xf32>
    %cst_183 = arith.constant dense<0.000000e+00> : vector<4x256xf32>
    %259 = tpu.matmul %258, %248, %cst_183 {dimension_numbers = #tpu.dot_dimension_numbers<[1], [0], [0], [1], [0, 0, 1, 1], [], []>} : vector<4x4xf32>, vector<4x256xf32>, vector<4x256xf32> -> vector<4x256xf32>
    %260 = arith.addf %256, %259 : vector<4x256xf32>
    %c0_184 = arith.constant 0 : index
    %c3_185 = arith.constant 3 : index
    %c0_186 = arith.constant 0 : index
    %c0_187 = arith.constant 0 : index
    %261 = vector.load %arg17[%c0_184, %c3_185, %c0_186, %c0_187] : memref<1x4x4x4xf32, #tpu.memory_space<vmem>>, vector<1x1x4x4xf32>
    %262 = vector.shape_cast %261 : vector<1x1x4x4xf32> to vector<4x4xf32>
    %cst_188 = arith.constant dense<0.000000e+00> : vector<4x256xf32>
    %263 = tpu.matmul %262, %249, %cst_188 {dimension_numbers = #tpu.dot_dimension_numbers<[1], [0], [0], [1], [0, 0, 1, 1], [], []>} : vector<4x4xf32>, vector<4x256xf32>, vector<4x256xf32> -> vector<4x256xf32>
    %264 = arith.addf %260, %263 : vector<4x256xf32>
    %c0_189 = arith.constant 0 : index
    %c0_190 = arith.constant 0 : index
    %c0_191 = arith.constant 0 : index
    %265 = vector.load %arg18[%c0_189, %c0_190, %c0_191] : memref<1x4x1xf32, #tpu.memory_space<vmem>>, vector<1x4x1xf32>
    %266 = vector.shape_cast %265 : vector<1x4x1xf32> to vector<4x1xf32>
    %c0_192 = arith.constant 0 : index
    %c0_193 = arith.constant 0 : index
    %c0_194 = arith.constant 0 : index
    %267 = vector.load %arg19[%c0_192, %c0_193, %c0_194] : memref<1x4x1xf32, #tpu.memory_space<vmem>>, vector<1x4x1xf32>
    %268 = vector.shape_cast %267 : vector<1x4x1xf32> to vector<4x1xf32>
    %cst_195 = arith.constant dense<0.000000e+00> : vector<4xf32>
    %269 = vector.multi_reduction <add>, %264, %cst_195 [1] : vector<4x256xf32> to vector<4xf32>
    %270 = vector.shape_cast %269 : vector<4xf32> to vector<4x1xf32>
    %cst_196 = arith.constant 3.906250e-03 : f32
    %271 = vector.broadcast %cst_196 : f32 to vector<4x1xf32>
    %272 = arith.mulf %270, %271 : vector<4x1xf32>
    %273 = arith.mulf %264, %264 : vector<4x256xf32>
    %cst_197 = arith.constant dense<0.000000e+00> : vector<4xf32>
    %274 = vector.multi_reduction <add>, %273, %cst_197 [1] : vector<4x256xf32> to vector<4xf32>
    %275 = vector.shape_cast %274 : vector<4xf32> to vector<4x1xf32>
    %cst_198 = arith.constant 3.906250e-03 : f32
    %276 = vector.broadcast %cst_198 : f32 to vector<4x1xf32>
    %277 = arith.mulf %275, %276 : vector<4x1xf32>
    %278 = arith.mulf %272, %272 : vector<4x1xf32>
    %279 = arith.subf %277, %278 : vector<4x1xf32>
    %cst_199 = arith.constant 9.99999974E-6 : f32
    %280 = vector.broadcast %cst_199 : f32 to vector<4x1xf32>
    %281 = arith.addf %279, %280 : vector<4x1xf32>
    %282 = math.rsqrt %281 : vector<4x1xf32>
    %283 = arith.mulf %266, %282 : vector<4x1xf32>
    %284 = arith.mulf %272, %283 : vector<4x1xf32>
    %285 = arith.subf %268, %284 : vector<4x1xf32>
    %286 = vector.broadcast %283 : vector<4x1xf32> to vector<4x256xf32>
    %287 = arith.mulf %264, %286 : vector<4x256xf32>
    %288 = vector.broadcast %285 : vector<4x1xf32> to vector<4x256xf32>
    %289 = arith.addf %287, %288 : vector<4x256xf32>
    %c0_200 = arith.constant 0 : index
    %c0_201 = arith.constant 0 : index
    %c0_202 = arith.constant 0 : index
    %290 = vector.load %arg20[%c0_200, %c0_201, %c0_202] : memref<1x4x256xf32, #tpu.memory_space<vmem>>, vector<1x4x256xf32>
    %291 = vector.shape_cast %290 : vector<1x4x256xf32> to vector<4x256xf32>
    %292 = vector.shape_cast %289 : vector<4x256xf32> to vector<1x4x256xf32>
    tpu.vector_store %arg20[%c0_200, %c0_201, %c0_202], %292 {strides = array<i32>} : memref<1x4x256xf32, #tpu.memory_space<vmem>>, vector<1x4x256xf32>,
    return
  }
  func.func @transform_0(%arg0: i32) -> (i32, i32, i32) {
    %c0_i32 = arith.constant 0 : i32
    %c0_i32_0 = arith.constant 0 : i32
    %c0_i32_1 = arith.constant 0 : i32
    return %arg0, %c0_i32, %c0_i32_0 : i32, i32, i32
  }
  func.func @transform_1(%arg0: i32) -> (i32, i32, i32) {
    %c0_i32 = arith.constant 0 : i32
    %c0_i32_0 = arith.constant 0 : i32
    %c0_i32_1 = arith.constant 0 : i32
    return %arg0, %c0_i32, %c0_i32_0 : i32, i32, i32
  }
  func.func @transform_2(%arg0: i32) -> (i32, i32, i32) {
    %c0_i32 = arith.constant 0 : i32
    %c0_i32_0 = arith.constant 0 : i32
    %c0_i32_1 = arith.constant 0 : i32
    return %arg0, %c0_i32, %c0_i32_0 : i32, i32, i32
  }
  func.func @transform_3(%arg0: i32) -> (i32, i32, i32) {
    %c0_i32 = arith.constant 0 : i32
    %c0_i32_0 = arith.constant 0 : i32
    %c0_i32_1 = arith.constant 0 : i32
    return %arg0, %c0_i32, %c0_i32_0 : i32, i32, i32
  }
  func.func @transform_4(%arg0: i32) -> (i32, i32, i32, i32) {
    %c0_i32 = arith.constant 0 : i32
    %c0_i32_0 = arith.constant 0 : i32
    %c0_i32_1 = arith.constant 0 : i32
    %c0_i32_2 = arith.constant 0 : i32
    return %arg0, %c0_i32, %c0_i32_0, %c0_i32_1 : i32, i32, i32, i32
  }
  func.func @transform_5(%arg0: i32) -> (i32, i32, i32) {
    %c0_i32 = arith.constant 0 : i32
    %c0_i32_0 = arith.constant 0 : i32
    %c0_i32_1 = arith.constant 0 : i32
    return %arg0, %c0_i32, %c0_i32_0 : i32, i32, i32
  }
  func.func @transform_6(%arg0: i32) -> (i32, i32, i32) {
    %c0_i32 = arith.constant 0 : i32
    %c0_i32_0 = arith.constant 0 : i32
    %c0_i32_1 = arith.constant 0 : i32
    return %arg0, %c0_i32, %c0_i32_0 : i32, i32, i32
  }
  func.func @transform_7(%arg0: i32) -> (i32, i32, i32) {
    %c0_i32 = arith.constant 0 : i32
    %c0_i32_0 = arith.constant 0 : i32
    %c0_i32_1 = arith.constant 0 : i32
    return %arg0, %c0_i32, %c0_i32_0 : i32, i32, i32
  }
  func.func @transform_8(%arg0: i32) -> (i32, i32, i32, i32) {
    %c0_i32 = arith.constant 0 : i32
    %c0_i32_0 = arith.constant 0 : i32
    %c0_i32_1 = arith.constant 0 : i32
    %c0_i32_2 = arith.constant 0 : i32
    return %arg0, %c0_i32, %c0_i32_0, %c0_i32_1 : i32, i32, i32, i32
  }
  func.func @transform_9(%arg0: i32) -> (i32, i32, i32) {
    %c0_i32 = arith.constant 0 : i32
    %c0_i32_0 = arith.constant 0 : i32
    %c0_i32_1 = arith.constant 0 : i32
    return %arg0, %c0_i32, %c0_i32_0 : i32, i32, i32
  }
  func.func @transform_10(%arg0: i32) -> (i32, i32, i32) {
    %c0_i32 = arith.constant 0 : i32
    %c0_i32_0 = arith.constant 0 : i32
    %c0_i32_1 = arith.constant 0 : i32
    return %arg0, %c0_i32, %c0_i32_0 : i32, i32, i32
  }
  func.func @transform_11(%arg0: i32) -> (i32, i32, i32) {
    %c0_i32 = arith.constant 0 : i32
    %c0_i32_0 = arith.constant 0 : i32
    %c0_i32_1 = arith.constant 0 : i32
    return %arg0, %c0_i32, %c0_i32_0 : i32, i32, i32
  }
  func.func @transform_12(%arg0: i32) -> (i32, i32, i32, i32) {
    %c0_i32 = arith.constant 0 : i32
    %c0_i32_0 = arith.constant 0 : i32
    %c0_i32_1 = arith.constant 0 : i32
    %c0_i32_2 = arith.constant 0 : i32
    return %arg0, %c0_i32, %c0_i32_0, %c0_i32_1 : i32, i32, i32, i32
  }
  func.func @transform_13(%arg0: i32) -> (i32, i32, i32) {
    %c0_i32 = arith.constant 0 : i32
    %c0_i32_0 = arith.constant 0 : i32
    %c0_i32_1 = arith.constant 0 : i32
    return %arg0, %c0_i32, %c0_i32_0 : i32, i32, i32
  }
  func.func @transform_14(%arg0: i32) -> (i32, i32, i32) {
    %c0_i32 = arith.constant 0 : i32
    %c0_i32_0 = arith.constant 0 : i32
    %c0_i32_1 = arith.constant 0 : i32
    return %arg0, %c0_i32, %c0_i32_0 : i32, i32, i32
  }
  func.func @transform_15(%arg0: i32) -> (i32, i32, i32) {
    %c0_i32 = arith.constant 0 : i32
    %c0_i32_0 = arith.constant 0 : i32
    %c0_i32_1 = arith.constant 0 : i32
    return %arg0, %c0_i32, %c0_i32_0 : i32, i32, i32
  }
  func.func @transform_16(%arg0: i32) -> (i32, i32, i32, i32) {
    %c0_i32 = arith.constant 0 : i32
    %c0_i32_0 = arith.constant 0 : i32
    %c0_i32_1 = arith.constant 0 : i32
    %c0_i32_2 = arith.constant 0 : i32
    return %arg0, %c0_i32, %c0_i32_0, %c0_i32_1 : i32, i32, i32, i32
  }
  func.func @transform_17(%arg0: i32) -> (i32, i32, i32) {
    %c0_i32 = arith.constant 0 : i32
    %c0_i32_0 = arith.constant 0 : i32
    %c0_i32_1 = arith.constant 0 : i32
    return %arg0, %c0_i32, %c0_i32_0 : i32, i32, i32
  }
  func.func @transform_18(%arg0: i32) -> (i32, i32, i32) {
    %c0_i32 = arith.constant 0 : i32
    %c0_i32_0 = arith.constant 0 : i32
    %c0_i32_1 = arith.constant 0 : i32
    return %arg0, %c0_i32, %c0_i32_0 : i32, i32, i32
  }
  func.func @transform_19(%arg0: i32) -> (i32, i32, i32) {
    %c0_i32 = arith.constant 0 : i32
    %c0_i32_0 = arith.constant 0 : i32
    %c0_i32_1 = arith.constant 0 : i32
    return %arg0, %c0_i32, %c0_i32_0 : i32, i32, i32
  }
}

</mosaic_0001>

<llo_original>
// kernel: _lambda_.1
$region0: #{_lambda_.1}
  #allocation0 [shape = 'u32[]', space=smem, size = 0x4, offset = 0x4, fixed_abs, tag = 'smem constant byte address 0x4 - core index']
  #allocation1 [shape = 'u32[144,128]{1,0:T(1,128)}', space=vmem, size = 0x12000, scoped, tag = 'internal scratch']
  #allocation2 [shape = 'f32[4,20,20]{2,1,0:T(8,128)}', space=vmem, size = 0xc000, scoped, tag = 'scratch operand']
  %s0 = inlined_call_operand.vmem [shape: f32[2,4,256], index: 0, kind: input, shape index: {}]
  %s1 = inlined_call_operand.vmem [shape: f32[2,16,4], index: 1, kind: input, shape index: {}]
  %s2 = inlined_call_operand.vmem [shape: f32[2,16,1], index: 2, kind: input, shape index: {}]
  %s3 = inlined_call_operand.vmem [shape: f32[2,16,1], index: 3, kind: input, shape index: {}]
  %s4 = inlined_call_operand.vmem [shape: f32[2,9,4,4], index: 4, kind: input, shape index: {}]
  %s5 = inlined_call_operand.vmem [shape: f32[2,4,1], index: 5, kind: input, shape index: {}]
  %s6 = inlined_call_operand.vmem [shape: f32[2,4,1], index: 6, kind: input, shape index: {}]
  %s7 = inlined_call_operand.vmem [shape: f32[2,4,1], index: 7, kind: input, shape index: {}]
  %s8 = inlined_call_operand.vmem [shape: f32[2,1,4,4], index: 8, kind: input, shape index: {}]
  %s9 = inlined_call_operand.vmem [shape: f32[2,4,1], index: 9, kind: input, shape index: {}]
  %s10 = inlined_call_operand.vmem [shape: f32[2,4,1], index: 10, kind: input, shape index: {}]
  %s11 = inlined_call_operand.vmem [shape: f32[2,4,1], index: 11, kind: input, shape index: {}]
  %s12 = inlined_call_operand.vmem [shape: f32[2,9,4,4], index: 12, kind: input, shape index: {}]
  %s13 = inlined_call_operand.vmem [shape: f32[2,4,1], index: 13, kind: input, shape index: {}]
  %s14 = inlined_call_operand.vmem [shape: f32[2,4,1], index: 14, kind: input, shape index: {}]
  %s15 = inlined_call_operand.vmem [shape: f32[2,4,1], index: 15, kind: input, shape index: {}]
  %s16 = inlined_call_operand.vmem [shape: f32[2,4,4,4], index: 16, kind: input, shape index: {}]
  %s17 = inlined_call_operand.vmem [shape: f32[2,4,1], index: 17, kind: input, shape index: {}]
  %s18 = inlined_call_operand.vmem [shape: f32[2,4,1], index: 18, kind: input, shape index: {}]
  %s19 = inlined_call_operand.vmem [shape: f32[2,4,256], index: 19, kind: output, shape index: {}]
  %s20 = sld [smem:[#allocation0]]
  $region109: #{_lambda_.1} parent=0
    _
  %s22 = ssub.s32 1, %s20
  %s23 = scalar_select 0, %s22, %s20
  loop: start=0, step=1, limit=4
  $region2: #{_lambda_.1} parent=0 // loop_pre_header
    _
  $region3: #{_lambda_.1} parent=0 // loop_header
    %s25 = sphi 0, %s29
    %p26 = scmp.ge.s32.totalorder %s25, 4
    %s35 = sphi 0, %s37
    %s38 = sphi 0, %s35
    %s39 = sphi 0, %s38
    %s55 = sphi 0, %s39
    %s61 = sphi 0, %s63
    %s64 = sphi 0, %s61
    %s65 = sphi 0, %s64
    %s81 = sphi 0, %s65
    %s87 = sphi 0, %s89
    %s90 = sphi 0, %s87
    %s91 = sphi 0, %s90
    %s107 = sphi 0, %s91
    %s113 = sphi 0, %s115
    %s116 = sphi 0, %s113
    %s117 = sphi 0, %s116
    %s133 = sphi 0, %s117
    %s139 = sphi 0, %s141
    %s142 = sphi 0, %s139
    %s143 = sphi 0, %s142
    %s159 = sphi 0, %s143
    %s165 = sphi 0, %s167
    %s168 = sphi 0, %s165
    %s169 = sphi 0, %s168
    %s185 = sphi 0, %s169
    %s191 = sphi 0, %s193
    %s194 = sphi 0, %s191
    %s195 = sphi 0, %s194
    %s211 = sphi 0, %s195
    %s217 = sphi 0, %s219
    %s220 = sphi 0, %s217
    %s221 = sphi 0, %s220
    %s237 = sphi 0, %s221
    %s243 = sphi 0, %s245
    %s246 = sphi 0, %s243
    %s247 = sphi 0, %s246
    %s263 = sphi 0, %s247
    %s269 = sphi 0, %s271
    %s272 = sphi 0, %s269
    %s273 = sphi 0, %s272
    %s289 = sphi 0, %s273
    %s295 = sphi 0, %s297
    %s298 = sphi 0, %s295
    %s299 = sphi 0, %s298
    %s315 = sphi 0, %s299
    %s321 = sphi 0, %s323
    %s324 = sphi 0, %s321
    %s325 = sphi 0, %s324
    %s341 = sphi 0, %s325
    %s347 = sphi 0, %s349
    %s350 = sphi 0, %s347
    %s351 = sphi 0, %s350
    %s367 = sphi 0, %s351
    %s373 = sphi 0, %s375
    %s376 = sphi 0, %s373
    %s377 = sphi 0, %s376
    %s393 = sphi 0, %s377
    %s399 = sphi 0, %s401
    %s402 = sphi 0, %s399
    %s403 = sphi 0, %s402
    %s419 = sphi 0, %s403
    %s425 = sphi 0, %s427
    %s428 = sphi 0, %s425
    %s429 = sphi 0, %s428
    %s445 = sphi 0, %s429
    %s451 = sphi 0, %s453
    %s454 = sphi 0, %s451
    %s455 = sphi 0, %s454
    %s471 = sphi 0, %s455
    %s477 = sphi 0, %s479
    %s480 = sphi 0, %s477
    %s481 = sphi 0, %s480
    %s497 = sphi 0, %s481
    %s503 = sphi 0, %s505
    %s506 = sphi 0, %s503
    %s507 = sphi 0, %s506
    %s523 = sphi 0, %s507
    %s529 = sphi 0, %s531
    %s532 = sphi 0, %s529
    %s533 = sphi 0, %s532
    %s549 = sphi 0, %s533
  $region4: #{_lambda_.1} parent=0 // loop_header_branch
    %28 = sbr.rel (%p26) target = $region8
  $region5: #{_lambda_.1} parent=0 // loop_body
    %s30 = ssub.s32 %s25, 1
    %s31 = ssub.s32 %s25, 2
    %s32 = sadd.s32 %s25, 1
    %s33 = ssub.s32 %s25, %s32
    %p34 = scmp.eq.s32.totalorder %s33, 0
    %s36 = sadd.s32 %s35, 1
    %s37 = scalar_select %p34, %s35, %s36
    %p40 = pneg %p34
    %p41 = scmp.eq.s32.totalorder %s25, 1
    %p42 = por %p40, %p41
    %p43 = scmp.ne.s32.totalorder %s35, %s38
    %p44 = scmp.eq.s32.totalorder %s25, 0
    %p45 = por %p43, %p44
    %p46 = scmp.ne.s32.totalorder %s35, %s38
    %p47 = scmp.eq.s32.totalorder %s30, 1
    %p48 = por %p46, %p47
    %p49 = scmp.ne.s32.totalorder %s38, %s39
    %p50 = scmp.eq.s32.totalorder %s30, 0
    %p51 = por %p49, %p50
    %p52 = scmp.ne.s32.totalorder %s38, %s39
    %p53 = scmp.eq.s32.totalorder %s31, 1
    %p54 = por %p52, %p53
    %p56 = scmp.ne.s32.totalorder %s39, %s55
    %p57 = scmp.eq.s32.totalorder %s31, 0
    %p58 = por %p56, %p57
    %s59 = ssub.s32 %s25, %s32
    %p60 = scmp.eq.s32.totalorder %s59, 0
    %s62 = sadd.s32 %s61, 1
    %s63 = scalar_select %p60, %s61, %s62
    %p66 = pneg %p60
    %p67 = scmp.eq.s32.totalorder %s25, 1
    %p68 = por %p66, %p67
    %p69 = scmp.ne.s32.totalorder %s61, %s64
    %p70 = scmp.eq.s32.totalorder %s25, 0
    %p71 = por %p69, %p70
    %p72 = scmp.ne.s32.totalorder %s61, %s64
    %p73 = scmp.eq.s32.totalorder %s30, 1
    %p74 = por %p72, %p73
    %p75 = scmp.ne.s32.totalorder %s64, %s65
    %p76 = scmp.eq.s32.totalorder %s30, 0
    %p77 = por %p75, %p76
    %p78 = scmp.ne.s32.totalorder %s64, %s65
    %p79 = scmp.eq.s32.totalorder %s31, 1
    %p80 = por %p78, %p79
    %p82 = scmp.ne.s32.totalorder %s65, %s81
    %p83 = scmp.eq.s32.totalorder %s31, 0
    %p84 = por %p82, %p83
    %s85 = ssub.s32 %s25, %s32
    %p86 = scmp.eq.s32.totalorder %s85, 0
    %s88 = sadd.s32 %s87, 1
    %s89 = scalar_select %p86, %s87, %s88
    %p92 = pneg %p86
    %p93 = scmp.eq.s32.totalorder %s25, 1
    %p94 = por %p92, %p93
    %p95 = scmp.ne.s32.totalorder %s87, %s90
    %p96 = scmp.eq.s32.totalorder %s25, 0
    %p97 = por %p95, %p96
    %p98 = scmp.ne.s32.totalorder %s87, %s90
    %p99 = scmp.eq.s32.totalorder %s30, 1
    %p100 = por %p98, %p99
    %p101 = scmp.ne.s32.totalorder %s90, %s91
    %p102 = scmp.eq.s32.totalorder %s30, 0
    %p103 = por %p101, %p102
    %p104 = scmp.ne.s32.totalorder %s90, %s91
    %p105 = scmp.eq.s32.totalorder %s31, 1
    %p106 = por %p104, %p105
    %p108 = scmp.ne.s32.totalorder %s91, %s107
    %p109 = scmp.eq.s32.totalorder %s31, 0
    %p110 = por %p108, %p109
    %s111 = ssub.s32 %s25, %s32
    %p112 = scmp.eq.s32.totalorder %s111, 0
    %s114 = sadd.s32 %s113, 1
    %s115 = scalar_select %p112, %s113, %s114
    %p118 = pneg %p112
    %p119 = scmp.eq.s32.totalorder %s25, 1
    %p120 = por %p118, %p119
    %p121 = scmp.ne.s32.totalorder %s113, %s116
    %p122 = scmp.eq.s32.totalorder %s25, 0
    %p123 = por %p121, %p122
    %p124 = scmp.ne.s32.totalorder %s113, %s116
    %p125 = scmp.eq.s32.totalorder %s30, 1
    %p126 = por %p124, %p125
    %p127 = scmp.ne.s32.totalorder %s116, %s117
    %p128 = scmp.eq.s32.totalorder %s30, 0
    %p129 = por %p127, %p128
    %p130 = scmp.ne.s32.totalorder %s116, %s117
    %p131 = scmp.eq.s32.totalorder %s31, 1
    %p132 = por %p130, %p131
    %p134 = scmp.ne.s32.totalorder %s117, %s133
    %p135 = scmp.eq.s32.totalorder %s31, 0
    %p136 = por %p134, %p135
    %s137 = ssub.s32 %s25, %s32
    %p138 = scmp.eq.s32.totalorder %s137, 0
    %s140 = sadd.s32 %s139, 1
    %s141 = scalar_select %p138, %s139, %s140
    %p144 = pneg %p138
    %p145 = scmp.eq.s32.totalorder %s25, 1
    %p146 = por %p144, %p145
    %p147 = scmp.ne.s32.totalorder %s139, %s142
    %p148 = scmp.eq.s32.totalorder %s25, 0
    %p149 = por %p147, %p148
    %p150 = scmp.ne.s32.totalorder %s139, %s142
    %p151 = scmp.eq.s32.totalorder %s30, 1
    %p152 = por %p150, %p151
    %p153 = scmp.ne.s32.totalorder %s142, %s143
    %p154 = scmp.eq.s32.totalorder %s30, 0
    %p155 = por %p153, %p154
    %p156 = scmp.ne.s32.totalorder %s142, %s143
    %p157 = scmp.eq.s32.totalorder %s31, 1
    %p158 = por %p156, %p157
    %p160 = scmp.ne.s32.totalorder %s143, %s159
    %p161 = scmp.eq.s32.totalorder %s31, 0
    %p162 = por %p160, %p161
    %s163 = ssub.s32 %s25, %s32
    %p164 = scmp.eq.s32.totalorder %s163, 0
    %s166 = sadd.s32 %s165, 1
    %s167 = scalar_select %p164, %s165, %s166
    %p170 = pneg %p164
    %p171 = scmp.eq.s32.totalorder %s25, 1
    %p172 = por %p170, %p171
    %p173 = scmp.ne.s32.totalorder %s165, %s168
    %p174 = scmp.eq.s32.totalorder %s25, 0
    %p175 = por %p173, %p174
    %p176 = scmp.ne.s32.totalorder %s165, %s168
    %p177 = scmp.eq.s32.totalorder %s30, 1
    %p178 = por %p176, %p177
    %p179 = scmp.ne.s32.totalorder %s168, %s169
    %p180 = scmp.eq.s32.totalorder %s30, 0
    %p181 = por %p179, %p180
    %p182 = scmp.ne.s32.totalorder %s168, %s169
    %p183 = scmp.eq.s32.totalorder %s31, 1
    %p184 = por %p182, %p183
    %p186 = scmp.ne.s32.totalorder %s169, %s185
    %p187 = scmp.eq.s32.totalorder %s31, 0
    %p188 = por %p186, %p187
    %s189 = ssub.s32 %s25, %s32
    %p190 = scmp.eq.s32.totalorder %s189, 0
    %s192 = sadd.s32 %s191, 1
    %s193 = scalar_select %p190, %s191, %s192
    %p196 = pneg %p190
    %p197 = scmp.eq.s32.totalorder %s25, 1
    %p198 = por %p196, %p197
    %p199 = scmp.ne.s32.totalorder %s191, %s194
    %p200 = scmp.eq.s32.totalorder %s25, 0
    %p201 = por %p199, %p200
    %p202 = scmp.ne.s32.totalorder %s191, %s194
    %p203 = scmp.eq.s32.totalorder %s30, 1
    %p204 = por %p202, %p203
    %p205 = scmp.ne.s32.totalorder %s194, %s195
    %p206 = scmp.eq.s32.totalorder %s30, 0
    %p207 = por %p205, %p206
    %p208 = scmp.ne.s32.totalorder %s194, %s195
    %p209 = scmp.eq.s32.totalorder %s31, 1
    %p210 = por %p208, %p209
    %p212 = scmp.ne.s32.totalorder %s195, %s211
    %p213 = scmp.eq.s32.totalorder %s31, 0
    %p214 = por %p212, %p213
    %s215 = ssub.s32 %s25, %s32
    %p216 = scmp.eq.s32.totalorder %s215, 0
    %s218 = sadd.s32 %s217, 1
    %s219 = scalar_select %p216, %s217, %s218
    %p222 = pneg %p216
    %p223 = scmp.eq.s32.totalorder %s25, 1
    %p224 = por %p222, %p223
    %p225 = scmp.ne.s32.totalorder %s217, %s220
    %p226 = scmp.eq.s32.totalorder %s25, 0
    %p227 = por %p225, %p226
    %p228 = scmp.ne.s32.totalorder %s217, %s220
    %p229 = scmp.eq.s32.totalorder %s30, 1
    %p230 = por %p228, %p229
    %p231 = scmp.ne.s32.totalorder %s220, %s221
    %p232 = scmp.eq.s32.totalorder %s30, 0
    %p233 = por %p231, %p232
    %p234 = scmp.ne.s32.totalorder %s220, %s221
    %p235 = scmp.eq.s32.totalorder %s31, 1
    %p236 = por %p234, %p235
    %p238 = scmp.ne.s32.totalorder %s221, %s237
    %p239 = scmp.eq.s32.totalorder %s31, 0
    %p240 = por %p238, %p239
    %s241 = ssub.s32 %s25, %s32
    %p242 = scmp.eq.s32.totalorder %s241, 0
    %s244 = sadd.s32 %s243, 1
    %s245 = scalar_select %p242, %s243, %s244
    %p248 = pneg %p242
    %p249 = scmp.eq.s32.totalorder %s25, 1
    %p250 = por %p248, %p249
    %p251 = scmp.ne.s32.totalorder %s243, %s246
    %p252 = scmp.eq.s32.totalorder %s25, 0
    %p253 = por %p251, %p252
    %p254 = scmp.ne.s32.totalorder %s243, %s246
    %p255 = scmp.eq.s32.totalorder %s30, 1
    %p256 = por %p254, %p255
    %p257 = scmp.ne.s32.totalorder %s246, %s247
    %p258 = scmp.eq.s32.totalorder %s30, 0
    %p259 = por %p257, %p258
    %p260 = scmp.ne.s32.totalorder %s246, %s247
    %p261 = scmp.eq.s32.totalorder %s31, 1
    %p262 = por %p260, %p261
    %p264 = scmp.ne.s32.totalorder %s247, %s263
    %p265 = scmp.eq.s32.totalorder %s31, 0
    %p266 = por %p264, %p265
    %s267 = ssub.s32 %s25, %s32
    %p268 = scmp.eq.s32.totalorder %s267, 0
    %s270 = sadd.s32 %s269, 1
    %s271 = scalar_select %p268, %s269, %s270
    %p274 = pneg %p268
    %p275 = scmp.eq.s32.totalorder %s25, 1
    %p276 = por %p274, %p275
    %p277 = scmp.ne.s32.totalorder %s269, %s272
    %p278 = scmp.eq.s32.totalorder %s25, 0
    %p279 = por %p277, %p278
    %p280 = scmp.ne.s32.totalorder %s269, %s272
    %p281 = scmp.eq.s32.totalorder %s30, 1
    %p282 = por %p280, %p281
    %p283 = scmp.ne.s32.totalorder %s272, %s273
    %p284 = scmp.eq.s32.totalorder %s30, 0
    %p285 = por %p283, %p284
    %p286 = scmp.ne.s32.totalorder %s272, %s273
    %p287 = scmp.eq.s32.totalorder %s31, 1
    %p288 = por %p286, %p287
    %p290 = scmp.ne.s32.totalorder %s273, %s289
    %p291 = scmp.eq.s32.totalorder %s31, 0
    %p292 = por %p290, %p291
    %s293 = ssub.s32 %s25, %s32
    %p294 = scmp.eq.s32.totalorder %s293, 0
    %s296 = sadd.s32 %s295, 1
    %s297 = scalar_select %p294, %s295, %s296
    %p300 = pneg %p294
    %p301 = scmp.eq.s32.totalorder %s25, 1
    %p302 = por %p300, %p301
    %p303 = scmp.ne.s32.totalorder %s295, %s298
    %p304 = scmp.eq.s32.totalorder %s25, 0
    %p305 = por %p303, %p304
    %p306 = scmp.ne.s32.totalorder %s295, %s298
    %p307 = scmp.eq.s32.totalorder %s30, 1
    %p308 = por %p306, %p307
    %p309 = scmp.ne.s32.totalorder %s298, %s299
    %p310 = scmp.eq.s32.totalorder %s30, 0
    %p311 = por %p309, %p310
    %p312 = scmp.ne.s32.totalorder %s298, %s299
    %p313 = scmp.eq.s32.totalorder %s31, 1
    %p314 = por %p312, %p313
    %p316 = scmp.ne.s32.totalorder %s299, %s315
    %p317 = scmp.eq.s32.totalorder %s31, 0
    %p318 = por %p316, %p317
    %s319 = ssub.s32 %s25, %s32
    %p320 = scmp.eq.s32.totalorder %s319, 0
    %s322 = sadd.s32 %s321, 1
    %s323 = scalar_select %p320, %s321, %s322
    %p326 = pneg %p320
    %p327 = scmp.eq.s32.totalorder %s25, 1
    %p328 = por %p326, %p327
    %p329 = scmp.ne.s32.totalorder %s321, %s324
    %p330 = scmp.eq.s32.totalorder %s25, 0
    %p331 = por %p329, %p330
    %p332 = scmp.ne.s32.totalorder %s321, %s324
    %p333 = scmp.eq.s32.totalorder %s30, 1
    %p334 = por %p332, %p333
    %p335 = scmp.ne.s32.totalorder %s324, %s325
    %p336 = scmp.eq.s32.totalorder %s30, 0
    %p337 = por %p335, %p336
    %p338 = scmp.ne.s32.totalorder %s324, %s325
    %p339 = scmp.eq.s32.totalorder %s31, 1
    %p340 = por %p338, %p339
    %p342 = scmp.ne.s32.totalorder %s325, %s341
    %p343 = scmp.eq.s32.totalorder %s31, 0
    %p344 = por %p342, %p343
    %s345 = ssub.s32 %s25, %s32
    %p346 = scmp.eq.s32.totalorder %s345, 0
    %s348 = sadd.s32 %s347, 1
    %s349 = scalar_select %p346, %s347, %s348
    %p352 = pneg %p346
    %p353 = scmp.eq.s32.totalorder %s25, 1
    %p354 = por %p352, %p353
    %p355 = scmp.ne.s32.totalorder %s347, %s350
    %p356 = scmp.eq.s32.totalorder %s25, 0
    %p357 = por %p355, %p356
    %p358 = scmp.ne.s32.totalorder %s347, %s350
    %p359 = scmp.eq.s32.totalorder %s30, 1
    %p360 = por %p358, %p359
    %p361 = scmp.ne.s32.totalorder %s350, %s351
    %p362 = scmp.eq.s32.totalorder %s30, 0
    %p363 = por %p361, %p362
    %p364 = scmp.ne.s32.totalorder %s350, %s351
    %p365 = scmp.eq.s32.totalorder %s31, 1
    %p366 = por %p364, %p365
    %p368 = scmp.ne.s32.totalorder %s351, %s367
    %p369 = scmp.eq.s32.totalorder %s31, 0
    %p370 = por %p368, %p369
    %s371 = ssub.s32 %s25, %s32
    %p372 = scmp.eq.s32.totalorder %s371, 0
    %s374 = sadd.s32 %s373, 1
    %s375 = scalar_select %p372, %s373, %s374
    %p378 = pneg %p372
    %p379 = scmp.eq.s32.totalorder %s25, 1
    %p380 = por %p378, %p379
    %p381 = scmp.ne.s32.totalorder %s373, %s376
    %p382 = scmp.eq.s32.totalorder %s25, 0
    %p383 = por %p381, %p382
    %p384 = scmp.ne.s32.totalorder %s373, %s376
    %p385 = scmp.eq.s32.totalorder %s30, 1
    %p386 = por %p384, %p385
    %p387 = scmp.ne.s32.totalorder %s376, %s377
    %p388 = scmp.eq.s32.totalorder %s30, 0
    %p389 = por %p387, %p388
    %p390 = scmp.ne.s32.totalorder %s376, %s377
    %p391 = scmp.eq.s32.totalorder %s31, 1
    %p392 = por %p390, %p391
    %p394 = scmp.ne.s32.totalorder %s377, %s393
    %p395 = scmp.eq.s32.totalorder %s31, 0
    %p396 = por %p394, %p395
    %s397 = ssub.s32 %s25, %s32
    %p398 = scmp.eq.s32.totalorder %s397, 0
    %s400 = sadd.s32 %s399, 1
    %s401 = scalar_select %p398, %s399, %s400
    %p404 = pneg %p398
    %p405 = scmp.eq.s32.totalorder %s25, 1
    %p406 = por %p404, %p405
    %p407 = scmp.ne.s32.totalorder %s399, %s402
    %p408 = scmp.eq.s32.totalorder %s25, 0
    %p409 = por %p407, %p408
    %p410 = scmp.ne.s32.totalorder %s399, %s402
    %p411 = scmp.eq.s32.totalorder %s30, 1
    %p412 = por %p410, %p411
    %p413 = scmp.ne.s32.totalorder %s402, %s403
    %p414 = scmp.eq.s32.totalorder %s30, 0
    %p415 = por %p413, %p414
    %p416 = scmp.ne.s32.totalorder %s402, %s403
    %p417 = scmp.eq.s32.totalorder %s31, 1
    %p418 = por %p416, %p417
    %p420 = scmp.ne.s32.totalorder %s403, %s419
    %p421 = scmp.eq.s32.totalorder %s31, 0
    %p422 = por %p420, %p421
    %s423 = ssub.s32 %s25, %s32
    %p424 = scmp.eq.s32.totalorder %s423, 0
    %s426 = sadd.s32 %s425, 1
    %s427 = scalar_select %p424, %s425, %s426
    %p430 = pneg %p424
    %p431 = scmp.eq.s32.totalorder %s25, 1
    %p432 = por %p430, %p431
    %p433 = scmp.ne.s32.totalorder %s425, %s428
    %p434 = scmp.eq.s32.totalorder %s25, 0
    %p435 = por %p433, %p434
    %p436 = scmp.ne.s32.totalorder %s425, %s428
    %p437 = scmp.eq.s32.totalorder %s30, 1
    %p438 = por %p436, %p437
    %p439 = scmp.ne.s32.totalorder %s428, %s429
    %p440 = scmp.eq.s32.totalorder %s30, 0
    %p441 = por %p439, %p440
    %p442 = scmp.ne.s32.totalorder %s428, %s429
    %p443 = scmp.eq.s32.totalorder %s31, 1
    %p444 = por %p442, %p443
    %p446 = scmp.ne.s32.totalorder %s429, %s445
    %p447 = scmp.eq.s32.totalorder %s31, 0
    %p448 = por %p446, %p447
    %s449 = ssub.s32 %s25, %s32
    %p450 = scmp.eq.s32.totalorder %s449, 0
    %s452 = sadd.s32 %s451, 1
    %s453 = scalar_select %p450, %s451, %s452
    %p456 = pneg %p450
    %p457 = scmp.eq.s32.totalorder %s25, 1
    %p458 = por %p456, %p457
    %p459 = scmp.ne.s32.totalorder %s451, %s454
    %p460 = scmp.eq.s32.totalorder %s25, 0
    %p461 = por %p459, %p460
    %p462 = scmp.ne.s32.totalorder %s451, %s454
    %p463 = scmp.eq.s32.totalorder %s30, 1
    %p464 = por %p462, %p463
    %p465 = scmp.ne.s32.totalorder %s454, %s455
    %p466 = scmp.eq.s32.totalorder %s30, 0
    %p467 = por %p465, %p466
    %p468 = scmp.ne.s32.totalorder %s454, %s455
    %p469 = scmp.eq.s32.totalorder %s31, 1
    %p470 = por %p468, %p469
    %p472 = scmp.ne.s32.totalorder %s455, %s471
    %p473 = scmp.eq.s32.totalorder %s31, 0
    %p474 = por %p472, %p473
    %s475 = ssub.s32 %s25, %s32
    %p476 = scmp.eq.s32.totalorder %s475, 0
    %s478 = sadd.s32 %s477, 1
    %s479 = scalar_select %p476, %s477, %s478
    %p482 = pneg %p476
    %p483 = scmp.eq.s32.totalorder %s25, 1
    %p484 = por %p482, %p483
    %p485 = scmp.ne.s32.totalorder %s477, %s480
    %p486 = scmp.eq.s32.totalorder %s25, 0
    %p487 = por %p485, %p486
    %p488 = scmp.ne.s32.totalorder %s477, %s480
    %p489 = scmp.eq.s32.totalorder %s30, 1
    %p490 = por %p488, %p489
    %p491 = scmp.ne.s32.totalorder %s480, %s481
    %p492 = scmp.eq.s32.totalorder %s30, 0
    %p493 = por %p491, %p492
    %p494 = scmp.ne.s32.totalorder %s480, %s481
    %p495 = scmp.eq.s32.totalorder %s31, 1
    %p496 = por %p494, %p495
    %p498 = scmp.ne.s32.totalorder %s481, %s497
    %p499 = scmp.eq.s32.totalorder %s31, 0
    %p500 = por %p498, %p499
    %s501 = ssub.s32 %s25, %s32
    %p502 = scmp.eq.s32.totalorder %s501, 0
    %s504 = sadd.s32 %s503, 1
    %s505 = scalar_select %p502, %s503, %s504
    %p508 = pneg %p502
    %p509 = scmp.eq.s32.totalorder %s25, 1
    %p510 = por %p508, %p509
    %p511 = scmp.ne.s32.totalorder %s503, %s506
    %p512 = scmp.eq.s32.totalorder %s25, 0
    %p513 = por %p511, %p512
    %p514 = scmp.ne.s32.totalorder %s503, %s506
    %p515 = scmp.eq.s32.totalorder %s30, 1
    %p516 = por %p514, %p515
    %p517 = scmp.ne.s32.totalorder %s506, %s507
    %p518 = scmp.eq.s32.totalorder %s30, 0
    %p519 = por %p517, %p518
    %p520 = scmp.ne.s32.totalorder %s506, %s507
    %p521 = scmp.eq.s32.totalorder %s31, 1
    %p522 = por %p520, %p521
    %p524 = scmp.ne.s32.totalorder %s507, %s523
    %p525 = scmp.eq.s32.totalorder %s31, 0
    %p526 = por %p524, %p525
    %s527 = ssub.s32 %s25, %s32
    %p528 = scmp.eq.s32.totalorder %s527, 0
    %s530 = sadd.s32 %s529, 1
    %s531 = scalar_select %p528, %s529, %s530
    %p534 = pneg %p528
    %p535 = scmp.eq.s32.totalorder %s25, 1
    %p536 = por %p534, %p535
    %p537 = scmp.ne.s32.totalorder %s529, %s532
    %p538 = scmp.eq.s32.totalorder %s25, 0
    %p539 = por %p537, %p538
    %p540 = scmp.ne.s32.totalorder %s529, %s532
    %p541 = scmp.eq.s32.totalorder %s30, 1
    %p542 = por %p540, %p541
    %p543 = scmp.ne.s32.totalorder %s532, %s533
    %p544 = scmp.eq.s32.totalorder %s30, 0
    %p545 = por %p543, %p544
    %p546 = scmp.ne.s32.totalorder %s532, %s533
    %p547 = scmp.eq.s32.totalorder %s31, 1
    %p548 = por %p546, %p547
    %p550 = scmp.ne.s32.totalorder %s533, %s549
    %p551 = scmp.eq.s32.totalorder %s31, 0
    %p552 = por %p550, %p551
    %p553 = scmp.le.s32.totalorder 1, %s25
    %p554 = scmp.lt.s32.totalorder %s25, 3
    %p555 = pnand %p553, %p554
    %p556 = pneg %p555
    // Predicated region
    $region9: #{_lambda_.1} parent=5 // pred_check
      _
    $region10: #{_lambda_.1} parent=5 // pred_check_branch
      %558 = sbr.rel (%p555) target = $region12
    $region11: #{_lambda_.1} parent=5 // pred_region
      %s559 = ssub.s32 %s25, 1
    $region12: #{_lambda_.1} parent=5 // pred_fallthru
      _
    %p560 = scmp.lt.s32.totalorder %s25, 2
    // Predicated region
    $region13: #{_lambda_.1} parent=5 // pred_check
      %p561 = pneg %p560
    $region14: #{_lambda_.1} parent=5 // pred_check_branch
      %563 = sbr.rel (%p561) target = $region16
    $region15: #{_lambda_.1} parent=5 // pred_region
      // Predicated region
      $region17: #{_lambda_.1} parent=15 // pred_check
        %p564 = pneg %p45
      $region18: #{_lambda_.1} parent=15 // pred_check_branch
        %566 = sbr.rel (%p564) target = $region20
      $region19: #{_lambda_.1} parent=15 // pred_region
        %p567 = scmp.lt.s32.totalorder %s25, 1
        %s568 = scalar_select %p567, %s25, 1
        %s569 = smul.addr %s568, 2
        %s570 = smul.addr %s569, 4
        %s571 = scalar_lea.vmem %s0, %s570
      $region20: #{_lambda_.1} parent=15 // pred_fallthru
        _
      // Predicated region
      $region21: #{_lambda_.1} parent=15 // pred_check
        %p572 = pneg %p71
      $region22: #{_lambda_.1} parent=15 // pred_check_branch
        %574 = sbr.rel (%p572) target = $region24
      $region23: #{_lambda_.1} parent=15 // pred_region
        %p575 = scmp.lt.s32.totalorder %s25, 1
        %s576 = scalar_select %p575, %s25, 1
        %s577 = smul.addr %s576, 2
        %s578 = smul.addr %s577, 8
        %s579 = scalar_lea.vmem %s1, %s578
      $region24: #{_lambda_.1} parent=15 // pred_fallthru
        _
      // Predicated region
      $region25: #{_lambda_.1} parent=15 // pred_check
        %p580 = pneg %p97
      $region26: #{_lambda_.1} parent=15 // pred_check_branch
        %582 = sbr.rel (%p580) target = $region28
      $region27: #{_lambda_.1} parent=15 // pred_region
        %p583 = scmp.lt.s32.totalorder %s25, 1
        %s584 = scalar_select %p583, %s25, 1
        %s585 = smul.addr %s584, 2
        %s586 = smul.addr %s585, 8
        %s587 = scalar_lea.vmem %s2, %s586
      $region28: #{_lambda_.1} parent=15 // pred_fallthru
        _
      // Predicated region
      $region29: #{_lambda_.1} parent=15 // pred_check
        %p588 = pneg %p123
      $region30: #{_lambda_.1} parent=15 // pred_check_branch
        %590 = sbr.rel (%p588) target = $region32
      $region31: #{_lambda_.1} parent=15 // pred_region
        %p591 = scmp.lt.s32.totalorder %s25, 1
        %s592 = scalar_select %p591, %s25, 1
        %s593 = smul.addr %s592, 2
        %s594 = smul.addr %s593, 8
        %s595 = scalar_lea.vmem %s3, %s594
      $region32: #{_lambda_.1} parent=15 // pred_fallthru
        _
      // Predicated region
      $region33: #{_lambda_.1} parent=15 // pred_check
        %p596 = pneg %p149
      $region34: #{_lambda_.1} parent=15 // pred_check_branch
        %598 = sbr.rel (%p596) target = $region36
      $region35: #{_lambda_.1} parent=15 // pred_region
        %p599 = scmp.lt.s32.totalorder %s25, 1
        %s600 = scalar_select %p599, %s25, 1
        %s601 = smul.addr %s600, 9
        %s602 = smul.addr %s601, 4
        %s603 = scalar_lea.vmem %s4, %s602
      $region36: #{_lambda_.1} parent=15 // pred_fallthru
        _
      // Predicated region
      $region37: #{_lambda_.1} parent=15 // pred_check
        %p604 = pneg %p175
      $region38: #{_lambda_.1} parent=15 // pred_check_branch
        %606 = sbr.rel (%p604) target = $region40
      $region39: #{_lambda_.1} parent=15 // pred_region
        %p607 = scmp.lt.s32.totalorder %s25, 1
        %s608 = scalar_select %p607, %s25, 1
        %s609 = smul.addr %s608, 4
        %s610 = scalar_lea.vmem %s5, %s609
      $region40: #{_lambda_.1} parent=15 // pred_fallthru
        _
      // Predicated region
      $region41: #{_lambda_.1} parent=15 // pred_check
        %p611 = pneg %p201
      $region42: #{_lambda_.1} parent=15 // pred_check_branch
        %613 = sbr.rel (%p611) target = $region44
      $region43: #{_lambda_.1} parent=15 // pred_region
        %p614 = scmp.lt.s32.totalorder %s25, 1
        %s615 = scalar_select %p614, %s25, 1
        %s616 = smul.addr %s615, 4
        %s617 = scalar_lea.vmem %s6, %s616
      $region44: #{_lambda_.1} parent=15 // pred_fallthru
        _
      // Predicated region
      $region45: #{_lambda_.1} parent=15 // pred_check
        %p618 = pneg %p227
      $region46: #{_lambda_.1} parent=15 // pred_check_branch
        %620 = sbr.rel (%p618) target = $region48
      $region47: #{_lambda_.1} parent=15 // pred_region
        %p621 = scmp.lt.s32.totalorder %s25, 1
        %s622 = scalar_select %p621, %s25, 1
        %s623 = smul.addr %s622, 4
        %s624 = scalar_lea.vmem %s7, %s623
      $region48: #{_lambda_.1} parent=15 // pred_fallthru
        _
      // Predicated region
      $region49: #{_lambda_.1} parent=15 // pred_check
        %p625 = pneg %p253
      $region50: #{_lambda_.1} parent=15 // pred_check_branch
        %627 = sbr.rel (%p625) target = $region52
      $region51: #{_lambda_.1} parent=15 // pred_region
        %p628 = scmp.lt.s32.totalorder %s25, 1
        %s629 = scalar_select %p628, %s25, 1
        %s630 = smul.addr %s629, 4
        %s631 = scalar_lea.vmem %s8, %s630
      $region52: #{_lambda_.1} parent=15 // pred_fallthru
        _
      // Predicated region
      $region53: #{_lambda_.1} parent=15 // pred_check
        %p632 = pneg %p279
      $region54: #{_lambda_.1} parent=15 // pred_check_branch
        %634 = sbr.rel (%p632) target = $region56
      $region55: #{_lambda_.1} parent=15 // pred_region
        %p635 = scmp.lt.s32.totalorder %s25, 1
        %s636 = scalar_select %p635, %s25, 1
        %s637 = smul.addr %s636, 4
        %s638 = scalar_lea.vmem %s9, %s637
      $region56: #{_lambda_.1} parent=15 // pred_fallthru
        _
      // Predicated region
      $region57: #{_lambda_.1} parent=15 // pred_check
        %p639 = pneg %p305
      $region58: #{_lambda_.1} parent=15 // pred_check_branch
        %641 = sbr.rel (%p639) target = $region60
      $region59: #{_lambda_.1} parent=15 // pred_region
        %p642 = scmp.lt.s32.totalorder %s25, 1
        %s643 = scalar_select %p642, %s25, 1
        %s644 = smul.addr %s643, 4
        %s645 = scalar_lea.vmem %s10, %s644
      $region60: #{_lambda_.1} parent=15 // pred_fallthru
        _
      // Predicated region
      $region61: #{_lambda_.1} parent=15 // pred_check
        %p646 = pneg %p331
      $region62: #{_lambda_.1} parent=15 // pred_check_branch
        %648 = sbr.rel (%p646) target = $region64
      $region63: #{_lambda_.1} parent=15 // pred_region
        %p649 = scmp.lt.s32.totalorder %s25, 1
        %s650 = scalar_select %p649, %s25, 1
        %s651 = smul.addr %s650, 4
        %s652 = scalar_lea.vmem %s11, %s651
      $region64: #{_lambda_.1} parent=15 // pred_fallthru
        _
      // Predicated region
      $region65: #{_lambda_.1} parent=15 // pred_check
        %p653 = pneg %p357
      $region66: #{_lambda_.1} parent=15 // pred_check_branch
        %655 = sbr.rel (%p653) target = $region68
      $region67: #{_lambda_.1} parent=15 // pred_region
        %p656 = scmp.lt.s32.totalorder %s25, 1
        %s657 = scalar_select %p656, %s25, 1
        %s658 = smul.addr %s657, 9
        %s659 = smul.addr %s658, 4
        %s660 = scalar_lea.vmem %s12, %s659
      $region68: #{_lambda_.1} parent=15 // pred_fallthru
        _
      // Predicated region
      $region69: #{_lambda_.1} parent=15 // pred_check
        %p661 = pneg %p383
      $region70: #{_lambda_.1} parent=15 // pred_check_branch
        %663 = sbr.rel (%p661) target = $region72
      $region71: #{_lambda_.1} parent=15 // pred_region
        %p664 = scmp.lt.s32.totalorder %s25, 1
        %s665 = scalar_select %p664, %s25, 1
        %s666 = smul.addr %s665, 4
        %s667 = scalar_lea.vmem %s13, %s666
      $region72: #{_lambda_.1} parent=15 // pred_fallthru
        _
      // Predicated region
      $region73: #{_lambda_.1} parent=15 // pred_check
        %p668 = pneg %p409
      $region74: #{_lambda_.1} parent=15 // pred_check_branch
        %670 = sbr.rel (%p668) target = $region76
      $region75: #{_lambda_.1} parent=15 // pred_region
        %p671 = scmp.lt.s32.totalorder %s25, 1
        %s672 = scalar_select %p671, %s25, 1
        %s673 = smul.addr %s672, 4
        %s674 = scalar_lea.vmem %s14, %s673
      $region76: #{_lambda_.1} parent=15 // pred_fallthru
        _
      // Predicated region
      $region77: #{_lambda_.1} parent=15 // pred_check
        %p675 = pneg %p435
      $region78: #{_lambda_.1} parent=15 // pred_check_branch
        %677 = sbr.rel (%p675) target = $region80
      $region79: #{_lambda_.1} parent=15 // pred_region
        %p678 = scmp.lt.s32.totalorder %s25, 1
        %s679 = scalar_select %p678, %s25, 1
        %s680 = smul.addr %s679, 4
        %s681 = scalar_lea.vmem %s15, %s680
      $region80: #{_lambda_.1} parent=15 // pred_fallthru
        _
      // Predicated region
      $region81: #{_lambda_.1} parent=15 // pred_check
        %p682 = pneg %p461
      $region82: #{_lambda_.1} parent=15 // pred_check_branch
        %684 = sbr.rel (%p682) target = $region84
      $region83: #{_lambda_.1} parent=15 // pred_region
        %p685 = scmp.lt.s32.totalorder %s25, 1
        %s686 = scalar_select %p685, %s25, 1
        %s687 = smul.addr %s686, 4
        %s688 = smul.addr %s687, 4
        %s689 = scalar_lea.vmem %s16, %s688
      $region84: #{_lambda_.1} parent=15 // pred_fallthru
        _
      // Predicated region
      $region85: #{_lambda_.1} parent=15 // pred_check
        %p690 = pneg %p487
      $region86: #{_lambda_.1} parent=15 // pred_check_branch
        %692 = sbr.rel (%p690) target = $region88
      $region87: #{_lambda_.1} parent=15 // pred_region
        %p693 = scmp.lt.s32.totalorder %s25, 1
        %s694 = scalar_select %p693, %s25, 1
        %s695 = smul.addr %s694, 4
        %s696 = scalar_lea.vmem %s17, %s695
      $region88: #{_lambda_.1} parent=15 // pred_fallthru
        _
      // Predicated region
      $region89: #{_lambda_.1} parent=15 // pred_check
        %p697 = pneg %p513
      $region90: #{_lambda_.1} parent=15 // pred_check_branch
        %699 = sbr.rel (%p697) target = $region92
      $region91: #{_lambda_.1} parent=15 // pred_region
        %p700 = scmp.lt.s32.totalorder %s25, 1
        %s701 = scalar_select %p700, %s25, 1
        %s702 = smul.addr %s701, 4
        %s703 = scalar_lea.vmem %s18, %s702
      $region92: #{_lambda_.1} parent=15 // pred_fallthru
        _
    $region16: #{_lambda_.1} parent=5 // pred_fallthru
      _
    %p704 = scmp.le.s32.totalorder 1, %s25
    %p705 = scmp.lt.s32.totalorder %s25, 3
    %p706 = pnand %p704, %p705
    %p707 = pneg %p706
    // Predicated region
    $region93: #{_lambda_.1} parent=5 // pred_check
      _
    $region94: #{_lambda_.1} parent=5 // pred_check_branch
      %709 = sbr.rel (%p706) target = $region96
    $region95: #{_lambda_.1} parent=5 // pred_region
      %s710 = ssub.s32 %s25, 1
      %p711 = scmp.lt.s32.totalorder %s30, 1
      %s712 = scalar_select %p711, %s30, 1
      %s713 = smul.addr %s712, 2
      %s714 = smul.addr %s713, 4
      %s715 = scalar_lea.vmem %s0, %s714
      %p716 = pneg %p51
      %p717 = pneg %p48
      %p718 = scmp.lt.s32.totalorder %s30, 1
      %s719 = scalar_select %p718, %s30, 1
      %s720 = smul.addr %s719, 2
      %s721 = smul.addr %s720, 8
      %s722 = scalar_lea.vmem %s1, %s721
      %p723 = pneg %p77
      %p724 = pneg %p74
      %p725 = scmp.lt.s32.totalorder %s30, 1
      %s726 = scalar_select %p725, %s30, 1
      %s727 = smul.addr %s726, 2
      %s728 = smul.addr %s727, 8
      %s729 = scalar_lea.vmem %s2, %s728
      %p730 = pneg %p103
      %p731 = pneg %p100
      %p732 = scmp.lt.s32.totalorder %s30, 1
      %s733 = scalar_select %p732, %s30, 1
      %s734 = smul.addr %s733, 2
      %s735 = smul.addr %s734, 8
      %s736 = scalar_lea.vmem %s3, %s735
      %p737 = pneg %p129
      %p738 = pneg %p126
      %p739 = scmp.lt.s32.totalorder %s30, 1
      %s740 = scalar_select %p739, %s30, 1
      %s741 = smul.addr %s740, 9
      %s742 = smul.addr %s741, 4
      %s743 = scalar_lea.vmem %s4, %s742
      %p744 = pneg %p155
      %p745 = pneg %p152
      %p746 = scmp.lt.s32.totalorder %s30, 1
      %s747 = scalar_select %p746, %s30, 1
      %s748 = smul.addr %s747, 4
      %s749 = scalar_lea.vmem %s5, %s748
      %p750 = pneg %p181
      %p751 = pneg %p178
      %p752 = scmp.lt.s32.totalorder %s30, 1
      %s753 = scalar_select %p752, %s30, 1
      %s754 = smul.addr %s753, 4
      %s755 = scalar_lea.vmem %s6, %s754
      %p756 = pneg %p207
      %p757 = pneg %p204
      %p758 = scmp.lt.s32.totalorder %s30, 1
      %s759 = scalar_select %p758, %s30, 1
      %s760 = smul.addr %s759, 4
      %s761 = scalar_lea.vmem %s7, %s760
      %p762 = pneg %p233
      %p763 = pneg %p230
      %p764 = scmp.lt.s32.totalorder %s30, 1
      %s765 = scalar_select %p764, %s30, 1
      %s766 = smul.addr %s765, 4
      %s767 = scalar_lea.vmem %s8, %s766
      %p768 = pneg %p259
      %p769 = pneg %p256
      %p770 = scmp.lt.s32.totalorder %s30, 1
      %s771 = scalar_select %p770, %s30, 1
      %s772 = smul.addr %s771, 4
      %s773 = scalar_lea.vmem %s9, %s772
      %p774 = pneg %p285
      %p775 = pneg %p282
      %p776 = scmp.lt.s32.totalorder %s30, 1
      %s777 = scalar_select %p776, %s30, 1
      %s778 = smul.addr %s777, 4
      %s779 = scalar_lea.vmem %s10, %s778
      %p780 = pneg %p311
      %p781 = pneg %p308
      %p782 = scmp.lt.s32.totalorder %s30, 1
      %s783 = scalar_select %p782, %s30, 1
      %s784 = smul.addr %s783, 4
      %s785 = scalar_lea.vmem %s11, %s784
      %p786 = pneg %p337
      %p787 = pneg %p334
      %p788 = scmp.lt.s32.totalorder %s30, 1
      %s789 = scalar_select %p788, %s30, 1
      %s790 = smul.addr %s789, 9
      %s791 = smul.addr %s790, 4
      %s792 = scalar_lea.vmem %s12, %s791
      %p793 = pneg %p363
      %p794 = pneg %p360
      %p795 = scmp.lt.s32.totalorder %s30, 1
      %s796 = scalar_select %p795, %s30, 1
      %s797 = smul.addr %s796, 4
      %s798 = scalar_lea.vmem %s13, %s797
      %p799 = pneg %p389
      %p800 = pneg %p386
      %p801 = scmp.lt.s32.totalorder %s30, 1
      %s802 = scalar_select %p801, %s30, 1
      %s803 = smul.addr %s802, 4
      %s804 = scalar_lea.vmem %s14, %s803
      %p805 = pneg %p415
      %p806 = pneg %p412
      %p807 = scmp.lt.s32.totalorder %s30, 1
      %s808 = scalar_select %p807, %s30, 1
      %s809 = smul.addr %s808, 4
      %s810 = scalar_lea.vmem %s15, %s809
      %p811 = pneg %p441
      %p812 = pneg %p438
      %p813 = scmp.lt.s32.totalorder %s30, 1
      %s814 = scalar_select %p813, %s30, 1
      %s815 = smul.addr %s814, 4
      %s816 = smul.addr %s815, 4
      %s817 = scalar_lea.vmem %s16, %s816
      %p818 = pneg %p467
      %p819 = pneg %p464
      %p820 = scmp.lt.s32.totalorder %s30, 1
      %s821 = scalar_select %p820, %s30, 1
      %s822 = smul.addr %s821, 4
      %s823 = scalar_lea.vmem %s17, %s822
      %p824 = pneg %p493
      %p825 = pneg %p490
      %p826 = scmp.lt.s32.totalorder %s30, 1
      %s827 = scalar_select %p826, %s30, 1
      %s828 = smul.addr %s827, 4
      %s829 = scalar_lea.vmem %s18, %s828
      %p830 = pneg %p519
      %p831 = pneg %p516
      %p832 = pneg %p545
      %p833 = pneg %p542
      %p834 = scmp.lt.s32.totalorder %s30, 1
      %s835 = scalar_select %p834, %s30, 1
      %s836 = smul.addr %s835, 2
      %s837 = smul.addr %s836, 4
      %s838 = scalar_lea.vmem %s19, %s837
      %p839 = scmp.lt.s32.totalorder %s30, 1
      %s840 = scalar_select %p839, %s30, 1
      %s841 = smul.addr %s840, 2
      %s842 = smul.addr %s841, 4
      %s843 = scalar_lea.vmem %s0, %s842
      %p844 = scmp.lt.s32.totalorder %s30, 1
      %s845 = scalar_select %p844, %s30, 1
      %s846 = smul.addr %s845, 2
      %s847 = smul.addr %s846, 8
      %s848 = scalar_lea.vmem %s1, %s847
      %p849 = scmp.lt.s32.totalorder %s30, 1
      %s850 = scalar_select %p849, %s30, 1
      %s851 = smul.addr %s850, 2
      %s852 = smul.addr %s851, 8
      %s853 = scalar_lea.vmem %s2, %s852
      %p854 = scmp.lt.s32.totalorder %s30, 1
      %s855 = scalar_select %p854, %s30, 1
      %s856 = smul.addr %s855, 2
      %s857 = smul.addr %s856, 8
      %s858 = scalar_lea.vmem %s3, %s857
      %p859 = scmp.lt.s32.totalorder %s30, 1
      %s860 = scalar_select %p859, %s30, 1
      %s861 = smul.addr %s860, 9
      %s862 = smul.addr %s861, 4
      %s863 = scalar_lea.vmem %s4, %s862
      %p864 = scmp.lt.s32.totalorder %s30, 1
      %s865 = scalar_select %p864, %s30, 1
      %s866 = smul.addr %s865, 4
      %s867 = scalar_lea.vmem %s5, %s866
      %p868 = scmp.lt.s32.totalorder %s30, 1
      %s869 = scalar_select %p868, %s30, 1
      %s870 = smul.addr %s869, 4
      %s871 = scalar_lea.vmem %s6, %s870
      %p872 = scmp.lt.s32.totalorder %s30, 1
      %s873 = scalar_select %p872, %s30, 1
      %s874 = smul.addr %s873, 4
      %s875 = scalar_lea.vmem %s7, %s874
      %p876 = scmp.lt.s32.totalorder %s30, 1
      %s877 = scalar_select %p876, %s30, 1
      %s878 = smul.addr %s877, 4
      %s879 = scalar_lea.vmem %s8, %s878
      %p880 = scmp.lt.s32.totalorder %s30, 1
      %s881 = scalar_select %p880, %s30, 1
      %s882 = smul.addr %s881, 4
      %s883 = scalar_lea.vmem %s9, %s882
      %p884 = scmp.lt.s32.totalorder %s30, 1
      %s885 = scalar_select %p884, %s30, 1
      %s886 = smul.addr %s885, 4
      %s887 = scalar_lea.vmem %s10, %s886
      %p888 = scmp.lt.s32.totalorder %s30, 1
      %s889 = scalar_select %p888, %s30, 1
      %s890 = smul.addr %s889, 4
      %s891 = scalar_lea.vmem %s11, %s890
      %p892 = scmp.lt.s32.totalorder %s30, 1
      %s893 = scalar_select %p892, %s30, 1
      %s894 = smul.addr %s893, 9
      %s895 = smul.addr %s894, 4
      %s896 = scalar_lea.vmem %s12, %s895
      %p897 = scmp.lt.s32.totalorder %s30, 1
      %s898 = scalar_select %p897, %s30, 1
      %s899 = smul.addr %s898, 4
      %s900 = scalar_lea.vmem %s13, %s899
      %p901 = scmp.lt.s32.totalorder %s30, 1
      %s902 = scalar_select %p901, %s30, 1
      %s903 = smul.addr %s902, 4
      %s904 = scalar_lea.vmem %s14, %s903
      %p905 = scmp.lt.s32.totalorder %s30, 1
      %s906 = scalar_select %p905, %s30, 1
      %s907 = smul.addr %s906, 4
      %s908 = scalar_lea.vmem %s15, %s907
      %p909 = scmp.lt.s32.totalorder %s30, 1
      %s910 = scalar_select %p909, %s30, 1
      %s911 = smul.addr %s910, 4
      %s912 = smul.addr %s911, 4
      %s913 = scalar_lea.vmem %s16, %s912
      %p914 = scmp.lt.s32.totalorder %s30, 1
      %s915 = scalar_select %p914, %s30, 1
      %s916 = smul.addr %s915, 4
      %s917 = scalar_lea.vmem %s17, %s916
      %p918 = scmp.lt.s32.totalorder %s30, 1
      %s919 = scalar_select %p918, %s30, 1
      %s920 = smul.addr %s919, 4
      %s921 = scalar_lea.vmem %s18, %s920
      %p922 = scmp.lt.s32.totalorder %s30, 1
      %s923 = scalar_select %p922, %s30, 1
      %s924 = smul.addr %s923, 2
      %s925 = smul.addr %s924, 4
      %s926 = scalar_lea.vmem %s19, %s925
      %v927 = vld [vmem:[%s848] sm:$0xff]
      %v928 = vld [vmem:[%s848 + $0x8] sm:$0xff]
      %v929 = vld [vmem:[%s843] sm:$0xff]
      %v931 = vcombine.high %v929, %v929
      %vm932 = vcmask 31744
      %v934 = vsel %vm932, %v927, 0
      %v937 = vsel %vm932, %v928, 0
      %vm939 = vcmask 1043456
      %v940 = vsel %vm939, %v929, 0
      %v942 = vsel %vm939, %v931, 0
      %944 = vmatprep.subr.mxu0 0.0
      %945 = vmatpush1.msra.mxu0 0.0
      %946 = vmatprep.subr.mxu0 0.0
      %947 = vmatpush1.msra.mxu0 0.0
      %948 = vmatprep.subr.mxu0 0.0
      %949 = vmatpush1.msra.mxu0 0.0
      %950 = vmatprep.subr.mxu0 0.0
      %951 = vmatpush1.msra.mxu0 0.0
      %952 = vmatprep.subr.mxu0 0.0
      %953 = vmatpush1.msra.mxu0 0.0
      %954 = vmatprep.subr.mxu0 0.0
      %955 = vmatpush1.msra.mxu0 0.0
      %956 = vmatprep.subr.mxu0 0.0
      %957 = vmatpush1.msra.mxu0 0.0
      %958 = vmatprep.subr.mxu0 0.0
      %959 = vmatpush1.msra.mxu0 0.0
      %960 = vmatprep.subr.mxu0 0.0
      %961 = vmatpush1.msra.mxu0 0.0
      %962 = vmatprep.subr.mxu0 0.0
      %963 = vmatpush1.msra.mxu0 0.0
      %964 = vmatprep.subr.mxu0 0.0
      %965 = vmatpush1.msra.mxu0 0.0
      %966 = vmatprep.subr.mxu0 0.0
      %967 = vmatpush1.msra.mxu0 0.0
      %968 = vmatprep.subr.mxu0 0.0
      %969 = vmatpush1.msra.mxu0 0.0
      %970 = vmatprep.subr.mxu0 0.0
      %971 = vmatpush1.msra.mxu0 0.0
      %972 = vmatprep.subr.mxu0 0.0
      %973 = vmatpush1.msra.mxu0 0.0
      %974 = vmatprep.subr.mxu0 %v942
      %975 = vmatpush1.msra.mxu0 %v940
      %976 = vmatprep.subr.mxu0 0.0
      %977 = vmatpush2.msra.mxu0 0.0
      %978 = vmatprep.subr.mxu0 0.0
      %979 = vmatpush2.msra.mxu0 0.0
      %980 = vmatprep.subr.mxu0 0.0
      %981 = vmatpush2.msra.mxu0 0.0
      %982 = vmatprep.subr.mxu0 0.0
      %983 = vmatpush2.msra.mxu0 0.0
      %984 = vmatprep.subr.mxu0 0.0
      %985 = vmatpush2.msra.mxu0 0.0
      %986 = vmatprep.subr.mxu0 0.0
      %987 = vmatpush2.msra.mxu0 0.0
      %988 = vmatprep.subr.mxu0 0.0
      %989 = vmatpush2.msra.mxu0 0.0
      %990 = vmatprep.subr.mxu0 0.0
      %991 = vmatpush2.msra.mxu0 0.0
      %992 = vmatprep.subr.mxu0 0.0
      %993 = vmatpush2.msra.mxu0 0.0
      %994 = vmatprep.subr.mxu0 0.0
      %995 = vmatpush2.msra.mxu0 0.0
      %996 = vmatprep.subr.mxu0 0.0
      %997 = vmatpush2.msra.mxu0 0.0
      %998 = vmatprep.subr.mxu0 0.0
      %999 = vmatpush2.msra.mxu0 0.0
      %1000 = vmatprep.subr.mxu0 0.0
      %1001 = vmatpush2.msra.mxu0 0.0
      %1002 = vmatprep.subr.mxu0 0.0
      %1003 = vmatpush2.msra.mxu0 0.0
      %1004 = vmatprep.subr.mxu0 0.0
      %1005 = vmatpush2.msra.mxu0 0.0
      %1006 = vmatprep.subr.mxu0 0.0
      %1007 = vmatpush2.msra.mxu0 0.0
      %1008 = vmatprep.mubr.f32.mxu0 0.0
      %1009 = vmatmul.mubr.f32.gmra.mxu0 %v934
      %v1010 = vpop.f32.mrf.mxu0
      %v1011 = vadd.f32 0.0, %v1010
      %v1012 = vpop.f32.mrf.mxu0
      %v1013 = vadd.f32 0.0, %v1012
      %1014 = vmatprep.mubr.f32.mxu0 0.0
      %1015 = vmatmul.mubr.f32.gmra.mxu0 %v937
      %v1016 = vpop.f32.mrf.mxu0
      %v1017 = vadd.f32 0.0, %v1016
      %v1018 = vpop.f32.mrf.mxu0
      %v1019 = vadd.f32 0.0, %v1018
      %1020 = vdwg.mxu0
      %v1021 = vld [vmem:[%s853] sm:$0xff]
      %v1022 = vld [vmem:[%s853 + $0x8] sm:$0xff]
      %v1023 = vld [vmem:[%s858] sm:$0xff]
      %v1024 = vld [vmem:[%s858 + $0x8] sm:$0xff]
      %v1025 = vadd.f32 %v1011, %v1013
      %1026 = vadd.xlane.f32.xlu0 %v1025
      %v1027 = vpop.xlane.xlu0 %1026
      %v1028 = vadd.f32 %v1017, %v1019
      %1029 = vadd.xlane.f32.xlu0 %v1028
      %v1030 = vpop.xlane.xlu0 %1029
      %v1031 = vmul.f32 %v1027, 0.00390625
      %v1032 = vmul.f32 %v1030, 0.00390625
      %v1033 = vmul.f32 %v1011, %v1011
      %v1034 = vmul.f32 %v1013, %v1013
      %v1035 = vmul.f32 %v1017, %v1017
      %v1036 = vmul.f32 %v1019, %v1019
      %v1037 = vadd.f32 %v1033, %v1034
      %1038 = vadd.xlane.f32.xlu0 %v1037
      %v1039 = vpop.xlane.xlu0 %1038
      %v1040 = vadd.f32 %v1035, %v1036
      %1041 = vadd.xlane.f32.xlu0 %v1040
      %v1042 = vpop.xlane.xlu0 %1041
      %v1043 = vmul.f32 %v1039, 0.00390625
      %v1044 = vmul.f32 %v1042, 0.00390625
      %v1045 = vmul.f32 %v1031, %v1031
      %v1046 = vmul.f32 %v1032, %v1032
      %v1047 = vsub.f32 %v1043, %v1045
      %v1048 = vsub.f32 %v1044, %v1046
      %v1049 = vadd.f32 %v1047, 1e-05
      %v1050 = vadd.f32 %v1048, 1e-05
      %v1051 = vrsqrt.pop %v1049
      %v1052 = vrsqrt.pop %v1050
      %v1053 = vmul.f32 %v1021, %v1051
      %v1054 = vmul.f32 %v1022, %v1052
      %v1055 = vmul.f32 %v1031, %v1053
      %v1056 = vmul.f32 %v1032, %v1054
      %v1057 = vsub.f32 %v1023, %v1055
      %v1058 = vsub.f32 %v1024, %v1056
      %1060 = vset.pattern.permute.xlu0 0
      %1061 = vperm.xlu0 %1060, %v1053
      %v1062 = vpop.permute.xlu0 %1061
      %1065 = vset.pattern.permute.xlu0 0
      %1066 = vperm.xlu0 %1065, %v1054
      %v1067 = vpop.permute.xlu0 %1066
      %v1069 = vmul.f32 %v1011, %v1062
      %v1070 = vmul.f32 %v1013, %v1062
      %v1071 = vmul.f32 %v1017, %v1067
      %v1072 = vmul.f32 %v1019, %v1067
      %1074 = vset.pattern.permute.xlu0 0
      %1075 = vperm.xlu0 %1074, %v1057
      %v1076 = vpop.permute.xlu0 %1075
      %1079 = vset.pattern.permute.xlu0 0
      %1080 = vperm.xlu0 %1079, %v1058
      %v1081 = vpop.permute.xlu0 %1080
      %v1083 = vadd.f32 %v1069, %v1076
      %v1084 = vadd.f32 %v1070, %v1076
      %v1085 = vadd.f32 %v1071, %v1081
      %v1086 = vadd.f32 %v1072, %v1081
      %v1087 = vmax.f32 %v1083, 0.0
      %v1088 = vmax.f32 %v1084, 0.0
      %v1089 = vmax.f32 %v1085, 0.0
      %v1090 = vmax.f32 %v1086, 0.0
      %vm1091 = vcmask 162816
      %1092 = vst.msk [vmem:[#allocation2] sm:$0xff] %vm1091, 0.0
      %1093 = vst.msk [vmem:[#allocation2 + $0x8] sm:$0xff] %vm1091, 0.0
      %vm1094 = vcmask 158720
      %1095 = vst.msk [vmem:[#allocation2 + $0x10] sm:$0xf] %vm1094, 0.0
      %1096 = vst.msk [vmem:[#allocation2 + $0x18] sm:$0xff] %vm1091, 0.0
      %1097 = vst.msk [vmem:[#allocation2 + $0x20] sm:$0xff] %vm1091, 0.0
      %1098 = vst.msk [vmem:[#allocation2 + $0x28] sm:$0xf] %vm1094, 0.0
      %1099 = vst.msk [vmem:[#allocation2 + $0x30] sm:$0xff] %vm1091, 0.0
      %1100 = vst.msk [vmem:[#allocation2 + $0x38] sm:$0xff] %vm1091, 0.0
      %1101 = vst.msk [vmem:[#allocation2 + $0x40] sm:$0xf] %vm1094, 0.0
      %1102 = vst.msk [vmem:[#allocation2 + $0x48] sm:$0xff] %vm1091, 0.0
      %1103 = vst.msk [vmem:[#allocation2 + $0x50] sm:$0xff] %vm1091, 0.0
      %1104 = vst.msk [vmem:[#allocation2 + $0x58] sm:$0xf] %vm1094, 0.0
      %1106 = vrot.lane.b32.xlu0 %v1087, 112
      %v1107 = vpop.permute.xlu0 %1106
      %1109 = vrot.lane.b32.xlu0 %v1087, 96
      %v1110 = vpop.permute.xlu0 %1109
      %1112 = vrot.lane.b32.xlu0 %v1087, 80
      %v1113 = vpop.permute.xlu0 %1112
      %1115 = vrot.lane.b32.xlu0 %v1087, 64
      %v1116 = vpop.permute.xlu0 %1115
      %1118 = vrot.lane.b32.xlu0 %v1087, 48
      %v1119 = vpop.permute.xlu0 %1118
      %1121 = vrot.lane.b32.xlu0 %v1087, 32
      %v1122 = vpop.permute.xlu0 %1121
      %1124 = vrot.lane.b32.xlu0 %v1087, 16
      %v1125 = vpop.permute.xlu0 %1124
      %1128 = vrot.lane.b32.xlu0 %v1088, 112
      %v1129 = vpop.permute.xlu0 %1128
      %1131 = vrot.lane.b32.xlu0 %v1088, 96
      %v1132 = vpop.permute.xlu0 %1131
      %1134 = vrot.lane.b32.xlu0 %v1088, 80
      %v1135 = vpop.permute.xlu0 %1134
      %1137 = vrot.lane.b32.xlu0 %v1088, 64
      %v1138 = vpop.permute.xlu0 %1137
      %1140 = vrot.lane.b32.xlu0 %v1088, 48
      %v1141 = vpop.permute.xlu0 %1140
      %1143 = vrot.lane.b32.xlu0 %v1088, 32
      %v1144 = vpop.permute.xlu0 %1143
      %1146 = vrot.lane.b32.xlu0 %v1088, 16
      %v1147 = vpop.permute.xlu0 %1146
      %v1149 = vcombine.low %v1087, %v1110
      %v1151 = vunpack.c.l.s4 1983009808
      %v1152 = vunpack.c.0.s8 %v1151
      %v1153 = vlaneseq
      %v1154 = vshrl.u32 %v1153, 7
      %v1155 = vsub.s32 %v1152, %v1154
      %v1156 = vrot.slane %v1149, %v1155
      %v1157 = vcombine.low %v1107, %v1113
      %v1159 = vunpack.c.l.s4 1983009808
      %v1160 = vunpack.c.0.s8 %v1159
      %v1161 = vlaneseq
      %v1162 = vshrl.u32 %v1161, 7
      %v1163 = vsub.s32 %v1160, %v1162
      %v1164 = vrot.slane %v1157, %v1163
      %v1165 = vcombine.low %v1116, %v1122
      %v1167 = vunpack.c.l.s4 1983009808
      %v1168 = vunpack.c.0.s8 %v1167
      %v1169 = vlaneseq
      %v1170 = vshrl.u32 %v1169, 7
      %v1171 = vsub.s32 %v1168, %v1170
      %v1172 = vrot.slane %v1165, %v1171
      %v1173 = vcombine.low %v1119, %v1125
      %v1175 = vunpack.c.l.s4 1983009808
      %v1176 = vunpack.c.0.s8 %v1175
      %v1177 = vlaneseq
      %v1178 = vshrl.u32 %v1177, 7
      %v1179 = vsub.s32 %v1176, %v1178
      %v1180 = vrot.slane %v1173, %v1179
      %v1181 = vcombine.low %v1156, %v1164
      %v1182 = vcombine.high %v1156, %v1164
      %v1184 = vunpack.c.l.s4 1934713408
      %v1185 = vunpack.c.0.s8 %v1184
      %v1186 = vlaneseq
      %v1187 = vshrl.u32 %v1186, 7
      %v1188 = vsub.s32 %v1185, %v1187
      %v1189 = vrot.slane %v1181, %v1188
      %v1191 = vunpack.c.l.s4 1934713408
      %v1192 = vunpack.c.0.s8 %v1191
      %v1193 = vlaneseq
      %v1194 = vshrl.u32 %v1193, 7
      %v1195 = vsub.s32 %v1192, %v1194
      %v1196 = vrot.slane %v1182, %v1195
      %v1197 = vcombine.low %v1172, %v1180
      %v1198 = vcombine.high %v1172, %v1180
      %v1200 = vunpack.c.l.s4 1934713408
      %v1201 = vunpack.c.0.s8 %v1200
      %v1202 = vlaneseq
      %v1203 = vshrl.u32 %v1202, 7
      %v1204 = vsub.s32 %v1201, %v1203
      %v1205 = vrot.slane %v1197, %v1204
      %v1207 = vunpack.c.l.s4 1934713408
      %v1208 = vunpack.c.0.s8 %v1207
      %v1209 = vlaneseq
      %v1210 = vshrl.u32 %v1209, 7
      %v1211 = vsub.s32 %v1208, %v1210
      %v1212 = vrot.slane %v1198, %v1211
      %v1213 = vcombine.low %v1189, %v1205
      %v1214 = vcombine.high %v1189, %v1205
      %v1215 = vcombine.low %v1196, %v1212
      %v1216 = vcombine.high %v1196, %v1212
      %v1217 = vcombine.low %v1088, %v1132
      %v1219 = vunpack.c.l.s4 1983009808
      %v1220 = vunpack.c.0.s8 %v1219
      %v1221 = vlaneseq
      %v1222 = vshrl.u32 %v1221, 7
      %v1223 = vsub.s32 %v1220, %v1222
      %v1224 = vrot.slane %v1217, %v1223
      %v1225 = vcombine.low %v1129, %v1135
      %v1227 = vunpack.c.l.s4 1983009808
      %v1228 = vunpack.c.0.s8 %v1227
      %v1229 = vlaneseq
      %v1230 = vshrl.u32 %v1229, 7
      %v1231 = vsub.s32 %v1228, %v1230
      %v1232 = vrot.slane %v1225, %v1231
      %v1233 = vcombine.low %v1138, %v1144
      %v1235 = vunpack.c.l.s4 1983009808
      %v1236 = vunpack.c.0.s8 %v1235
      %v1237 = vlaneseq
      %v1238 = vshrl.u32 %v1237, 7
      %v1239 = vsub.s32 %v1236, %v1238
      %v1240 = vrot.slane %v1233, %v1239
      %v1241 = vcombine.low %v1141, %v1147
      %v1243 = vunpack.c.l.s4 1983009808
      %v1244 = vunpack.c.0.s8 %v1243
      %v1245 = vlaneseq
      %v1246 = vshrl.u32 %v1245, 7
      %v1247 = vsub.s32 %v1244, %v1246
      %v1248 = vrot.slane %v1241, %v1247
      %v1249 = vcombine.low %v1224, %v1232
      %v1250 = vcombine.high %v1224, %v1232
      %v1252 = vunpack.c.l.s4 1934713408
      %v1253 = vunpack.c.0.s8 %v1252
      %v1254 = vlaneseq
      %v1255 = vshrl.u32 %v1254, 7
      %v1256 = vsub.s32 %v1253, %v1255
      %v1257 = vrot.slane %v1249, %v1256
      %v1259 = vunpack.c.l.s4 1934713408
      %v1260 = vunpack.c.0.s8 %v1259
      %v1261 = vlaneseq
      %v1262 = vshrl.u32 %v1261, 7
      %v1263 = vsub.s32 %v1260, %v1262
      %v1264 = vrot.slane %v1250, %v1263
      %v1265 = vcombine.low %v1240, %v1248
      %v1266 = vcombine.high %v1240, %v1248
      %v1268 = vunpack.c.l.s4 1934713408
      %v1269 = vunpack.c.0.s8 %v1268
      %v1270 = vlaneseq
      %v1271 = vshrl.u32 %v1270, 7
      %v1272 = vsub.s32 %v1269, %v1271
      %v1273 = vrot.slane %v1265, %v1272
      %v1275 = vunpack.c.l.s4 1934713408
      %v1276 = vunpack.c.0.s8 %v1275
      %v1277 = vlaneseq
      %v1278 = vshrl.u32 %v1277, 7
      %v1279 = vsub.s32 %v1276, %v1278
      %v1280 = vrot.slane %v1266, %v1279
      %v1281 = vcombine.low %v1257, %v1273
      %v1282 = vcombine.high %v1257, %v1273
      %v1283 = vcombine.low %v1264, %v1280
      %v1284 = vcombine.high %v1264, %v1280
      %1293 = vrot.lane.b32.xlu0 %v1213, 1
      %v1294 = vpop.permute.xlu0 %1293
      %1295 = vrot.lane.b32.xlu0 %v1281, 1
      %v1296 = vpop.permute.xlu0 %1295
      %1297 = vrot.lane.b32.xlu0 %v1214, 1
      %v1298 = vpop.permute.xlu0 %1297
      %1299 = vrot.lane.b32.xlu0 %v1282, 1
      %v1300 = vpop.permute.xlu0 %1299
      %1301 = vrot.lane.b32.xlu0 %v1215, 1
      %v1302 = vpop.permute.xlu0 %1301
      %1303 = vrot.lane.b32.xlu0 %v1283, 1
      %v1304 = vpop.permute.xlu0 %1303
      %1305 = vrot.lane.b32.xlu0 %v1216, 1
      %v1306 = vpop.permute.xlu0 %1305
      %1307 = vrot.lane.b32.xlu0 %v1284, 1
      %v1308 = vpop.permute.xlu0 %1307
      %vm1317 = vcmask 138248
      %1318 = vst.msk [vmem:[#allocation2 + $0x1] sm:$0xff] %vm1317, %v1294
      %1319 = vst.msk [vmem:[#allocation2 + $0x9] sm:$0xff] %vm1317, %v1296
      %1320 = vst.msk [vmem:[#allocation2 + $0x19] sm:$0xff] %vm1317, %v1298
      %1321 = vst.msk [vmem:[#allocation2 + $0x21] sm:$0xff] %vm1317, %v1300
      %1322 = vst.msk [vmem:[#allocation2 + $0x31] sm:$0xff] %vm1317, %v1302
      %1323 = vst.msk [vmem:[#allocation2 + $0x39] sm:$0xff] %vm1317, %v1304
      %1324 = vst.msk [vmem:[#allocation2 + $0x49] sm:$0xff] %vm1317, %v1306
      %1325 = vst.msk [vmem:[#allocation2 + $0x51] sm:$0xff] %vm1317, %v1308
      %v1326 = vld [vmem:[#allocation2] sm:$0xff]
      %v1327 = vld [vmem:[#allocation2 + $0x8] sm:$0xff]
      %v1328 = vld [vmem:[#allocation2 + $0x10] sm:$0xf]
      %v1329 = vld [vmem:[#allocation2 + $0x18] sm:$0xff]
      %v1330 = vld [vmem:[#allocation2 + $0x20] sm:$0xff]
      %v1331 = vld [vmem:[#allocation2 + $0x28] sm:$0xf]
      %v1332 = vld [vmem:[#allocation2 + $0x30] sm:$0xff]
      %v1333 = vld [vmem:[#allocation2 + $0x38] sm:$0xff]
      %v1334 = vld [vmem:[#allocation2 + $0x40] sm:$0xf]
      %v1335 = vld [vmem:[#allocation2 + $0x48] sm:$0xff]
      %v1336 = vld [vmem:[#allocation2 + $0x50] sm:$0xff]
      %v1337 = vld [vmem:[#allocation2 + $0x58] sm:$0xf]
      %v1338 = vcombine.low %v1326, %v1332
      %v1339 = vcombine.high %v1326, %v1332
      %v1341 = vunpack.c.l.s4 1983009808
      %v1342 = vunpack.c.0.s8 %v1341
      %v1343 = vlaneseq
      %v1344 = vshrl.u32 %v1343, 7
      %v1345 = vsub.s32 %v1342, %v1344
      %v1346 = vrot.slane %v1338, %v1345
      %v1348 = vunpack.c.l.s4 1983009808
      %v1349 = vunpack.c.0.s8 %v1348
      %v1350 = vlaneseq
      %v1351 = vshrl.u32 %v1350, 7
      %v1352 = vsub.s32 %v1349, %v1351
      %v1353 = vrot.slane %v1339, %v1352
      %v1354 = vcombine.low %v1329, %v1335
      %v1355 = vcombine.high %v1329, %v1335
      %v1357 = vunpack.c.l.s4 1983009808
      %v1358 = vunpack.c.0.s8 %v1357
      %v1359 = vlaneseq
      %v1360 = vshrl.u32 %v1359, 7
      %v1361 = vsub.s32 %v1358, %v1360
      %v1362 = vrot.slane %v1354, %v1361
      %v1364 = vunpack.c.l.s4 1983009808
      %v1365 = vunpack.c.0.s8 %v1364
      %v1366 = vlaneseq
      %v1367 = vshrl.u32 %v1366, 7
      %v1368 = vsub.s32 %v1365, %v1367
      %v1369 = vrot.slane %v1355, %v1368
      %v1370 = vcombine.low %v1346, %v1362
      %v1371 = vcombine.high %v1346, %v1362
      %v1373 = vunpack.c.l.s4 1934713408
      %v1374 = vunpack.c.0.s8 %v1373
      %v1375 = vlaneseq
      %v1376 = vshrl.u32 %v1375, 7
      %v1377 = vsub.s32 %v1374, %v1376
      %v1378 = vrot.slane %v1370, %v1377
      %v1380 = vunpack.c.l.s4 1934713408
      %v1381 = vunpack.c.0.s8 %v1380
      %v1382 = vlaneseq
      %v1383 = vshrl.u32 %v1382, 7
      %v1384 = vsub.s32 %v1381, %v1383
      %v1385 = vrot.slane %v1371, %v1384
      %v1386 = vcombine.low %v1353, %v1369
      %v1387 = vcombine.high %v1353, %v1369
      %v1389 = vunpack.c.l.s4 1934713408
      %v1390 = vunpack.c.0.s8 %v1389
      %v1391 = vlaneseq
      %v1392 = vshrl.u32 %v1391, 7
      %v1393 = vsub.s32 %v1390, %v1392
      %v1394 = vrot.slane %v1386, %v1393
      %v1396 = vunpack.c.l.s4 1934713408
      %v1397 = vunpack.c.0.s8 %v1396
      %v1398 = vlaneseq
      %v1399 = vshrl.u32 %v1398, 7
      %v1400 = vsub.s32 %v1397, %v1399
      %v1401 = vrot.slane %v1387, %v1400
      %v1402 = vcombine.high %v1378, 0.0
      %v1403 = vcombine.high %v1385, 0.0
      %v1404 = vcombine.high %v1394, 0.0
      %v1405 = vcombine.high %v1401, 0.0
      %v1406 = vcombine.low %v1327, %v1333
      %v1407 = vcombine.high %v1327, %v1333
      %v1409 = vunpack.c.l.s4 1983009808
      %v1410 = vunpack.c.0.s8 %v1409
      %v1411 = vlaneseq
      %v1412 = vshrl.u32 %v1411, 7
      %v1413 = vsub.s32 %v1410, %v1412
      %v1414 = vrot.slane %v1406, %v1413
      %v1416 = vunpack.c.l.s4 1983009808
      %v1417 = vunpack.c.0.s8 %v1416
      %v1418 = vlaneseq
      %v1419 = vshrl.u32 %v1418, 7
      %v1420 = vsub.s32 %v1417, %v1419
      %v1421 = vrot.slane %v1407, %v1420
      %v1422 = vcombine.low %v1330, %v1336
      %v1423 = vcombine.high %v1330, %v1336
      %v1425 = vunpack.c.l.s4 1983009808
      %v1426 = vunpack.c.0.s8 %v1425
      %v1427 = vlaneseq
      %v1428 = vshrl.u32 %v1427, 7
      %v1429 = vsub.s32 %v1426, %v1428
      %v1430 = vrot.slane %v1422, %v1429
      %v1432 = vunpack.c.l.s4 1983009808
      %v1433 = vunpack.c.0.s8 %v1432
      %v1434 = vlaneseq
      %v1435 = vshrl.u32 %v1434, 7
      %v1436 = vsub.s32 %v1433, %v1435
      %v1437 = vrot.slane %v1423, %v1436
      %v1438 = vcombine.low %v1414, %v1430
      %v1439 = vcombine.high %v1414, %v1430
      %v1441 = vunpack.c.l.s4 1934713408
      %v1442 = vunpack.c.0.s8 %v1441
      %v1443 = vlaneseq
      %v1444 = vshrl.u32 %v1443, 7
      %v1445 = vsub.s32 %v1442, %v1444
      %v1446 = vrot.slane %v1438, %v1445
      %v1448 = vunpack.c.l.s4 1934713408
      %v1449 = vunpack.c.0.s8 %v1448
      %v1450 = vlaneseq
      %v1451 = vshrl.u32 %v1450, 7
      %v1452 = vsub.s32 %v1449, %v1451
      %v1453 = vrot.slane %v1439, %v1452
      %v1454 = vcombine.low %v1421, %v1437
      %v1455 = vcombine.high %v1421, %v1437
      %v1457 = vunpack.c.l.s4 1934713408
      %v1458 = vunpack.c.0.s8 %v1457
      %v1459 = vlaneseq
      %v1460 = vshrl.u32 %v1459, 7
      %v1461 = vsub.s32 %v1458, %v1460
      %v1462 = vrot.slane %v1454, %v1461
      %v1464 = vunpack.c.l.s4 1934713408
      %v1465 = vunpack.c.0.s8 %v1464
      %v1466 = vlaneseq
      %v1467 = vshrl.u32 %v1466, 7
      %v1468 = vsub.s32 %v1465, %v1467
      %v1469 = vrot.slane %v1455, %v1468
      %v1470 = vcombine.high %v1446, 0.0
      %v1471 = vcombine.high %v1453, 0.0
      %v1472 = vcombine.high %v1462, 0.0
      %v1473 = vcombine.high %v1469, 0.0
      %1475 = vrot.lane.b32.xlu0 %v1402, 16
      %v1476 = vpop.permute.xlu0 %1475
      %1479 = vrot.lane.b32.xlu0 %v1385, 32
      %v1480 = vpop.permute.xlu0 %1479
      %1483 = vrot.lane.b32.xlu0 %v1403, 48
      %v1484 = vpop.permute.xlu0 %1483
      %1487 = vrot.lane.b32.xlu0 %v1394, 64
      %v1488 = vpop.permute.xlu0 %1487
      %1491 = vrot.lane.b32.xlu0 %v1404, 80
      %v1492 = vpop.permute.xlu0 %1491
      %1495 = vrot.lane.b32.xlu0 %v1401, 96
      %v1496 = vpop.permute.xlu0 %1495
      %1499 = vrot.lane.b32.xlu0 %v1405, 112
      %v1500 = vpop.permute.xlu0 %1499
      %1503 = vrot.lane.b32.xlu0 %v1470, 16
      %v1504 = vpop.permute.xlu0 %1503
      %1507 = vrot.lane.b32.xlu0 %v1453, 32
      %v1508 = vpop.permute.xlu0 %1507
      %1511 = vrot.lane.b32.xlu0 %v1471, 48
      %v1512 = vpop.permute.xlu0 %1511
      %1515 = vrot.lane.b32.xlu0 %v1462, 64
      %v1516 = vpop.permute.xlu0 %1515
      %1519 = vrot.lane.b32.xlu0 %v1472, 80
      %v1520 = vpop.permute.xlu0 %1519
      %1523 = vrot.lane.b32.xlu0 %v1469, 96
      %v1524 = vpop.permute.xlu0 %1523
      %1527 = vrot.lane.b32.xlu0 %v1473, 112
      %v1528 = vpop.permute.xlu0 %1527
      %vm1530 = vcmask 130048
      %v1531 = vsel %vm1530, %v1378, %v1476
      %vm1532 = vcmask 261120
      %v1533 = vsel %vm1532, %v1531, %v1480
      %vm1534 = vcmask 392192
      %v1535 = vsel %vm1534, %v1533, %v1484
      %vm1536 = vcmask 523264
      %v1537 = vsel %vm1536, %v1535, %v1488
      %vm1538 = vcmask 654336
      %v1539 = vsel %vm1538, %v1537, %v1492
      %vm1540 = vcmask 785408
      %v1541 = vsel %vm1540, %v1539, %v1496
      %vm1542 = vcmask 916480
      %v1543 = vsel %vm1542, %v1541, %v1500
      %v1544 = vsel %vm1530, %v1446, %v1504
      %v1545 = vsel %vm1532, %v1544, %v1508
      %v1546 = vsel %vm1534, %v1545, %v1512
      %v1547 = vsel %vm1536, %v1546, %v1516
      %v1548 = vsel %vm1538, %v1547, %v1520
      %v1549 = vsel %vm1540, %v1548, %v1524
      %v1550 = vsel %vm1542, %v1549, %v1528
      %v1551 = vld [vmem:[%s863] sm:$0xf]
      %1560 = vrot.lane.b32.xlu0 %v1326, 127
      %v1561 = vpop.permute.xlu0 %1560
      %1562 = vrot.lane.b32.xlu0 %v1327, 127
      %v1563 = vpop.permute.xlu0 %1562
      %1564 = vrot.lane.b32.xlu0 %v1329, 127
      %v1565 = vpop.permute.xlu0 %1564
      %1566 = vrot.lane.b32.xlu0 %v1330, 127
      %v1567 = vpop.permute.xlu0 %1566
      %1568 = vrot.lane.b32.xlu0 %v1332, 127
      %v1569 = vpop.permute.xlu0 %1568
      %1570 = vrot.lane.b32.xlu0 %v1333, 127
      %v1571 = vpop.permute.xlu0 %1570
      %1572 = vrot.lane.b32.xlu0 %v1335, 127
      %v1573 = vpop.permute.xlu0 %1572
      %1574 = vrot.lane.b32.xlu0 %v1336, 127
      %v1575 = vpop.permute.xlu0 %1574
      %v1584 = vcombine.low %v1561, %v1569
      %v1585 = vcombine.high %v1561, %v1569
      %v1587 = vunpack.c.l.s4 1983009808
      %v1588 = vunpack.c.0.s8 %v1587
      %v1589 = vlaneseq
      %v1590 = vshrl.u32 %v1589, 7
      %v1591 = vsub.s32 %v1588, %v1590
      %v1592 = vrot.slane %v1584, %v1591
      %v1594 = vunpack.c.l.s4 1983009808
      %v1595 = vunpack.c.0.s8 %v1594
      %v1596 = vlaneseq
      %v1597 = vshrl.u32 %v1596, 7
      %v1598 = vsub.s32 %v1595, %v1597
      %v1599 = vrot.slane %v1585, %v1598
      %v1600 = vcombine.low %v1565, %v1573
      %v1601 = vcombine.high %v1565, %v1573
      %v1603 = vunpack.c.l.s4 1983009808
      %v1604 = vunpack.c.0.s8 %v1603
      %v1605 = vlaneseq
      %v1606 = vshrl.u32 %v1605, 7
      %v1607 = vsub.s32 %v1604, %v1606
      %v1608 = vrot.slane %v1600, %v1607
      %v1610 = vunpack.c.l.s4 1983009808
      %v1611 = vunpack.c.0.s8 %v1610
      %v1612 = vlaneseq
      %v1613 = vshrl.u32 %v1612, 7
      %v1614 = vsub.s32 %v1611, %v1613
      %v1615 = vrot.slane %v1601, %v1614
      %v1616 = vcombine.low %v1592, %v1608
      %v1617 = vcombine.high %v1592, %v1608
      %v1619 = vunpack.c.l.s4 1934713408
      %v1620 = vunpack.c.0.s8 %v1619
      %v1621 = vlaneseq
      %v1622 = vshrl.u32 %v1621, 7
      %v1623 = vsub.s32 %v1620, %v1622
      %v1624 = vrot.slane %v1616, %v1623
      %v1626 = vunpack.c.l.s4 1934713408
      %v1627 = vunpack.c.0.s8 %v1626
      %v1628 = vlaneseq
      %v1629 = vshrl.u32 %v1628, 7
      %v1630 = vsub.s32 %v1627, %v1629
      %v1631 = vrot.slane %v1617, %v1630
      %v1632 = vcombine.low %v1599, %v1615
      %v1633 = vcombine.high %v1599, %v1615
      %v1635 = vunpack.c.l.s4 1934713408
      %v1636 = vunpack.c.0.s8 %v1635
      %v1637 = vlaneseq
      %v1638 = vshrl.u32 %v1637, 7
      %v1639 = vsub.s32 %v1636, %v1638
      %v1640 = vrot.slane %v1632, %v1639
      %v1642 = vunpack.c.l.s4 1934713408
      %v1643 = vunpack.c.0.s8 %v1642
      %v1644 = vlaneseq
      %v1645 = vshrl.u32 %v1644, 7
      %v1646 = vsub.s32 %v1643, %v1645
      %v1647 = vrot.slane %v1633, %v1646
      %v1648 = vcombine.high %v1624, 0.0
      %v1649 = vcombine.high %v1631, 0.0
      %v1650 = vcombine.high %v1640, 0.0
      %v1651 = vcombine.high %v1647, 0.0
      %v1652 = vcombine.low %v1563, %v1571
      %v1653 = vcombine.high %v1563, %v1571
      %v1655 = vunpack.c.l.s4 1983009808
      %v1656 = vunpack.c.0.s8 %v1655
      %v1657 = vlaneseq
      %v1658 = vshrl.u32 %v1657, 7
      %v1659 = vsub.s32 %v1656, %v1658
      %v1660 = vrot.slane %v1652, %v1659
      %v1662 = vunpack.c.l.s4 1983009808
      %v1663 = vunpack.c.0.s8 %v1662
      %v1664 = vlaneseq
      %v1665 = vshrl.u32 %v1664, 7
      %v1666 = vsub.s32 %v1663, %v1665
      %v1667 = vrot.slane %v1653, %v1666
      %v1668 = vcombine.low %v1567, %v1575
      %v1669 = vcombine.high %v1567, %v1575
      %v1671 = vunpack.c.l.s4 1983009808
      %v1672 = vunpack.c.0.s8 %v1671
      %v1673 = vlaneseq
      %v1674 = vshrl.u32 %v1673, 7
      %v1675 = vsub.s32 %v1672, %v1674
      %v1676 = vrot.slane %v1668, %v1675
      %v1678 = vunpack.c.l.s4 1983009808
      %v1679 = vunpack.c.0.s8 %v1678
      %v1680 = vlaneseq
      %v1681 = vshrl.u32 %v1680, 7
      %v1682 = vsub.s32 %v1679, %v1681
      %v1683 = vrot.slane %v1669, %v1682
      %v1684 = vcombine.low %v1660, %v1676
      %v1685 = vcombine.high %v1660, %v1676
      %v1687 = vunpack.c.l.s4 1934713408
      %v1688 = vunpack.c.0.s8 %v1687
      %v1689 = vlaneseq
      %v1690 = vshrl.u32 %v1689, 7
      %v1691 = vsub.s32 %v1688, %v1690
      %v1692 = vrot.slane %v1684, %v1691
      %v1694 = vunpack.c.l.s4 1934713408
      %v1695 = vunpack.c.0.s8 %v1694
      %v1696 = vlaneseq
      %v1697 = vshrl.u32 %v1696, 7
      %v1698 = vsub.s32 %v1695, %v1697
      %v1699 = vrot.slane %v1685, %v1698
      %v1700 = vcombine.low %v1667, %v1683
      %v1701 = vcombine.high %v1667, %v1683
      %v1703 = vunpack.c.l.s4 1934713408
      %v1704 = vunpack.c.0.s8 %v1703
      %v1705 = vlaneseq
      %v1706 = vshrl.u32 %v1705, 7
      %v1707 = vsub.s32 %v1704, %v1706
      %v1708 = vrot.slane %v1700, %v1707
      %v1710 = vunpack.c.l.s4 1934713408
      %v1711 = vunpack.c.0.s8 %v1710
      %v1712 = vlaneseq
      %v1713 = vshrl.u32 %v1712, 7
      %v1714 = vsub.s32 %v1711, %v1713
      %v1715 = vrot.slane %v1701, %v1714
      %v1716 = vcombine.high %v1692, 0.0
      %v1717 = vcombine.high %v1699, 0.0
      %v1718 = vcombine.high %v1708, 0.0
      %v1719 = vcombine.high %v1715, 0.0
      %1721 = vrot.lane.b32.xlu0 %v1648, 16
      %v1722 = vpop.permute.xlu0 %1721
      %1725 = vrot.lane.b32.xlu0 %v1631, 32
      %v1726 = vpop.permute.xlu0 %1725
      %1729 = vrot.lane.b32.xlu0 %v1649, 48
      %v1730 = vpop.permute.xlu0 %1729
      %1733 = vrot.lane.b32.xlu0 %v1640, 64
      %v1734 = vpop.permute.xlu0 %1733
      %1737 = vrot.lane.b32.xlu0 %v1650, 80
      %v1738 = vpop.permute.xlu0 %1737
      %1741 = vrot.lane.b32.xlu0 %v1647, 96
      %v1742 = vpop.permute.xlu0 %1741
      %1745 = vrot.lane.b32.xlu0 %v1651, 112
      %v1746 = vpop.permute.xlu0 %1745
      %1749 = vrot.lane.b32.xlu0 %v1716, 16
      %v1750 = vpop.permute.xlu0 %1749
      %1753 = vrot.lane.b32.xlu0 %v1699, 32
      %v1754 = vpop.permute.xlu0 %1753
      %1757 = vrot.lane.b32.xlu0 %v1717, 48
      %v1758 = vpop.permute.xlu0 %1757
      %1761 = vrot.lane.b32.xlu0 %v1708, 64
      %v1762 = vpop.permute.xlu0 %1761
      %1765 = vrot.lane.b32.xlu0 %v1718, 80
      %v1766 = vpop.permute.xlu0 %1765
      %1769 = vrot.lane.b32.xlu0 %v1715, 96
      %v1770 = vpop.permute.xlu0 %1769
      %1773 = vrot.lane.b32.xlu0 %v1719, 112
      %v1774 = vpop.permute.xlu0 %1773
      %v1776 = vsel %vm1530, %v1624, %v1722
      %v1777 = vsel %vm1532, %v1776, %v1726
      %v1778 = vsel %vm1534, %v1777, %v1730
      %v1779 = vsel %vm1536, %v1778, %v1734
      %v1780 = vsel %vm1538, %v1779, %v1738
      %v1781 = vsel %vm1540, %v1780, %v1742
      %v1782 = vsel %vm1542, %v1781, %v1746
      %v1783 = vsel %vm1530, %v1692, %v1750
      %v1784 = vsel %vm1532, %v1783, %v1754
      %v1785 = vsel %vm1534, %v1784, %v1758
      %v1786 = vsel %vm1536, %v1785, %v1762
      %v1787 = vsel %vm1538, %v1786, %v1766
      %v1788 = vsel %vm1540, %v1787, %v1770
      %v1789 = vsel %vm1542, %v1788, %v1774
      %s1790 = scalar_lea.vmem %s863, 4
      %v1791 = vld [vmem:[%s1790] sm:$0xf]
      %v1793 = vsel %vm932, %v1791, 0
      %v1796 = vsel %vm939, %v1782, 0
      %v1799 = vsel %vm939, %v1789, 0
      %1801 = vmatprep.subr.mxu0 0.0
      %1802 = vmatpush1.msra.mxu0 0.0
      %1803 = vmatprep.subr.mxu0 0.0
      %1804 = vmatpush1.msra.mxu0 0.0
      %1805 = vmatprep.subr.mxu0 0.0
      %1806 = vmatpush1.msra.mxu0 0.0
      %1807 = vmatprep.subr.mxu0 0.0
      %1808 = vmatpush1.msra.mxu0 0.0
      %1809 = vmatprep.subr.mxu0 0.0
      %1810 = vmatpush1.msra.mxu0 0.0
      %1811 = vmatprep.subr.mxu0 0.0
      %1812 = vmatpush1.msra.mxu0 0.0
      %1813 = vmatprep.subr.mxu0 0.0
      %1814 = vmatpush1.msra.mxu0 0.0
      %1815 = vmatprep.subr.mxu0 0.0
      %1816 = vmatpush1.msra.mxu0 0.0
      %1817 = vmatprep.subr.mxu0 0.0
      %1818 = vmatpush1.msra.mxu0 0.0
      %1819 = vmatprep.subr.mxu0 0.0
      %1820 = vmatpush1.msra.mxu0 0.0
      %1821 = vmatprep.subr.mxu0 0.0
      %1822 = vmatpush1.msra.mxu0 0.0
      %1823 = vmatprep.subr.mxu0 0.0
      %1824 = vmatpush1.msra.mxu0 0.0
      %1825 = vmatprep.subr.mxu0 0.0
      %1826 = vmatpush1.msra.mxu0 0.0
      %1827 = vmatprep.subr.mxu0 0.0
      %1828 = vmatpush1.msra.mxu0 0.0
      %1829 = vmatprep.subr.mxu0 0.0
      %1830 = vmatpush1.msra.mxu0 0.0
      %1831 = vmatprep.subr.mxu0 %v1799
      %1832 = vmatpush1.msra.mxu0 %v1796
      %1833 = vmatprep.subr.mxu0 0.0
      %1834 = vmatpush2.msra.mxu0 0.0
      %1835 = vmatprep.subr.mxu0 0.0
      %1836 = vmatpush2.msra.mxu0 0.0
      %1837 = vmatprep.subr.mxu0 0.0
      %1838 = vmatpush2.msra.mxu0 0.0
      %1839 = vmatprep.subr.mxu0 0.0
      %1840 = vmatpush2.msra.mxu0 0.0
      %1841 = vmatprep.subr.mxu0 0.0
      %1842 = vmatpush2.msra.mxu0 0.0
      %1843 = vmatprep.subr.mxu0 0.0
      %1844 = vmatpush2.msra.mxu0 0.0
      %1845 = vmatprep.subr.mxu0 0.0
      %1846 = vmatpush2.msra.mxu0 0.0
      %1847 = vmatprep.subr.mxu0 0.0
      %1848 = vmatpush2.msra.mxu0 0.0
      %1849 = vmatprep.subr.mxu0 0.0
      %1850 = vmatpush2.msra.mxu0 0.0
      %1851 = vmatprep.subr.mxu0 0.0
      %1852 = vmatpush2.msra.mxu0 0.0
      %1853 = vmatprep.subr.mxu0 0.0
      %1854 = vmatpush2.msra.mxu0 0.0
      %1855 = vmatprep.subr.mxu0 0.0
      %1856 = vmatpush2.msra.mxu0 0.0
      %1857 = vmatprep.subr.mxu0 0.0
      %1858 = vmatpush2.msra.mxu0 0.0
      %1859 = vmatprep.subr.mxu0 0.0
      %1860 = vmatpush2.msra.mxu0 0.0
      %1861 = vmatprep.subr.mxu0 0.0
      %1862 = vmatpush2.msra.mxu0 0.0
      %1863 = vmatprep.subr.mxu0 0.0
      %1864 = vmatpush2.msra.mxu0 0.0
      %1865 = vmatprep.mubr.f32.mxu0 0.0
      %1866 = vmatmul.mubr.f32.gmra.mxu0 %v1793
      %v1867 = vpop.f32.mrf.mxu0
      %v1868 = vadd.f32 0.0, %v1867
      %v1869 = vpop.f32.mrf.mxu0
      %v1870 = vadd.f32 0.0, %v1869
      %1871 = vdwg.mxu0
      %v1873 = vsel %vm932, %v1551, 0
      %v1876 = vsel %vm939, %v1543, 0
      %v1879 = vsel %vm939, %v1550, 0
      %1881 = vmatprep.subr.mxu0 0.0
      %1882 = vmatpush1.msra.mxu0 0.0
      %1883 = vmatprep.subr.mxu0 0.0
      %1884 = vmatpush1.msra.mxu0 0.0
      %1885 = vmatprep.subr.mxu0 0.0
      %1886 = vmatpush1.msra.mxu0 0.0
      %1887 = vmatprep.subr.mxu0 0.0
      %1888 = vmatpush1.msra.mxu0 0.0
      %1889 = vmatprep.subr.mxu0 0.0
      %1890 = vmatpush1.msra.mxu0 0.0
      %1891 = vmatprep.subr.mxu0 0.0
      %1892 = vmatpush1.msra.mxu0 0.0
      %1893 = vmatprep.subr.mxu0 0.0
      %1894 = vmatpush1.msra.mxu0 0.0
      %1895 = vmatprep.subr.mxu0 0.0
      %1896 = vmatpush1.msra.mxu0 0.0
      %1897 = vmatprep.subr.mxu0 0.0
      %1898 = vmatpush1.msra.mxu0 0.0
      %1899 = vmatprep.subr.mxu0 0.0
      %1900 = vmatpush1.msra.mxu0 0.0
      %1901 = vmatprep.subr.mxu0 0.0
      %1902 = vmatpush1.msra.mxu0 0.0
      %1903 = vmatprep.subr.mxu0 0.0
      %1904 = vmatpush1.msra.mxu0 0.0
      %1905 = vmatprep.subr.mxu0 0.0
      %1906 = vmatpush1.msra.mxu0 0.0
      %1907 = vmatprep.subr.mxu0 0.0
      %1908 = vmatpush1.msra.mxu0 0.0
      %1909 = vmatprep.subr.mxu0 0.0
      %1910 = vmatpush1.msra.mxu0 0.0
      %1911 = vmatprep.subr.mxu0 %v1879
      %1912 = vmatpush1.msra.mxu0 %v1876
      %1913 = vmatprep.subr.mxu0 0.0
      %1914 = vmatpush2.msra.mxu0 0.0
      %1915 = vmatprep.subr.mxu0 0.0
      %1916 = vmatpush2.msra.mxu0 0.0
      %1917 = vmatprep.subr.mxu0 0.0
      %1918 = vmatpush2.msra.mxu0 0.0
      %1919 = vmatprep.subr.mxu0 0.0
      %1920 = vmatpush2.msra.mxu0 0.0
      %1921 = vmatprep.subr.mxu0 0.0
      %1922 = vmatpush2.msra.mxu0 0.0
      %1923 = vmatprep.subr.mxu0 0.0
      %1924 = vmatpush2.msra.mxu0 0.0
      %1925 = vmatprep.subr.mxu0 0.0
      %1926 = vmatpush2.msra.mxu0 0.0
      %1927 = vmatprep.subr.mxu0 0.0
      %1928 = vmatpush2.msra.mxu0 0.0
      %1929 = vmatprep.subr.mxu0 0.0
      %1930 = vmatpush2.msra.mxu0 0.0
      %1931 = vmatprep.subr.mxu0 0.0
      %1932 = vmatpush2.msra.mxu0 0.0
      %1933 = vmatprep.subr.mxu0 0.0
      %1934 = vmatpush2.msra.mxu0 0.0
      %1935 = vmatprep.subr.mxu0 0.0
      %1936 = vmatpush2.msra.mxu0 0.0
      %1937 = vmatprep.subr.mxu0 0.0
      %1938 = vmatpush2.msra.mxu0 0.0
      %1939 = vmatprep.subr.mxu0 0.0
      %1940 = vmatpush2.msra.mxu0 0.0
      %1941 = vmatprep.subr.mxu0 0.0
      %1942 = vmatpush2.msra.mxu0 0.0
      %1943 = vmatprep.subr.mxu0 0.0
      %1944 = vmatpush2.msra.mxu0 0.0
      %1945 = vmatprep.mubr.f32.mxu0 0.0
      %1946 = vmatmul.mubr.f32.gmra.mxu0 %v1873
      %v1947 = vpop.f32.mrf.mxu0
      %v1948 = vadd.f32 %v1868, %v1947
      %v1949 = vpop.f32.mrf.mxu0
      %v1950 = vadd.f32 %v1870, %v1949
      %1951 = vdwg.mxu0
      %1952 = vrot.lane.b32.xlu0 %v1326, 126
      %v1953 = vpop.permute.xlu0 %1952
      %1954 = vrot.lane.b32.xlu0 %v1327, 126
      %v1955 = vpop.permute.xlu0 %1954
      %1956 = vrot.lane.b32.xlu0 %v1329, 126
      %v1957 = vpop.permute.xlu0 %1956
      %1958 = vrot.lane.b32.xlu0 %v1330, 126
      %v1959 = vpop.permute.xlu0 %1958
      %1960 = vrot.lane.b32.xlu0 %v1332, 126
      %v1961 = vpop.permute.xlu0 %1960
      %1962 = vrot.lane.b32.xlu0 %v1333, 126
      %v1963 = vpop.permute.xlu0 %1962
      %1964 = vrot.lane.b32.xlu0 %v1335, 126
      %v1965 = vpop.permute.xlu0 %1964
      %1966 = vrot.lane.b32.xlu0 %v1336, 126
      %v1967 = vpop.permute.xlu0 %1966
      %v1976 = vcombine.low %v1953, %v1961
      %v1977 = vcombine.high %v1953, %v1961
      %v1979 = vunpack.c.l.s4 1983009808
      %v1980 = vunpack.c.0.s8 %v1979
      %v1981 = vlaneseq
      %v1982 = vshrl.u32 %v1981, 7
      %v1983 = vsub.s32 %v1980, %v1982
      %v1984 = vrot.slane %v1976, %v1983
      %v1986 = vunpack.c.l.s4 1983009808
      %v1987 = vunpack.c.0.s8 %v1986
      %v1988 = vlaneseq
      %v1989 = vshrl.u32 %v1988, 7
      %v1990 = vsub.s32 %v1987, %v1989
      %v1991 = vrot.slane %v1977, %v1990
      %v1992 = vcombine.low %v1957, %v1965
      %v1993 = vcombine.high %v1957, %v1965
      %v1995 = vunpack.c.l.s4 1983009808
      %v1996 = vunpack.c.0.s8 %v1995
      %v1997 = vlaneseq
      %v1998 = vshrl.u32 %v1997, 7
      %v1999 = vsub.s32 %v1996, %v1998
      %v2000 = vrot.slane %v1992, %v1999
      %v2002 = vunpack.c.l.s4 1983009808
      %v2003 = vunpack.c.0.s8 %v2002
      %v2004 = vlaneseq
      %v2005 = vshrl.u32 %v2004, 7
      %v2006 = vsub.s32 %v2003, %v2005
      %v2007 = vrot.slane %v1993, %v2006
      %v2008 = vcombine.low %v1984, %v2000
      %v2009 = vcombine.high %v1984, %v2000
      %v2011 = vunpack.c.l.s4 1934713408
      %v2012 = vunpack.c.0.s8 %v2011
      %v2013 = vlaneseq
      %v2014 = vshrl.u32 %v2013, 7
      %v2015 = vsub.s32 %v2012, %v2014
      %v2016 = vrot.slane %v2008, %v2015
      %v2018 = vunpack.c.l.s4 1934713408
      %v2019 = vunpack.c.0.s8 %v2018
      %v2020 = vlaneseq
      %v2021 = vshrl.u32 %v2020, 7
      %v2022 = vsub.s32 %v2019, %v2021
      %v2023 = vrot.slane %v2009, %v2022
      %v2024 = vcombine.low %v1991, %v2007
      %v2025 = vcombine.high %v1991, %v2007
      %v2027 = vunpack.c.l.s4 1934713408
      %v2028 = vunpack.c.0.s8 %v2027
      %v2029 = vlaneseq
      %v2030 = vshrl.u32 %v2029, 7
      %v2031 = vsub.s32 %v2028, %v2030
      %v2032 = vrot.slane %v2024, %v2031
      %v2034 = vunpack.c.l.s4 1934713408
      %v2035 = vunpack.c.0.s8 %v2034
      %v2036 = vlaneseq
      %v2037 = vshrl.u32 %v2036, 7
      %v2038 = vsub.s32 %v2035, %v2037
      %v2039 = vrot.slane %v2025, %v2038
      %v2040 = vcombine.high %v2016, 0.0
      %v2041 = vcombine.high %v2023, 0.0
      %v2042 = vcombine.high %v2032, 0.0
      %v2043 = vcombine.high %v2039, 0.0
      %v2044 = vcombine.low %v1955, %v1963
      %v2045 = vcombine.high %v1955, %v1963
      %v2047 = vunpack.c.l.s4 1983009808
      %v2048 = vunpack.c.0.s8 %v2047
      %v2049 = vlaneseq
      %v2050 = vshrl.u32 %v2049, 7
      %v2051 = vsub.s32 %v2048, %v2050
      %v2052 = vrot.slane %v2044, %v2051
      %v2054 = vunpack.c.l.s4 1983009808
      %v2055 = vunpack.c.0.s8 %v2054
      %v2056 = vlaneseq
      %v2057 = vshrl.u32 %v2056, 7
      %v2058 = vsub.s32 %v2055, %v2057
      %v2059 = vrot.slane %v2045, %v2058
      %v2060 = vcombine.low %v1959, %v1967
      %v2061 = vcombine.high %v1959, %v1967
      %v2063 = vunpack.c.l.s4 1983009808
      %v2064 = vunpack.c.0.s8 %v2063
      %v2065 = vlaneseq
      %v2066 = vshrl.u32 %v2065, 7
      %v2067 = vsub.s32 %v2064, %v2066
      %v2068 = vrot.slane %v2060, %v2067
      %v2070 = vunpack.c.l.s4 1983009808
      %v2071 = vunpack.c.0.s8 %v2070
      %v2072 = vlaneseq
      %v2073 = vshrl.u32 %v2072, 7
      %v2074 = vsub.s32 %v2071, %v2073
      %v2075 = vrot.slane %v2061, %v2074
      %v2076 = vcombine.low %v2052, %v2068
      %v2077 = vcombine.high %v2052, %v2068
      %v2079 = vunpack.c.l.s4 1934713408
      %v2080 = vunpack.c.0.s8 %v2079
      %v2081 = vlaneseq
      %v2082 = vshrl.u32 %v2081, 7
      %v2083 = vsub.s32 %v2080, %v2082
      %v2084 = vrot.slane %v2076, %v2083
      %v2086 = vunpack.c.l.s4 1934713408
      %v2087 = vunpack.c.0.s8 %v2086
      %v2088 = vlaneseq
      %v2089 = vshrl.u32 %v2088, 7
      %v2090 = vsub.s32 %v2087, %v2089
      %v2091 = vrot.slane %v2077, %v2090
      %v2092 = vcombine.low %v2059, %v2075
      %v2093 = vcombine.high %v2059, %v2075
      %v2095 = vunpack.c.l.s4 1934713408
      %v2096 = vunpack.c.0.s8 %v2095
      %v2097 = vlaneseq
      %v2098 = vshrl.u32 %v2097, 7
      %v2099 = vsub.s32 %v2096, %v2098
      %v2100 = vrot.slane %v2092, %v2099
      %v2102 = vunpack.c.l.s4 1934713408
      %v2103 = vunpack.c.0.s8 %v2102
      %v2104 = vlaneseq
      %v2105 = vshrl.u32 %v2104, 7
      %v2106 = vsub.s32 %v2103, %v2105
      %v2107 = vrot.slane %v2093, %v2106
      %v2108 = vcombine.high %v2084, 0.0
      %v2109 = vcombine.high %v2091, 0.0
      %v2110 = vcombine.high %v2100, 0.0
      %v2111 = vcombine.high %v2107, 0.0
      %2113 = vrot.lane.b32.xlu0 %v2040, 16
      %v2114 = vpop.permute.xlu0 %2113
      %2117 = vrot.lane.b32.xlu0 %v2023, 32
      %v2118 = vpop.permute.xlu0 %2117
      %2121 = vrot.lane.b32.xlu0 %v2041, 48
      %v2122 = vpop.permute.xlu0 %2121
      %2125 = vrot.lane.b32.xlu0 %v2032, 64
      %v2126 = vpop.permute.xlu0 %2125
      %2129 = vrot.lane.b32.xlu0 %v2042, 80
      %v2130 = vpop.permute.xlu0 %2129
      %2133 = vrot.lane.b32.xlu0 %v2039, 96
      %v2134 = vpop.permute.xlu0 %2133
      %2137 = vrot.lane.b32.xlu0 %v2043, 112
      %v2138 = vpop.permute.xlu0 %2137
      %2141 = vrot.lane.b32.xlu0 %v2108, 16
      %v2142 = vpop.permute.xlu0 %2141
      %2145 = vrot.lane.b32.xlu0 %v2091, 32
      %v2146 = vpop.permute.xlu0 %2145
      %2149 = vrot.lane.b32.xlu0 %v2109, 48
      %v2150 = vpop.permute.xlu0 %2149
      %2153 = vrot.lane.b32.xlu0 %v2100, 64
      %v2154 = vpop.permute.xlu0 %2153
      %2157 = vrot.lane.b32.xlu0 %v2110, 80
      %v2158 = vpop.permute.xlu0 %2157
      %2161 = vrot.lane.b32.xlu0 %v2107, 96
      %v2162 = vpop.permute.xlu0 %2161
      %2165 = vrot.lane.b32.xlu0 %v2111, 112
      %v2166 = vpop.permute.xlu0 %2165
      %v2168 = vsel %vm1530, %v2016, %v2114
      %v2169 = vsel %vm1532, %v2168, %v2118
      %v2170 = vsel %vm1534, %v2169, %v2122
      %v2171 = vsel %vm1536, %v2170, %v2126
      %v2172 = vsel %vm1538, %v2171, %v2130
      %v2173 = vsel %vm1540, %v2172, %v2134
      %v2174 = vsel %vm1542, %v2173, %v2138
      %v2175 = vsel %vm1530, %v2084, %v2142
      %v2176 = vsel %vm1532, %v2175, %v2146
      %v2177 = vsel %vm1534, %v2176, %v2150
      %v2178 = vsel %vm1536, %v2177, %v2154
      %v2179 = vsel %vm1538, %v2178, %v2158
      %v2180 = vsel %vm1540, %v2179, %v2162
      %v2181 = vsel %vm1542, %v2180, %v2166
      %s2182 = scalar_lea.vmem %s863, 8
      %v2183 = vld [vmem:[%s2182] sm:$0xf]
      %v2185 = vsel %vm932, %v2183, 0
      %v2188 = vsel %vm939, %v2174, 0
      %v2191 = vsel %vm939, %v2181, 0
      %2193 = vmatprep.subr.mxu0 0.0
      %2194 = vmatpush1.msra.mxu0 0.0
      %2195 = vmatprep.subr.mxu0 0.0
      %2196 = vmatpush1.msra.mxu0 0.0
      %2197 = vmatprep.subr.mxu0 0.0
      %2198 = vmatpush1.msra.mxu0 0.0
      %2199 = vmatprep.subr.mxu0 0.0
      %2200 = vmatpush1.msra.mxu0 0.0
      %2201 = vmatprep.subr.mxu0 0.0
      %2202 = vmatpush1.msra.mxu0 0.0
      %2203 = vmatprep.subr.mxu0 0.0
      %2204 = vmatpush1.msra.mxu0 0.0
      %2205 = vmatprep.subr.mxu0 0.0
      %2206 = vmatpush1.msra.mxu0 0.0
      %2207 = vmatprep.subr.mxu0 0.0
      %2208 = vmatpush1.msra.mxu0 0.0
      %2209 = vmatprep.subr.mxu0 0.0
      %2210 = vmatpush1.msra.mxu0 0.0
      %2211 = vmatprep.subr.mxu0 0.0
      %2212 = vmatpush1.msra.mxu0 0.0
      %2213 = vmatprep.subr.mxu0 0.0
      %2214 = vmatpush1.msra.mxu0 0.0
      %2215 = vmatprep.subr.mxu0 0.0
      %2216 = vmatpush1.msra.mxu0 0.0
      %2217 = vmatprep.subr.mxu0 0.0
      %2218 = vmatpush1.msra.mxu0 0.0
      %2219 = vmatprep.subr.mxu0 0.0
      %2220 = vmatpush1.msra.mxu0 0.0
      %2221 = vmatprep.subr.mxu0 0.0
      %2222 = vmatpush1.msra.mxu0 0.0
      %2223 = vmatprep.subr.mxu0 %v2191
      %2224 = vmatpush1.msra.mxu0 %v2188
      %2225 = vmatprep.subr.mxu0 0.0
      %2226 = vmatpush2.msra.mxu0 0.0
      %2227 = vmatprep.subr.mxu0 0.0
      %2228 = vmatpush2.msra.mxu0 0.0
      %2229 = vmatprep.subr.mxu0 0.0
      %2230 = vmatpush2.msra.mxu0 0.0
      %2231 = vmatprep.subr.mxu0 0.0
      %2232 = vmatpush2.msra.mxu0 0.0
      %2233 = vmatprep.subr.mxu0 0.0
      %2234 = vmatpush2.msra.mxu0 0.0
      %2235 = vmatprep.subr.mxu0 0.0
      %2236 = vmatpush2.msra.mxu0 0.0
      %2237 = vmatprep.subr.mxu0 0.0
      %2238 = vmatpush2.msra.mxu0 0.0
      %2239 = vmatprep.subr.mxu0 0.0
      %2240 = vmatpush2.msra.mxu0 0.0
      %2241 = vmatprep.subr.mxu0 0.0
      %2242 = vmatpush2.msra.mxu0 0.0
      %2243 = vmatprep.subr.mxu0 0.0
      %2244 = vmatpush2.msra.mxu0 0.0
      %2245 = vmatprep.subr.mxu0 0.0
      %2246 = vmatpush2.msra.mxu0 0.0
      %2247 = vmatprep.subr.mxu0 0.0
      %2248 = vmatpush2.msra.mxu0 0.0
      %2249 = vmatprep.subr.mxu0 0.0
      %2250 = vmatpush2.msra.mxu0 0.0
      %2251 = vmatprep.subr.mxu0 0.0
      %2252 = vmatpush2.msra.mxu0 0.0
      %2253 = vmatprep.subr.mxu0 0.0
      %2254 = vmatpush2.msra.mxu0 0.0
      %2255 = vmatprep.subr.mxu0 0.0
      %2256 = vmatpush2.msra.mxu0 0.0
      %2257 = vmatprep.mubr.f32.mxu0 0.0
      %2258 = vmatmul.mubr.f32.gmra.mxu0 %v2185
      %v2259 = vpop.f32.mrf.mxu0
      %v2260 = vadd.f32 0.0, %v2259
      %v2261 = vpop.f32.mrf.mxu0
      %v2262 = vadd.f32 0.0, %v2261
      %2263 = vdwg.mxu0
      %v2264 = vadd.f32 %v1948, %v2260
      %v2265 = vadd.f32 %v1950, %v2262
      %vm2270 = vcmask 1046528
      %v2271 = vrot.slane %v1326, 1
      %v2272 = vrot.slane %v1327, 1
      %v2273 = vsel %vm2270, %v2271, %v2272
      %v2274 = vrot.slane %v1328, 1
      %v2275 = vsel %vm2270, %v2272, %v2274
      %v2276 = vrot.slane %v1329, 1
      %v2277 = vrot.slane %v1330, 1
      %v2278 = vsel %vm2270, %v2276, %v2277
      %v2279 = vrot.slane %v1331, 1
      %v2280 = vsel %vm2270, %v2277, %v2279
      %v2281 = vrot.slane %v1332, 1
      %v2282 = vrot.slane %v1333, 1
      %v2283 = vsel %vm2270, %v2281, %v2282
      %v2284 = vrot.slane %v1334, 1
      %v2285 = vsel %vm2270, %v2282, %v2284
      %v2286 = vrot.slane %v1335, 1
      %v2287 = vrot.slane %v1336, 1
      %v2288 = vsel %vm2270, %v2286, %v2287
      %v2289 = vrot.slane %v1337, 1
      %v2290 = vsel %vm2270, %v2287, %v2289
      %v2299 = vcombine.low %v2273, %v2283
      %v2300 = vcombine.high %v2273, %v2283
      %v2302 = vunpack.c.l.s4 1983009808
      %v2303 = vunpack.c.0.s8 %v2302
      %v2304 = vlaneseq
      %v2305 = vshrl.u32 %v2304, 7
      %v2306 = vsub.s32 %v2303, %v2305
      %v2307 = vrot.slane %v2299, %v2306
      %v2309 = vunpack.c.l.s4 1983009808
      %v2310 = vunpack.c.0.s8 %v2309
      %v2311 = vlaneseq
      %v2312 = vshrl.u32 %v2311, 7
      %v2313 = vsub.s32 %v2310, %v2312
      %v2314 = vrot.slane %v2300, %v2313
      %v2315 = vcombine.low %v2278, %v2288
      %v2316 = vcombine.high %v2278, %v2288
      %v2318 = vunpack.c.l.s4 1983009808
      %v2319 = vunpack.c.0.s8 %v2318
      %v2320 = vlaneseq
      %v2321 = vshrl.u32 %v2320, 7
      %v2322 = vsub.s32 %v2319, %v2321
      %v2323 = vrot.slane %v2315, %v2322
      %v2325 = vunpack.c.l.s4 1983009808
      %v2326 = vunpack.c.0.s8 %v2325
      %v2327 = vlaneseq
      %v2328 = vshrl.u32 %v2327, 7
      %v2329 = vsub.s32 %v2326, %v2328
      %v2330 = vrot.slane %v2316, %v2329
      %v2331 = vcombine.low %v2307, %v2323
      %v2332 = vcombine.high %v2307, %v2323
      %v2334 = vunpack.c.l.s4 1934713408
      %v2335 = vunpack.c.0.s8 %v2334
      %v2336 = vlaneseq
      %v2337 = vshrl.u32 %v2336, 7
      %v2338 = vsub.s32 %v2335, %v2337
      %v2339 = vrot.slane %v2331, %v2338
      %v2341 = vunpack.c.l.s4 1934713408
      %v2342 = vunpack.c.0.s8 %v2341
      %v2343 = vlaneseq
      %v2344 = vshrl.u32 %v2343, 7
      %v2345 = vsub.s32 %v2342, %v2344
      %v2346 = vrot.slane %v2332, %v2345
      %v2347 = vcombine.low %v2314, %v2330
      %v2348 = vcombine.high %v2314, %v2330
      %v2350 = vunpack.c.l.s4 1934713408
      %v2351 = vunpack.c.0.s8 %v2350
      %v2352 = vlaneseq
      %v2353 = vshrl.u32 %v2352, 7
      %v2354 = vsub.s32 %v2351, %v2353
      %v2355 = vrot.slane %v2347, %v2354
      %v2357 = vunpack.c.l.s4 1934713408
      %v2358 = vunpack.c.0.s8 %v2357
      %v2359 = vlaneseq
      %v2360 = vshrl.u32 %v2359, 7
      %v2361 = vsub.s32 %v2358, %v2360
      %v2362 = vrot.slane %v2348, %v2361
      %v2363 = vcombine.high %v2339, 0.0
      %v2364 = vcombine.high %v2346, 0.0
      %v2365 = vcombine.high %v2355, 0.0
      %v2366 = vcombine.high %v2362, 0.0
      %v2367 = vcombine.low %v2275, %v2285
      %v2368 = vcombine.high %v2275, %v2285
      %v2370 = vunpack.c.l.s4 1983009808
      %v2371 = vunpack.c.0.s8 %v2370
      %v2372 = vlaneseq
      %v2373 = vshrl.u32 %v2372, 7
      %v2374 = vsub.s32 %v2371, %v2373
      %v2375 = vrot.slane %v2367, %v2374
      %v2377 = vunpack.c.l.s4 1983009808
      %v2378 = vunpack.c.0.s8 %v2377
      %v2379 = vlaneseq
      %v2380 = vshrl.u32 %v2379, 7
      %v2381 = vsub.s32 %v2378, %v2380
      %v2382 = vrot.slane %v2368, %v2381
      %v2383 = vcombine.low %v2280, %v2290
      %v2384 = vcombine.high %v2280, %v2290
      %v2386 = vunpack.c.l.s4 1983009808
      %v2387 = vunpack.c.0.s8 %v2386
      %v2388 = vlaneseq
      %v2389 = vshrl.u32 %v2388, 7
      %v2390 = vsub.s32 %v2387, %v2389
      %v2391 = vrot.slane %v2383, %v2390
      %v2393 = vunpack.c.l.s4 1983009808
      %v2394 = vunpack.c.0.s8 %v2393
      %v2395 = vlaneseq
      %v2396 = vshrl.u32 %v2395, 7
      %v2397 = vsub.s32 %v2394, %v2396
      %v2398 = vrot.slane %v2384, %v2397
      %v2399 = vcombine.low %v2375, %v2391
      %v2400 = vcombine.high %v2375, %v2391
      %v2402 = vunpack.c.l.s4 1934713408
      %v2403 = vunpack.c.0.s8 %v2402
      %v2404 = vlaneseq
      %v2405 = vshrl.u32 %v2404, 7
      %v2406 = vsub.s32 %v2403, %v2405
      %v2407 = vrot.slane %v2399, %v2406
      %v2409 = vunpack.c.l.s4 1934713408
      %v2410 = vunpack.c.0.s8 %v2409
      %v2411 = vlaneseq
      %v2412 = vshrl.u32 %v2411, 7
      %v2413 = vsub.s32 %v2410, %v2412
      %v2414 = vrot.slane %v2400, %v2413
      %v2415 = vcombine.low %v2382, %v2398
      %v2416 = vcombine.high %v2382, %v2398
      %v2418 = vunpack.c.l.s4 1934713408
      %v2419 = vunpack.c.0.s8 %v2418
      %v2420 = vlaneseq
      %v2421 = vshrl.u32 %v2420, 7
      %v2422 = vsub.s32 %v2419, %v2421
      %v2423 = vrot.slane %v2415, %v2422
      %v2425 = vunpack.c.l.s4 1934713408
      %v2426 = vunpack.c.0.s8 %v2425
      %v2427 = vlaneseq
      %v2428 = vshrl.u32 %v2427, 7
      %v2429 = vsub.s32 %v2426, %v2428
      %v2430 = vrot.slane %v2416, %v2429
      %v2431 = vcombine.high %v2407, 0.0
      %v2432 = vcombine.high %v2414, 0.0
      %v2433 = vcombine.high %v2423, 0.0
      %v2434 = vcombine.high %v2430, 0.0
      %2436 = vrot.lane.b32.xlu0 %v2363, 16
      %v2437 = vpop.permute.xlu0 %2436
      %2440 = vrot.lane.b32.xlu0 %v2346, 32
      %v2441 = vpop.permute.xlu0 %2440
      %2444 = vrot.lane.b32.xlu0 %v2364, 48
      %v2445 = vpop.permute.xlu0 %2444
      %2448 = vrot.lane.b32.xlu0 %v2355, 64
      %v2449 = vpop.permute.xlu0 %2448
      %2452 = vrot.lane.b32.xlu0 %v2365, 80
      %v2453 = vpop.permute.xlu0 %2452
      %2456 = vrot.lane.b32.xlu0 %v2362, 96
      %v2457 = vpop.permute.xlu0 %2456
      %2460 = vrot.lane.b32.xlu0 %v2366, 112
      %v2461 = vpop.permute.xlu0 %2460
      %2464 = vrot.lane.b32.xlu0 %v2431, 16
      %v2465 = vpop.permute.xlu0 %2464
      %2468 = vrot.lane.b32.xlu0 %v2414, 32
      %v2469 = vpop.permute.xlu0 %2468
      %2472 = vrot.lane.b32.xlu0 %v2432, 48
      %v2473 = vpop.permute.xlu0 %2472
      %2476 = vrot.lane.b32.xlu0 %v2423, 64
      %v2477 = vpop.permute.xlu0 %2476
      %2480 = vrot.lane.b32.xlu0 %v2433, 80
      %v2481 = vpop.permute.xlu0 %2480
      %2484 = vrot.lane.b32.xlu0 %v2430, 96
      %v2485 = vpop.permute.xlu0 %2484
      %2488 = vrot.lane.b32.xlu0 %v2434, 112
      %v2489 = vpop.permute.xlu0 %2488
      %v2491 = vsel %vm1530, %v2339, %v2437
      %v2492 = vsel %vm1532, %v2491, %v2441
      %v2493 = vsel %vm1534, %v2492, %v2445
      %v2494 = vsel %vm1536, %v2493, %v2449
      %v2495 = vsel %vm1538, %v2494, %v2453
      %v2496 = vsel %vm1540, %v2495, %v2457
      %v2497 = vsel %vm1542, %v2496, %v2461
      %v2498 = vsel %vm1530, %v2407, %v2465
      %v2499 = vsel %vm1532, %v2498, %v2469
      %v2500 = vsel %vm1534, %v2499, %v2473
      %v2501 = vsel %vm1536, %v2500, %v2477
      %v2502 = vsel %vm1538, %v2501, %v2481
      %v2503 = vsel %vm1540, %v2502, %v2485
      %v2504 = vsel %vm1542, %v2503, %v2489
      %s2505 = scalar_lea.vmem %s863, 12
      %v2506 = vld [vmem:[%s2505] sm:$0xf]
      %v2508 = vsel %vm932, %v2506, 0
      %v2511 = vsel %vm939, %v2497, 0
      %v2514 = vsel %vm939, %v2504, 0
      %2516 = vmatprep.subr.mxu0 0.0
      %2517 = vmatpush1.msra.mxu0 0.0
      %2518 = vmatprep.subr.mxu0 0.0
      %2519 = vmatpush1.msra.mxu0 0.0
      %2520 = vmatprep.subr.mxu0 0.0
      %2521 = vmatpush1.msra.mxu0 0.0
      %2522 = vmatprep.subr.mxu0 0.0
      %2523 = vmatpush1.msra.mxu0 0.0
      %2524 = vmatprep.subr.mxu0 0.0
      %2525 = vmatpush1.msra.mxu0 0.0
      %2526 = vmatprep.subr.mxu0 0.0
      %2527 = vmatpush1.msra.mxu0 0.0
      %2528 = vmatprep.subr.mxu0 0.0
      %2529 = vmatpush1.msra.mxu0 0.0
      %2530 = vmatprep.subr.mxu0 0.0
      %2531 = vmatpush1.msra.mxu0 0.0
      %2532 = vmatprep.subr.mxu0 0.0
      %2533 = vmatpush1.msra.mxu0 0.0
      %2534 = vmatprep.subr.mxu0 0.0
      %2535 = vmatpush1.msra.mxu0 0.0
      %2536 = vmatprep.subr.mxu0 0.0
      %2537 = vmatpush1.msra.mxu0 0.0
      %2538 = vmatprep.subr.mxu0 0.0
      %2539 = vmatpush1.msra.mxu0 0.0
      %2540 = vmatprep.subr.mxu0 0.0
      %2541 = vmatpush1.msra.mxu0 0.0
      %2542 = vmatprep.subr.mxu0 0.0
      %2543 = vmatpush1.msra.mxu0 0.0
      %2544 = vmatprep.subr.mxu0 0.0
      %2545 = vmatpush1.msra.mxu0 0.0
      %2546 = vmatprep.subr.mxu0 %v2514
      %2547 = vmatpush1.msra.mxu0 %v2511
      %2548 = vmatprep.subr.mxu0 0.0
      %2549 = vmatpush2.msra.mxu0 0.0
      %2550 = vmatprep.subr.mxu0 0.0
      %2551 = vmatpush2.msra.mxu0 0.0
      %2552 = vmatprep.subr.mxu0 0.0
      %2553 = vmatpush2.msra.mxu0 0.0
      %2554 = vmatprep.subr.mxu0 0.0
      %2555 = vmatpush2.msra.mxu0 0.0
      %2556 = vmatprep.subr.mxu0 0.0
      %2557 = vmatpush2.msra.mxu0 0.0
      %2558 = vmatprep.subr.mxu0 0.0
      %2559 = vmatpush2.msra.mxu0 0.0
      %2560 = vmatprep.subr.mxu0 0.0
      %2561 = vmatpush2.msra.mxu0 0.0
      %2562 = vmatprep.subr.mxu0 0.0
      %2563 = vmatpush2.msra.mxu0 0.0
      %2564 = vmatprep.subr.mxu0 0.0
      %2565 = vmatpush2.msra.mxu0 0.0
      %2566 = vmatprep.subr.mxu0 0.0
      %2567 = vmatpush2.msra.mxu0 0.0
      %2568 = vmatprep.subr.mxu0 0.0
      %2569 = vmatpush2.msra.mxu0 0.0
      %2570 = vmatprep.subr.mxu0 0.0
      %2571 = vmatpush2.msra.mxu0 0.0
      %2572 = vmatprep.subr.mxu0 0.0
      %2573 = vmatpush2.msra.mxu0 0.0
      %2574 = vmatprep.subr.mxu0 0.0
      %2575 = vmatpush2.msra.mxu0 0.0
      %2576 = vmatprep.subr.mxu0 0.0
      %2577 = vmatpush2.msra.mxu0 0.0
      %2578 = vmatprep.subr.mxu0 0.0
      %2579 = vmatpush2.msra.mxu0 0.0
      %2580 = vmatprep.mubr.f32.mxu0 0.0
      %2581 = vmatmul.mubr.f32.gmra.mxu0 %v2508
      %v2582 = vpop.f32.mrf.mxu0
      %v2583 = vadd.f32 0.0, %v2582
      %v2584 = vpop.f32.mrf.mxu0
      %v2585 = vadd.f32 0.0, %v2584
      %2586 = vdwg.mxu0
      %v2587 = vadd.f32 %v2264, %v2583
      %v2588 = vadd.f32 %v2265, %v2585
      %2589 = vrot.lane.b32.xlu0 %v2273, 127
      %v2590 = vpop.permute.xlu0 %2589
      %2591 = vrot.lane.b32.xlu0 %v2275, 127
      %v2592 = vpop.permute.xlu0 %2591
      %2593 = vrot.lane.b32.xlu0 %v2278, 127
      %v2594 = vpop.permute.xlu0 %2593
      %2595 = vrot.lane.b32.xlu0 %v2280, 127
      %v2596 = vpop.permute.xlu0 %2595
      %2597 = vrot.lane.b32.xlu0 %v2283, 127
      %v2598 = vpop.permute.xlu0 %2597
      %2599 = vrot.lane.b32.xlu0 %v2285, 127
      %v2600 = vpop.permute.xlu0 %2599
      %2601 = vrot.lane.b32.xlu0 %v2288, 127
      %v2602 = vpop.permute.xlu0 %2601
      %2603 = vrot.lane.b32.xlu0 %v2290, 127
      %v2604 = vpop.permute.xlu0 %2603
      %v2613 = vcombine.low %v2590, %v2598
      %v2614 = vcombine.high %v2590, %v2598
      %v2616 = vunpack.c.l.s4 1983009808
      %v2617 = vunpack.c.0.s8 %v2616
      %v2618 = vlaneseq
      %v2619 = vshrl.u32 %v2618, 7
      %v2620 = vsub.s32 %v2617, %v2619
      %v2621 = vrot.slane %v2613, %v2620
      %v2623 = vunpack.c.l.s4 1983009808
      %v2624 = vunpack.c.0.s8 %v2623
      %v2625 = vlaneseq
      %v2626 = vshrl.u32 %v2625, 7
      %v2627 = vsub.s32 %v2624, %v2626
      %v2628 = vrot.slane %v2614, %v2627
      %v2629 = vcombine.low %v2594, %v2602
      %v2630 = vcombine.high %v2594, %v2602
      %v2632 = vunpack.c.l.s4 1983009808
      %v2633 = vunpack.c.0.s8 %v2632
      %v2634 = vlaneseq
      %v2635 = vshrl.u32 %v2634, 7
      %v2636 = vsub.s32 %v2633, %v2635
      %v2637 = vrot.slane %v2629, %v2636
      %v2639 = vunpack.c.l.s4 1983009808
      %v2640 = vunpack.c.0.s8 %v2639
      %v2641 = vlaneseq
      %v2642 = vshrl.u32 %v2641, 7
      %v2643 = vsub.s32 %v2640, %v2642
      %v2644 = vrot.slane %v2630, %v2643
      %v2645 = vcombine.low %v2621, %v2637
      %v2646 = vcombine.high %v2621, %v2637
      %v2648 = vunpack.c.l.s4 1934713408
      %v2649 = vunpack.c.0.s8 %v2648
      %v2650 = vlaneseq
      %v2651 = vshrl.u32 %v2650, 7
      %v2652 = vsub.s32 %v2649, %v2651
      %v2653 = vrot.slane %v2645, %v2652
      %v2655 = vunpack.c.l.s4 1934713408
      %v2656 = vunpack.c.0.s8 %v2655
      %v2657 = vlaneseq
      %v2658 = vshrl.u32 %v2657, 7
      %v2659 = vsub.s32 %v2656, %v2658
      %v2660 = vrot.slane %v2646, %v2659
      %v2661 = vcombine.low %v2628, %v2644
      %v2662 = vcombine.high %v2628, %v2644
      %v2664 = vunpack.c.l.s4 1934713408
      %v2665 = vunpack.c.0.s8 %v2664
      %v2666 = vlaneseq
      %v2667 = vshrl.u32 %v2666, 7
      %v2668 = vsub.s32 %v2665, %v2667
      %v2669 = vrot.slane %v2661, %v2668
      %v2671 = vunpack.c.l.s4 1934713408
      %v2672 = vunpack.c.0.s8 %v2671
      %v2673 = vlaneseq
      %v2674 = vshrl.u32 %v2673, 7
      %v2675 = vsub.s32 %v2672, %v2674
      %v2676 = vrot.slane %v2662, %v2675
      %v2677 = vcombine.high %v2653, 0.0
      %v2678 = vcombine.high %v2660, 0.0
      %v2679 = vcombine.high %v2669, 0.0
      %v2680 = vcombine.high %v2676, 0.0
      %v2681 = vcombine.low %v2592, %v2600
      %v2682 = vcombine.high %v2592, %v2600
      %v2684 = vunpack.c.l.s4 1983009808
      %v2685 = vunpack.c.0.s8 %v2684
      %v2686 = vlaneseq
      %v2687 = vshrl.u32 %v2686, 7
      %v2688 = vsub.s32 %v2685, %v2687
      %v2689 = vrot.slane %v2681, %v2688
      %v2691 = vunpack.c.l.s4 1983009808
      %v2692 = vunpack.c.0.s8 %v2691
      %v2693 = vlaneseq
      %v2694 = vshrl.u32 %v2693, 7
      %v2695 = vsub.s32 %v2692, %v2694
      %v2696 = vrot.slane %v2682, %v2695
      %v2697 = vcombine.low %v2596, %v2604
      %v2698 = vcombine.high %v2596, %v2604
      %v2700 = vunpack.c.l.s4 1983009808
      %v2701 = vunpack.c.0.s8 %v2700
      %v2702 = vlaneseq
      %v2703 = vshrl.u32 %v2702, 7
      %v2704 = vsub.s32 %v2701, %v2703
      %v2705 = vrot.slane %v2697, %v2704
      %v2707 = vunpack.c.l.s4 1983009808
      %v2708 = vunpack.c.0.s8 %v2707
      %v2709 = vlaneseq
      %v2710 = vshrl.u32 %v2709, 7
      %v2711 = vsub.s32 %v2708, %v2710
      %v2712 = vrot.slane %v2698, %v2711
      %v2713 = vcombine.low %v2689, %v2705
      %v2714 = vcombine.high %v2689, %v2705
      %v2716 = vunpack.c.l.s4 1934713408
      %v2717 = vunpack.c.0.s8 %v2716
      %v2718 = vlaneseq
      %v2719 = vshrl.u32 %v2718, 7
      %v2720 = vsub.s32 %v2717, %v2719
      %v2721 = vrot.slane %v2713, %v2720
      %v2723 = vunpack.c.l.s4 1934713408
      %v2724 = vunpack.c.0.s8 %v2723
      %v2725 = vlaneseq
      %v2726 = vshrl.u32 %v2725, 7
      %v2727 = vsub.s32 %v2724, %v2726
      %v2728 = vrot.slane %v2714, %v2727
      %v2729 = vcombine.low %v2696, %v2712
      %v2730 = vcombine.high %v2696, %v2712
      %v2732 = vunpack.c.l.s4 1934713408
      %v2733 = vunpack.c.0.s8 %v2732
      %v2734 = vlaneseq
      %v2735 = vshrl.u32 %v2734, 7
      %v2736 = vsub.s32 %v2733, %v2735
      %v2737 = vrot.slane %v2729, %v2736
      %v2739 = vunpack.c.l.s4 1934713408
      %v2740 = vunpack.c.0.s8 %v2739
      %v2741 = vlaneseq
      %v2742 = vshrl.u32 %v2741, 7
      %v2743 = vsub.s32 %v2740, %v2742
      %v2744 = vrot.slane %v2730, %v2743
      %v2745 = vcombine.high %v2721, 0.0
      %v2746 = vcombine.high %v2728, 0.0
      %v2747 = vcombine.high %v2737, 0.0
      %v2748 = vcombine.high %v2744, 0.0
      %2750 = vrot.lane.b32.xlu0 %v2677, 16
      %v2751 = vpop.permute.xlu0 %2750
      %2754 = vrot.lane.b32.xlu0 %v2660, 32
      %v2755 = vpop.permute.xlu0 %2754
      %2758 = vrot.lane.b32.xlu0 %v2678, 48
      %v2759 = vpop.permute.xlu0 %2758
      %2762 = vrot.lane.b32.xlu0 %v2669, 64
      %v2763 = vpop.permute.xlu0 %2762
      %2766 = vrot.lane.b32.xlu0 %v2679, 80
      %v2767 = vpop.permute.xlu0 %2766
      %2770 = vrot.lane.b32.xlu0 %v2676, 96
      %v2771 = vpop.permute.xlu0 %2770
      %2774 = vrot.lane.b32.xlu0 %v2680, 112
      %v2775 = vpop.permute.xlu0 %2774
      %2778 = vrot.lane.b32.xlu0 %v2745, 16
      %v2779 = vpop.permute.xlu0 %2778
      %2782 = vrot.lane.b32.xlu0 %v2728, 32
      %v2783 = vpop.permute.xlu0 %2782
      %2786 = vrot.lane.b32.xlu0 %v2746, 48
      %v2787 = vpop.permute.xlu0 %2786
      %2790 = vrot.lane.b32.xlu0 %v2737, 64
      %v2791 = vpop.permute.xlu0 %2790
      %2794 = vrot.lane.b32.xlu0 %v2747, 80
      %v2795 = vpop.permute.xlu0 %2794
      %2798 = vrot.lane.b32.xlu0 %v2744, 96
      %v2799 = vpop.permute.xlu0 %2798
      %2802 = vrot.lane.b32.xlu0 %v2748, 112
      %v2803 = vpop.permute.xlu0 %2802
      %v2805 = vsel %vm1530, %v2653, %v2751
      %v2806 = vsel %vm1532, %v2805, %v2755
      %v2807 = vsel %vm1534, %v2806, %v2759
      %v2808 = vsel %vm1536, %v2807, %v2763
      %v2809 = vsel %vm1538, %v2808, %v2767
      %v2810 = vsel %vm1540, %v2809, %v2771
      %v2811 = vsel %vm1542, %v2810, %v2775
      %v2812 = vsel %vm1530, %v2721, %v2779
      %v2813 = vsel %vm1532, %v2812, %v2783
      %v2814 = vsel %vm1534, %v2813, %v2787
      %v2815 = vsel %vm1536, %v2814, %v2791
      %v2816 = vsel %vm1538, %v2815, %v2795
      %v2817 = vsel %vm1540, %v2816, %v2799
      %v2818 = vsel %vm1542, %v2817, %v2803
      %s2819 = scalar_lea.vmem %s863, 16
      %v2820 = vld [vmem:[%s2819] sm:$0xf]
      %v2822 = vsel %vm932, %v2820, 0
      %v2825 = vsel %vm939, %v2811, 0
      %v2828 = vsel %vm939, %v2818, 0
      %2830 = vmatprep.subr.mxu0 0.0
      %2831 = vmatpush1.msra.mxu0 0.0
      %2832 = vmatprep.subr.mxu0 0.0
      %2833 = vmatpush1.msra.mxu0 0.0
      %2834 = vmatprep.subr.mxu0 0.0
      %2835 = vmatpush1.msra.mxu0 0.0
      %2836 = vmatprep.subr.mxu0 0.0
      %2837 = vmatpush1.msra.mxu0 0.0
      %2838 = vmatprep.subr.mxu0 0.0
      %2839 = vmatpush1.msra.mxu0 0.0
      %2840 = vmatprep.subr.mxu0 0.0
      %2841 = vmatpush1.msra.mxu0 0.0
      %2842 = vmatprep.subr.mxu0 0.0
      %2843 = vmatpush1.msra.mxu0 0.0
      %2844 = vmatprep.subr.mxu0 0.0
      %2845 = vmatpush1.msra.mxu0 0.0
      %2846 = vmatprep.subr.mxu0 0.0
      %2847 = vmatpush1.msra.mxu0 0.0
      %2848 = vmatprep.subr.mxu0 0.0
      %2849 = vmatpush1.msra.mxu0 0.0
      %2850 = vmatprep.subr.mxu0 0.0
      %2851 = vmatpush1.msra.mxu0 0.0
      %2852 = vmatprep.subr.mxu0 0.0
      %2853 = vmatpush1.msra.mxu0 0.0
      %2854 = vmatprep.subr.mxu0 0.0
      %2855 = vmatpush1.msra.mxu0 0.0
      %2856 = vmatprep.subr.mxu0 0.0
      %2857 = vmatpush1.msra.mxu0 0.0
      %2858 = vmatprep.subr.mxu0 0.0
      %2859 = vmatpush1.msra.mxu0 0.0
      %2860 = vmatprep.subr.mxu0 %v2828
      %2861 = vmatpush1.msra.mxu0 %v2825
      %2862 = vmatprep.subr.mxu0 0.0
      %2863 = vmatpush2.msra.mxu0 0.0
      %2864 = vmatprep.subr.mxu0 0.0
      %2865 = vmatpush2.msra.mxu0 0.0
      %2866 = vmatprep.subr.mxu0 0.0
      %2867 = vmatpush2.msra.mxu0 0.0
      %2868 = vmatprep.subr.mxu0 0.0
      %2869 = vmatpush2.msra.mxu0 0.0
      %2870 = vmatprep.subr.mxu0 0.0
      %2871 = vmatpush2.msra.mxu0 0.0
      %2872 = vmatprep.subr.mxu0 0.0
      %2873 = vmatpush2.msra.mxu0 0.0
      %2874 = vmatprep.subr.mxu0 0.0
      %2875 = vmatpush2.msra.mxu0 0.0
      %2876 = vmatprep.subr.mxu0 0.0
      %2877 = vmatpush2.msra.mxu0 0.0
      %2878 = vmatprep.subr.mxu0 0.0
      %2879 = vmatpush2.msra.mxu0 0.0
      %2880 = vmatprep.subr.mxu0 0.0
      %2881 = vmatpush2.msra.mxu0 0.0
      %2882 = vmatprep.subr.mxu0 0.0
      %2883 = vmatpush2.msra.mxu0 0.0
      %2884 = vmatprep.subr.mxu0 0.0
      %2885 = vmatpush2.msra.mxu0 0.0
      %2886 = vmatprep.subr.mxu0 0.0
      %2887 = vmatpush2.msra.mxu0 0.0
      %2888 = vmatprep.subr.mxu0 0.0
      %2889 = vmatpush2.msra.mxu0 0.0
      %2890 = vmatprep.subr.mxu0 0.0
      %2891 = vmatpush2.msra.mxu0 0.0
      %2892 = vmatprep.subr.mxu0 0.0
      %2893 = vmatpush2.msra.mxu0 0.0
      %2894 = vmatprep.mubr.f32.mxu0 0.0
      %2895 = vmatmul.mubr.f32.gmra.mxu0 %v2822
      %v2896 = vpop.f32.mrf.mxu0
      %v2897 = vadd.f32 0.0, %v2896
      %v2898 = vpop.f32.mrf.mxu0
      %v2899 = vadd.f32 0.0, %v2898
      %2900 = vdwg.mxu0
      %v2901 = vadd.f32 %v2587, %v2897
      %v2902 = vadd.f32 %v2588, %v2899
      %2903 = vrot.lane.b32.xlu0 %v2273, 126
      %v2904 = vpop.permute.xlu0 %2903
      %2905 = vrot.lane.b32.xlu0 %v2275, 126
      %v2906 = vpop.permute.xlu0 %2905
      %2907 = vrot.lane.b32.xlu0 %v2278, 126
      %v2908 = vpop.permute.xlu0 %2907
      %2909 = vrot.lane.b32.xlu0 %v2280, 126
      %v2910 = vpop.permute.xlu0 %2909
      %2911 = vrot.lane.b32.xlu0 %v2283, 126
      %v2912 = vpop.permute.xlu0 %2911
      %2913 = vrot.lane.b32.xlu0 %v2285, 126
      %v2914 = vpop.permute.xlu0 %2913
      %2915 = vrot.lane.b32.xlu0 %v2288, 126
      %v2916 = vpop.permute.xlu0 %2915
      %2917 = vrot.lane.b32.xlu0 %v2290, 126
      %v2918 = vpop.permute.xlu0 %2917
      %v2927 = vcombine.low %v2904, %v2912
      %v2928 = vcombine.high %v2904, %v2912
      %v2930 = vunpack.c.l.s4 1983009808
      %v2931 = vunpack.c.0.s8 %v2930
      %v2932 = vlaneseq
      %v2933 = vshrl.u32 %v2932, 7
      %v2934 = vsub.s32 %v2931, %v2933
      %v2935 = vrot.slane %v2927, %v2934
      %v2937 = vunpack.c.l.s4 1983009808
      %v2938 = vunpack.c.0.s8 %v2937
      %v2939 = vlaneseq
      %v2940 = vshrl.u32 %v2939, 7
      %v2941 = vsub.s32 %v2938, %v2940
      %v2942 = vrot.slane %v2928, %v2941
      %v2943 = vcombine.low %v2908, %v2916
      %v2944 = vcombine.high %v2908, %v2916
      %v2946 = vunpack.c.l.s4 1983009808
      %v2947 = vunpack.c.0.s8 %v2946
      %v2948 = vlaneseq
      %v2949 = vshrl.u32 %v2948, 7
      %v2950 = vsub.s32 %v2947, %v2949
      %v2951 = vrot.slane %v2943, %v2950
      %v2953 = vunpack.c.l.s4 1983009808
      %v2954 = vunpack.c.0.s8 %v2953
      %v2955 = vlaneseq
      %v2956 = vshrl.u32 %v2955, 7
      %v2957 = vsub.s32 %v2954, %v2956
      %v2958 = vrot.slane %v2944, %v2957
      %v2959 = vcombine.low %v2935, %v2951
      %v2960 = vcombine.high %v2935, %v2951
      %v2962 = vunpack.c.l.s4 1934713408
      %v2963 = vunpack.c.0.s8 %v2962
      %v2964 = vlaneseq
      %v2965 = vshrl.u32 %v2964, 7
      %v2966 = vsub.s32 %v2963, %v2965
      %v2967 = vrot.slane %v2959, %v2966
      %v2969 = vunpack.c.l.s4 1934713408
      %v2970 = vunpack.c.0.s8 %v2969
      %v2971 = vlaneseq
      %v2972 = vshrl.u32 %v2971, 7
      %v2973 = vsub.s32 %v2970, %v2972
      %v2974 = vrot.slane %v2960, %v2973
      %v2975 = vcombine.low %v2942, %v2958
      %v2976 = vcombine.high %v2942, %v2958
      %v2978 = vunpack.c.l.s4 1934713408
      %v2979 = vunpack.c.0.s8 %v2978
      %v2980 = vlaneseq
      %v2981 = vshrl.u32 %v2980, 7
      %v2982 = vsub.s32 %v2979, %v2981
      %v2983 = vrot.slane %v2975, %v2982
      %v2985 = vunpack.c.l.s4 1934713408
      %v2986 = vunpack.c.0.s8 %v2985
      %v2987 = vlaneseq
      %v2988 = vshrl.u32 %v2987, 7
      %v2989 = vsub.s32 %v2986, %v2988
      %v2990 = vrot.slane %v2976, %v2989
      %v2991 = vcombine.high %v2967, 0.0
      %v2992 = vcombine.high %v2974, 0.0
      %v2993 = vcombine.high %v2983, 0.0
      %v2994 = vcombine.high %v2990, 0.0
      %v2995 = vcombine.low %v2906, %v2914
      %v2996 = vcombine.high %v2906, %v2914
      %v2998 = vunpack.c.l.s4 1983009808
      %v2999 = vunpack.c.0.s8 %v2998
      %v3000 = vlaneseq
      %v3001 = vshrl.u32 %v3000, 7
      %v3002 = vsub.s32 %v2999, %v3001
      %v3003 = vrot.slane %v2995, %v3002
      %v3005 = vunpack.c.l.s4 1983009808
      %v3006 = vunpack.c.0.s8 %v3005
      %v3007 = vlaneseq
      %v3008 = vshrl.u32 %v3007, 7
      %v3009 = vsub.s32 %v3006, %v3008
      %v3010 = vrot.slane %v2996, %v3009
      %v3011 = vcombine.low %v2910, %v2918
      %v3012 = vcombine.high %v2910, %v2918
      %v3014 = vunpack.c.l.s4 1983009808
      %v3015 = vunpack.c.0.s8 %v3014
      %v3016 = vlaneseq
      %v3017 = vshrl.u32 %v3016, 7
      %v3018 = vsub.s32 %v3015, %v3017
      %v3019 = vrot.slane %v3011, %v3018
      %v3021 = vunpack.c.l.s4 1983009808
      %v3022 = vunpack.c.0.s8 %v3021
      %v3023 = vlaneseq
      %v3024 = vshrl.u32 %v3023, 7
      %v3025 = vsub.s32 %v3022, %v3024
      %v3026 = vrot.slane %v3012, %v3025
      %v3027 = vcombine.low %v3003, %v3019
      %v3028 = vcombine.high %v3003, %v3019
      %v3030 = vunpack.c.l.s4 1934713408
      %v3031 = vunpack.c.0.s8 %v3030
      %v3032 = vlaneseq
      %v3033 = vshrl.u32 %v3032, 7
      %v3034 = vsub.s32 %v3031, %v3033
      %v3035 = vrot.slane %v3027, %v3034
      %v3037 = vunpack.c.l.s4 1934713408
      %v3038 = vunpack.c.0.s8 %v3037
      %v3039 = vlaneseq
      %v3040 = vshrl.u32 %v3039, 7
      %v3041 = vsub.s32 %v3038, %v3040
      %v3042 = vrot.slane %v3028, %v3041
      %v3043 = vcombine.low %v3010, %v3026
      %v3044 = vcombine.high %v3010, %v3026
      %v3046 = vunpack.c.l.s4 1934713408
      %v3047 = vunpack.c.0.s8 %v3046
      %v3048 = vlaneseq
      %v3049 = vshrl.u32 %v3048, 7
      %v3050 = vsub.s32 %v3047, %v3049
      %v3051 = vrot.slane %v3043, %v3050
      %v3053 = vunpack.c.l.s4 1934713408
      %v3054 = vunpack.c.0.s8 %v3053
      %v3055 = vlaneseq
      %v3056 = vshrl.u32 %v3055, 7
      %v3057 = vsub.s32 %v3054, %v3056
      %v3058 = vrot.slane %v3044, %v3057
      %v3059 = vcombine.high %v3035, 0.0
      %v3060 = vcombine.high %v3042, 0.0
      %v3061 = vcombine.high %v3051, 0.0
      %v3062 = vcombine.high %v3058, 0.0
      %3064 = vrot.lane.b32.xlu0 %v2991, 16
      %v3065 = vpop.permute.xlu0 %3064
      %3068 = vrot.lane.b32.xlu0 %v2974, 32
      %v3069 = vpop.permute.xlu0 %3068
      %3072 = vrot.lane.b32.xlu0 %v2992, 48
      %v3073 = vpop.permute.xlu0 %3072
      %3076 = vrot.lane.b32.xlu0 %v2983, 64
      %v3077 = vpop.permute.xlu0 %3076
      %3080 = vrot.lane.b32.xlu0 %v2993, 80
      %v3081 = vpop.permute.xlu0 %3080
      %3084 = vrot.lane.b32.xlu0 %v2990, 96
      %v3085 = vpop.permute.xlu0 %3084
      %3088 = vrot.lane.b32.xlu0 %v2994, 112
      %v3089 = vpop.permute.xlu0 %3088
      %3092 = vrot.lane.b32.xlu0 %v3059, 16
      %v3093 = vpop.permute.xlu0 %3092
      %3096 = vrot.lane.b32.xlu0 %v3042, 32
      %v3097 = vpop.permute.xlu0 %3096
      %3100 = vrot.lane.b32.xlu0 %v3060, 48
      %v3101 = vpop.permute.xlu0 %3100
      %3104 = vrot.lane.b32.xlu0 %v3051, 64
      %v3105 = vpop.permute.xlu0 %3104
      %3108 = vrot.lane.b32.xlu0 %v3061, 80
      %v3109 = vpop.permute.xlu0 %3108
      %3112 = vrot.lane.b32.xlu0 %v3058, 96
      %v3113 = vpop.permute.xlu0 %3112
      %3116 = vrot.lane.b32.xlu0 %v3062, 112
      %v3117 = vpop.permute.xlu0 %3116
      %v3119 = vsel %vm1530, %v2967, %v3065
      %v3120 = vsel %vm1532, %v3119, %v3069
      %v3121 = vsel %vm1534, %v3120, %v3073
      %v3122 = vsel %vm1536, %v3121, %v3077
      %v3123 = vsel %vm1538, %v3122, %v3081
      %v3124 = vsel %vm1540, %v3123, %v3085
      %v3125 = vsel %vm1542, %v3124, %v3089
      %v3126 = vsel %vm1530, %v3035, %v3093
      %v3127 = vsel %vm1532, %v3126, %v3097
      %v3128 = vsel %vm1534, %v3127, %v3101
      %v3129 = vsel %vm1536, %v3128, %v3105
      %v3130 = vsel %vm1538, %v3129, %v3109
      %v3131 = vsel %vm1540, %v3130, %v3113
      %v3132 = vsel %vm1542, %v3131, %v3117
      %s3133 = scalar_lea.vmem %s863, 20
      %v3134 = vld [vmem:[%s3133] sm:$0xf]
      %v3136 = vsel %vm932, %v3134, 0
      %v3139 = vsel %vm939, %v3125, 0
      %v3142 = vsel %vm939, %v3132, 0
      %3144 = vmatprep.subr.mxu0 0.0
      %3145 = vmatpush1.msra.mxu0 0.0
      %3146 = vmatprep.subr.mxu0 0.0
      %3147 = vmatpush1.msra.mxu0 0.0
      %3148 = vmatprep.subr.mxu0 0.0
      %3149 = vmatpush1.msra.mxu0 0.0
      %3150 = vmatprep.subr.mxu0 0.0
      %3151 = vmatpush1.msra.mxu0 0.0
      %3152 = vmatprep.subr.mxu0 0.0
      %3153 = vmatpush1.msra.mxu0 0.0
      %3154 = vmatprep.subr.mxu0 0.0
      %3155 = vmatpush1.msra.mxu0 0.0
      %3156 = vmatprep.subr.mxu0 0.0
      %3157 = vmatpush1.msra.mxu0 0.0
      %3158 = vmatprep.subr.mxu0 0.0
      %3159 = vmatpush1.msra.mxu0 0.0
      %3160 = vmatprep.subr.mxu0 0.0
      %3161 = vmatpush1.msra.mxu0 0.0
      %3162 = vmatprep.subr.mxu0 0.0
      %3163 = vmatpush1.msra.mxu0 0.0
      %3164 = vmatprep.subr.mxu0 0.0
      %3165 = vmatpush1.msra.mxu0 0.0
      %3166 = vmatprep.subr.mxu0 0.0
      %3167 = vmatpush1.msra.mxu0 0.0
      %3168 = vmatprep.subr.mxu0 0.0
      %3169 = vmatpush1.msra.mxu0 0.0
      %3170 = vmatprep.subr.mxu0 0.0
      %3171 = vmatpush1.msra.mxu0 0.0
      %3172 = vmatprep.subr.mxu0 0.0
      %3173 = vmatpush1.msra.mxu0 0.0
      %3174 = vmatprep.subr.mxu0 %v3142
      %3175 = vmatpush1.msra.mxu0 %v3139
      %3176 = vmatprep.subr.mxu0 0.0
      %3177 = vmatpush2.msra.mxu0 0.0
      %3178 = vmatprep.subr.mxu0 0.0
      %3179 = vmatpush2.msra.mxu0 0.0
      %3180 = vmatprep.subr.mxu0 0.0
      %3181 = vmatpush2.msra.mxu0 0.0
      %3182 = vmatprep.subr.mxu0 0.0
      %3183 = vmatpush2.msra.mxu0 0.0
      %3184 = vmatprep.subr.mxu0 0.0
      %3185 = vmatpush2.msra.mxu0 0.0
      %3186 = vmatprep.subr.mxu0 0.0
      %3187 = vmatpush2.msra.mxu0 0.0
      %3188 = vmatprep.subr.mxu0 0.0
      %3189 = vmatpush2.msra.mxu0 0.0
      %3190 = vmatprep.subr.mxu0 0.0
      %3191 = vmatpush2.msra.mxu0 0.0
      %3192 = vmatprep.subr.mxu0 0.0
      %3193 = vmatpush2.msra.mxu0 0.0
      %3194 = vmatprep.subr.mxu0 0.0
      %3195 = vmatpush2.msra.mxu0 0.0
      %3196 = vmatprep.subr.mxu0 0.0
      %3197 = vmatpush2.msra.mxu0 0.0
      %3198 = vmatprep.subr.mxu0 0.0
      %3199 = vmatpush2.msra.mxu0 0.0
      %3200 = vmatprep.subr.mxu0 0.0
      %3201 = vmatpush2.msra.mxu0 0.0
      %3202 = vmatprep.subr.mxu0 0.0
      %3203 = vmatpush2.msra.mxu0 0.0
      %3204 = vmatprep.subr.mxu0 0.0
      %3205 = vmatpush2.msra.mxu0 0.0
      %3206 = vmatprep.subr.mxu0 0.0
      %3207 = vmatpush2.msra.mxu0 0.0
      %3208 = vmatprep.mubr.f32.mxu0 0.0
      %3209 = vmatmul.mubr.f32.gmra.mxu0 %v3136
      %v3210 = vpop.f32.mrf.mxu0
      %v3211 = vadd.f32 0.0, %v3210
      %v3212 = vpop.f32.mrf.mxu0
      %v3213 = vadd.f32 0.0, %v3212
      %3214 = vdwg.mxu0
      %v3215 = vadd.f32 %v2901, %v3211
      %v3216 = vadd.f32 %v2902, %v3213
      %vm3217 = vcmask 1045504
      %v3218 = vrot.slane %v1326, 2
      %v3219 = vrot.slane %v1327, 2
      %v3220 = vsel %vm3217, %v3218, %v3219
      %v3221 = vrot.slane %v1328, 2
      %v3222 = vsel %vm3217, %v3219, %v3221
      %v3223 = vrot.slane %v1329, 2
      %v3224 = vrot.slane %v1330, 2
      %v3225 = vsel %vm3217, %v3223, %v3224
      %v3226 = vrot.slane %v1331, 2
      %v3227 = vsel %vm3217, %v3224, %v3226
      %v3228 = vrot.slane %v1332, 2
      %v3229 = vrot.slane %v1333, 2
      %v3230 = vsel %vm3217, %v3228, %v3229
      %v3231 = vrot.slane %v1334, 2
      %v3232 = vsel %vm3217, %v3229, %v3231
      %v3233 = vrot.slane %v1335, 2
      %v3234 = vrot.slane %v1336, 2
      %v3235 = vsel %vm3217, %v3233, %v3234
      %v3236 = vrot.slane %v1337, 2
      %v3237 = vsel %vm3217, %v3234, %v3236
      %v3246 = vcombine.low %v3220, %v3230
      %v3247 = vcombine.high %v3220, %v3230
      %v3249 = vunpack.c.l.s4 1983009808
      %v3250 = vunpack.c.0.s8 %v3249
      %v3251 = vlaneseq
      %v3252 = vshrl.u32 %v3251, 7
      %v3253 = vsub.s32 %v3250, %v3252
      %v3254 = vrot.slane %v3246, %v3253
      %v3256 = vunpack.c.l.s4 1983009808
      %v3257 = vunpack.c.0.s8 %v3256
      %v3258 = vlaneseq
      %v3259 = vshrl.u32 %v3258, 7
      %v3260 = vsub.s32 %v3257, %v3259
      %v3261 = vrot.slane %v3247, %v3260
      %v3262 = vcombine.low %v3225, %v3235
      %v3263 = vcombine.high %v3225, %v3235
      %v3265 = vunpack.c.l.s4 1983009808
      %v3266 = vunpack.c.0.s8 %v3265
      %v3267 = vlaneseq
      %v3268 = vshrl.u32 %v3267, 7
      %v3269 = vsub.s32 %v3266, %v3268
      %v3270 = vrot.slane %v3262, %v3269
      %v3272 = vunpack.c.l.s4 1983009808
      %v3273 = vunpack.c.0.s8 %v3272
      %v3274 = vlaneseq
      %v3275 = vshrl.u32 %v3274, 7
      %v3276 = vsub.s32 %v3273, %v3275
      %v3277 = vrot.slane %v3263, %v3276
      %v3278 = vcombine.low %v3254, %v3270
      %v3279 = vcombine.high %v3254, %v3270
      %v3281 = vunpack.c.l.s4 1934713408
      %v3282 = vunpack.c.0.s8 %v3281
      %v3283 = vlaneseq
      %v3284 = vshrl.u32 %v3283, 7
      %v3285 = vsub.s32 %v3282, %v3284
      %v3286 = vrot.slane %v3278, %v3285
      %v3288 = vunpack.c.l.s4 1934713408
      %v3289 = vunpack.c.0.s8 %v3288
      %v3290 = vlaneseq
      %v3291 = vshrl.u32 %v3290, 7
      %v3292 = vsub.s32 %v3289, %v3291
      %v3293 = vrot.slane %v3279, %v3292
      %v3294 = vcombine.low %v3261, %v3277
      %v3295 = vcombine.high %v3261, %v3277
      %v3297 = vunpack.c.l.s4 1934713408
      %v3298 = vunpack.c.0.s8 %v3297
      %v3299 = vlaneseq
      %v3300 = vshrl.u32 %v3299, 7
      %v3301 = vsub.s32 %v3298, %v3300
      %v3302 = vrot.slane %v3294, %v3301
      %v3304 = vunpack.c.l.s4 1934713408
      %v3305 = vunpack.c.0.s8 %v3304
      %v3306 = vlaneseq
      %v3307 = vshrl.u32 %v3306, 7
      %v3308 = vsub.s32 %v3305, %v3307
      %v3309 = vrot.slane %v3295, %v3308
      %v3310 = vcombine.high %v3286, 0.0
      %v3311 = vcombine.high %v3293, 0.0
      %v3312 = vcombine.high %v3302, 0.0
      %v3313 = vcombine.high %v3309, 0.0
      %v3314 = vcombine.low %v3222, %v3232
      %v3315 = vcombine.high %v3222, %v3232
      %v3317 = vunpack.c.l.s4 1983009808
      %v3318 = vunpack.c.0.s8 %v3317
      %v3319 = vlaneseq
      %v3320 = vshrl.u32 %v3319, 7
      %v3321 = vsub.s32 %v3318, %v3320
      %v3322 = vrot.slane %v3314, %v3321
      %v3324 = vunpack.c.l.s4 1983009808
      %v3325 = vunpack.c.0.s8 %v3324
      %v3326 = vlaneseq
      %v3327 = vshrl.u32 %v3326, 7
      %v3328 = vsub.s32 %v3325, %v3327
      %v3329 = vrot.slane %v3315, %v3328
      %v3330 = vcombine.low %v3227, %v3237
      %v3331 = vcombine.high %v3227, %v3237
      %v3333 = vunpack.c.l.s4 1983009808
      %v3334 = vunpack.c.0.s8 %v3333
      %v3335 = vlaneseq
      %v3336 = vshrl.u32 %v3335, 7
      %v3337 = vsub.s32 %v3334, %v3336
      %v3338 = vrot.slane %v3330, %v3337
      %v3340 = vunpack.c.l.s4 1983009808
      %v3341 = vunpack.c.0.s8 %v3340
      %v3342 = vlaneseq
      %v3343 = vshrl.u32 %v3342, 7
      %v3344 = vsub.s32 %v3341, %v3343
      %v3345 = vrot.slane %v3331, %v3344
      %v3346 = vcombine.low %v3322, %v3338
      %v3347 = vcombine.high %v3322, %v3338
      %v3349 = vunpack.c.l.s4 1934713408
      %v3350 = vunpack.c.0.s8 %v3349
      %v3351 = vlaneseq
      %v3352 = vshrl.u32 %v3351, 7
      %v3353 = vsub.s32 %v3350, %v3352
      %v3354 = vrot.slane %v3346, %v3353
      %v3356 = vunpack.c.l.s4 1934713408
      %v3357 = vunpack.c.0.s8 %v3356
      %v3358 = vlaneseq
      %v3359 = vshrl.u32 %v3358, 7
      %v3360 = vsub.s32 %v3357, %v3359
      %v3361 = vrot.slane %v3347, %v3360
      %v3362 = vcombine.low %v3329, %v3345
      %v3363 = vcombine.high %v3329, %v3345
      %v3365 = vunpack.c.l.s4 1934713408
      %v3366 = vunpack.c.0.s8 %v3365
      %v3367 = vlaneseq
      %v3368 = vshrl.u32 %v3367, 7
      %v3369 = vsub.s32 %v3366, %v3368
      %v3370 = vrot.slane %v3362, %v3369
      %v3372 = vunpack.c.l.s4 1934713408
      %v3373 = vunpack.c.0.s8 %v3372
      %v3374 = vlaneseq
      %v3375 = vshrl.u32 %v3374, 7
      %v3376 = vsub.s32 %v3373, %v3375
      %v3377 = vrot.slane %v3363, %v3376
      %v3378 = vcombine.high %v3354, 0.0
      %v3379 = vcombine.high %v3361, 0.0
      %v3380 = vcombine.high %v3370, 0.0
      %v3381 = vcombine.high %v3377, 0.0
      %3383 = vrot.lane.b32.xlu0 %v3310, 16
      %v3384 = vpop.permute.xlu0 %3383
      %3387 = vrot.lane.b32.xlu0 %v3293, 32
      %v3388 = vpop.permute.xlu0 %3387
      %3391 = vrot.lane.b32.xlu0 %v3311, 48
      %v3392 = vpop.permute.xlu0 %3391
      %3395 = vrot.lane.b32.xlu0 %v3302, 64
      %v3396 = vpop.permute.xlu0 %3395
      %3399 = vrot.lane.b32.xlu0 %v3312, 80
      %v3400 = vpop.permute.xlu0 %3399
      %3403 = vrot.lane.b32.xlu0 %v3309, 96
      %v3404 = vpop.permute.xlu0 %3403
      %3407 = vrot.lane.b32.xlu0 %v3313, 112
      %v3408 = vpop.permute.xlu0 %3407
      %3411 = vrot.lane.b32.xlu0 %v3378, 16
      %v3412 = vpop.permute.xlu0 %3411
      %3415 = vrot.lane.b32.xlu0 %v3361, 32
      %v3416 = vpop.permute.xlu0 %3415
      %3419 = vrot.lane.b32.xlu0 %v3379, 48
      %v3420 = vpop.permute.xlu0 %3419
      %3423 = vrot.lane.b32.xlu0 %v3370, 64
      %v3424 = vpop.permute.xlu0 %3423
      %3427 = vrot.lane.b32.xlu0 %v3380, 80
      %v3428 = vpop.permute.xlu0 %3427
      %3431 = vrot.lane.b32.xlu0 %v3377, 96
      %v3432 = vpop.permute.xlu0 %3431
      %3435 = vrot.lane.b32.xlu0 %v3381, 112
      %v3436 = vpop.permute.xlu0 %3435
      %v3438 = vsel %vm1530, %v3286, %v3384
      %v3439 = vsel %vm1532, %v3438, %v3388
      %v3440 = vsel %vm1534, %v3439, %v3392
      %v3441 = vsel %vm1536, %v3440, %v3396
      %v3442 = vsel %vm1538, %v3441, %v3400
      %v3443 = vsel %vm1540, %v3442, %v3404
      %v3444 = vsel %vm1542, %v3443, %v3408
      %v3445 = vsel %vm1530, %v3354, %v3412
      %v3446 = vsel %vm1532, %v3445, %v3416
      %v3447 = vsel %vm1534, %v3446, %v3420
      %v3448 = vsel %vm1536, %v3447, %v3424
      %v3449 = vsel %vm1538, %v3448, %v3428
      %v3450 = vsel %vm1540, %v3449, %v3432
      %v3451 = vsel %vm1542, %v3450, %v3436
      %s3452 = scalar_lea.vmem %s863, 24
      %v3453 = vld [vmem:[%s3452] sm:$0xf]
      %v3455 = vsel %vm932, %v3453, 0
      %v3458 = vsel %vm939, %v3444, 0
      %v3461 = vsel %vm939, %v3451, 0
      %3463 = vmatprep.subr.mxu0 0.0
      %3464 = vmatpush1.msra.mxu0 0.0
      %3465 = vmatprep.subr.mxu0 0.0
      %3466 = vmatpush1.msra.mxu0 0.0
      %3467 = vmatprep.subr.mxu0 0.0
      %3468 = vmatpush1.msra.mxu0 0.0
      %3469 = vmatprep.subr.mxu0 0.0
      %3470 = vmatpush1.msra.mxu0 0.0
      %3471 = vmatprep.subr.mxu0 0.0
      %3472 = vmatpush1.msra.mxu0 0.0
      %3473 = vmatprep.subr.mxu0 0.0
      %3474 = vmatpush1.msra.mxu0 0.0
      %3475 = vmatprep.subr.mxu0 0.0
      %3476 = vmatpush1.msra.mxu0 0.0
      %3477 = vmatprep.subr.mxu0 0.0
      %3478 = vmatpush1.msra.mxu0 0.0
      %3479 = vmatprep.subr.mxu0 0.0
      %3480 = vmatpush1.msra.mxu0 0.0
      %3481 = vmatprep.subr.mxu0 0.0
      %3482 = vmatpush1.msra.mxu0 0.0
      %3483 = vmatprep.subr.mxu0 0.0
      %3484 = vmatpush1.msra.mxu0 0.0
      %3485 = vmatprep.subr.mxu0 0.0
      %3486 = vmatpush1.msra.mxu0 0.0
      %3487 = vmatprep.subr.mxu0 0.0
      %3488 = vmatpush1.msra.mxu0 0.0
      %3489 = vmatprep.subr.mxu0 0.0
      %3490 = vmatpush1.msra.mxu0 0.0
      %3491 = vmatprep.subr.mxu0 0.0
      %3492 = vmatpush1.msra.mxu0 0.0
      %3493 = vmatprep.subr.mxu0 %v3461
      %3494 = vmatpush1.msra.mxu0 %v3458
      %3495 = vmatprep.subr.mxu0 0.0
      %3496 = vmatpush2.msra.mxu0 0.0
      %3497 = vmatprep.subr.mxu0 0.0
      %3498 = vmatpush2.msra.mxu0 0.0
      %3499 = vmatprep.subr.mxu0 0.0
      %3500 = vmatpush2.msra.mxu0 0.0
      %3501 = vmatprep.subr.mxu0 0.0
      %3502 = vmatpush2.msra.mxu0 0.0
      %3503 = vmatprep.subr.mxu0 0.0
      %3504 = vmatpush2.msra.mxu0 0.0
      %3505 = vmatprep.subr.mxu0 0.0
      %3506 = vmatpush2.msra.mxu0 0.0
      %3507 = vmatprep.subr.mxu0 0.0
      %3508 = vmatpush2.msra.mxu0 0.0
      %3509 = vmatprep.subr.mxu0 0.0
      %3510 = vmatpush2.msra.mxu0 0.0
      %3511 = vmatprep.subr.mxu0 0.0
      %3512 = vmatpush2.msra.mxu0 0.0
      %3513 = vmatprep.subr.mxu0 0.0
      %3514 = vmatpush2.msra.mxu0 0.0
      %3515 = vmatprep.subr.mxu0 0.0
      %3516 = vmatpush2.msra.mxu0 0.0
      %3517 = vmatprep.subr.mxu0 0.0
      %3518 = vmatpush2.msra.mxu0 0.0
      %3519 = vmatprep.subr.mxu0 0.0
      %3520 = vmatpush2.msra.mxu0 0.0
      %3521 = vmatprep.subr.mxu0 0.0
      %3522 = vmatpush2.msra.mxu0 0.0
      %3523 = vmatprep.subr.mxu0 0.0
      %3524 = vmatpush2.msra.mxu0 0.0
      %3525 = vmatprep.subr.mxu0 0.0
      %3526 = vmatpush2.msra.mxu0 0.0
      %3527 = vmatprep.mubr.f32.mxu0 0.0
      %3528 = vmatmul.mubr.f32.gmra.mxu0 %v3455
      %v3529 = vpop.f32.mrf.mxu0
      %v3530 = vadd.f32 0.0, %v3529
      %v3531 = vpop.f32.mrf.mxu0
      %v3532 = vadd.f32 0.0, %v3531
      %3533 = vdwg.mxu0
      %v3534 = vadd.f32 %v3215, %v3530
      %v3535 = vadd.f32 %v3216, %v3532
      %3536 = vrot.lane.b32.xlu0 %v3220, 127
      %v3537 = vpop.permute.xlu0 %3536
      %3538 = vrot.lane.b32.xlu0 %v3222, 127
      %v3539 = vpop.permute.xlu0 %3538
      %3540 = vrot.lane.b32.xlu0 %v3225, 127
      %v3541 = vpop.permute.xlu0 %3540
      %3542 = vrot.lane.b32.xlu0 %v3227, 127
      %v3543 = vpop.permute.xlu0 %3542
      %3544 = vrot.lane.b32.xlu0 %v3230, 127
      %v3545 = vpop.permute.xlu0 %3544
      %3546 = vrot.lane.b32.xlu0 %v3232, 127
      %v3547 = vpop.permute.xlu0 %3546
      %3548 = vrot.lane.b32.xlu0 %v3235, 127
      %v3549 = vpop.permute.xlu0 %3548
      %3550 = vrot.lane.b32.xlu0 %v3237, 127
      %v3551 = vpop.permute.xlu0 %3550
      %v3560 = vcombine.low %v3537, %v3545
      %v3561 = vcombine.high %v3537, %v3545
      %v3563 = vunpack.c.l.s4 1983009808
      %v3564 = vunpack.c.0.s8 %v3563
      %v3565 = vlaneseq
      %v3566 = vshrl.u32 %v3565, 7
      %v3567 = vsub.s32 %v3564, %v3566
      %v3568 = vrot.slane %v3560, %v3567
      %v3570 = vunpack.c.l.s4 1983009808
      %v3571 = vunpack.c.0.s8 %v3570
      %v3572 = vlaneseq
      %v3573 = vshrl.u32 %v3572, 7
      %v3574 = vsub.s32 %v3571, %v3573
      %v3575 = vrot.slane %v3561, %v3574
      %v3576 = vcombine.low %v3541, %v3549
      %v3577 = vcombine.high %v3541, %v3549
      %v3579 = vunpack.c.l.s4 1983009808
      %v3580 = vunpack.c.0.s8 %v3579
      %v3581 = vlaneseq
      %v3582 = vshrl.u32 %v3581, 7
      %v3583 = vsub.s32 %v3580, %v3582
      %v3584 = vrot.slane %v3576, %v3583
      %v3586 = vunpack.c.l.s4 1983009808
      %v3587 = vunpack.c.0.s8 %v3586
      %v3588 = vlaneseq
      %v3589 = vshrl.u32 %v3588, 7
      %v3590 = vsub.s32 %v3587, %v3589
      %v3591 = vrot.slane %v3577, %v3590
      %v3592 = vcombine.low %v3568, %v3584
      %v3593 = vcombine.high %v3568, %v3584
      %v3595 = vunpack.c.l.s4 1934713408
      %v3596 = vunpack.c.0.s8 %v3595
      %v3597 = vlaneseq
      %v3598 = vshrl.u32 %v3597, 7
      %v3599 = vsub.s32 %v3596, %v3598
      %v3600 = vrot.slane %v3592, %v3599
      %v3602 = vunpack.c.l.s4 1934713408
      %v3603 = vunpack.c.0.s8 %v3602
      %v3604 = vlaneseq
      %v3605 = vshrl.u32 %v3604, 7
      %v3606 = vsub.s32 %v3603, %v3605
      %v3607 = vrot.slane %v3593, %v3606
      %v3608 = vcombine.low %v3575, %v3591
      %v3609 = vcombine.high %v3575, %v3591
      %v3611 = vunpack.c.l.s4 1934713408
      %v3612 = vunpack.c.0.s8 %v3611
      %v3613 = vlaneseq
      %v3614 = vshrl.u32 %v3613, 7
      %v3615 = vsub.s32 %v3612, %v3614
      %v3616 = vrot.slane %v3608, %v3615
      %v3618 = vunpack.c.l.s4 1934713408
      %v3619 = vunpack.c.0.s8 %v3618
      %v3620 = vlaneseq
      %v3621 = vshrl.u32 %v3620, 7
      %v3622 = vsub.s32 %v3619, %v3621
      %v3623 = vrot.slane %v3609, %v3622
      %v3624 = vcombine.high %v3600, 0.0
      %v3625 = vcombine.high %v3607, 0.0
      %v3626 = vcombine.high %v3616, 0.0
      %v3627 = vcombine.high %v3623, 0.0
      %v3628 = vcombine.low %v3539, %v3547
      %v3629 = vcombine.high %v3539, %v3547
      %v3631 = vunpack.c.l.s4 1983009808
      %v3632 = vunpack.c.0.s8 %v3631
      %v3633 = vlaneseq
      %v3634 = vshrl.u32 %v3633, 7
      %v3635 = vsub.s32 %v3632, %v3634
      %v3636 = vrot.slane %v3628, %v3635
      %v3638 = vunpack.c.l.s4 1983009808
      %v3639 = vunpack.c.0.s8 %v3638
      %v3640 = vlaneseq
      %v3641 = vshrl.u32 %v3640, 7
      %v3642 = vsub.s32 %v3639, %v3641
      %v3643 = vrot.slane %v3629, %v3642
      %v3644 = vcombine.low %v3543, %v3551
      %v3645 = vcombine.high %v3543, %v3551
      %v3647 = vunpack.c.l.s4 1983009808
      %v3648 = vunpack.c.0.s8 %v3647
      %v3649 = vlaneseq
      %v3650 = vshrl.u32 %v3649, 7
      %v3651 = vsub.s32 %v3648, %v3650
      %v3652 = vrot.slane %v3644, %v3651
      %v3654 = vunpack.c.l.s4 1983009808
      %v3655 = vunpack.c.0.s8 %v3654
      %v3656 = vlaneseq
      %v3657 = vshrl.u32 %v3656, 7
      %v3658 = vsub.s32 %v3655, %v3657
      %v3659 = vrot.slane %v3645, %v3658
      %v3660 = vcombine.low %v3636, %v3652
      %v3661 = vcombine.high %v3636, %v3652
      %v3663 = vunpack.c.l.s4 1934713408
      %v3664 = vunpack.c.0.s8 %v3663
      %v3665 = vlaneseq
      %v3666 = vshrl.u32 %v3665, 7
      %v3667 = vsub.s32 %v3664, %v3666
      %v3668 = vrot.slane %v3660, %v3667
      %v3670 = vunpack.c.l.s4 1934713408
      %v3671 = vunpack.c.0.s8 %v3670
      %v3672 = vlaneseq
      %v3673 = vshrl.u32 %v3672, 7
      %v3674 = vsub.s32 %v3671, %v3673
      %v3675 = vrot.slane %v3661, %v3674
      %v3676 = vcombine.low %v3643, %v3659
      %v3677 = vcombine.high %v3643, %v3659
      %v3679 = vunpack.c.l.s4 1934713408
      %v3680 = vunpack.c.0.s8 %v3679
      %v3681 = vlaneseq
      %v3682 = vshrl.u32 %v3681, 7
      %v3683 = vsub.s32 %v3680, %v3682
      %v3684 = vrot.slane %v3676, %v3683
      %v3686 = vunpack.c.l.s4 1934713408
      %v3687 = vunpack.c.0.s8 %v3686
      %v3688 = vlaneseq
      %v3689 = vshrl.u32 %v3688, 7
      %v3690 = vsub.s32 %v3687, %v3689
      %v3691 = vrot.slane %v3677, %v3690
      %v3692 = vcombine.high %v3668, 0.0
      %v3693 = vcombine.high %v3675, 0.0
      %v3694 = vcombine.high %v3684, 0.0
      %v3695 = vcombine.high %v3691, 0.0
      %3697 = vrot.lane.b32.xlu0 %v3624, 16
      %v3698 = vpop.permute.xlu0 %3697
      %3701 = vrot.lane.b32.xlu0 %v3607, 32
      %v3702 = vpop.permute.xlu0 %3701
      %3705 = vrot.lane.b32.xlu0 %v3625, 48
      %v3706 = vpop.permute.xlu0 %3705
      %3709 = vrot.lane.b32.xlu0 %v3616, 64
      %v3710 = vpop.permute.xlu0 %3709
      %3713 = vrot.lane.b32.xlu0 %v3626, 80
      %v3714 = vpop.permute.xlu0 %3713
      %3717 = vrot.lane.b32.xlu0 %v3623, 96
      %v3718 = vpop.permute.xlu0 %3717
      %3721 = vrot.lane.b32.xlu0 %v3627, 112
      %v3722 = vpop.permute.xlu0 %3721
      %3725 = vrot.lane.b32.xlu0 %v3692, 16
      %v3726 = vpop.permute.xlu0 %3725
      %3729 = vrot.lane.b32.xlu0 %v3675, 32
      %v3730 = vpop.permute.xlu0 %3729
      %3733 = vrot.lane.b32.xlu0 %v3693, 48
      %v3734 = vpop.permute.xlu0 %3733
      %3737 = vrot.lane.b32.xlu0 %v3684, 64
      %v3738 = vpop.permute.xlu0 %3737
      %3741 = vrot.lane.b32.xlu0 %v3694, 80
      %v3742 = vpop.permute.xlu0 %3741
      %3745 = vrot.lane.b32.xlu0 %v3691, 96
      %v3746 = vpop.permute.xlu0 %3745
      %3749 = vrot.lane.b32.xlu0 %v3695, 112
      %v3750 = vpop.permute.xlu0 %3749
      %v3752 = vsel %vm1530, %v3600, %v3698
      %v3753 = vsel %vm1532, %v3752, %v3702
      %v3754 = vsel %vm1534, %v3753, %v3706
      %v3755 = vsel %vm1536, %v3754, %v3710
      %v3756 = vsel %vm1538, %v3755, %v3714
      %v3757 = vsel %vm1540, %v3756, %v3718
      %v3758 = vsel %vm1542, %v3757, %v3722
      %v3759 = vsel %vm1530, %v3668, %v3726
      %v3760 = vsel %vm1532, %v3759, %v3730
      %v3761 = vsel %vm1534, %v3760, %v3734
      %v3762 = vsel %vm1536, %v3761, %v3738
      %v3763 = vsel %vm1538, %v3762, %v3742
      %v3764 = vsel %vm1540, %v3763, %v3746
      %v3765 = vsel %vm1542, %v3764, %v3750
      %s3766 = scalar_lea.vmem %s863, 28
      %v3767 = vld [vmem:[%s3766] sm:$0xf]
      %v3769 = vsel %vm932, %v3767, 0
      %v3772 = vsel %vm939, %v3758, 0
      %v3775 = vsel %vm939, %v3765, 0
      %3777 = vmatprep.subr.mxu0 0.0
      %3778 = vmatpush1.msra.mxu0 0.0
      %3779 = vmatprep.subr.mxu0 0.0
      %3780 = vmatpush1.msra.mxu0 0.0
      %3781 = vmatprep.subr.mxu0 0.0
      %3782 = vmatpush1.msra.mxu0 0.0
      %3783 = vmatprep.subr.mxu0 0.0
      %3784 = vmatpush1.msra.mxu0 0.0
      %3785 = vmatprep.subr.mxu0 0.0
      %3786 = vmatpush1.msra.mxu0 0.0
      %3787 = vmatprep.subr.mxu0 0.0
      %3788 = vmatpush1.msra.mxu0 0.0
      %3789 = vmatprep.subr.mxu0 0.0
      %3790 = vmatpush1.msra.mxu0 0.0
      %3791 = vmatprep.subr.mxu0 0.0
      %3792 = vmatpush1.msra.mxu0 0.0
      %3793 = vmatprep.subr.mxu0 0.0
      %3794 = vmatpush1.msra.mxu0 0.0
      %3795 = vmatprep.subr.mxu0 0.0
      %3796 = vmatpush1.msra.mxu0 0.0
      %3797 = vmatprep.subr.mxu0 0.0
      %3798 = vmatpush1.msra.mxu0 0.0
      %3799 = vmatprep.subr.mxu0 0.0
      %3800 = vmatpush1.msra.mxu0 0.0
      %3801 = vmatprep.subr.mxu0 0.0
      %3802 = vmatpush1.msra.mxu0 0.0
      %3803 = vmatprep.subr.mxu0 0.0
      %3804 = vmatpush1.msra.mxu0 0.0
      %3805 = vmatprep.subr.mxu0 0.0
      %3806 = vmatpush1.msra.mxu0 0.0
      %3807 = vmatprep.subr.mxu0 %v3775
      %3808 = vmatpush1.msra.mxu0 %v3772
      %3809 = vmatprep.subr.mxu0 0.0
      %3810 = vmatpush2.msra.mxu0 0.0
      %3811 = vmatprep.subr.mxu0 0.0
      %3812 = vmatpush2.msra.mxu0 0.0
      %3813 = vmatprep.subr.mxu0 0.0
      %3814 = vmatpush2.msra.mxu0 0.0
      %3815 = vmatprep.subr.mxu0 0.0
      %3816 = vmatpush2.msra.mxu0 0.0
      %3817 = vmatprep.subr.mxu0 0.0
      %3818 = vmatpush2.msra.mxu0 0.0
      %3819 = vmatprep.subr.mxu0 0.0
      %3820 = vmatpush2.msra.mxu0 0.0
      %3821 = vmatprep.subr.mxu0 0.0
      %3822 = vmatpush2.msra.mxu0 0.0
      %3823 = vmatprep.subr.mxu0 0.0
      %3824 = vmatpush2.msra.mxu0 0.0
      %3825 = vmatprep.subr.mxu0 0.0
      %3826 = vmatpush2.msra.mxu0 0.0
      %3827 = vmatprep.subr.mxu0 0.0
      %3828 = vmatpush2.msra.mxu0 0.0
      %3829 = vmatprep.subr.mxu0 0.0
      %3830 = vmatpush2.msra.mxu0 0.0
      %3831 = vmatprep.subr.mxu0 0.0
      %3832 = vmatpush2.msra.mxu0 0.0
      %3833 = vmatprep.subr.mxu0 0.0
      %3834 = vmatpush2.msra.mxu0 0.0
      %3835 = vmatprep.subr.mxu0 0.0
      %3836 = vmatpush2.msra.mxu0 0.0
      %3837 = vmatprep.subr.mxu0 0.0
      %3838 = vmatpush2.msra.mxu0 0.0
      %3839 = vmatprep.subr.mxu0 0.0
      %3840 = vmatpush2.msra.mxu0 0.0
      %3841 = vmatprep.mubr.f32.mxu0 0.0
      %3842 = vmatmul.mubr.f32.gmra.mxu0 %v3769
      %v3843 = vpop.f32.mrf.mxu0
      %v3844 = vadd.f32 0.0, %v3843
      %v3845 = vpop.f32.mrf.mxu0
      %v3846 = vadd.f32 0.0, %v3845
      %3847 = vdwg.mxu0
      %v3848 = vadd.f32 %v3534, %v3844
      %v3849 = vadd.f32 %v3535, %v3846
      %3850 = vrot.lane.b32.xlu0 %v3220, 126
      %v3851 = vpop.permute.xlu0 %3850
      %3852 = vrot.lane.b32.xlu0 %v3222, 126
      %v3853 = vpop.permute.xlu0 %3852
      %3854 = vrot.lane.b32.xlu0 %v3225, 126
      %v3855 = vpop.permute.xlu0 %3854
      %3856 = vrot.lane.b32.xlu0 %v3227, 126
      %v3857 = vpop.permute.xlu0 %3856
      %3858 = vrot.lane.b32.xlu0 %v3230, 126
      %v3859 = vpop.permute.xlu0 %3858
      %3860 = vrot.lane.b32.xlu0 %v3232, 126
      %v3861 = vpop.permute.xlu0 %3860
      %3862 = vrot.lane.b32.xlu0 %v3235, 126
      %v3863 = vpop.permute.xlu0 %3862
      %3864 = vrot.lane.b32.xlu0 %v3237, 126
      %v3865 = vpop.permute.xlu0 %3864
      %v3874 = vcombine.low %v3851, %v3859
      %v3875 = vcombine.high %v3851, %v3859
      %v3877 = vunpack.c.l.s4 1983009808
      %v3878 = vunpack.c.0.s8 %v3877
      %v3879 = vlaneseq
      %v3880 = vshrl.u32 %v3879, 7
      %v3881 = vsub.s32 %v3878, %v3880
      %v3882 = vrot.slane %v3874, %v3881
      %v3884 = vunpack.c.l.s4 1983009808
      %v3885 = vunpack.c.0.s8 %v3884
      %v3886 = vlaneseq
      %v3887 = vshrl.u32 %v3886, 7
      %v3888 = vsub.s32 %v3885, %v3887
      %v3889 = vrot.slane %v3875, %v3888
      %v3890 = vcombine.low %v3855, %v3863
      %v3891 = vcombine.high %v3855, %v3863
      %v3893 = vunpack.c.l.s4 1983009808
      %v3894 = vunpack.c.0.s8 %v3893
      %v3895 = vlaneseq
      %v3896 = vshrl.u32 %v3895, 7
      %v3897 = vsub.s32 %v3894, %v3896
      %v3898 = vrot.slane %v3890, %v3897
      %v3900 = vunpack.c.l.s4 1983009808
      %v3901 = vunpack.c.0.s8 %v3900
      %v3902 = vlaneseq
      %v3903 = vshrl.u32 %v3902, 7
      %v3904 = vsub.s32 %v3901, %v3903
      %v3905 = vrot.slane %v3891, %v3904
      %v3906 = vcombine.low %v3882, %v3898
      %v3907 = vcombine.high %v3882, %v3898
      %v3909 = vunpack.c.l.s4 1934713408
      %v3910 = vunpack.c.0.s8 %v3909
      %v3911 = vlaneseq
      %v3912 = vshrl.u32 %v3911, 7
      %v3913 = vsub.s32 %v3910, %v3912
      %v3914 = vrot.slane %v3906, %v3913
      %v3916 = vunpack.c.l.s4 1934713408
      %v3917 = vunpack.c.0.s8 %v3916
      %v3918 = vlaneseq
      %v3919 = vshrl.u32 %v3918, 7
      %v3920 = vsub.s32 %v3917, %v3919
      %v3921 = vrot.slane %v3907, %v3920
      %v3922 = vcombine.low %v3889, %v3905
      %v3923 = vcombine.high %v3889, %v3905
      %v3925 = vunpack.c.l.s4 1934713408
      %v3926 = vunpack.c.0.s8 %v3925
      %v3927 = vlaneseq
      %v3928 = vshrl.u32 %v3927, 7
      %v3929 = vsub.s32 %v3926, %v3928
      %v3930 = vrot.slane %v3922, %v3929
      %v3932 = vunpack.c.l.s4 1934713408
      %v3933 = vunpack.c.0.s8 %v3932
      %v3934 = vlaneseq
      %v3935 = vshrl.u32 %v3934, 7
      %v3936 = vsub.s32 %v3933, %v3935
      %v3937 = vrot.slane %v3923, %v3936
      %v3938 = vcombine.high %v3914, 0.0
      %v3939 = vcombine.high %v3921, 0.0
      %v3940 = vcombine.high %v3930, 0.0
      %v3941 = vcombine.high %v3937, 0.0
      %v3942 = vcombine.low %v3853, %v3861
      %v3943 = vcombine.high %v3853, %v3861
      %v3945 = vunpack.c.l.s4 1983009808
      %v3946 = vunpack.c.0.s8 %v3945
      %v3947 = vlaneseq
      %v3948 = vshrl.u32 %v3947, 7
      %v3949 = vsub.s32 %v3946, %v3948
      %v3950 = vrot.slane %v3942, %v3949
      %v3952 = vunpack.c.l.s4 1983009808
      %v3953 = vunpack.c.0.s8 %v3952
      %v3954 = vlaneseq
      %v3955 = vshrl.u32 %v3954, 7
      %v3956 = vsub.s32 %v3953, %v3955
      %v3957 = vrot.slane %v3943, %v3956
      %v3958 = vcombine.low %v3857, %v3865
      %v3959 = vcombine.high %v3857, %v3865
      %v3961 = vunpack.c.l.s4 1983009808
      %v3962 = vunpack.c.0.s8 %v3961
      %v3963 = vlaneseq
      %v3964 = vshrl.u32 %v3963, 7
      %v3965 = vsub.s32 %v3962, %v3964
      %v3966 = vrot.slane %v3958, %v3965
      %v3968 = vunpack.c.l.s4 1983009808
      %v3969 = vunpack.c.0.s8 %v3968
      %v3970 = vlaneseq
      %v3971 = vshrl.u32 %v3970, 7
      %v3972 = vsub.s32 %v3969, %v3971
      %v3973 = vrot.slane %v3959, %v3972
      %v3974 = vcombine.low %v3950, %v3966
      %v3975 = vcombine.high %v3950, %v3966
      %v3977 = vunpack.c.l.s4 1934713408
      %v3978 = vunpack.c.0.s8 %v3977
      %v3979 = vlaneseq
      %v3980 = vshrl.u32 %v3979, 7
      %v3981 = vsub.s32 %v3978, %v3980
      %v3982 = vrot.slane %v3974, %v3981
      %v3984 = vunpack.c.l.s4 1934713408
      %v3985 = vunpack.c.0.s8 %v3984
      %v3986 = vlaneseq
      %v3987 = vshrl.u32 %v3986, 7
      %v3988 = vsub.s32 %v3985, %v3987
      %v3989 = vrot.slane %v3975, %v3988
      %v3990 = vcombine.low %v3957, %v3973
      %v3991 = vcombine.high %v3957, %v3973
      %v3993 = vunpack.c.l.s4 1934713408
      %v3994 = vunpack.c.0.s8 %v3993
      %v3995 = vlaneseq
      %v3996 = vshrl.u32 %v3995, 7
      %v3997 = vsub.s32 %v3994, %v3996
      %v3998 = vrot.slane %v3990, %v3997
      %v4000 = vunpack.c.l.s4 1934713408
      %v4001 = vunpack.c.0.s8 %v4000
      %v4002 = vlaneseq
      %v4003 = vshrl.u32 %v4002, 7
      %v4004 = vsub.s32 %v4001, %v4003
      %v4005 = vrot.slane %v3991, %v4004
      %v4006 = vcombine.high %v3982, 0.0
      %v4007 = vcombine.high %v3989, 0.0
      %v4008 = vcombine.high %v3998, 0.0
      %v4009 = vcombine.high %v4005, 0.0
      %4011 = vrot.lane.b32.xlu0 %v3938, 16
      %v4012 = vpop.permute.xlu0 %4011
      %4015 = vrot.lane.b32.xlu0 %v3921, 32
      %v4016 = vpop.permute.xlu0 %4015
      %4019 = vrot.lane.b32.xlu0 %v3939, 48
      %v4020 = vpop.permute.xlu0 %4019
      %4023 = vrot.lane.b32.xlu0 %v3930, 64
      %v4024 = vpop.permute.xlu0 %4023
      %4027 = vrot.lane.b32.xlu0 %v3940, 80
      %v4028 = vpop.permute.xlu0 %4027
      %4031 = vrot.lane.b32.xlu0 %v3937, 96
      %v4032 = vpop.permute.xlu0 %4031
      %4035 = vrot.lane.b32.xlu0 %v3941, 112
      %v4036 = vpop.permute.xlu0 %4035
      %4039 = vrot.lane.b32.xlu0 %v4006, 16
      %v4040 = vpop.permute.xlu0 %4039
      %4043 = vrot.lane.b32.xlu0 %v3989, 32
      %v4044 = vpop.permute.xlu0 %4043
      %4047 = vrot.lane.b32.xlu0 %v4007, 48
      %v4048 = vpop.permute.xlu0 %4047
      %4051 = vrot.lane.b32.xlu0 %v3998, 64
      %v4052 = vpop.permute.xlu0 %4051
      %4055 = vrot.lane.b32.xlu0 %v4008, 80
      %v4056 = vpop.permute.xlu0 %4055
      %4059 = vrot.lane.b32.xlu0 %v4005, 96
      %v4060 = vpop.permute.xlu0 %4059
      %4063 = vrot.lane.b32.xlu0 %v4009, 112
      %v4064 = vpop.permute.xlu0 %4063
      %v4066 = vsel %vm1530, %v3914, %v4012
      %v4067 = vsel %vm1532, %v4066, %v4016
      %v4068 = vsel %vm1534, %v4067, %v4020
      %v4069 = vsel %vm1536, %v4068, %v4024
      %v4070 = vsel %vm1538, %v4069, %v4028
      %v4071 = vsel %vm1540, %v4070, %v4032
      %v4072 = vsel %vm1542, %v4071, %v4036
      %v4073 = vsel %vm1530, %v3982, %v4040
      %v4074 = vsel %vm1532, %v4073, %v4044
      %v4075 = vsel %vm1534, %v4074, %v4048
      %v4076 = vsel %vm1536, %v4075, %v4052
      %v4077 = vsel %vm1538, %v4076, %v4056
      %v4078 = vsel %vm1540, %v4077, %v4060
      %v4079 = vsel %vm1542, %v4078, %v4064
      %s4080 = scalar_lea.vmem %s863, 32
      %v4081 = vld [vmem:[%s4080] sm:$0xf]
      %v4083 = vsel %vm932, %v4081, 0
      %v4086 = vsel %vm939, %v4072, 0
      %v4089 = vsel %vm939, %v4079, 0
      %4091 = vmatprep.subr.mxu0 0.0
      %4092 = vmatpush1.msra.mxu0 0.0
      %4093 = vmatprep.subr.mxu0 0.0
      %4094 = vmatpush1.msra.mxu0 0.0
      %4095 = vmatprep.subr.mxu0 0.0
      %4096 = vmatpush1.msra.mxu0 0.0
      %4097 = vmatprep.subr.mxu0 0.0
      %4098 = vmatpush1.msra.mxu0 0.0
      %4099 = vmatprep.subr.mxu0 0.0
      %4100 = vmatpush1.msra.mxu0 0.0
      %4101 = vmatprep.subr.mxu0 0.0
      %4102 = vmatpush1.msra.mxu0 0.0
      %4103 = vmatprep.subr.mxu0 0.0
      %4104 = vmatpush1.msra.mxu0 0.0
      %4105 = vmatprep.subr.mxu0 0.0
      %4106 = vmatpush1.msra.mxu0 0.0
      %4107 = vmatprep.subr.mxu0 0.0
      %4108 = vmatpush1.msra.mxu0 0.0
      %4109 = vmatprep.subr.mxu0 0.0
      %4110 = vmatpush1.msra.mxu0 0.0
      %4111 = vmatprep.subr.mxu0 0.0
      %4112 = vmatpush1.msra.mxu0 0.0
      %4113 = vmatprep.subr.mxu0 0.0
      %4114 = vmatpush1.msra.mxu0 0.0
      %4115 = vmatprep.subr.mxu0 0.0
      %4116 = vmatpush1.msra.mxu0 0.0
      %4117 = vmatprep.subr.mxu0 0.0
      %4118 = vmatpush1.msra.mxu0 0.0
      %4119 = vmatprep.subr.mxu0 0.0
      %4120 = vmatpush1.msra.mxu0 0.0
      %4121 = vmatprep.subr.mxu0 %v4089
      %4122 = vmatpush1.msra.mxu0 %v4086
      %4123 = vmatprep.subr.mxu0 0.0
      %4124 = vmatpush2.msra.mxu0 0.0
      %4125 = vmatprep.subr.mxu0 0.0
      %4126 = vmatpush2.msra.mxu0 0.0
      %4127 = vmatprep.subr.mxu0 0.0
      %4128 = vmatpush2.msra.mxu0 0.0
      %4129 = vmatprep.subr.mxu0 0.0
      %4130 = vmatpush2.msra.mxu0 0.0
      %4131 = vmatprep.subr.mxu0 0.0
      %4132 = vmatpush2.msra.mxu0 0.0
      %4133 = vmatprep.subr.mxu0 0.0
      %4134 = vmatpush2.msra.mxu0 0.0
      %4135 = vmatprep.subr.mxu0 0.0
      %4136 = vmatpush2.msra.mxu0 0.0
      %4137 = vmatprep.subr.mxu0 0.0
      %4138 = vmatpush2.msra.mxu0 0.0
      %4139 = vmatprep.subr.mxu0 0.0
      %4140 = vmatpush2.msra.mxu0 0.0
      %4141 = vmatprep.subr.mxu0 0.0
      %4142 = vmatpush2.msra.mxu0 0.0
      %4143 = vmatprep.subr.mxu0 0.0
      %4144 = vmatpush2.msra.mxu0 0.0
      %4145 = vmatprep.subr.mxu0 0.0
      %4146 = vmatpush2.msra.mxu0 0.0
      %4147 = vmatprep.subr.mxu0 0.0
      %4148 = vmatpush2.msra.mxu0 0.0
      %4149 = vmatprep.subr.mxu0 0.0
      %4150 = vmatpush2.msra.mxu0 0.0
      %4151 = vmatprep.subr.mxu0 0.0
      %4152 = vmatpush2.msra.mxu0 0.0
      %4153 = vmatprep.subr.mxu0 0.0
      %4154 = vmatpush2.msra.mxu0 0.0
      %4155 = vmatprep.mubr.f32.mxu0 0.0
      %4156 = vmatmul.mubr.f32.gmra.mxu0 %v4083
      %v4157 = vpop.f32.mrf.mxu0
      %v4158 = vadd.f32 0.0, %v4157
      %v4159 = vpop.f32.mrf.mxu0
      %v4160 = vadd.f32 0.0, %v4159
      %4161 = vdwg.mxu0
      %v4162 = vadd.f32 %v3848, %v4158
      %v4163 = vadd.f32 %v3849, %v4160
      %v4164 = vld [vmem:[%s867] sm:$0xf]
      %4166 = vset.pattern.permute.xlu0 0
      %4167 = vperm.xlu0 %4166, %v4164
      %v4168 = vpop.permute.xlu0 %4167
      %v4170 = vadd.f32 %v4162, %v4168
      %v4171 = vadd.f32 %v4163, %v4168
      %v4172 = vld [vmem:[%s871] sm:$0xf]
      %v4173 = vld [vmem:[%s875] sm:$0xf]
      %v4174 = vsel %vm939, %v4170, 0.0
      %v4175 = vsel %vm939, %v4171, 0.0
      %v4176 = vadd.f32 %v4174, %v4175
      %4177 = vadd.xlane.f32.xlu0 %v4176
      %v4178 = vpop.xlane.xlu0 %4177
      %v4179 = vmul.f32 %v4178, 0.00390625
      %v4180 = vmul.f32 %v4170, %v4170
      %v4181 = vmul.f32 %v4171, %v4171
      %v4182 = vsel %vm939, %v4180, 0.0
      %v4183 = vsel %vm939, %v4181, 0.0
      %v4184 = vadd.f32 %v4182, %v4183
      %4185 = vadd.xlane.f32.xlu0 %v4184
      %v4186 = vpop.xlane.xlu0 %4185
      %v4187 = vmul.f32 %v4186, 0.00390625
      %v4188 = vmul.f32 %v4179, %v4179
      %v4189 = vsub.f32 %v4187, %v4188
      %v4190 = vadd.f32 %v4189, 1e-05
      %v4191 = vrsqrt.pop %v4190
      %v4192 = vmul.f32 %v4172, %v4191
      %v4193 = vmul.f32 %v4179, %v4192
      %v4194 = vsub.f32 %v4173, %v4193
      %4196 = vset.pattern.permute.xlu0 0
      %4197 = vperm.xlu0 %4196, %v4192
      %v4198 = vpop.permute.xlu0 %4197
      %v4200 = vmul.f32 %v4170, %v4198
      %v4201 = vmul.f32 %v4171, %v4198
      %4203 = vset.pattern.permute.xlu0 0
      %4204 = vperm.xlu0 %4203, %v4194
      %v4205 = vpop.permute.xlu0 %4204
      %v4207 = vadd.f32 %v4200, %v4205
      %v4208 = vadd.f32 %v4201, %v4205
      %v4209 = vmax.f32 %v4207, 0.0
      %v4210 = vmax.f32 %v4208, 0.0
      %v4211 = vrot.slane %v1087, 4
      %v4212 = vrot.slane %v1088, 4
      %v4215 = vadd.f32 %v4209, %v4211
      %v4216 = vadd.f32 %v4210, %v4212
      %v4217 = vld [vmem:[%s879] sm:$0xf]
      %v4218 = vld [vmem:[%s883] sm:$0xf]
      %4220 = vset.pattern.permute.xlu0 0
      %4221 = vperm.xlu0 %4220, %v4218
      %v4222 = vpop.permute.xlu0 %4221
      %v4225 = vsel %vm932, %v4217, 0
      %v4228 = vsel %vm939, %v4215, 0
      %v4231 = vsel %vm939, %v4216, 0
      %4233 = vmatprep.subr.mxu0 0.0
      %4234 = vmatpush1.msra.mxu0 0.0
      %4235 = vmatprep.subr.mxu0 0.0
      %4236 = vmatpush1.msra.mxu0 0.0
      %4237 = vmatprep.subr.mxu0 0.0
      %4238 = vmatpush1.msra.mxu0 0.0
      %4239 = vmatprep.subr.mxu0 0.0
      %4240 = vmatpush1.msra.mxu0 0.0
      %4241 = vmatprep.subr.mxu0 0.0
      %4242 = vmatpush1.msra.mxu0 0.0
      %4243 = vmatprep.subr.mxu0 0.0
      %4244 = vmatpush1.msra.mxu0 0.0
      %4245 = vmatprep.subr.mxu0 0.0
      %4246 = vmatpush1.msra.mxu0 0.0
      %4247 = vmatprep.subr.mxu0 0.0
      %4248 = vmatpush1.msra.mxu0 0.0
      %4249 = vmatprep.subr.mxu0 0.0
      %4250 = vmatpush1.msra.mxu0 0.0
      %4251 = vmatprep.subr.mxu0 0.0
      %4252 = vmatpush1.msra.mxu0 0.0
      %4253 = vmatprep.subr.mxu0 0.0
      %4254 = vmatpush1.msra.mxu0 0.0
      %4255 = vmatprep.subr.mxu0 0.0
      %4256 = vmatpush1.msra.mxu0 0.0
      %4257 = vmatprep.subr.mxu0 0.0
      %4258 = vmatpush1.msra.mxu0 0.0
      %4259 = vmatprep.subr.mxu0 0.0
      %4260 = vmatpush1.msra.mxu0 0.0
      %4261 = vmatprep.subr.mxu0 0.0
      %4262 = vmatpush1.msra.mxu0 0.0
      %4263 = vmatprep.subr.mxu0 %v4231
      %4264 = vmatpush1.msra.mxu0 %v4228
      %4265 = vmatprep.subr.mxu0 0.0
      %4266 = vmatpush2.msra.mxu0 0.0
      %4267 = vmatprep.subr.mxu0 0.0
      %4268 = vmatpush2.msra.mxu0 0.0
      %4269 = vmatprep.subr.mxu0 0.0
      %4270 = vmatpush2.msra.mxu0 0.0
      %4271 = vmatprep.subr.mxu0 0.0
      %4272 = vmatpush2.msra.mxu0 0.0
      %4273 = vmatprep.subr.mxu0 0.0
      %4274 = vmatpush2.msra.mxu0 0.0
      %4275 = vmatprep.subr.mxu0 0.0
      %4276 = vmatpush2.msra.mxu0 0.0
      %4277 = vmatprep.subr.mxu0 0.0
      %4278 = vmatpush2.msra.mxu0 0.0
      %4279 = vmatprep.subr.mxu0 0.0
      %4280 = vmatpush2.msra.mxu0 0.0
      %4281 = vmatprep.subr.mxu0 0.0
      %4282 = vmatpush2.msra.mxu0 0.0
      %4283 = vmatprep.subr.mxu0 0.0
      %4284 = vmatpush2.msra.mxu0 0.0
      %4285 = vmatprep.subr.mxu0 0.0
      %4286 = vmatpush2.msra.mxu0 0.0
      %4287 = vmatprep.subr.mxu0 0.0
      %4288 = vmatpush2.msra.mxu0 0.0
      %4289 = vmatprep.subr.mxu0 0.0
      %4290 = vmatpush2.msra.mxu0 0.0
      %4291 = vmatprep.subr.mxu0 0.0
      %4292 = vmatpush2.msra.mxu0 0.0
      %4293 = vmatprep.subr.mxu0 0.0
      %4294 = vmatpush2.msra.mxu0 0.0
      %4295 = vmatprep.subr.mxu0 0.0
      %4296 = vmatpush2.msra.mxu0 0.0
      %4297 = vmatprep.mubr.f32.mxu0 0.0
      %4298 = vmatmul.mubr.f32.gmra.mxu0 %v4225
      %v4299 = vpop.f32.mrf.mxu0
      %v4300 = vadd.f32 %v4222, %v4299
      %v4301 = vpop.f32.mrf.mxu0
      %v4302 = vadd.f32 %v4222, %v4301
      %4303 = vdwg.mxu0
      %v4304 = vld [vmem:[%s887] sm:$0xf]
      %v4305 = vld [vmem:[%s891] sm:$0xf]
      %v4306 = vsel %vm939, %v4300, 0.0
      %v4307 = vsel %vm939, %v4302, 0.0
      %v4308 = vadd.f32 %v4306, %v4307
      %4309 = vadd.xlane.f32.xlu0 %v4308
      %v4310 = vpop.xlane.xlu0 %4309
      %v4311 = vmul.f32 %v4310, 0.00390625
      %v4312 = vmul.f32 %v4300, %v4300
      %v4313 = vmul.f32 %v4302, %v4302
      %v4314 = vsel %vm939, %v4312, 0.0
      %v4315 = vsel %vm939, %v4313, 0.0
      %v4316 = vadd.f32 %v4314, %v4315
      %4317 = vadd.xlane.f32.xlu0 %v4316
      %v4318 = vpop.xlane.xlu0 %4317
      %v4319 = vmul.f32 %v4318, 0.00390625
      %v4320 = vmul.f32 %v4311, %v4311
      %v4321 = vsub.f32 %v4319, %v4320
      %v4322 = vadd.f32 %v4321, 1e-05
      %v4323 = vrsqrt.pop %v4322
      %v4324 = vmul.f32 %v4304, %v4323
      %v4325 = vmul.f32 %v4311, %v4324
      %v4326 = vsub.f32 %v4305, %v4325
      %4328 = vset.pattern.permute.xlu0 0
      %4329 = vperm.xlu0 %4328, %v4324
      %v4330 = vpop.permute.xlu0 %4329
      %v4332 = vmul.f32 %v4300, %v4330
      %v4333 = vmul.f32 %v4302, %v4330
      %4335 = vset.pattern.permute.xlu0 0
      %4336 = vperm.xlu0 %4335, %v4326
      %v4337 = vpop.permute.xlu0 %4336
      %v4339 = vadd.f32 %v4332, %v4337
      %v4340 = vadd.f32 %v4333, %v4337
      %v4341 = vmax.f32 %v4339, 0.0
      %v4342 = vmax.f32 %v4340, 0.0
      %v4343 = vadd.f32 %v4341, %v1089
      %v4344 = vadd.f32 %v4342, %v1090
      %4345 = vst.msk [vmem:[#allocation2] sm:$0xff] %vm1091, 0.0
      %4346 = vst.msk [vmem:[#allocation2 + $0x8] sm:$0xff] %vm1091, 0.0
      %4347 = vst.msk [vmem:[#allocation2 + $0x10] sm:$0xf] %vm1094, 0.0
      %4348 = vst.msk [vmem:[#allocation2 + $0x18] sm:$0xff] %vm1091, 0.0
      %4349 = vst.msk [vmem:[#allocation2 + $0x20] sm:$0xff] %vm1091, 0.0
      %4350 = vst.msk [vmem:[#allocation2 + $0x28] sm:$0xf] %vm1094, 0.0
      %4351 = vst.msk [vmem:[#allocation2 + $0x30] sm:$0xff] %vm1091, 0.0
      %4352 = vst.msk [vmem:[#allocation2 + $0x38] sm:$0xff] %vm1091, 0.0
      %4353 = vst.msk [vmem:[#allocation2 + $0x40] sm:$0xf] %vm1094, 0.0
      %4354 = vst.msk [vmem:[#allocation2 + $0x48] sm:$0xff] %vm1091, 0.0
      %4355 = vst.msk [vmem:[#allocation2 + $0x50] sm:$0xff] %vm1091, 0.0
      %4356 = vst.msk [vmem:[#allocation2 + $0x58] sm:$0xf] %vm1094, 0.0
      %4358 = vrot.lane.b32.xlu0 %v4343, 112
      %v4359 = vpop.permute.xlu0 %4358
      %4361 = vrot.lane.b32.xlu0 %v4343, 96
      %v4362 = vpop.permute.xlu0 %4361
      %4364 = vrot.lane.b32.xlu0 %v4343, 80
      %v4365 = vpop.permute.xlu0 %4364
      %4367 = vrot.lane.b32.xlu0 %v4343, 64
      %v4368 = vpop.permute.xlu0 %4367
      %4370 = vrot.lane.b32.xlu0 %v4343, 48
      %v4371 = vpop.permute.xlu0 %4370
      %4373 = vrot.lane.b32.xlu0 %v4343, 32
      %v4374 = vpop.permute.xlu0 %4373
      %4376 = vrot.lane.b32.xlu0 %v4343, 16
      %v4377 = vpop.permute.xlu0 %4376
      %4380 = vrot.lane.b32.xlu0 %v4344, 112
      %v4381 = vpop.permute.xlu0 %4380
      %4383 = vrot.lane.b32.xlu0 %v4344, 96
      %v4384 = vpop.permute.xlu0 %4383
      %4386 = vrot.lane.b32.xlu0 %v4344, 80
      %v4387 = vpop.permute.xlu0 %4386
      %4389 = vrot.lane.b32.xlu0 %v4344, 64
      %v4390 = vpop.permute.xlu0 %4389
      %4392 = vrot.lane.b32.xlu0 %v4344, 48
      %v4393 = vpop.permute.xlu0 %4392
      %4395 = vrot.lane.b32.xlu0 %v4344, 32
      %v4396 = vpop.permute.xlu0 %4395
      %4398 = vrot.lane.b32.xlu0 %v4344, 16
      %v4399 = vpop.permute.xlu0 %4398
      %v4401 = vcombine.low %v4343, %v4362
      %v4403 = vunpack.c.l.s4 1983009808
      %v4404 = vunpack.c.0.s8 %v4403
      %v4405 = vlaneseq
      %v4406 = vshrl.u32 %v4405, 7
      %v4407 = vsub.s32 %v4404, %v4406
      %v4408 = vrot.slane %v4401, %v4407
      %v4409 = vcombine.low %v4359, %v4365
      %v4411 = vunpack.c.l.s4 1983009808
      %v4412 = vunpack.c.0.s8 %v4411
      %v4413 = vlaneseq
      %v4414 = vshrl.u32 %v4413, 7
      %v4415 = vsub.s32 %v4412, %v4414
      %v4416 = vrot.slane %v4409, %v4415
      %v4417 = vcombine.low %v4368, %v4374
      %v4419 = vunpack.c.l.s4 1983009808
      %v4420 = vunpack.c.0.s8 %v4419
      %v4421 = vlaneseq
      %v4422 = vshrl.u32 %v4421, 7
      %v4423 = vsub.s32 %v4420, %v4422
      %v4424 = vrot.slane %v4417, %v4423
      %v4425 = vcombine.low %v4371, %v4377
      %v4427 = vunpack.c.l.s4 1983009808
      %v4428 = vunpack.c.0.s8 %v4427
      %v4429 = vlaneseq
      %v4430 = vshrl.u32 %v4429, 7
      %v4431 = vsub.s32 %v4428, %v4430
      %v4432 = vrot.slane %v4425, %v4431
      %v4433 = vcombine.low %v4408, %v4416
      %v4434 = vcombine.high %v4408, %v4416
      %v4436 = vunpack.c.l.s4 1934713408
      %v4437 = vunpack.c.0.s8 %v4436
      %v4438 = vlaneseq
      %v4439 = vshrl.u32 %v4438, 7
      %v4440 = vsub.s32 %v4437, %v4439
      %v4441 = vrot.slane %v4433, %v4440
      %v4443 = vunpack.c.l.s4 1934713408
      %v4444 = vunpack.c.0.s8 %v4443
      %v4445 = vlaneseq
      %v4446 = vshrl.u32 %v4445, 7
      %v4447 = vsub.s32 %v4444, %v4446
      %v4448 = vrot.slane %v4434, %v4447
      %v4449 = vcombine.low %v4424, %v4432
      %v4450 = vcombine.high %v4424, %v4432
      %v4452 = vunpack.c.l.s4 1934713408
      %v4453 = vunpack.c.0.s8 %v4452
      %v4454 = vlaneseq
      %v4455 = vshrl.u32 %v4454, 7
      %v4456 = vsub.s32 %v4453, %v4455
      %v4457 = vrot.slane %v4449, %v4456
      %v4459 = vunpack.c.l.s4 1934713408
      %v4460 = vunpack.c.0.s8 %v4459
      %v4461 = vlaneseq
      %v4462 = vshrl.u32 %v4461, 7
      %v4463 = vsub.s32 %v4460, %v4462
      %v4464 = vrot.slane %v4450, %v4463
      %v4465 = vcombine.low %v4441, %v4457
      %v4466 = vcombine.high %v4441, %v4457
      %v4467 = vcombine.low %v4448, %v4464
      %v4468 = vcombine.high %v4448, %v4464
      %v4469 = vcombine.low %v4344, %v4384
      %v4471 = vunpack.c.l.s4 1983009808
      %v4472 = vunpack.c.0.s8 %v4471
      %v4473 = vlaneseq
      %v4474 = vshrl.u32 %v4473, 7
      %v4475 = vsub.s32 %v4472, %v4474
      %v4476 = vrot.slane %v4469, %v4475
      %v4477 = vcombine.low %v4381, %v4387
      %v4479 = vunpack.c.l.s4 1983009808
      %v4480 = vunpack.c.0.s8 %v4479
      %v4481 = vlaneseq
      %v4482 = vshrl.u32 %v4481, 7
      %v4483 = vsub.s32 %v4480, %v4482
      %v4484 = vrot.slane %v4477, %v4483
      %v4485 = vcombine.low %v4390, %v4396
      %v4487 = vunpack.c.l.s4 1983009808
      %v4488 = vunpack.c.0.s8 %v4487
      %v4489 = vlaneseq
      %v4490 = vshrl.u32 %v4489, 7
      %v4491 = vsub.s32 %v4488, %v4490
      %v4492 = vrot.slane %v4485, %v4491
      %v4493 = vcombine.low %v4393, %v4399
      %v4495 = vunpack.c.l.s4 1983009808
      %v4496 = vunpack.c.0.s8 %v4495
      %v4497 = vlaneseq
      %v4498 = vshrl.u32 %v4497, 7
      %v4499 = vsub.s32 %v4496, %v4498
      %v4500 = vrot.slane %v4493, %v4499
      %v4501 = vcombine.low %v4476, %v4484
      %v4502 = vcombine.high %v4476, %v4484
      %v4504 = vunpack.c.l.s4 1934713408
      %v4505 = vunpack.c.0.s8 %v4504
      %v4506 = vlaneseq
      %v4507 = vshrl.u32 %v4506, 7
      %v4508 = vsub.s32 %v4505, %v4507
      %v4509 = vrot.slane %v4501, %v4508
      %v4511 = vunpack.c.l.s4 1934713408
      %v4512 = vunpack.c.0.s8 %v4511
      %v4513 = vlaneseq
      %v4514 = vshrl.u32 %v4513, 7
      %v4515 = vsub.s32 %v4512, %v4514
      %v4516 = vrot.slane %v4502, %v4515
      %v4517 = vcombine.low %v4492, %v4500
      %v4518 = vcombine.high %v4492, %v4500
      %v4520 = vunpack.c.l.s4 1934713408
      %v4521 = vunpack.c.0.s8 %v4520
      %v4522 = vlaneseq
      %v4523 = vshrl.u32 %v4522, 7
      %v4524 = vsub.s32 %v4521, %v4523
      %v4525 = vrot.slane %v4517, %v4524
      %v4527 = vunpack.c.l.s4 1934713408
      %v4528 = vunpack.c.0.s8 %v4527
      %v4529 = vlaneseq
      %v4530 = vshrl.u32 %v4529, 7
      %v4531 = vsub.s32 %v4528, %v4530
      %v4532 = vrot.slane %v4518, %v4531
      %v4533 = vcombine.low %v4509, %v4525
      %v4534 = vcombine.high %v4509, %v4525
      %v4535 = vcombine.low %v4516, %v4532
      %v4536 = vcombine.high %v4516, %v4532
      %4545 = vrot.lane.b32.xlu0 %v4465, 2
      %v4546 = vpop.permute.xlu0 %4545
      %4547 = vrot.lane.b32.xlu0 %v4533, 2
      %v4548 = vpop.permute.xlu0 %4547
      %4549 = vrot.lane.b32.xlu0 %v4466, 2
      %v4550 = vpop.permute.xlu0 %4549
      %4551 = vrot.lane.b32.xlu0 %v4534, 2
      %v4552 = vpop.permute.xlu0 %4551
      %4553 = vrot.lane.b32.xlu0 %v4467, 2
      %v4554 = vpop.permute.xlu0 %4553
      %4555 = vrot.lane.b32.xlu0 %v4535, 2
      %v4556 = vpop.permute.xlu0 %4555
      %4557 = vrot.lane.b32.xlu0 %v4468, 2
      %v4558 = vpop.permute.xlu0 %4557
      %4559 = vrot.lane.b32.xlu0 %v4536, 2
      %v4560 = vpop.permute.xlu0 %4559
      %vm4569 = vcmask 146448
      %4570 = vst.msk [vmem:[#allocation2 + $0x2] sm:$0xff] %vm4569, %v4546
      %4571 = vst.msk [vmem:[#allocation2 + $0xa] sm:$0xff] %vm4569, %v4548
      %4572 = vst.msk [vmem:[#allocation2 + $0x1a] sm:$0xff] %vm4569, %v4550
      %4573 = vst.msk [vmem:[#allocation2 + $0x22] sm:$0xff] %vm4569, %v4552
      %4574 = vst.msk [vmem:[#allocation2 + $0x32] sm:$0xff] %vm4569, %v4554
      %4575 = vst.msk [vmem:[#allocation2 + $0x3a] sm:$0xff] %vm4569, %v4556
      %4576 = vst.msk [vmem:[#allocation2 + $0x4a] sm:$0xff] %vm4569, %v4558
      %4577 = vst.msk [vmem:[#allocation2 + $0x52] sm:$0xff] %vm4569, %v4560
      %v4578 = vld [vmem:[#allocation2] sm:$0xff]
      %v4579 = vld [vmem:[#allocation2 + $0x8] sm:$0xff]
      %v4580 = vld [vmem:[#allocation2 + $0x10] sm:$0xf]
      %v4581 = vld [vmem:[#allocation2 + $0x18] sm:$0xff]
      %v4582 = vld [vmem:[#allocation2 + $0x20] sm:$0xff]
      %v4583 = vld [vmem:[#allocation2 + $0x28] sm:$0xf]
      %v4584 = vld [vmem:[#allocation2 + $0x30] sm:$0xff]
      %v4585 = vld [vmem:[#allocation2 + $0x38] sm:$0xff]
      %v4586 = vld [vmem:[#allocation2 + $0x40] sm:$0xf]
      %v4587 = vld [vmem:[#allocation2 + $0x48] sm:$0xff]
      %v4588 = vld [vmem:[#allocation2 + $0x50] sm:$0xff]
      %v4589 = vld [vmem:[#allocation2 + $0x58] sm:$0xf]
      %v4590 = vcombine.low %v4578, %v4584
      %v4591 = vcombine.high %v4578, %v4584
      %v4593 = vunpack.c.l.s4 1983009808
      %v4594 = vunpack.c.0.s8 %v4593
      %v4595 = vlaneseq
      %v4596 = vshrl.u32 %v4595, 7
      %v4597 = vsub.s32 %v4594, %v4596
      %v4598 = vrot.slane %v4590, %v4597
      %v4600 = vunpack.c.l.s4 1983009808
      %v4601 = vunpack.c.0.s8 %v4600
      %v4602 = vlaneseq
      %v4603 = vshrl.u32 %v4602, 7
      %v4604 = vsub.s32 %v4601, %v4603
      %v4605 = vrot.slane %v4591, %v4604
      %v4606 = vcombine.low %v4581, %v4587
      %v4607 = vcombine.high %v4581, %v4587
      %v4609 = vunpack.c.l.s4 1983009808
      %v4610 = vunpack.c.0.s8 %v4609
      %v4611 = vlaneseq
      %v4612 = vshrl.u32 %v4611, 7
      %v4613 = vsub.s32 %v4610, %v4612
      %v4614 = vrot.slane %v4606, %v4613
      %v4616 = vunpack.c.l.s4 1983009808
      %v4617 = vunpack.c.0.s8 %v4616
      %v4618 = vlaneseq
      %v4619 = vshrl.u32 %v4618, 7
      %v4620 = vsub.s32 %v4617, %v4619
      %v4621 = vrot.slane %v4607, %v4620
      %v4622 = vcombine.low %v4598, %v4614
      %v4623 = vcombine.high %v4598, %v4614
      %v4625 = vunpack.c.l.s4 1934713408
      %v4626 = vunpack.c.0.s8 %v4625
      %v4627 = vlaneseq
      %v4628 = vshrl.u32 %v4627, 7
      %v4629 = vsub.s32 %v4626, %v4628
      %v4630 = vrot.slane %v4622, %v4629
      %v4632 = vunpack.c.l.s4 1934713408
      %v4633 = vunpack.c.0.s8 %v4632
      %v4634 = vlaneseq
      %v4635 = vshrl.u32 %v4634, 7
      %v4636 = vsub.s32 %v4633, %v4635
      %v4637 = vrot.slane %v4623, %v4636
      %v4638 = vcombine.low %v4605, %v4621
      %v4639 = vcombine.high %v4605, %v4621
      %v4641 = vunpack.c.l.s4 1934713408
      %v4642 = vunpack.c.0.s8 %v4641
      %v4643 = vlaneseq
      %v4644 = vshrl.u32 %v4643, 7
      %v4645 = vsub.s32 %v4642, %v4644
      %v4646 = vrot.slane %v4638, %v4645
      %v4648 = vunpack.c.l.s4 1934713408
      %v4649 = vunpack.c.0.s8 %v4648
      %v4650 = vlaneseq
      %v4651 = vshrl.u32 %v4650, 7
      %v4652 = vsub.s32 %v4649, %v4651
      %v4653 = vrot.slane %v4639, %v4652
      %v4654 = vcombine.high %v4630, 0.0
      %v4655 = vcombine.high %v4637, 0.0
      %v4656 = vcombine.high %v4646, 0.0
      %v4657 = vcombine.high %v4653, 0.0
      %v4658 = vcombine.low %v4579, %v4585
      %v4659 = vcombine.high %v4579, %v4585
      %v4661 = vunpack.c.l.s4 1983009808
      %v4662 = vunpack.c.0.s8 %v4661
      %v4663 = vlaneseq
      %v4664 = vshrl.u32 %v4663, 7
      %v4665 = vsub.s32 %v4662, %v4664
      %v4666 = vrot.slane %v4658, %v4665
      %v4668 = vunpack.c.l.s4 1983009808
      %v4669 = vunpack.c.0.s8 %v4668
      %v4670 = vlaneseq
      %v4671 = vshrl.u32 %v4670, 7
      %v4672 = vsub.s32 %v4669, %v4671
      %v4673 = vrot.slane %v4659, %v4672
      %v4674 = vcombine.low %v4582, %v4588
      %v4675 = vcombine.high %v4582, %v4588
      %v4677 = vunpack.c.l.s4 1983009808
      %v4678 = vunpack.c.0.s8 %v4677
      %v4679 = vlaneseq
      %v4680 = vshrl.u32 %v4679, 7
      %v4681 = vsub.s32 %v4678, %v4680
      %v4682 = vrot.slane %v4674, %v4681
      %v4684 = vunpack.c.l.s4 1983009808
      %v4685 = vunpack.c.0.s8 %v4684
      %v4686 = vlaneseq
      %v4687 = vshrl.u32 %v4686, 7
      %v4688 = vsub.s32 %v4685, %v4687
      %v4689 = vrot.slane %v4675, %v4688
      %v4690 = vcombine.low %v4666, %v4682
      %v4691 = vcombine.high %v4666, %v4682
      %v4693 = vunpack.c.l.s4 1934713408
      %v4694 = vunpack.c.0.s8 %v4693
      %v4695 = vlaneseq
      %v4696 = vshrl.u32 %v4695, 7
      %v4697 = vsub.s32 %v4694, %v4696
      %v4698 = vrot.slane %v4690, %v4697
      %v4700 = vunpack.c.l.s4 1934713408
      %v4701 = vunpack.c.0.s8 %v4700
      %v4702 = vlaneseq
      %v4703 = vshrl.u32 %v4702, 7
      %v4704 = vsub.s32 %v4701, %v4703
      %v4705 = vrot.slane %v4691, %v4704
      %v4706 = vcombine.low %v4673, %v4689
      %v4707 = vcombine.high %v4673, %v4689
      %v4709 = vunpack.c.l.s4 1934713408
      %v4710 = vunpack.c.0.s8 %v4709
      %v4711 = vlaneseq
      %v4712 = vshrl.u32 %v4711, 7
      %v4713 = vsub.s32 %v4710, %v4712
      %v4714 = vrot.slane %v4706, %v4713
      %v4716 = vunpack.c.l.s4 1934713408
      %v4717 = vunpack.c.0.s8 %v4716
      %v4718 = vlaneseq
      %v4719 = vshrl.u32 %v4718, 7
      %v4720 = vsub.s32 %v4717, %v4719
      %v4721 = vrot.slane %v4707, %v4720
      %v4722 = vcombine.high %v4698, 0.0
      %v4723 = vcombine.high %v4705, 0.0
      %v4724 = vcombine.high %v4714, 0.0
      %v4725 = vcombine.high %v4721, 0.0
      %4727 = vrot.lane.b32.xlu0 %v4654, 16
      %v4728 = vpop.permute.xlu0 %4727
      %4731 = vrot.lane.b32.xlu0 %v4637, 32
      %v4732 = vpop.permute.xlu0 %4731
      %4735 = vrot.lane.b32.xlu0 %v4655, 48
      %v4736 = vpop.permute.xlu0 %4735
      %4739 = vrot.lane.b32.xlu0 %v4646, 64
      %v4740 = vpop.permute.xlu0 %4739
      %4743 = vrot.lane.b32.xlu0 %v4656, 80
      %v4744 = vpop.permute.xlu0 %4743
      %4747 = vrot.lane.b32.xlu0 %v4653, 96
      %v4748 = vpop.permute.xlu0 %4747
      %4751 = vrot.lane.b32.xlu0 %v4657, 112
      %v4752 = vpop.permute.xlu0 %4751
      %4755 = vrot.lane.b32.xlu0 %v4722, 16
      %v4756 = vpop.permute.xlu0 %4755
      %4759 = vrot.lane.b32.xlu0 %v4705, 32
      %v4760 = vpop.permute.xlu0 %4759
      %4763 = vrot.lane.b32.xlu0 %v4723, 48
      %v4764 = vpop.permute.xlu0 %4763
      %4767 = vrot.lane.b32.xlu0 %v4714, 64
      %v4768 = vpop.permute.xlu0 %4767
      %4771 = vrot.lane.b32.xlu0 %v4724, 80
      %v4772 = vpop.permute.xlu0 %4771
      %4775 = vrot.lane.b32.xlu0 %v4721, 96
      %v4776 = vpop.permute.xlu0 %4775
      %4779 = vrot.lane.b32.xlu0 %v4725, 112
      %v4780 = vpop.permute.xlu0 %4779
      %v4782 = vsel %vm1530, %v4630, %v4728
      %v4783 = vsel %vm1532, %v4782, %v4732
      %v4784 = vsel %vm1534, %v4783, %v4736
      %v4785 = vsel %vm1536, %v4784, %v4740
      %v4786 = vsel %vm1538, %v4785, %v4744
      %v4787 = vsel %vm1540, %v4786, %v4748
      %v4788 = vsel %vm1542, %v4787, %v4752
      %v4789 = vsel %vm1530, %v4698, %v4756
      %v4790 = vsel %vm1532, %v4789, %v4760
      %v4791 = vsel %vm1534, %v4790, %v4764
      %v4792 = vsel %vm1536, %v4791, %v4768
      %v4793 = vsel %vm1538, %v4792, %v4772
      %v4794 = vsel %vm1540, %v4793, %v4776
      %v4795 = vsel %vm1542, %v4794, %v4780
      %v4796 = vld [vmem:[%s896] sm:$0xf]
      %4805 = vrot.lane.b32.xlu0 %v4578, 126
      %v4806 = vpop.permute.xlu0 %4805
      %4807 = vrot.lane.b32.xlu0 %v4579, 126
      %v4808 = vpop.permute.xlu0 %4807
      %4809 = vrot.lane.b32.xlu0 %v4581, 126
      %v4810 = vpop.permute.xlu0 %4809
      %4811 = vrot.lane.b32.xlu0 %v4582, 126
      %v4812 = vpop.permute.xlu0 %4811
      %4813 = vrot.lane.b32.xlu0 %v4584, 126
      %v4814 = vpop.permute.xlu0 %4813
      %4815 = vrot.lane.b32.xlu0 %v4585, 126
      %v4816 = vpop.permute.xlu0 %4815
      %4817 = vrot.lane.b32.xlu0 %v4587, 126
      %v4818 = vpop.permute.xlu0 %4817
      %4819 = vrot.lane.b32.xlu0 %v4588, 126
      %v4820 = vpop.permute.xlu0 %4819
      %v4829 = vcombine.low %v4806, %v4814
      %v4830 = vcombine.high %v4806, %v4814
      %v4832 = vunpack.c.l.s4 1983009808
      %v4833 = vunpack.c.0.s8 %v4832
      %v4834 = vlaneseq
      %v4835 = vshrl.u32 %v4834, 7
      %v4836 = vsub.s32 %v4833, %v4835
      %v4837 = vrot.slane %v4829, %v4836
      %v4839 = vunpack.c.l.s4 1983009808
      %v4840 = vunpack.c.0.s8 %v4839
      %v4841 = vlaneseq
      %v4842 = vshrl.u32 %v4841, 7
      %v4843 = vsub.s32 %v4840, %v4842
      %v4844 = vrot.slane %v4830, %v4843
      %v4845 = vcombine.low %v4810, %v4818
      %v4846 = vcombine.high %v4810, %v4818
      %v4848 = vunpack.c.l.s4 1983009808
      %v4849 = vunpack.c.0.s8 %v4848
      %v4850 = vlaneseq
      %v4851 = vshrl.u32 %v4850, 7
      %v4852 = vsub.s32 %v4849, %v4851
      %v4853 = vrot.slane %v4845, %v4852
      %v4855 = vunpack.c.l.s4 1983009808
      %v4856 = vunpack.c.0.s8 %v4855
      %v4857 = vlaneseq
      %v4858 = vshrl.u32 %v4857, 7
      %v4859 = vsub.s32 %v4856, %v4858
      %v4860 = vrot.slane %v4846, %v4859
      %v4861 = vcombine.low %v4837, %v4853
      %v4862 = vcombine.high %v4837, %v4853
      %v4864 = vunpack.c.l.s4 1934713408
      %v4865 = vunpack.c.0.s8 %v4864
      %v4866 = vlaneseq
      %v4867 = vshrl.u32 %v4866, 7
      %v4868 = vsub.s32 %v4865, %v4867
      %v4869 = vrot.slane %v4861, %v4868
      %v4871 = vunpack.c.l.s4 1934713408
      %v4872 = vunpack.c.0.s8 %v4871
      %v4873 = vlaneseq
      %v4874 = vshrl.u32 %v4873, 7
      %v4875 = vsub.s32 %v4872, %v4874
      %v4876 = vrot.slane %v4862, %v4875
      %v4877 = vcombine.low %v4844, %v4860
      %v4878 = vcombine.high %v4844, %v4860
      %v4880 = vunpack.c.l.s4 1934713408
      %v4881 = vunpack.c.0.s8 %v4880
      %v4882 = vlaneseq
      %v4883 = vshrl.u32 %v4882, 7
      %v4884 = vsub.s32 %v4881, %v4883
      %v4885 = vrot.slane %v4877, %v4884
      %v4887 = vunpack.c.l.s4 1934713408
      %v4888 = vunpack.c.0.s8 %v4887
      %v4889 = vlaneseq
      %v4890 = vshrl.u32 %v4889, 7
      %v4891 = vsub.s32 %v4888, %v4890
      %v4892 = vrot.slane %v4878, %v4891
      %v4893 = vcombine.high %v4869, 0.0
      %v4894 = vcombine.high %v4876, 0.0
      %v4895 = vcombine.high %v4885, 0.0
      %v4896 = vcombine.high %v4892, 0.0
      %v4897 = vcombine.low %v4808, %v4816
      %v4898 = vcombine.high %v4808, %v4816
      %v4900 = vunpack.c.l.s4 1983009808
      %v4901 = vunpack.c.0.s8 %v4900
      %v4902 = vlaneseq
      %v4903 = vshrl.u32 %v4902, 7
      %v4904 = vsub.s32 %v4901, %v4903
      %v4905 = vrot.slane %v4897, %v4904
      %v4907 = vunpack.c.l.s4 1983009808
      %v4908 = vunpack.c.0.s8 %v4907
      %v4909 = vlaneseq
      %v4910 = vshrl.u32 %v4909, 7
      %v4911 = vsub.s32 %v4908, %v4910
      %v4912 = vrot.slane %v4898, %v4911
      %v4913 = vcombine.low %v4812, %v4820
      %v4914 = vcombine.high %v4812, %v4820
      %v4916 = vunpack.c.l.s4 1983009808
      %v4917 = vunpack.c.0.s8 %v4916
      %v4918 = vlaneseq
      %v4919 = vshrl.u32 %v4918, 7
      %v4920 = vsub.s32 %v4917, %v4919
      %v4921 = vrot.slane %v4913, %v4920
      %v4923 = vunpack.c.l.s4 1983009808
      %v4924 = vunpack.c.0.s8 %v4923
      %v4925 = vlaneseq
      %v4926 = vshrl.u32 %v4925, 7
      %v4927 = vsub.s32 %v4924, %v4926
      %v4928 = vrot.slane %v4914, %v4927
      %v4929 = vcombine.low %v4905, %v4921
      %v4930 = vcombine.high %v4905, %v4921
      %v4932 = vunpack.c.l.s4 1934713408
      %v4933 = vunpack.c.0.s8 %v4932
      %v4934 = vlaneseq
      %v4935 = vshrl.u32 %v4934, 7
      %v4936 = vsub.s32 %v4933, %v4935
      %v4937 = vrot.slane %v4929, %v4936
      %v4939 = vunpack.c.l.s4 1934713408
      %v4940 = vunpack.c.0.s8 %v4939
      %v4941 = vlaneseq
      %v4942 = vshrl.u32 %v4941, 7
      %v4943 = vsub.s32 %v4940, %v4942
      %v4944 = vrot.slane %v4930, %v4943
      %v4945 = vcombine.low %v4912, %v4928
      %v4946 = vcombine.high %v4912, %v4928
      %v4948 = vunpack.c.l.s4 1934713408
      %v4949 = vunpack.c.0.s8 %v4948
      %v4950 = vlaneseq
      %v4951 = vshrl.u32 %v4950, 7
      %v4952 = vsub.s32 %v4949, %v4951
      %v4953 = vrot.slane %v4945, %v4952
      %v4955 = vunpack.c.l.s4 1934713408
      %v4956 = vunpack.c.0.s8 %v4955
      %v4957 = vlaneseq
      %v4958 = vshrl.u32 %v4957, 7
      %v4959 = vsub.s32 %v4956, %v4958
      %v4960 = vrot.slane %v4946, %v4959
      %v4961 = vcombine.high %v4937, 0.0
      %v4962 = vcombine.high %v4944, 0.0
      %v4963 = vcombine.high %v4953, 0.0
      %v4964 = vcombine.high %v4960, 0.0
      %4966 = vrot.lane.b32.xlu0 %v4893, 16
      %v4967 = vpop.permute.xlu0 %4966
      %4970 = vrot.lane.b32.xlu0 %v4876, 32
      %v4971 = vpop.permute.xlu0 %4970
      %4974 = vrot.lane.b32.xlu0 %v4894, 48
      %v4975 = vpop.permute.xlu0 %4974
      %4978 = vrot.lane.b32.xlu0 %v4885, 64
      %v4979 = vpop.permute.xlu0 %4978
      %4982 = vrot.lane.b32.xlu0 %v4895, 80
      %v4983 = vpop.permute.xlu0 %4982
      %4986 = vrot.lane.b32.xlu0 %v4892, 96
      %v4987 = vpop.permute.xlu0 %4986
      %4990 = vrot.lane.b32.xlu0 %v4896, 112
      %v4991 = vpop.permute.xlu0 %4990
      %4994 = vrot.lane.b32.xlu0 %v4961, 16
      %v4995 = vpop.permute.xlu0 %4994
      %4998 = vrot.lane.b32.xlu0 %v4944, 32
      %v4999 = vpop.permute.xlu0 %4998
      %5002 = vrot.lane.b32.xlu0 %v4962, 48
      %v5003 = vpop.permute.xlu0 %5002
      %5006 = vrot.lane.b32.xlu0 %v4953, 64
      %v5007 = vpop.permute.xlu0 %5006
      %5010 = vrot.lane.b32.xlu0 %v4963, 80
      %v5011 = vpop.permute.xlu0 %5010
      %5014 = vrot.lane.b32.xlu0 %v4960, 96
      %v5015 = vpop.permute.xlu0 %5014
      %5018 = vrot.lane.b32.xlu0 %v4964, 112
      %v5019 = vpop.permute.xlu0 %5018
      %v5021 = vsel %vm1530, %v4869, %v4967
      %v5022 = vsel %vm1532, %v5021, %v4971
      %v5023 = vsel %vm1534, %v5022, %v4975
      %v5024 = vsel %vm1536, %v5023, %v4979
      %v5025 = vsel %vm1538, %v5024, %v4983
      %v5026 = vsel %vm1540, %v5025, %v4987
      %v5027 = vsel %vm1542, %v5026, %v4991
      %v5028 = vsel %vm1530, %v4937, %v4995
      %v5029 = vsel %vm1532, %v5028, %v4999
      %v5030 = vsel %vm1534, %v5029, %v5003
      %v5031 = vsel %vm1536, %v5030, %v5007
      %v5032 = vsel %vm1538, %v5031, %v5011
      %v5033 = vsel %vm1540, %v5032, %v5015
      %v5034 = vsel %vm1542, %v5033, %v5019
      %s5035 = scalar_lea.vmem %s896, 4
      %v5036 = vld [vmem:[%s5035] sm:$0xf]
      %v5038 = vsel %vm932, %v5036, 0
      %v5041 = vsel %vm939, %v5027, 0
      %v5044 = vsel %vm939, %v5034, 0
      %5046 = vmatprep.subr.mxu0 0.0
      %5047 = vmatpush1.msra.mxu0 0.0
      %5048 = vmatprep.subr.mxu0 0.0
      %5049 = vmatpush1.msra.mxu0 0.0
      %5050 = vmatprep.subr.mxu0 0.0
      %5051 = vmatpush1.msra.mxu0 0.0
      %5052 = vmatprep.subr.mxu0 0.0
      %5053 = vmatpush1.msra.mxu0 0.0
      %5054 = vmatprep.subr.mxu0 0.0
      %5055 = vmatpush1.msra.mxu0 0.0
      %5056 = vmatprep.subr.mxu0 0.0
      %5057 = vmatpush1.msra.mxu0 0.0
      %5058 = vmatprep.subr.mxu0 0.0
      %5059 = vmatpush1.msra.mxu0 0.0
      %5060 = vmatprep.subr.mxu0 0.0
      %5061 = vmatpush1.msra.mxu0 0.0
      %5062 = vmatprep.subr.mxu0 0.0
      %5063 = vmatpush1.msra.mxu0 0.0
      %5064 = vmatprep.subr.mxu0 0.0
      %5065 = vmatpush1.msra.mxu0 0.0
      %5066 = vmatprep.subr.mxu0 0.0
      %5067 = vmatpush1.msra.mxu0 0.0
      %5068 = vmatprep.subr.mxu0 0.0
      %5069 = vmatpush1.msra.mxu0 0.0
      %5070 = vmatprep.subr.mxu0 0.0
      %5071 = vmatpush1.msra.mxu0 0.0
      %5072 = vmatprep.subr.mxu0 0.0
      %5073 = vmatpush1.msra.mxu0 0.0
      %5074 = vmatprep.subr.mxu0 0.0
      %5075 = vmatpush1.msra.mxu0 0.0
      %5076 = vmatprep.subr.mxu0 %v5044
      %5077 = vmatpush1.msra.mxu0 %v5041
      %5078 = vmatprep.subr.mxu0 0.0
      %5079 = vmatpush2.msra.mxu0 0.0
      %5080 = vmatprep.subr.mxu0 0.0
      %5081 = vmatpush2.msra.mxu0 0.0
      %5082 = vmatprep.subr.mxu0 0.0
      %5083 = vmatpush2.msra.mxu0 0.0
      %5084 = vmatprep.subr.mxu0 0.0
      %5085 = vmatpush2.msra.mxu0 0.0
      %5086 = vmatprep.subr.mxu0 0.0
      %5087 = vmatpush2.msra.mxu0 0.0
      %5088 = vmatprep.subr.mxu0 0.0
      %5089 = vmatpush2.msra.mxu0 0.0
      %5090 = vmatprep.subr.mxu0 0.0
      %5091 = vmatpush2.msra.mxu0 0.0
      %5092 = vmatprep.subr.mxu0 0.0
      %5093 = vmatpush2.msra.mxu0 0.0
      %5094 = vmatprep.subr.mxu0 0.0
      %5095 = vmatpush2.msra.mxu0 0.0
      %5096 = vmatprep.subr.mxu0 0.0
      %5097 = vmatpush2.msra.mxu0 0.0
      %5098 = vmatprep.subr.mxu0 0.0
      %5099 = vmatpush2.msra.mxu0 0.0
      %5100 = vmatprep.subr.mxu0 0.0
      %5101 = vmatpush2.msra.mxu0 0.0
      %5102 = vmatprep.subr.mxu0 0.0
      %5103 = vmatpush2.msra.mxu0 0.0
      %5104 = vmatprep.subr.mxu0 0.0
      %5105 = vmatpush2.msra.mxu0 0.0
      %5106 = vmatprep.subr.mxu0 0.0
      %5107 = vmatpush2.msra.mxu0 0.0
      %5108 = vmatprep.subr.mxu0 0.0
      %5109 = vmatpush2.msra.mxu0 0.0
      %5110 = vmatprep.mubr.f32.mxu0 0.0
      %5111 = vmatmul.mubr.f32.gmra.mxu0 %v5038
      %v5112 = vpop.f32.mrf.mxu0
      %v5113 = vadd.f32 0.0, %v5112
      %v5114 = vpop.f32.mrf.mxu0
      %v5115 = vadd.f32 0.0, %v5114
      %5116 = vdwg.mxu0
      %v5118 = vsel %vm932, %v4796, 0
      %v5121 = vsel %vm939, %v4788, 0
      %v5124 = vsel %vm939, %v4795, 0
      %5126 = vmatprep.subr.mxu0 0.0
      %5127 = vmatpush1.msra.mxu0 0.0
      %5128 = vmatprep.subr.mxu0 0.0
      %5129 = vmatpush1.msra.mxu0 0.0
      %5130 = vmatprep.subr.mxu0 0.0
      %5131 = vmatpush1.msra.mxu0 0.0
      %5132 = vmatprep.subr.mxu0 0.0
      %5133 = vmatpush1.msra.mxu0 0.0
      %5134 = vmatprep.subr.mxu0 0.0
      %5135 = vmatpush1.msra.mxu0 0.0
      %5136 = vmatprep.subr.mxu0 0.0
      %5137 = vmatpush1.msra.mxu0 0.0
      %5138 = vmatprep.subr.mxu0 0.0
      %5139 = vmatpush1.msra.mxu0 0.0
      %5140 = vmatprep.subr.mxu0 0.0
      %5141 = vmatpush1.msra.mxu0 0.0
      %5142 = vmatprep.subr.mxu0 0.0
      %5143 = vmatpush1.msra.mxu0 0.0
      %5144 = vmatprep.subr.mxu0 0.0
      %5145 = vmatpush1.msra.mxu0 0.0
      %5146 = vmatprep.subr.mxu0 0.0
      %5147 = vmatpush1.msra.mxu0 0.0
      %5148 = vmatprep.subr.mxu0 0.0
      %5149 = vmatpush1.msra.mxu0 0.0
      %5150 = vmatprep.subr.mxu0 0.0
      %5151 = vmatpush1.msra.mxu0 0.0
      %5152 = vmatprep.subr.mxu0 0.0
      %5153 = vmatpush1.msra.mxu0 0.0
      %5154 = vmatprep.subr.mxu0 0.0
      %5155 = vmatpush1.msra.mxu0 0.0
      %5156 = vmatprep.subr.mxu0 %v5124
      %5157 = vmatpush1.msra.mxu0 %v5121
      %5158 = vmatprep.subr.mxu0 0.0
      %5159 = vmatpush2.msra.mxu0 0.0
      %5160 = vmatprep.subr.mxu0 0.0
      %5161 = vmatpush2.msra.mxu0 0.0
      %5162 = vmatprep.subr.mxu0 0.0
      %5163 = vmatpush2.msra.mxu0 0.0
      %5164 = vmatprep.subr.mxu0 0.0
      %5165 = vmatpush2.msra.mxu0 0.0
      %5166 = vmatprep.subr.mxu0 0.0
      %5167 = vmatpush2.msra.mxu0 0.0
      %5168 = vmatprep.subr.mxu0 0.0
      %5169 = vmatpush2.msra.mxu0 0.0
      %5170 = vmatprep.subr.mxu0 0.0
      %5171 = vmatpush2.msra.mxu0 0.0
      %5172 = vmatprep.subr.mxu0 0.0
      %5173 = vmatpush2.msra.mxu0 0.0
      %5174 = vmatprep.subr.mxu0 0.0
      %5175 = vmatpush2.msra.mxu0 0.0
      %5176 = vmatprep.subr.mxu0 0.0
      %5177 = vmatpush2.msra.mxu0 0.0
      %5178 = vmatprep.subr.mxu0 0.0
      %5179 = vmatpush2.msra.mxu0 0.0
      %5180 = vmatprep.subr.mxu0 0.0
      %5181 = vmatpush2.msra.mxu0 0.0
      %5182 = vmatprep.subr.mxu0 0.0
      %5183 = vmatpush2.msra.mxu0 0.0
      %5184 = vmatprep.subr.mxu0 0.0
      %5185 = vmatpush2.msra.mxu0 0.0
      %5186 = vmatprep.subr.mxu0 0.0
      %5187 = vmatpush2.msra.mxu0 0.0
      %5188 = vmatprep.subr.mxu0 0.0
      %5189 = vmatpush2.msra.mxu0 0.0
      %5190 = vmatprep.mubr.f32.mxu0 0.0
      %5191 = vmatmul.mubr.f32.gmra.mxu0 %v5118
      %v5192 = vpop.f32.mrf.mxu0
      %v5193 = vadd.f32 %v5113, %v5192
      %v5194 = vpop.f32.mrf.mxu0
      %v5195 = vadd.f32 %v5115, %v5194
      %5196 = vdwg.mxu0
      %5197 = vrot.lane.b32.xlu0 %v4578, 124
      %v5198 = vpop.permute.xlu0 %5197
      %5199 = vrot.lane.b32.xlu0 %v4579, 124
      %v5200 = vpop.permute.xlu0 %5199
      %5201 = vrot.lane.b32.xlu0 %v4581, 124
      %v5202 = vpop.permute.xlu0 %5201
      %5203 = vrot.lane.b32.xlu0 %v4582, 124
      %v5204 = vpop.permute.xlu0 %5203
      %5205 = vrot.lane.b32.xlu0 %v4584, 124
      %v5206 = vpop.permute.xlu0 %5205
      %5207 = vrot.lane.b32.xlu0 %v4585, 124
      %v5208 = vpop.permute.xlu0 %5207
      %5209 = vrot.lane.b32.xlu0 %v4587, 124
      %v5210 = vpop.permute.xlu0 %5209
      %5211 = vrot.lane.b32.xlu0 %v4588, 124
      %v5212 = vpop.permute.xlu0 %5211
      %v5221 = vcombine.low %v5198, %v5206
      %v5222 = vcombine.high %v5198, %v5206
      %v5224 = vunpack.c.l.s4 1983009808
      %v5225 = vunpack.c.0.s8 %v5224
      %v5226 = vlaneseq
      %v5227 = vshrl.u32 %v5226, 7
      %v5228 = vsub.s32 %v5225, %v5227
      %v5229 = vrot.slane %v5221, %v5228
      %v5231 = vunpack.c.l.s4 1983009808
      %v5232 = vunpack.c.0.s8 %v5231
      %v5233 = vlaneseq
      %v5234 = vshrl.u32 %v5233, 7
      %v5235 = vsub.s32 %v5232, %v5234
      %v5236 = vrot.slane %v5222, %v5235
      %v5237 = vcombine.low %v5202, %v5210
      %v5238 = vcombine.high %v5202, %v5210
      %v5240 = vunpack.c.l.s4 1983009808
      %v5241 = vunpack.c.0.s8 %v5240
      %v5242 = vlaneseq
      %v5243 = vshrl.u32 %v5242, 7
      %v5244 = vsub.s32 %v5241, %v5243
      %v5245 = vrot.slane %v5237, %v5244
      %v5247 = vunpack.c.l.s4 1983009808
      %v5248 = vunpack.c.0.s8 %v5247
      %v5249 = vlaneseq
      %v5250 = vshrl.u32 %v5249, 7
      %v5251 = vsub.s32 %v5248, %v5250
      %v5252 = vrot.slane %v5238, %v5251
      %v5253 = vcombine.low %v5229, %v5245
      %v5254 = vcombine.high %v5229, %v5245
      %v5256 = vunpack.c.l.s4 1934713408
      %v5257 = vunpack.c.0.s8 %v5256
      %v5258 = vlaneseq
      %v5259 = vshrl.u32 %v5258, 7
      %v5260 = vsub.s32 %v5257, %v5259
      %v5261 = vrot.slane %v5253, %v5260
      %v5263 = vunpack.c.l.s4 1934713408
      %v5264 = vunpack.c.0.s8 %v5263
      %v5265 = vlaneseq
      %v5266 = vshrl.u32 %v5265, 7
      %v5267 = vsub.s32 %v5264, %v5266
      %v5268 = vrot.slane %v5254, %v5267
      %v5269 = vcombine.low %v5236, %v5252
      %v5270 = vcombine.high %v5236, %v5252
      %v5272 = vunpack.c.l.s4 1934713408
      %v5273 = vunpack.c.0.s8 %v5272
      %v5274 = vlaneseq
      %v5275 = vshrl.u32 %v5274, 7
      %v5276 = vsub.s32 %v5273, %v5275
      %v5277 = vrot.slane %v5269, %v5276
      %v5279 = vunpack.c.l.s4 1934713408
      %v5280 = vunpack.c.0.s8 %v5279
      %v5281 = vlaneseq
      %v5282 = vshrl.u32 %v5281, 7
      %v5283 = vsub.s32 %v5280, %v5282
      %v5284 = vrot.slane %v5270, %v5283
      %v5285 = vcombine.high %v5261, 0.0
      %v5286 = vcombine.high %v5268, 0.0
      %v5287 = vcombine.high %v5277, 0.0
      %v5288 = vcombine.high %v5284, 0.0
      %v5289 = vcombine.low %v5200, %v5208
      %v5290 = vcombine.high %v5200, %v5208
      %v5292 = vunpack.c.l.s4 1983009808
      %v5293 = vunpack.c.0.s8 %v5292
      %v5294 = vlaneseq
      %v5295 = vshrl.u32 %v5294, 7
      %v5296 = vsub.s32 %v5293, %v5295
      %v5297 = vrot.slane %v5289, %v5296
      %v5299 = vunpack.c.l.s4 1983009808
      %v5300 = vunpack.c.0.s8 %v5299
      %v5301 = vlaneseq
      %v5302 = vshrl.u32 %v5301, 7
      %v5303 = vsub.s32 %v5300, %v5302
      %v5304 = vrot.slane %v5290, %v5303
      %v5305 = vcombine.low %v5204, %v5212
      %v5306 = vcombine.high %v5204, %v5212
      %v5308 = vunpack.c.l.s4 1983009808
      %v5309 = vunpack.c.0.s8 %v5308
      %v5310 = vlaneseq
      %v5311 = vshrl.u32 %v5310, 7
      %v5312 = vsub.s32 %v5309, %v5311
      %v5313 = vrot.slane %v5305, %v5312
      %v5315 = vunpack.c.l.s4 1983009808
      %v5316 = vunpack.c.0.s8 %v5315
      %v5317 = vlaneseq
      %v5318 = vshrl.u32 %v5317, 7
      %v5319 = vsub.s32 %v5316, %v5318
      %v5320 = vrot.slane %v5306, %v5319
      %v5321 = vcombine.low %v5297, %v5313
      %v5322 = vcombine.high %v5297, %v5313
      %v5324 = vunpack.c.l.s4 1934713408
      %v5325 = vunpack.c.0.s8 %v5324
      %v5326 = vlaneseq
      %v5327 = vshrl.u32 %v5326, 7
      %v5328 = vsub.s32 %v5325, %v5327
      %v5329 = vrot.slane %v5321, %v5328
      %v5331 = vunpack.c.l.s4 1934713408
      %v5332 = vunpack.c.0.s8 %v5331
      %v5333 = vlaneseq
      %v5334 = vshrl.u32 %v5333, 7
      %v5335 = vsub.s32 %v5332, %v5334
      %v5336 = vrot.slane %v5322, %v5335
      %v5337 = vcombine.low %v5304, %v5320
      %v5338 = vcombine.high %v5304, %v5320
      %v5340 = vunpack.c.l.s4 1934713408
      %v5341 = vunpack.c.0.s8 %v5340
      %v5342 = vlaneseq
      %v5343 = vshrl.u32 %v5342, 7
      %v5344 = vsub.s32 %v5341, %v5343
      %v5345 = vrot.slane %v5337, %v5344
      %v5347 = vunpack.c.l.s4 1934713408
      %v5348 = vunpack.c.0.s8 %v5347
      %v5349 = vlaneseq
      %v5350 = vshrl.u32 %v5349, 7
      %v5351 = vsub.s32 %v5348, %v5350
      %v5352 = vrot.slane %v5338, %v5351
      %v5353 = vcombine.high %v5329, 0.0
      %v5354 = vcombine.high %v5336, 0.0
      %v5355 = vcombine.high %v5345, 0.0
      %v5356 = vcombine.high %v5352, 0.0
      %5358 = vrot.lane.b32.xlu0 %v5285, 16
      %v5359 = vpop.permute.xlu0 %5358
      %5362 = vrot.lane.b32.xlu0 %v5268, 32
      %v5363 = vpop.permute.xlu0 %5362
      %5366 = vrot.lane.b32.xlu0 %v5286, 48
      %v5367 = vpop.permute.xlu0 %5366
      %5370 = vrot.lane.b32.xlu0 %v5277, 64
      %v5371 = vpop.permute.xlu0 %5370
      %5374 = vrot.lane.b32.xlu0 %v5287, 80
      %v5375 = vpop.permute.xlu0 %5374
      %5378 = vrot.lane.b32.xlu0 %v5284, 96
      %v5379 = vpop.permute.xlu0 %5378
      %5382 = vrot.lane.b32.xlu0 %v5288, 112
      %v5383 = vpop.permute.xlu0 %5382
      %5386 = vrot.lane.b32.xlu0 %v5353, 16
      %v5387 = vpop.permute.xlu0 %5386
      %5390 = vrot.lane.b32.xlu0 %v5336, 32
      %v5391 = vpop.permute.xlu0 %5390
      %5394 = vrot.lane.b32.xlu0 %v5354, 48
      %v5395 = vpop.permute.xlu0 %5394
      %5398 = vrot.lane.b32.xlu0 %v5345, 64
      %v5399 = vpop.permute.xlu0 %5398
      %5402 = vrot.lane.b32.xlu0 %v5355, 80
      %v5403 = vpop.permute.xlu0 %5402
      %5406 = vrot.lane.b32.xlu0 %v5352, 96
      %v5407 = vpop.permute.xlu0 %5406
      %5410 = vrot.lane.b32.xlu0 %v5356, 112
      %v5411 = vpop.permute.xlu0 %5410
      %v5413 = vsel %vm1530, %v5261, %v5359
      %v5414 = vsel %vm1532, %v5413, %v5363
      %v5415 = vsel %vm1534, %v5414, %v5367
      %v5416 = vsel %vm1536, %v5415, %v5371
      %v5417 = vsel %vm1538, %v5416, %v5375
      %v5418 = vsel %vm1540, %v5417, %v5379
      %v5419 = vsel %vm1542, %v5418, %v5383
      %v5420 = vsel %vm1530, %v5329, %v5387
      %v5421 = vsel %vm1532, %v5420, %v5391
      %v5422 = vsel %vm1534, %v5421, %v5395
      %v5423 = vsel %vm1536, %v5422, %v5399
      %v5424 = vsel %vm1538, %v5423, %v5403
      %v5425 = vsel %vm1540, %v5424, %v5407
      %v5426 = vsel %vm1542, %v5425, %v5411
      %s5427 = scalar_lea.vmem %s896, 8
      %v5428 = vld [vmem:[%s5427] sm:$0xf]
      %v5430 = vsel %vm932, %v5428, 0
      %v5433 = vsel %vm939, %v5419, 0
      %v5436 = vsel %vm939, %v5426, 0
      %5438 = vmatprep.subr.mxu0 0.0
      %5439 = vmatpush1.msra.mxu0 0.0
      %5440 = vmatprep.subr.mxu0 0.0
      %5441 = vmatpush1.msra.mxu0 0.0
      %5442 = vmatprep.subr.mxu0 0.0
      %5443 = vmatpush1.msra.mxu0 0.0
      %5444 = vmatprep.subr.mxu0 0.0
      %5445 = vmatpush1.msra.mxu0 0.0
      %5446 = vmatprep.subr.mxu0 0.0
      %5447 = vmatpush1.msra.mxu0 0.0
      %5448 = vmatprep.subr.mxu0 0.0
      %5449 = vmatpush1.msra.mxu0 0.0
      %5450 = vmatprep.subr.mxu0 0.0
      %5451 = vmatpush1.msra.mxu0 0.0
      %5452 = vmatprep.subr.mxu0 0.0
      %5453 = vmatpush1.msra.mxu0 0.0
      %5454 = vmatprep.subr.mxu0 0.0
      %5455 = vmatpush1.msra.mxu0 0.0
      %5456 = vmatprep.subr.mxu0 0.0
      %5457 = vmatpush1.msra.mxu0 0.0
      %5458 = vmatprep.subr.mxu0 0.0
      %5459 = vmatpush1.msra.mxu0 0.0
      %5460 = vmatprep.subr.mxu0 0.0
      %5461 = vmatpush1.msra.mxu0 0.0
      %5462 = vmatprep.subr.mxu0 0.0
      %5463 = vmatpush1.msra.mxu0 0.0
      %5464 = vmatprep.subr.mxu0 0.0
      %5465 = vmatpush1.msra.mxu0 0.0
      %5466 = vmatprep.subr.mxu0 0.0
      %5467 = vmatpush1.msra.mxu0 0.0
      %5468 = vmatprep.subr.mxu0 %v5436
      %5469 = vmatpush1.msra.mxu0 %v5433
      %5470 = vmatprep.subr.mxu0 0.0
      %5471 = vmatpush2.msra.mxu0 0.0
      %5472 = vmatprep.subr.mxu0 0.0
      %5473 = vmatpush2.msra.mxu0 0.0
      %5474 = vmatprep.subr.mxu0 0.0
      %5475 = vmatpush2.msra.mxu0 0.0
      %5476 = vmatprep.subr.mxu0 0.0
      %5477 = vmatpush2.msra.mxu0 0.0
      %5478 = vmatprep.subr.mxu0 0.0
      %5479 = vmatpush2.msra.mxu0 0.0
      %5480 = vmatprep.subr.mxu0 0.0
      %5481 = vmatpush2.msra.mxu0 0.0
      %5482 = vmatprep.subr.mxu0 0.0
      %5483 = vmatpush2.msra.mxu0 0.0
      %5484 = vmatprep.subr.mxu0 0.0
      %5485 = vmatpush2.msra.mxu0 0.0
      %5486 = vmatprep.subr.mxu0 0.0
      %5487 = vmatpush2.msra.mxu0 0.0
      %5488 = vmatprep.subr.mxu0 0.0
      %5489 = vmatpush2.msra.mxu0 0.0
      %5490 = vmatprep.subr.mxu0 0.0
      %5491 = vmatpush2.msra.mxu0 0.0
      %5492 = vmatprep.subr.mxu0 0.0
      %5493 = vmatpush2.msra.mxu0 0.0
      %5494 = vmatprep.subr.mxu0 0.0
      %5495 = vmatpush2.msra.mxu0 0.0
      %5496 = vmatprep.subr.mxu0 0.0
      %5497 = vmatpush2.msra.mxu0 0.0
      %5498 = vmatprep.subr.mxu0 0.0
      %5499 = vmatpush2.msra.mxu0 0.0
      %5500 = vmatprep.subr.mxu0 0.0
      %5501 = vmatpush2.msra.mxu0 0.0
      %5502 = vmatprep.mubr.f32.mxu0 0.0
      %5503 = vmatmul.mubr.f32.gmra.mxu0 %v5430
      %v5504 = vpop.f32.mrf.mxu0
      %v5505 = vadd.f32 0.0, %v5504
      %v5506 = vpop.f32.mrf.mxu0
      %v5507 = vadd.f32 0.0, %v5506
      %5508 = vdwg.mxu0
      %v5509 = vadd.f32 %v5193, %v5505
      %v5510 = vadd.f32 %v5195, %v5507
      %v5515 = vrot.slane %v4578, 2
      %v5516 = vrot.slane %v4579, 2
      %v5517 = vsel %vm3217, %v5515, %v5516
      %v5518 = vrot.slane %v4580, 2
      %v5519 = vsel %vm3217, %v5516, %v5518
      %v5520 = vrot.slane %v4581, 2
      %v5521 = vrot.slane %v4582, 2
      %v5522 = vsel %vm3217, %v5520, %v5521
      %v5523 = vrot.slane %v4583, 2
      %v5524 = vsel %vm3217, %v5521, %v5523
      %v5525 = vrot.slane %v4584, 2
      %v5526 = vrot.slane %v4585, 2
      %v5527 = vsel %vm3217, %v5525, %v5526
      %v5528 = vrot.slane %v4586, 2
      %v5529 = vsel %vm3217, %v5526, %v5528
      %v5530 = vrot.slane %v4587, 2
      %v5531 = vrot.slane %v4588, 2
      %v5532 = vsel %vm3217, %v5530, %v5531
      %v5533 = vrot.slane %v4589, 2
      %v5534 = vsel %vm3217, %v5531, %v5533
      %v5543 = vcombine.low %v5517, %v5527
      %v5544 = vcombine.high %v5517, %v5527
      %v5546 = vunpack.c.l.s4 1983009808
      %v5547 = vunpack.c.0.s8 %v5546
      %v5548 = vlaneseq
      %v5549 = vshrl.u32 %v5548, 7
      %v5550 = vsub.s32 %v5547, %v5549
      %v5551 = vrot.slane %v5543, %v5550
      %v5553 = vunpack.c.l.s4 1983009808
      %v5554 = vunpack.c.0.s8 %v5553
      %v5555 = vlaneseq
      %v5556 = vshrl.u32 %v5555, 7
      %v5557 = vsub.s32 %v5554, %v5556
      %v5558 = vrot.slane %v5544, %v5557
      %v5559 = vcombine.low %v5522, %v5532
      %v5560 = vcombine.high %v5522, %v5532
      %v5562 = vunpack.c.l.s4 1983009808
      %v5563 = vunpack.c.0.s8 %v5562
      %v5564 = vlaneseq
      %v5565 = vshrl.u32 %v5564, 7
      %v5566 = vsub.s32 %v5563, %v5565
      %v5567 = vrot.slane %v5559, %v5566
      %v5569 = vunpack.c.l.s4 1983009808
      %v5570 = vunpack.c.0.s8 %v5569
      %v5571 = vlaneseq
      %v5572 = vshrl.u32 %v5571, 7
      %v5573 = vsub.s32 %v5570, %v5572
      %v5574 = vrot.slane %v5560, %v5573
      %v5575 = vcombine.low %v5551, %v5567
      %v5576 = vcombine.high %v5551, %v5567
      %v5578 = vunpack.c.l.s4 1934713408
      %v5579 = vunpack.c.0.s8 %v5578
      %v5580 = vlaneseq
      %v5581 = vshrl.u32 %v5580, 7
      %v5582 = vsub.s32 %v5579, %v5581
      %v5583 = vrot.slane %v5575, %v5582
      %v5585 = vunpack.c.l.s4 1934713408
      %v5586 = vunpack.c.0.s8 %v5585
      %v5587 = vlaneseq
      %v5588 = vshrl.u32 %v5587, 7
      %v5589 = vsub.s32 %v5586, %v5588
      %v5590 = vrot.slane %v5576, %v5589
      %v5591 = vcombine.low %v5558, %v5574
      %v5592 = vcombine.high %v5558, %v5574
      %v5594 = vunpack.c.l.s4 1934713408
      %v5595 = vunpack.c.0.s8 %v5594
      %v5596 = vlaneseq
      %v5597 = vshrl.u32 %v5596, 7
      %v5598 = vsub.s32 %v5595, %v5597
      %v5599 = vrot.slane %v5591, %v5598
      %v5601 = vunpack.c.l.s4 1934713408
      %v5602 = vunpack.c.0.s8 %v5601
      %v5603 = vlaneseq
      %v5604 = vshrl.u32 %v5603, 7
      %v5605 = vsub.s32 %v5602, %v5604
      %v5606 = vrot.slane %v5592, %v5605
      %v5607 = vcombine.high %v5583, 0.0
      %v5608 = vcombine.high %v5590, 0.0
      %v5609 = vcombine.high %v5599, 0.0
      %v5610 = vcombine.high %v5606, 0.0
      %v5611 = vcombine.low %v5519, %v5529
      %v5612 = vcombine.high %v5519, %v5529
      %v5614 = vunpack.c.l.s4 1983009808
      %v5615 = vunpack.c.0.s8 %v5614
      %v5616 = vlaneseq
      %v5617 = vshrl.u32 %v5616, 7
      %v5618 = vsub.s32 %v5615, %v5617
      %v5619 = vrot.slane %v5611, %v5618
      %v5621 = vunpack.c.l.s4 1983009808
      %v5622 = vunpack.c.0.s8 %v5621
      %v5623 = vlaneseq
      %v5624 = vshrl.u32 %v5623, 7
      %v5625 = vsub.s32 %v5622, %v5624
      %v5626 = vrot.slane %v5612, %v5625
      %v5627 = vcombine.low %v5524, %v5534
      %v5628 = vcombine.high %v5524, %v5534
      %v5630 = vunpack.c.l.s4 1983009808
      %v5631 = vunpack.c.0.s8 %v5630
      %v5632 = vlaneseq
      %v5633 = vshrl.u32 %v5632, 7
      %v5634 = vsub.s32 %v5631, %v5633
      %v5635 = vrot.slane %v5627, %v5634
      %v5637 = vunpack.c.l.s4 1983009808
      %v5638 = vunpack.c.0.s8 %v5637
      %v5639 = vlaneseq
      %v5640 = vshrl.u32 %v5639, 7
      %v5641 = vsub.s32 %v5638, %v5640
      %v5642 = vrot.slane %v5628, %v5641
      %v5643 = vcombine.low %v5619, %v5635
      %v5644 = vcombine.high %v5619, %v5635
      %v5646 = vunpack.c.l.s4 1934713408
      %v5647 = vunpack.c.0.s8 %v5646
      %v5648 = vlaneseq
      %v5649 = vshrl.u32 %v5648, 7
      %v5650 = vsub.s32 %v5647, %v5649
      %v5651 = vrot.slane %v5643, %v5650
      %v5653 = vunpack.c.l.s4 1934713408
      %v5654 = vunpack.c.0.s8 %v5653
      %v5655 = vlaneseq
      %v5656 = vshrl.u32 %v5655, 7
      %v5657 = vsub.s32 %v5654, %v5656
      %v5658 = vrot.slane %v5644, %v5657
      %v5659 = vcombine.low %v5626, %v5642
      %v5660 = vcombine.high %v5626, %v5642
      %v5662 = vunpack.c.l.s4 1934713408
      %v5663 = vunpack.c.0.s8 %v5662
      %v5664 = vlaneseq
      %v5665 = vshrl.u32 %v5664, 7
      %v5666 = vsub.s32 %v5663, %v5665
      %v5667 = vrot.slane %v5659, %v5666
      %v5669 = vunpack.c.l.s4 1934713408
      %v5670 = vunpack.c.0.s8 %v5669
      %v5671 = vlaneseq
      %v5672 = vshrl.u32 %v5671, 7
      %v5673 = vsub.s32 %v5670, %v5672
      %v5674 = vrot.slane %v5660, %v5673
      %v5675 = vcombine.high %v5651, 0.0
      %v5676 = vcombine.high %v5658, 0.0
      %v5677 = vcombine.high %v5667, 0.0
      %v5678 = vcombine.high %v5674, 0.0
      %5680 = vrot.lane.b32.xlu0 %v5607, 16
      %v5681 = vpop.permute.xlu0 %5680
      %5684 = vrot.lane.b32.xlu0 %v5590, 32
      %v5685 = vpop.permute.xlu0 %5684
      %5688 = vrot.lane.b32.xlu0 %v5608, 48
      %v5689 = vpop.permute.xlu0 %5688
      %5692 = vrot.lane.b32.xlu0 %v5599, 64
      %v5693 = vpop.permute.xlu0 %5692
      %5696 = vrot.lane.b32.xlu0 %v5609, 80
      %v5697 = vpop.permute.xlu0 %5696
      %5700 = vrot.lane.b32.xlu0 %v5606, 96
      %v5701 = vpop.permute.xlu0 %5700
      %5704 = vrot.lane.b32.xlu0 %v5610, 112
      %v5705 = vpop.permute.xlu0 %5704
      %5708 = vrot.lane.b32.xlu0 %v5675, 16
      %v5709 = vpop.permute.xlu0 %5708
      %5712 = vrot.lane.b32.xlu0 %v5658, 32
      %v5713 = vpop.permute.xlu0 %5712
      %5716 = vrot.lane.b32.xlu0 %v5676, 48
      %v5717 = vpop.permute.xlu0 %5716
      %5720 = vrot.lane.b32.xlu0 %v5667, 64
      %v5721 = vpop.permute.xlu0 %5720
      %5724 = vrot.lane.b32.xlu0 %v5677, 80
      %v5725 = vpop.permute.xlu0 %5724
      %5728 = vrot.lane.b32.xlu0 %v5674, 96
      %v5729 = vpop.permute.xlu0 %5728
      %5732 = vrot.lane.b32.xlu0 %v5678, 112
      %v5733 = vpop.permute.xlu0 %5732
      %v5735 = vsel %vm1530, %v5583, %v5681
      %v5736 = vsel %vm1532, %v5735, %v5685
      %v5737 = vsel %vm1534, %v5736, %v5689
      %v5738 = vsel %vm1536, %v5737, %v5693
      %v5739 = vsel %vm1538, %v5738, %v5697
      %v5740 = vsel %vm1540, %v5739, %v5701
      %v5741 = vsel %vm1542, %v5740, %v5705
      %v5742 = vsel %vm1530, %v5651, %v5709
      %v5743 = vsel %vm1532, %v5742, %v5713
      %v5744 = vsel %vm1534, %v5743, %v5717
      %v5745 = vsel %vm1536, %v5744, %v5721
      %v5746 = vsel %vm1538, %v5745, %v5725
      %v5747 = vsel %vm1540, %v5746, %v5729
      %v5748 = vsel %vm1542, %v5747, %v5733
      %s5749 = scalar_lea.vmem %s896, 12
      %v5750 = vld [vmem:[%s5749] sm:$0xf]
      %v5752 = vsel %vm932, %v5750, 0
      %v5755 = vsel %vm939, %v5741, 0
      %v5758 = vsel %vm939, %v5748, 0
      %5760 = vmatprep.subr.mxu0 0.0
      %5761 = vmatpush1.msra.mxu0 0.0
      %5762 = vmatprep.subr.mxu0 0.0
      %5763 = vmatpush1.msra.mxu0 0.0
      %5764 = vmatprep.subr.mxu0 0.0
      %5765 = vmatpush1.msra.mxu0 0.0
      %5766 = vmatprep.subr.mxu0 0.0
      %5767 = vmatpush1.msra.mxu0 0.0
      %5768 = vmatprep.subr.mxu0 0.0
      %5769 = vmatpush1.msra.mxu0 0.0
      %5770 = vmatprep.subr.mxu0 0.0
      %5771 = vmatpush1.msra.mxu0 0.0
      %5772 = vmatprep.subr.mxu0 0.0
      %5773 = vmatpush1.msra.mxu0 0.0
      %5774 = vmatprep.subr.mxu0 0.0
      %5775 = vmatpush1.msra.mxu0 0.0
      %5776 = vmatprep.subr.mxu0 0.0
      %5777 = vmatpush1.msra.mxu0 0.0
      %5778 = vmatprep.subr.mxu0 0.0
      %5779 = vmatpush1.msra.mxu0 0.0
      %5780 = vmatprep.subr.mxu0 0.0
      %5781 = vmatpush1.msra.mxu0 0.0
      %5782 = vmatprep.subr.mxu0 0.0
      %5783 = vmatpush1.msra.mxu0 0.0
      %5784 = vmatprep.subr.mxu0 0.0
      %5785 = vmatpush1.msra.mxu0 0.0
      %5786 = vmatprep.subr.mxu0 0.0
      %5787 = vmatpush1.msra.mxu0 0.0
      %5788 = vmatprep.subr.mxu0 0.0
      %5789 = vmatpush1.msra.mxu0 0.0
      %5790 = vmatprep.subr.mxu0 %v5758
      %5791 = vmatpush1.msra.mxu0 %v5755
      %5792 = vmatprep.subr.mxu0 0.0
      %5793 = vmatpush2.msra.mxu0 0.0
      %5794 = vmatprep.subr.mxu0 0.0
      %5795 = vmatpush2.msra.mxu0 0.0
      %5796 = vmatprep.subr.mxu0 0.0
      %5797 = vmatpush2.msra.mxu0 0.0
      %5798 = vmatprep.subr.mxu0 0.0
      %5799 = vmatpush2.msra.mxu0 0.0
      %5800 = vmatprep.subr.mxu0 0.0
      %5801 = vmatpush2.msra.mxu0 0.0
      %5802 = vmatprep.subr.mxu0 0.0
      %5803 = vmatpush2.msra.mxu0 0.0
      %5804 = vmatprep.subr.mxu0 0.0
      %5805 = vmatpush2.msra.mxu0 0.0
      %5806 = vmatprep.subr.mxu0 0.0
      %5807 = vmatpush2.msra.mxu0 0.0
      %5808 = vmatprep.subr.mxu0 0.0
      %5809 = vmatpush2.msra.mxu0 0.0
      %5810 = vmatprep.subr.mxu0 0.0
      %5811 = vmatpush2.msra.mxu0 0.0
      %5812 = vmatprep.subr.mxu0 0.0
      %5813 = vmatpush2.msra.mxu0 0.0
      %5814 = vmatprep.subr.mxu0 0.0
      %5815 = vmatpush2.msra.mxu0 0.0
      %5816 = vmatprep.subr.mxu0 0.0
      %5817 = vmatpush2.msra.mxu0 0.0
      %5818 = vmatprep.subr.mxu0 0.0
      %5819 = vmatpush2.msra.mxu0 0.0
      %5820 = vmatprep.subr.mxu0 0.0
      %5821 = vmatpush2.msra.mxu0 0.0
      %5822 = vmatprep.subr.mxu0 0.0
      %5823 = vmatpush2.msra.mxu0 0.0
      %5824 = vmatprep.mubr.f32.mxu0 0.0
      %5825 = vmatmul.mubr.f32.gmra.mxu0 %v5752
      %v5826 = vpop.f32.mrf.mxu0
      %v5827 = vadd.f32 0.0, %v5826
      %v5828 = vpop.f32.mrf.mxu0
      %v5829 = vadd.f32 0.0, %v5828
      %5830 = vdwg.mxu0
      %v5831 = vadd.f32 %v5509, %v5827
      %v5832 = vadd.f32 %v5510, %v5829
      %5833 = vrot.lane.b32.xlu0 %v5517, 126
      %v5834 = vpop.permute.xlu0 %5833
      %5835 = vrot.lane.b32.xlu0 %v5519, 126
      %v5836 = vpop.permute.xlu0 %5835
      %5837 = vrot.lane.b32.xlu0 %v5522, 126
      %v5838 = vpop.permute.xlu0 %5837
      %5839 = vrot.lane.b32.xlu0 %v5524, 126
      %v5840 = vpop.permute.xlu0 %5839
      %5841 = vrot.lane.b32.xlu0 %v5527, 126
      %v5842 = vpop.permute.xlu0 %5841
      %5843 = vrot.lane.b32.xlu0 %v5529, 126
      %v5844 = vpop.permute.xlu0 %5843
      %5845 = vrot.lane.b32.xlu0 %v5532, 126
      %v5846 = vpop.permute.xlu0 %5845
      %5847 = vrot.lane.b32.xlu0 %v5534, 126
      %v5848 = vpop.permute.xlu0 %5847
      %v5857 = vcombine.low %v5834, %v5842
      %v5858 = vcombine.high %v5834, %v5842
      %v5860 = vunpack.c.l.s4 1983009808
      %v5861 = vunpack.c.0.s8 %v5860
      %v5862 = vlaneseq
      %v5863 = vshrl.u32 %v5862, 7
      %v5864 = vsub.s32 %v5861, %v5863
      %v5865 = vrot.slane %v5857, %v5864
      %v5867 = vunpack.c.l.s4 1983009808
      %v5868 = vunpack.c.0.s8 %v5867
      %v5869 = vlaneseq
      %v5870 = vshrl.u32 %v5869, 7
      %v5871 = vsub.s32 %v5868, %v5870
      %v5872 = vrot.slane %v5858, %v5871
      %v5873 = vcombine.low %v5838, %v5846
      %v5874 = vcombine.high %v5838, %v5846
      %v5876 = vunpack.c.l.s4 1983009808
      %v5877 = vunpack.c.0.s8 %v5876
      %v5878 = vlaneseq
      %v5879 = vshrl.u32 %v5878, 7
      %v5880 = vsub.s32 %v5877, %v5879
      %v5881 = vrot.slane %v5873, %v5880
      %v5883 = vunpack.c.l.s4 1983009808
      %v5884 = vunpack.c.0.s8 %v5883
      %v5885 = vlaneseq
      %v5886 = vshrl.u32 %v5885, 7
      %v5887 = vsub.s32 %v5884, %v5886
      %v5888 = vrot.slane %v5874, %v5887
      %v5889 = vcombine.low %v5865, %v5881
      %v5890 = vcombine.high %v5865, %v5881
      %v5892 = vunpack.c.l.s4 1934713408
      %v5893 = vunpack.c.0.s8 %v5892
      %v5894 = vlaneseq
      %v5895 = vshrl.u32 %v5894, 7
      %v5896 = vsub.s32 %v5893, %v5895
      %v5897 = vrot.slane %v5889, %v5896
      %v5899 = vunpack.c.l.s4 1934713408
      %v5900 = vunpack.c.0.s8 %v5899
      %v5901 = vlaneseq
      %v5902 = vshrl.u32 %v5901, 7
      %v5903 = vsub.s32 %v5900, %v5902
      %v5904 = vrot.slane %v5890, %v5903
      %v5905 = vcombine.low %v5872, %v5888
      %v5906 = vcombine.high %v5872, %v5888
      %v5908 = vunpack.c.l.s4 1934713408
      %v5909 = vunpack.c.0.s8 %v5908
      %v5910 = vlaneseq
      %v5911 = vshrl.u32 %v5910, 7
      %v5912 = vsub.s32 %v5909, %v5911
      %v5913 = vrot.slane %v5905, %v5912
      %v5915 = vunpack.c.l.s4 1934713408
      %v5916 = vunpack.c.0.s8 %v5915
      %v5917 = vlaneseq
      %v5918 = vshrl.u32 %v5917, 7
      %v5919 = vsub.s32 %v5916, %v5918
      %v5920 = vrot.slane %v5906, %v5919
      %v5921 = vcombine.high %v5897, 0.0
      %v5922 = vcombine.high %v5904, 0.0
      %v5923 = vcombine.high %v5913, 0.0
      %v5924 = vcombine.high %v5920, 0.0
      %v5925 = vcombine.low %v5836, %v5844
      %v5926 = vcombine.high %v5836, %v5844
      %v5928 = vunpack.c.l.s4 1983009808
      %v5929 = vunpack.c.0.s8 %v5928
      %v5930 = vlaneseq
      %v5931 = vshrl.u32 %v5930, 7
      %v5932 = vsub.s32 %v5929, %v5931
      %v5933 = vrot.slane %v5925, %v5932
      %v5935 = vunpack.c.l.s4 1983009808
      %v5936 = vunpack.c.0.s8 %v5935
      %v5937 = vlaneseq
      %v5938 = vshrl.u32 %v5937, 7
      %v5939 = vsub.s32 %v5936, %v5938
      %v5940 = vrot.slane %v5926, %v5939
      %v5941 = vcombine.low %v5840, %v5848
      %v5942 = vcombine.high %v5840, %v5848
      %v5944 = vunpack.c.l.s4 1983009808
      %v5945 = vunpack.c.0.s8 %v5944
      %v5946 = vlaneseq
      %v5947 = vshrl.u32 %v5946, 7
      %v5948 = vsub.s32 %v5945, %v5947
      %v5949 = vrot.slane %v5941, %v5948
      %v5951 = vunpack.c.l.s4 1983009808
      %v5952 = vunpack.c.0.s8 %v5951
      %v5953 = vlaneseq
      %v5954 = vshrl.u32 %v5953, 7
      %v5955 = vsub.s32 %v5952, %v5954
      %v5956 = vrot.slane %v5942, %v5955
      %v5957 = vcombine.low %v5933, %v5949
      %v5958 = vcombine.high %v5933, %v5949
      %v5960 = vunpack.c.l.s4 1934713408
      %v5961 = vunpack.c.0.s8 %v5960
      %v5962 = vlaneseq
      %v5963 = vshrl.u32 %v5962, 7
      %v5964 = vsub.s32 %v5961, %v5963
      %v5965 = vrot.slane %v5957, %v5964
      %v5967 = vunpack.c.l.s4 1934713408
      %v5968 = vunpack.c.0.s8 %v5967
      %v5969 = vlaneseq
      %v5970 = vshrl.u32 %v5969, 7
      %v5971 = vsub.s32 %v5968, %v5970
      %v5972 = vrot.slane %v5958, %v5971
      %v5973 = vcombine.low %v5940, %v5956
      %v5974 = vcombine.high %v5940, %v5956
      %v5976 = vunpack.c.l.s4 1934713408
      %v5977 = vunpack.c.0.s8 %v5976
      %v5978 = vlaneseq
      %v5979 = vshrl.u32 %v5978, 7
      %v5980 = vsub.s32 %v5977, %v5979
      %v5981 = vrot.slane %v5973, %v5980
      %v5983 = vunpack.c.l.s4 1934713408
      %v5984 = vunpack.c.0.s8 %v5983
      %v5985 = vlaneseq
      %v5986 = vshrl.u32 %v5985, 7
      %v5987 = vsub.s32 %v5984, %v5986
      %v5988 = vrot.slane %v5974, %v5987
      %v5989 = vcombine.high %v5965, 0.0
      %v5990 = vcombine.high %v5972, 0.0
      %v5991 = vcombine.high %v5981, 0.0
      %v5992 = vcombine.high %v5988, 0.0
      %5994 = vrot.lane.b32.xlu0 %v5921, 16
      %v5995 = vpop.permute.xlu0 %5994
      %5998 = vrot.lane.b32.xlu0 %v5904, 32
      %v5999 = vpop.permute.xlu0 %5998
      %6002 = vrot.lane.b32.xlu0 %v5922, 48
      %v6003 = vpop.permute.xlu0 %6002
      %6006 = vrot.lane.b32.xlu0 %v5913, 64
      %v6007 = vpop.permute.xlu0 %6006
      %6010 = vrot.lane.b32.xlu0 %v5923, 80
      %v6011 = vpop.permute.xlu0 %6010
      %6014 = vrot.lane.b32.xlu0 %v5920, 96
      %v6015 = vpop.permute.xlu0 %6014
      %6018 = vrot.lane.b32.xlu0 %v5924, 112
      %v6019 = vpop.permute.xlu0 %6018
      %6022 = vrot.lane.b32.xlu0 %v5989, 16
      %v6023 = vpop.permute.xlu0 %6022
      %6026 = vrot.lane.b32.xlu0 %v5972, 32
      %v6027 = vpop.permute.xlu0 %6026
      %6030 = vrot.lane.b32.xlu0 %v5990, 48
      %v6031 = vpop.permute.xlu0 %6030
      %6034 = vrot.lane.b32.xlu0 %v5981, 64
      %v6035 = vpop.permute.xlu0 %6034
      %6038 = vrot.lane.b32.xlu0 %v5991, 80
      %v6039 = vpop.permute.xlu0 %6038
      %6042 = vrot.lane.b32.xlu0 %v5988, 96
      %v6043 = vpop.permute.xlu0 %6042
      %6046 = vrot.lane.b32.xlu0 %v5992, 112
      %v6047 = vpop.permute.xlu0 %6046
      %v6049 = vsel %vm1530, %v5897, %v5995
      %v6050 = vsel %vm1532, %v6049, %v5999
      %v6051 = vsel %vm1534, %v6050, %v6003
      %v6052 = vsel %vm1536, %v6051, %v6007
      %v6053 = vsel %vm1538, %v6052, %v6011
      %v6054 = vsel %vm1540, %v6053, %v6015
      %v6055 = vsel %vm1542, %v6054, %v6019
      %v6056 = vsel %vm1530, %v5965, %v6023
      %v6057 = vsel %vm1532, %v6056, %v6027
      %v6058 = vsel %vm1534, %v6057, %v6031
      %v6059 = vsel %vm1536, %v6058, %v6035
      %v6060 = vsel %vm1538, %v6059, %v6039
      %v6061 = vsel %vm1540, %v6060, %v6043
      %v6062 = vsel %vm1542, %v6061, %v6047
      %s6063 = scalar_lea.vmem %s896, 16
      %v6064 = vld [vmem:[%s6063] sm:$0xf]
      %v6066 = vsel %vm932, %v6064, 0
      %v6069 = vsel %vm939, %v6055, 0
      %v6072 = vsel %vm939, %v6062, 0
      %6074 = vmatprep.subr.mxu0 0.0
      %6075 = vmatpush1.msra.mxu0 0.0
      %6076 = vmatprep.subr.mxu0 0.0
      %6077 = vmatpush1.msra.mxu0 0.0
      %6078 = vmatprep.subr.mxu0 0.0
      %6079 = vmatpush1.msra.mxu0 0.0
      %6080 = vmatprep.subr.mxu0 0.0
      %6081 = vmatpush1.msra.mxu0 0.0
      %6082 = vmatprep.subr.mxu0 0.0
      %6083 = vmatpush1.msra.mxu0 0.0
      %6084 = vmatprep.subr.mxu0 0.0
      %6085 = vmatpush1.msra.mxu0 0.0
      %6086 = vmatprep.subr.mxu0 0.0
      %6087 = vmatpush1.msra.mxu0 0.0
      %6088 = vmatprep.subr.mxu0 0.0
      %6089 = vmatpush1.msra.mxu0 0.0
      %6090 = vmatprep.subr.mxu0 0.0
      %6091 = vmatpush1.msra.mxu0 0.0
      %6092 = vmatprep.subr.mxu0 0.0
      %6093 = vmatpush1.msra.mxu0 0.0
      %6094 = vmatprep.subr.mxu0 0.0
      %6095 = vmatpush1.msra.mxu0 0.0
      %6096 = vmatprep.subr.mxu0 0.0
      %6097 = vmatpush1.msra.mxu0 0.0
      %6098 = vmatprep.subr.mxu0 0.0
      %6099 = vmatpush1.msra.mxu0 0.0
      %6100 = vmatprep.subr.mxu0 0.0
      %6101 = vmatpush1.msra.mxu0 0.0
      %6102 = vmatprep.subr.mxu0 0.0
      %6103 = vmatpush1.msra.mxu0 0.0
      %6104 = vmatprep.subr.mxu0 %v6072
      %6105 = vmatpush1.msra.mxu0 %v6069
      %6106 = vmatprep.subr.mxu0 0.0
      %6107 = vmatpush2.msra.mxu0 0.0
      %6108 = vmatprep.subr.mxu0 0.0
      %6109 = vmatpush2.msra.mxu0 0.0
      %6110 = vmatprep.subr.mxu0 0.0
      %6111 = vmatpush2.msra.mxu0 0.0
      %6112 = vmatprep.subr.mxu0 0.0
      %6113 = vmatpush2.msra.mxu0 0.0
      %6114 = vmatprep.subr.mxu0 0.0
      %6115 = vmatpush2.msra.mxu0 0.0
      %6116 = vmatprep.subr.mxu0 0.0
      %6117 = vmatpush2.msra.mxu0 0.0
      %6118 = vmatprep.subr.mxu0 0.0
      %6119 = vmatpush2.msra.mxu0 0.0
      %6120 = vmatprep.subr.mxu0 0.0
      %6121 = vmatpush2.msra.mxu0 0.0
      %6122 = vmatprep.subr.mxu0 0.0
      %6123 = vmatpush2.msra.mxu0 0.0
      %6124 = vmatprep.subr.mxu0 0.0
      %6125 = vmatpush2.msra.mxu0 0.0
      %6126 = vmatprep.subr.mxu0 0.0
      %6127 = vmatpush2.msra.mxu0 0.0
      %6128 = vmatprep.subr.mxu0 0.0
      %6129 = vmatpush2.msra.mxu0 0.0
      %6130 = vmatprep.subr.mxu0 0.0
      %6131 = vmatpush2.msra.mxu0 0.0
      %6132 = vmatprep.subr.mxu0 0.0
      %6133 = vmatpush2.msra.mxu0 0.0
      %6134 = vmatprep.subr.mxu0 0.0
      %6135 = vmatpush2.msra.mxu0 0.0
      %6136 = vmatprep.subr.mxu0 0.0
      %6137 = vmatpush2.msra.mxu0 0.0
      %6138 = vmatprep.mubr.f32.mxu0 0.0
      %6139 = vmatmul.mubr.f32.gmra.mxu0 %v6066
      %v6140 = vpop.f32.mrf.mxu0
      %v6141 = vadd.f32 0.0, %v6140
      %v6142 = vpop.f32.mrf.mxu0
      %v6143 = vadd.f32 0.0, %v6142
      %6144 = vdwg.mxu0
      %v6145 = vadd.f32 %v5831, %v6141
      %v6146 = vadd.f32 %v5832, %v6143
      %6147 = vrot.lane.b32.xlu0 %v5517, 124
      %v6148 = vpop.permute.xlu0 %6147
      %6149 = vrot.lane.b32.xlu0 %v5519, 124
      %v6150 = vpop.permute.xlu0 %6149
      %6151 = vrot.lane.b32.xlu0 %v5522, 124
      %v6152 = vpop.permute.xlu0 %6151
      %6153 = vrot.lane.b32.xlu0 %v5524, 124
      %v6154 = vpop.permute.xlu0 %6153
      %6155 = vrot.lane.b32.xlu0 %v5527, 124
      %v6156 = vpop.permute.xlu0 %6155
      %6157 = vrot.lane.b32.xlu0 %v5529, 124
      %v6158 = vpop.permute.xlu0 %6157
      %6159 = vrot.lane.b32.xlu0 %v5532, 124
      %v6160 = vpop.permute.xlu0 %6159
      %6161 = vrot.lane.b32.xlu0 %v5534, 124
      %v6162 = vpop.permute.xlu0 %6161
      %v6171 = vcombine.low %v6148, %v6156
      %v6172 = vcombine.high %v6148, %v6156
      %v6174 = vunpack.c.l.s4 1983009808
      %v6175 = vunpack.c.0.s8 %v6174
      %v6176 = vlaneseq
      %v6177 = vshrl.u32 %v6176, 7
      %v6178 = vsub.s32 %v6175, %v6177
      %v6179 = vrot.slane %v6171, %v6178
      %v6181 = vunpack.c.l.s4 1983009808
      %v6182 = vunpack.c.0.s8 %v6181
      %v6183 = vlaneseq
      %v6184 = vshrl.u32 %v6183, 7
      %v6185 = vsub.s32 %v6182, %v6184
      %v6186 = vrot.slane %v6172, %v6185
      %v6187 = vcombine.low %v6152, %v6160
      %v6188 = vcombine.high %v6152, %v6160
      %v6190 = vunpack.c.l.s4 1983009808
      %v6191 = vunpack.c.0.s8 %v6190
      %v6192 = vlaneseq
      %v6193 = vshrl.u32 %v6192, 7
      %v6194 = vsub.s32 %v6191, %v6193
      %v6195 = vrot.slane %v6187, %v6194
      %v6197 = vunpack.c.l.s4 1983009808
      %v6198 = vunpack.c.0.s8 %v6197
      %v6199 = vlaneseq
      %v6200 = vshrl.u32 %v6199, 7
      %v6201 = vsub.s32 %v6198, %v6200
      %v6202 = vrot.slane %v6188, %v6201
      %v6203 = vcombine.low %v6179, %v6195
      %v6204 = vcombine.high %v6179, %v6195
      %v6206 = vunpack.c.l.s4 1934713408
      %v6207 = vunpack.c.0.s8 %v6206
      %v6208 = vlaneseq
      %v6209 = vshrl.u32 %v6208, 7
      %v6210 = vsub.s32 %v6207, %v6209
      %v6211 = vrot.slane %v6203, %v6210
      %v6213 = vunpack.c.l.s4 1934713408
      %v6214 = vunpack.c.0.s8 %v6213
      %v6215 = vlaneseq
      %v6216 = vshrl.u32 %v6215, 7
      %v6217 = vsub.s32 %v6214, %v6216
      %v6218 = vrot.slane %v6204, %v6217
      %v6219 = vcombine.low %v6186, %v6202
      %v6220 = vcombine.high %v6186, %v6202
      %v6222 = vunpack.c.l.s4 1934713408
      %v6223 = vunpack.c.0.s8 %v6222
      %v6224 = vlaneseq
      %v6225 = vshrl.u32 %v6224, 7
      %v6226 = vsub.s32 %v6223, %v6225
      %v6227 = vrot.slane %v6219, %v6226
      %v6229 = vunpack.c.l.s4 1934713408
      %v6230 = vunpack.c.0.s8 %v6229
      %v6231 = vlaneseq
      %v6232 = vshrl.u32 %v6231, 7
      %v6233 = vsub.s32 %v6230, %v6232
      %v6234 = vrot.slane %v6220, %v6233
      %v6235 = vcombine.high %v6211, 0.0
      %v6236 = vcombine.high %v6218, 0.0
      %v6237 = vcombine.high %v6227, 0.0
      %v6238 = vcombine.high %v6234, 0.0
      %v6239 = vcombine.low %v6150, %v6158
      %v6240 = vcombine.high %v6150, %v6158
      %v6242 = vunpack.c.l.s4 1983009808
      %v6243 = vunpack.c.0.s8 %v6242
      %v6244 = vlaneseq
      %v6245 = vshrl.u32 %v6244, 7
      %v6246 = vsub.s32 %v6243, %v6245
      %v6247 = vrot.slane %v6239, %v6246
      %v6249 = vunpack.c.l.s4 1983009808
      %v6250 = vunpack.c.0.s8 %v6249
      %v6251 = vlaneseq
      %v6252 = vshrl.u32 %v6251, 7
      %v6253 = vsub.s32 %v6250, %v6252
      %v6254 = vrot.slane %v6240, %v6253
      %v6255 = vcombine.low %v6154, %v6162
      %v6256 = vcombine.high %v6154, %v6162
      %v6258 = vunpack.c.l.s4 1983009808
      %v6259 = vunpack.c.0.s8 %v6258
      %v6260 = vlaneseq
      %v6261 = vshrl.u32 %v6260, 7
      %v6262 = vsub.s32 %v6259, %v6261
      %v6263 = vrot.slane %v6255, %v6262
      %v6265 = vunpack.c.l.s4 1983009808
      %v6266 = vunpack.c.0.s8 %v6265
      %v6267 = vlaneseq
      %v6268 = vshrl.u32 %v6267, 7
      %v6269 = vsub.s32 %v6266, %v6268
      %v6270 = vrot.slane %v6256, %v6269
      %v6271 = vcombine.low %v6247, %v6263
      %v6272 = vcombine.high %v6247, %v6263
      %v6274 = vunpack.c.l.s4 1934713408
      %v6275 = vunpack.c.0.s8 %v6274
      %v6276 = vlaneseq
      %v6277 = vshrl.u32 %v6276, 7
      %v6278 = vsub.s32 %v6275, %v6277
      %v6279 = vrot.slane %v6271, %v6278
      %v6281 = vunpack.c.l.s4 1934713408
      %v6282 = vunpack.c.0.s8 %v6281
      %v6283 = vlaneseq
      %v6284 = vshrl.u32 %v6283, 7
      %v6285 = vsub.s32 %v6282, %v6284
      %v6286 = vrot.slane %v6272, %v6285
      %v6287 = vcombine.low %v6254, %v6270
      %v6288 = vcombine.high %v6254, %v6270
      %v6290 = vunpack.c.l.s4 1934713408
      %v6291 = vunpack.c.0.s8 %v6290
      %v6292 = vlaneseq
      %v6293 = vshrl.u32 %v6292, 7
      %v6294 = vsub.s32 %v6291, %v6293
      %v6295 = vrot.slane %v6287, %v6294
      %v6297 = vunpack.c.l.s4 1934713408
      %v6298 = vunpack.c.0.s8 %v6297
      %v6299 = vlaneseq
      %v6300 = vshrl.u32 %v6299, 7
      %v6301 = vsub.s32 %v6298, %v6300
      %v6302 = vrot.slane %v6288, %v6301
      %v6303 = vcombine.high %v6279, 0.0
      %v6304 = vcombine.high %v6286, 0.0
      %v6305 = vcombine.high %v6295, 0.0
      %v6306 = vcombine.high %v6302, 0.0
      %6308 = vrot.lane.b32.xlu0 %v6235, 16
      %v6309 = vpop.permute.xlu0 %6308
      %6312 = vrot.lane.b32.xlu0 %v6218, 32
      %v6313 = vpop.permute.xlu0 %6312
      %6316 = vrot.lane.b32.xlu0 %v6236, 48
      %v6317 = vpop.permute.xlu0 %6316
      %6320 = vrot.lane.b32.xlu0 %v6227, 64
      %v6321 = vpop.permute.xlu0 %6320
      %6324 = vrot.lane.b32.xlu0 %v6237, 80
      %v6325 = vpop.permute.xlu0 %6324
      %6328 = vrot.lane.b32.xlu0 %v6234, 96
      %v6329 = vpop.permute.xlu0 %6328
      %6332 = vrot.lane.b32.xlu0 %v6238, 112
      %v6333 = vpop.permute.xlu0 %6332
      %6336 = vrot.lane.b32.xlu0 %v6303, 16
      %v6337 = vpop.permute.xlu0 %6336
      %6340 = vrot.lane.b32.xlu0 %v6286, 32
      %v6341 = vpop.permute.xlu0 %6340
      %6344 = vrot.lane.b32.xlu0 %v6304, 48
      %v6345 = vpop.permute.xlu0 %6344
      %6348 = vrot.lane.b32.xlu0 %v6295, 64
      %v6349 = vpop.permute.xlu0 %6348
      %6352 = vrot.lane.b32.xlu0 %v6305, 80
      %v6353 = vpop.permute.xlu0 %6352
      %6356 = vrot.lane.b32.xlu0 %v6302, 96
      %v6357 = vpop.permute.xlu0 %6356
      %6360 = vrot.lane.b32.xlu0 %v6306, 112
      %v6361 = vpop.permute.xlu0 %6360
      %v6363 = vsel %vm1530, %v6211, %v6309
      %v6364 = vsel %vm1532, %v6363, %v6313
      %v6365 = vsel %vm1534, %v6364, %v6317
      %v6366 = vsel %vm1536, %v6365, %v6321
      %v6367 = vsel %vm1538, %v6366, %v6325
      %v6368 = vsel %vm1540, %v6367, %v6329
      %v6369 = vsel %vm1542, %v6368, %v6333
      %v6370 = vsel %vm1530, %v6279, %v6337
      %v6371 = vsel %vm1532, %v6370, %v6341
      %v6372 = vsel %vm1534, %v6371, %v6345
      %v6373 = vsel %vm1536, %v6372, %v6349
      %v6374 = vsel %vm1538, %v6373, %v6353
      %v6375 = vsel %vm1540, %v6374, %v6357
      %v6376 = vsel %vm1542, %v6375, %v6361
      %s6377 = scalar_lea.vmem %s896, 20
      %v6378 = vld [vmem:[%s6377] sm:$0xf]
      %v6380 = vsel %vm932, %v6378, 0
      %v6383 = vsel %vm939, %v6369, 0
      %v6386 = vsel %vm939, %v6376, 0
      %6388 = vmatprep.subr.mxu0 0.0
      %6389 = vmatpush1.msra.mxu0 0.0
      %6390 = vmatprep.subr.mxu0 0.0
      %6391 = vmatpush1.msra.mxu0 0.0
      %6392 = vmatprep.subr.mxu0 0.0
      %6393 = vmatpush1.msra.mxu0 0.0
      %6394 = vmatprep.subr.mxu0 0.0
      %6395 = vmatpush1.msra.mxu0 0.0
      %6396 = vmatprep.subr.mxu0 0.0
      %6397 = vmatpush1.msra.mxu0 0.0
      %6398 = vmatprep.subr.mxu0 0.0
      %6399 = vmatpush1.msra.mxu0 0.0
      %6400 = vmatprep.subr.mxu0 0.0
      %6401 = vmatpush1.msra.mxu0 0.0
      %6402 = vmatprep.subr.mxu0 0.0
      %6403 = vmatpush1.msra.mxu0 0.0
      %6404 = vmatprep.subr.mxu0 0.0
      %6405 = vmatpush1.msra.mxu0 0.0
      %6406 = vmatprep.subr.mxu0 0.0
      %6407 = vmatpush1.msra.mxu0 0.0
      %6408 = vmatprep.subr.mxu0 0.0
      %6409 = vmatpush1.msra.mxu0 0.0
      %6410 = vmatprep.subr.mxu0 0.0
      %6411 = vmatpush1.msra.mxu0 0.0
      %6412 = vmatprep.subr.mxu0 0.0
      %6413 = vmatpush1.msra.mxu0 0.0
      %6414 = vmatprep.subr.mxu0 0.0
      %6415 = vmatpush1.msra.mxu0 0.0
      %6416 = vmatprep.subr.mxu0 0.0
      %6417 = vmatpush1.msra.mxu0 0.0
      %6418 = vmatprep.subr.mxu0 %v6386
      %6419 = vmatpush1.msra.mxu0 %v6383
      %6420 = vmatprep.subr.mxu0 0.0
      %6421 = vmatpush2.msra.mxu0 0.0
      %6422 = vmatprep.subr.mxu0 0.0
      %6423 = vmatpush2.msra.mxu0 0.0
      %6424 = vmatprep.subr.mxu0 0.0
      %6425 = vmatpush2.msra.mxu0 0.0
      %6426 = vmatprep.subr.mxu0 0.0
      %6427 = vmatpush2.msra.mxu0 0.0
      %6428 = vmatprep.subr.mxu0 0.0
      %6429 = vmatpush2.msra.mxu0 0.0
      %6430 = vmatprep.subr.mxu0 0.0
      %6431 = vmatpush2.msra.mxu0 0.0
      %6432 = vmatprep.subr.mxu0 0.0
      %6433 = vmatpush2.msra.mxu0 0.0
      %6434 = vmatprep.subr.mxu0 0.0
      %6435 = vmatpush2.msra.mxu0 0.0
      %6436 = vmatprep.subr.mxu0 0.0
      %6437 = vmatpush2.msra.mxu0 0.0
      %6438 = vmatprep.subr.mxu0 0.0
      %6439 = vmatpush2.msra.mxu0 0.0
      %6440 = vmatprep.subr.mxu0 0.0
      %6441 = vmatpush2.msra.mxu0 0.0
      %6442 = vmatprep.subr.mxu0 0.0
      %6443 = vmatpush2.msra.mxu0 0.0
      %6444 = vmatprep.subr.mxu0 0.0
      %6445 = vmatpush2.msra.mxu0 0.0
      %6446 = vmatprep.subr.mxu0 0.0
      %6447 = vmatpush2.msra.mxu0 0.0
      %6448 = vmatprep.subr.mxu0 0.0
      %6449 = vmatpush2.msra.mxu0 0.0
      %6450 = vmatprep.subr.mxu0 0.0
      %6451 = vmatpush2.msra.mxu0 0.0
      %6452 = vmatprep.mubr.f32.mxu0 0.0
      %6453 = vmatmul.mubr.f32.gmra.mxu0 %v6380
      %v6454 = vpop.f32.mrf.mxu0
      %v6455 = vadd.f32 0.0, %v6454
      %v6456 = vpop.f32.mrf.mxu0
      %v6457 = vadd.f32 0.0, %v6456
      %6458 = vdwg.mxu0
      %v6459 = vadd.f32 %v6145, %v6455
      %v6460 = vadd.f32 %v6146, %v6457
      %v6461 = vrot.slane %v4578, 4
      %v6462 = vrot.slane %v4579, 4
      %v6463 = vsel %vm939, %v6461, %v6462
      %v6464 = vrot.slane %v4580, 4
      %v6465 = vsel %vm939, %v6462, %v6464
      %v6466 = vrot.slane %v4581, 4
      %v6467 = vrot.slane %v4582, 4
      %v6468 = vsel %vm939, %v6466, %v6467
      %v6469 = vrot.slane %v4583, 4
      %v6470 = vsel %vm939, %v6467, %v6469
      %v6471 = vrot.slane %v4584, 4
      %v6472 = vrot.slane %v4585, 4
      %v6473 = vsel %vm939, %v6471, %v6472
      %v6474 = vrot.slane %v4586, 4
      %v6475 = vsel %vm939, %v6472, %v6474
      %v6476 = vrot.slane %v4587, 4
      %v6477 = vrot.slane %v4588, 4
      %v6478 = vsel %vm939, %v6476, %v6477
      %v6479 = vrot.slane %v4589, 4
      %v6480 = vsel %vm939, %v6477, %v6479
      %v6489 = vcombine.low %v6463, %v6473
      %v6490 = vcombine.high %v6463, %v6473
      %v6492 = vunpack.c.l.s4 1983009808
      %v6493 = vunpack.c.0.s8 %v6492
      %v6494 = vlaneseq
      %v6495 = vshrl.u32 %v6494, 7
      %v6496 = vsub.s32 %v6493, %v6495
      %v6497 = vrot.slane %v6489, %v6496
      %v6499 = vunpack.c.l.s4 1983009808
      %v6500 = vunpack.c.0.s8 %v6499
      %v6501 = vlaneseq
      %v6502 = vshrl.u32 %v6501, 7
      %v6503 = vsub.s32 %v6500, %v6502
      %v6504 = vrot.slane %v6490, %v6503
      %v6505 = vcombine.low %v6468, %v6478
      %v6506 = vcombine.high %v6468, %v6478
      %v6508 = vunpack.c.l.s4 1983009808
      %v6509 = vunpack.c.0.s8 %v6508
      %v6510 = vlaneseq
      %v6511 = vshrl.u32 %v6510, 7
      %v6512 = vsub.s32 %v6509, %v6511
      %v6513 = vrot.slane %v6505, %v6512
      %v6515 = vunpack.c.l.s4 1983009808
      %v6516 = vunpack.c.0.s8 %v6515
      %v6517 = vlaneseq
      %v6518 = vshrl.u32 %v6517, 7
      %v6519 = vsub.s32 %v6516, %v6518
      %v6520 = vrot.slane %v6506, %v6519
      %v6521 = vcombine.low %v6497, %v6513
      %v6522 = vcombine.high %v6497, %v6513
      %v6524 = vunpack.c.l.s4 1934713408
      %v6525 = vunpack.c.0.s8 %v6524
      %v6526 = vlaneseq
      %v6527 = vshrl.u32 %v6526, 7
      %v6528 = vsub.s32 %v6525, %v6527
      %v6529 = vrot.slane %v6521, %v6528
      %v6531 = vunpack.c.l.s4 1934713408
      %v6532 = vunpack.c.0.s8 %v6531
      %v6533 = vlaneseq
      %v6534 = vshrl.u32 %v6533, 7
      %v6535 = vsub.s32 %v6532, %v6534
      %v6536 = vrot.slane %v6522, %v6535
      %v6537 = vcombine.low %v6504, %v6520
      %v6538 = vcombine.high %v6504, %v6520
      %v6540 = vunpack.c.l.s4 1934713408
      %v6541 = vunpack.c.0.s8 %v6540
      %v6542 = vlaneseq
      %v6543 = vshrl.u32 %v6542, 7
      %v6544 = vsub.s32 %v6541, %v6543
      %v6545 = vrot.slane %v6537, %v6544
      %v6547 = vunpack.c.l.s4 1934713408
      %v6548 = vunpack.c.0.s8 %v6547
      %v6549 = vlaneseq
      %v6550 = vshrl.u32 %v6549, 7
      %v6551 = vsub.s32 %v6548, %v6550
      %v6552 = vrot.slane %v6538, %v6551
      %v6553 = vcombine.high %v6529, 0.0
      %v6554 = vcombine.high %v6536, 0.0
      %v6555 = vcombine.high %v6545, 0.0
      %v6556 = vcombine.high %v6552, 0.0
      %v6557 = vcombine.low %v6465, %v6475
      %v6558 = vcombine.high %v6465, %v6475
      %v6560 = vunpack.c.l.s4 1983009808
      %v6561 = vunpack.c.0.s8 %v6560
      %v6562 = vlaneseq
      %v6563 = vshrl.u32 %v6562, 7
      %v6564 = vsub.s32 %v6561, %v6563
      %v6565 = vrot.slane %v6557, %v6564
      %v6567 = vunpack.c.l.s4 1983009808
      %v6568 = vunpack.c.0.s8 %v6567
      %v6569 = vlaneseq
      %v6570 = vshrl.u32 %v6569, 7
      %v6571 = vsub.s32 %v6568, %v6570
      %v6572 = vrot.slane %v6558, %v6571
      %v6573 = vcombine.low %v6470, %v6480
      %v6574 = vcombine.high %v6470, %v6480
      %v6576 = vunpack.c.l.s4 1983009808
      %v6577 = vunpack.c.0.s8 %v6576
      %v6578 = vlaneseq
      %v6579 = vshrl.u32 %v6578, 7
      %v6580 = vsub.s32 %v6577, %v6579
      %v6581 = vrot.slane %v6573, %v6580
      %v6583 = vunpack.c.l.s4 1983009808
      %v6584 = vunpack.c.0.s8 %v6583
      %v6585 = vlaneseq
      %v6586 = vshrl.u32 %v6585, 7
      %v6587 = vsub.s32 %v6584, %v6586
      %v6588 = vrot.slane %v6574, %v6587
      %v6589 = vcombine.low %v6565, %v6581
      %v6590 = vcombine.high %v6565, %v6581
      %v6592 = vunpack.c.l.s4 1934713408
      %v6593 = vunpack.c.0.s8 %v6592
      %v6594 = vlaneseq
      %v6595 = vshrl.u32 %v6594, 7
      %v6596 = vsub.s32 %v6593, %v6595
      %v6597 = vrot.slane %v6589, %v6596
      %v6599 = vunpack.c.l.s4 1934713408
      %v6600 = vunpack.c.0.s8 %v6599
      %v6601 = vlaneseq
      %v6602 = vshrl.u32 %v6601, 7
      %v6603 = vsub.s32 %v6600, %v6602
      %v6604 = vrot.slane %v6590, %v6603
      %v6605 = vcombine.low %v6572, %v6588
      %v6606 = vcombine.high %v6572, %v6588
      %v6608 = vunpack.c.l.s4 1934713408
      %v6609 = vunpack.c.0.s8 %v6608
      %v6610 = vlaneseq
      %v6611 = vshrl.u32 %v6610, 7
      %v6612 = vsub.s32 %v6609, %v6611
      %v6613 = vrot.slane %v6605, %v6612
      %v6615 = vunpack.c.l.s4 1934713408
      %v6616 = vunpack.c.0.s8 %v6615
      %v6617 = vlaneseq
      %v6618 = vshrl.u32 %v6617, 7
      %v6619 = vsub.s32 %v6616, %v6618
      %v6620 = vrot.slane %v6606, %v6619
      %v6621 = vcombine.high %v6597, 0.0
      %v6622 = vcombine.high %v6604, 0.0
      %v6623 = vcombine.high %v6613, 0.0
      %v6624 = vcombine.high %v6620, 0.0
      %6626 = vrot.lane.b32.xlu0 %v6553, 16
      %v6627 = vpop.permute.xlu0 %6626
      %6630 = vrot.lane.b32.xlu0 %v6536, 32
      %v6631 = vpop.permute.xlu0 %6630
      %6634 = vrot.lane.b32.xlu0 %v6554, 48
      %v6635 = vpop.permute.xlu0 %6634
      %6638 = vrot.lane.b32.xlu0 %v6545, 64
      %v6639 = vpop.permute.xlu0 %6638
      %6642 = vrot.lane.b32.xlu0 %v6555, 80
      %v6643 = vpop.permute.xlu0 %6642
      %6646 = vrot.lane.b32.xlu0 %v6552, 96
      %v6647 = vpop.permute.xlu0 %6646
      %6650 = vrot.lane.b32.xlu0 %v6556, 112
      %v6651 = vpop.permute.xlu0 %6650
      %6654 = vrot.lane.b32.xlu0 %v6621, 16
      %v6655 = vpop.permute.xlu0 %6654
      %6658 = vrot.lane.b32.xlu0 %v6604, 32
      %v6659 = vpop.permute.xlu0 %6658
      %6662 = vrot.lane.b32.xlu0 %v6622, 48
      %v6663 = vpop.permute.xlu0 %6662
      %6666 = vrot.lane.b32.xlu0 %v6613, 64
      %v6667 = vpop.permute.xlu0 %6666
      %6670 = vrot.lane.b32.xlu0 %v6623, 80
      %v6671 = vpop.permute.xlu0 %6670
      %6674 = vrot.lane.b32.xlu0 %v6620, 96
      %v6675 = vpop.permute.xlu0 %6674
      %6678 = vrot.lane.b32.xlu0 %v6624, 112
      %v6679 = vpop.permute.xlu0 %6678
      %v6681 = vsel %vm1530, %v6529, %v6627
      %v6682 = vsel %vm1532, %v6681, %v6631
      %v6683 = vsel %vm1534, %v6682, %v6635
      %v6684 = vsel %vm1536, %v6683, %v6639
      %v6685 = vsel %vm1538, %v6684, %v6643
      %v6686 = vsel %vm1540, %v6685, %v6647
      %v6687 = vsel %vm1542, %v6686, %v6651
      %v6688 = vsel %vm1530, %v6597, %v6655
      %v6689 = vsel %vm1532, %v6688, %v6659
      %v6690 = vsel %vm1534, %v6689, %v6663
      %v6691 = vsel %vm1536, %v6690, %v6667
      %v6692 = vsel %vm1538, %v6691, %v6671
      %v6693 = vsel %vm1540, %v6692, %v6675
      %v6694 = vsel %vm1542, %v6693, %v6679
      %s6695 = scalar_lea.vmem %s896, 24
      %v6696 = vld [vmem:[%s6695] sm:$0xf]
      %v6698 = vsel %vm932, %v6696, 0
      %v6701 = vsel %vm939, %v6687, 0
      %v6704 = vsel %vm939, %v6694, 0
      %6706 = vmatprep.subr.mxu0 0.0
      %6707 = vmatpush1.msra.mxu0 0.0
      %6708 = vmatprep.subr.mxu0 0.0
      %6709 = vmatpush1.msra.mxu0 0.0
      %6710 = vmatprep.subr.mxu0 0.0
      %6711 = vmatpush1.msra.mxu0 0.0
      %6712 = vmatprep.subr.mxu0 0.0
      %6713 = vmatpush1.msra.mxu0 0.0
      %6714 = vmatprep.subr.mxu0 0.0
      %6715 = vmatpush1.msra.mxu0 0.0
      %6716 = vmatprep.subr.mxu0 0.0
      %6717 = vmatpush1.msra.mxu0 0.0
      %6718 = vmatprep.subr.mxu0 0.0
      %6719 = vmatpush1.msra.mxu0 0.0
      %6720 = vmatprep.subr.mxu0 0.0
      %6721 = vmatpush1.msra.mxu0 0.0
      %6722 = vmatprep.subr.mxu0 0.0
      %6723 = vmatpush1.msra.mxu0 0.0
      %6724 = vmatprep.subr.mxu0 0.0
      %6725 = vmatpush1.msra.mxu0 0.0
      %6726 = vmatprep.subr.mxu0 0.0
      %6727 = vmatpush1.msra.mxu0 0.0
      %6728 = vmatprep.subr.mxu0 0.0
      %6729 = vmatpush1.msra.mxu0 0.0
      %6730 = vmatprep.subr.mxu0 0.0
      %6731 = vmatpush1.msra.mxu0 0.0
      %6732 = vmatprep.subr.mxu0 0.0
      %6733 = vmatpush1.msra.mxu0 0.0
      %6734 = vmatprep.subr.mxu0 0.0
      %6735 = vmatpush1.msra.mxu0 0.0
      %6736 = vmatprep.subr.mxu0 %v6704
      %6737 = vmatpush1.msra.mxu0 %v6701
      %6738 = vmatprep.subr.mxu0 0.0
      %6739 = vmatpush2.msra.mxu0 0.0
      %6740 = vmatprep.subr.mxu0 0.0
      %6741 = vmatpush2.msra.mxu0 0.0
      %6742 = vmatprep.subr.mxu0 0.0
      %6743 = vmatpush2.msra.mxu0 0.0
      %6744 = vmatprep.subr.mxu0 0.0
      %6745 = vmatpush2.msra.mxu0 0.0
      %6746 = vmatprep.subr.mxu0 0.0
      %6747 = vmatpush2.msra.mxu0 0.0
      %6748 = vmatprep.subr.mxu0 0.0
      %6749 = vmatpush2.msra.mxu0 0.0
      %6750 = vmatprep.subr.mxu0 0.0
      %6751 = vmatpush2.msra.mxu0 0.0
      %6752 = vmatprep.subr.mxu0 0.0
      %6753 = vmatpush2.msra.mxu0 0.0
      %6754 = vmatprep.subr.mxu0 0.0
      %6755 = vmatpush2.msra.mxu0 0.0
      %6756 = vmatprep.subr.mxu0 0.0
      %6757 = vmatpush2.msra.mxu0 0.0
      %6758 = vmatprep.subr.mxu0 0.0
      %6759 = vmatpush2.msra.mxu0 0.0
      %6760 = vmatprep.subr.mxu0 0.0
      %6761 = vmatpush2.msra.mxu0 0.0
      %6762 = vmatprep.subr.mxu0 0.0
      %6763 = vmatpush2.msra.mxu0 0.0
      %6764 = vmatprep.subr.mxu0 0.0
      %6765 = vmatpush2.msra.mxu0 0.0
      %6766 = vmatprep.subr.mxu0 0.0
      %6767 = vmatpush2.msra.mxu0 0.0
      %6768 = vmatprep.subr.mxu0 0.0
      %6769 = vmatpush2.msra.mxu0 0.0
      %6770 = vmatprep.mubr.f32.mxu0 0.0
      %6771 = vmatmul.mubr.f32.gmra.mxu0 %v6698
      %v6772 = vpop.f32.mrf.mxu0
      %v6773 = vadd.f32 0.0, %v6772
      %v6774 = vpop.f32.mrf.mxu0
      %v6775 = vadd.f32 0.0, %v6774
      %6776 = vdwg.mxu0
      %v6777 = vadd.f32 %v6459, %v6773
      %v6778 = vadd.f32 %v6460, %v6775
      %6779 = vrot.lane.b32.xlu0 %v6463, 126
      %v6780 = vpop.permute.xlu0 %6779
      %6781 = vrot.lane.b32.xlu0 %v6465, 126
      %v6782 = vpop.permute.xlu0 %6781
      %6783 = vrot.lane.b32.xlu0 %v6468, 126
      %v6784 = vpop.permute.xlu0 %6783
      %6785 = vrot.lane.b32.xlu0 %v6470, 126
      %v6786 = vpop.permute.xlu0 %6785
      %6787 = vrot.lane.b32.xlu0 %v6473, 126
      %v6788 = vpop.permute.xlu0 %6787
      %6789 = vrot.lane.b32.xlu0 %v6475, 126
      %v6790 = vpop.permute.xlu0 %6789
      %6791 = vrot.lane.b32.xlu0 %v6478, 126
      %v6792 = vpop.permute.xlu0 %6791
      %6793 = vrot.lane.b32.xlu0 %v6480, 126
      %v6794 = vpop.permute.xlu0 %6793
      %v6803 = vcombine.low %v6780, %v6788
      %v6804 = vcombine.high %v6780, %v6788
      %v6806 = vunpack.c.l.s4 1983009808
      %v6807 = vunpack.c.0.s8 %v6806
      %v6808 = vlaneseq
      %v6809 = vshrl.u32 %v6808, 7
      %v6810 = vsub.s32 %v6807, %v6809
      %v6811 = vrot.slane %v6803, %v6810
      %v6813 = vunpack.c.l.s4 1983009808
      %v6814 = vunpack.c.0.s8 %v6813
      %v6815 = vlaneseq
      %v6816 = vshrl.u32 %v6815, 7
      %v6817 = vsub.s32 %v6814, %v6816
      %v6818 = vrot.slane %v6804, %v6817
      %v6819 = vcombine.low %v6784, %v6792
      %v6820 = vcombine.high %v6784, %v6792
      %v6822 = vunpack.c.l.s4 1983009808
      %v6823 = vunpack.c.0.s8 %v6822
      %v6824 = vlaneseq
      %v6825 = vshrl.u32 %v6824, 7
      %v6826 = vsub.s32 %v6823, %v6825
      %v6827 = vrot.slane %v6819, %v6826
      %v6829 = vunpack.c.l.s4 1983009808
      %v6830 = vunpack.c.0.s8 %v6829
      %v6831 = vlaneseq
      %v6832 = vshrl.u32 %v6831, 7
      %v6833 = vsub.s32 %v6830, %v6832
      %v6834 = vrot.slane %v6820, %v6833
      %v6835 = vcombine.low %v6811, %v6827
      %v6836 = vcombine.high %v6811, %v6827
      %v6838 = vunpack.c.l.s4 1934713408
      %v6839 = vunpack.c.0.s8 %v6838
      %v6840 = vlaneseq
      %v6841 = vshrl.u32 %v6840, 7
      %v6842 = vsub.s32 %v6839, %v6841
      %v6843 = vrot.slane %v6835, %v6842
      %v6845 = vunpack.c.l.s4 1934713408
      %v6846 = vunpack.c.0.s8 %v6845
      %v6847 = vlaneseq
      %v6848 = vshrl.u32 %v6847, 7
      %v6849 = vsub.s32 %v6846, %v6848
      %v6850 = vrot.slane %v6836, %v6849
      %v6851 = vcombine.low %v6818, %v6834
      %v6852 = vcombine.high %v6818, %v6834
      %v6854 = vunpack.c.l.s4 1934713408
      %v6855 = vunpack.c.0.s8 %v6854
      %v6856 = vlaneseq
      %v6857 = vshrl.u32 %v6856, 7
      %v6858 = vsub.s32 %v6855, %v6857
      %v6859 = vrot.slane %v6851, %v6858
      %v6861 = vunpack.c.l.s4 1934713408
      %v6862 = vunpack.c.0.s8 %v6861
      %v6863 = vlaneseq
      %v6864 = vshrl.u32 %v6863, 7
      %v6865 = vsub.s32 %v6862, %v6864
      %v6866 = vrot.slane %v6852, %v6865
      %v6867 = vcombine.high %v6843, 0.0
      %v6868 = vcombine.high %v6850, 0.0
      %v6869 = vcombine.high %v6859, 0.0
      %v6870 = vcombine.high %v6866, 0.0
      %v6871 = vcombine.low %v6782, %v6790
      %v6872 = vcombine.high %v6782, %v6790
      %v6874 = vunpack.c.l.s4 1983009808
      %v6875 = vunpack.c.0.s8 %v6874
      %v6876 = vlaneseq
      %v6877 = vshrl.u32 %v6876, 7
      %v6878 = vsub.s32 %v6875, %v6877
      %v6879 = vrot.slane %v6871, %v6878
      %v6881 = vunpack.c.l.s4 1983009808
      %v6882 = vunpack.c.0.s8 %v6881
      %v6883 = vlaneseq
      %v6884 = vshrl.u32 %v6883, 7
      %v6885 = vsub.s32 %v6882, %v6884
      %v6886 = vrot.slane %v6872, %v6885
      %v6887 = vcombine.low %v6786, %v6794
      %v6888 = vcombine.high %v6786, %v6794
      %v6890 = vunpack.c.l.s4 1983009808
      %v6891 = vunpack.c.0.s8 %v6890
      %v6892 = vlaneseq
      %v6893 = vshrl.u32 %v6892, 7
      %v6894 = vsub.s32 %v6891, %v6893
      %v6895 = vrot.slane %v6887, %v6894
      %v6897 = vunpack.c.l.s4 1983009808
      %v6898 = vunpack.c.0.s8 %v6897
      %v6899 = vlaneseq
      %v6900 = vshrl.u32 %v6899, 7
      %v6901 = vsub.s32 %v6898, %v6900
      %v6902 = vrot.slane %v6888, %v6901
      %v6903 = vcombine.low %v6879, %v6895
      %v6904 = vcombine.high %v6879, %v6895
      %v6906 = vunpack.c.l.s4 1934713408
      %v6907 = vunpack.c.0.s8 %v6906
      %v6908 = vlaneseq
      %v6909 = vshrl.u32 %v6908, 7
      %v6910 = vsub.s32 %v6907, %v6909
      %v6911 = vrot.slane %v6903, %v6910
      %v6913 = vunpack.c.l.s4 1934713408
      %v6914 = vunpack.c.0.s8 %v6913
      %v6915 = vlaneseq
      %v6916 = vshrl.u32 %v6915, 7
      %v6917 = vsub.s32 %v6914, %v6916
      %v6918 = vrot.slane %v6904, %v6917
      %v6919 = vcombine.low %v6886, %v6902
      %v6920 = vcombine.high %v6886, %v6902
      %v6922 = vunpack.c.l.s4 1934713408
      %v6923 = vunpack.c.0.s8 %v6922
      %v6924 = vlaneseq
      %v6925 = vshrl.u32 %v6924, 7
      %v6926 = vsub.s32 %v6923, %v6925
      %v6927 = vrot.slane %v6919, %v6926
      %v6929 = vunpack.c.l.s4 1934713408
      %v6930 = vunpack.c.0.s8 %v6929
      %v6931 = vlaneseq
      %v6932 = vshrl.u32 %v6931, 7
      %v6933 = vsub.s32 %v6930, %v6932
      %v6934 = vrot.slane %v6920, %v6933
      %v6935 = vcombine.high %v6911, 0.0
      %v6936 = vcombine.high %v6918, 0.0
      %v6937 = vcombine.high %v6927, 0.0
      %v6938 = vcombine.high %v6934, 0.0
      %6940 = vrot.lane.b32.xlu0 %v6867, 16
      %v6941 = vpop.permute.xlu0 %6940
      %6944 = vrot.lane.b32.xlu0 %v6850, 32
      %v6945 = vpop.permute.xlu0 %6944
      %6948 = vrot.lane.b32.xlu0 %v6868, 48
      %v6949 = vpop.permute.xlu0 %6948
      %6952 = vrot.lane.b32.xlu0 %v6859, 64
      %v6953 = vpop.permute.xlu0 %6952
      %6956 = vrot.lane.b32.xlu0 %v6869, 80
      %v6957 = vpop.permute.xlu0 %6956
      %6960 = vrot.lane.b32.xlu0 %v6866, 96
      %v6961 = vpop.permute.xlu0 %6960
      %6964 = vrot.lane.b32.xlu0 %v6870, 112
      %v6965 = vpop.permute.xlu0 %6964
      %6968 = vrot.lane.b32.xlu0 %v6935, 16
      %v6969 = vpop.permute.xlu0 %6968
      %6972 = vrot.lane.b32.xlu0 %v6918, 32
      %v6973 = vpop.permute.xlu0 %6972
      %6976 = vrot.lane.b32.xlu0 %v6936, 48
      %v6977 = vpop.permute.xlu0 %6976
      %6980 = vrot.lane.b32.xlu0 %v6927, 64
      %v6981 = vpop.permute.xlu0 %6980
      %6984 = vrot.lane.b32.xlu0 %v6937, 80
      %v6985 = vpop.permute.xlu0 %6984
      %6988 = vrot.lane.b32.xlu0 %v6934, 96
      %v6989 = vpop.permute.xlu0 %6988
      %6992 = vrot.lane.b32.xlu0 %v6938, 112
      %v6993 = vpop.permute.xlu0 %6992
      %v6995 = vsel %vm1530, %v6843, %v6941
      %v6996 = vsel %vm1532, %v6995, %v6945
      %v6997 = vsel %vm1534, %v6996, %v6949
      %v6998 = vsel %vm1536, %v6997, %v6953
      %v6999 = vsel %vm1538, %v6998, %v6957
      %v7000 = vsel %vm1540, %v6999, %v6961
      %v7001 = vsel %vm1542, %v7000, %v6965
      %v7002 = vsel %vm1530, %v6911, %v6969
      %v7003 = vsel %vm1532, %v7002, %v6973
      %v7004 = vsel %vm1534, %v7003, %v6977
      %v7005 = vsel %vm1536, %v7004, %v6981
      %v7006 = vsel %vm1538, %v7005, %v6985
      %v7007 = vsel %vm1540, %v7006, %v6989
      %v7008 = vsel %vm1542, %v7007, %v6993
      %s7009 = scalar_lea.vmem %s896, 28
      %v7010 = vld [vmem:[%s7009] sm:$0xf]
      %v7012 = vsel %vm932, %v7010, 0
      %v7015 = vsel %vm939, %v7001, 0
      %v7018 = vsel %vm939, %v7008, 0
      %7020 = vmatprep.subr.mxu0 0.0
      %7021 = vmatpush1.msra.mxu0 0.0
      %7022 = vmatprep.subr.mxu0 0.0
      %7023 = vmatpush1.msra.mxu0 0.0
      %7024 = vmatprep.subr.mxu0 0.0
      %7025 = vmatpush1.msra.mxu0 0.0
      %7026 = vmatprep.subr.mxu0 0.0
      %7027 = vmatpush1.msra.mxu0 0.0
      %7028 = vmatprep.subr.mxu0 0.0
      %7029 = vmatpush1.msra.mxu0 0.0
      %7030 = vmatprep.subr.mxu0 0.0
      %7031 = vmatpush1.msra.mxu0 0.0
      %7032 = vmatprep.subr.mxu0 0.0
      %7033 = vmatpush1.msra.mxu0 0.0
      %7034 = vmatprep.subr.mxu0 0.0
      %7035 = vmatpush1.msra.mxu0 0.0
      %7036 = vmatprep.subr.mxu0 0.0
      %7037 = vmatpush1.msra.mxu0 0.0
      %7038 = vmatprep.subr.mxu0 0.0
      %7039 = vmatpush1.msra.mxu0 0.0
      %7040 = vmatprep.subr.mxu0 0.0
      %7041 = vmatpush1.msra.mxu0 0.0
      %7042 = vmatprep.subr.mxu0 0.0
      %7043 = vmatpush1.msra.mxu0 0.0
      %7044 = vmatprep.subr.mxu0 0.0
      %7045 = vmatpush1.msra.mxu0 0.0
      %7046 = vmatprep.subr.mxu0 0.0
      %7047 = vmatpush1.msra.mxu0 0.0
      %7048 = vmatprep.subr.mxu0 0.0
      %7049 = vmatpush1.msra.mxu0 0.0
      %7050 = vmatprep.subr.mxu0 %v7018
      %7051 = vmatpush1.msra.mxu0 %v7015
      %7052 = vmatprep.subr.mxu0 0.0
      %7053 = vmatpush2.msra.mxu0 0.0
      %7054 = vmatprep.subr.mxu0 0.0
      %7055 = vmatpush2.msra.mxu0 0.0
      %7056 = vmatprep.subr.mxu0 0.0
      %7057 = vmatpush2.msra.mxu0 0.0
      %7058 = vmatprep.subr.mxu0 0.0
      %7059 = vmatpush2.msra.mxu0 0.0
      %7060 = vmatprep.subr.mxu0 0.0
      %7061 = vmatpush2.msra.mxu0 0.0
      %7062 = vmatprep.subr.mxu0 0.0
      %7063 = vmatpush2.msra.mxu0 0.0
      %7064 = vmatprep.subr.mxu0 0.0
      %7065 = vmatpush2.msra.mxu0 0.0
      %7066 = vmatprep.subr.mxu0 0.0
      %7067 = vmatpush2.msra.mxu0 0.0
      %7068 = vmatprep.subr.mxu0 0.0
      %7069 = vmatpush2.msra.mxu0 0.0
      %7070 = vmatprep.subr.mxu0 0.0
      %7071 = vmatpush2.msra.mxu0 0.0
      %7072 = vmatprep.subr.mxu0 0.0
      %7073 = vmatpush2.msra.mxu0 0.0
      %7074 = vmatprep.subr.mxu0 0.0
      %7075 = vmatpush2.msra.mxu0 0.0
      %7076 = vmatprep.subr.mxu0 0.0
      %7077 = vmatpush2.msra.mxu0 0.0
      %7078 = vmatprep.subr.mxu0 0.0
      %7079 = vmatpush2.msra.mxu0 0.0
      %7080 = vmatprep.subr.mxu0 0.0
      %7081 = vmatpush2.msra.mxu0 0.0
      %7082 = vmatprep.subr.mxu0 0.0
      %7083 = vmatpush2.msra.mxu0 0.0
      %7084 = vmatprep.mubr.f32.mxu0 0.0
      %7085 = vmatmul.mubr.f32.gmra.mxu0 %v7012
      %v7086 = vpop.f32.mrf.mxu0
      %v7087 = vadd.f32 0.0, %v7086
      %v7088 = vpop.f32.mrf.mxu0
      %v7089 = vadd.f32 0.0, %v7088
      %7090 = vdwg.mxu0
      %v7091 = vadd.f32 %v6777, %v7087
      %v7092 = vadd.f32 %v6778, %v7089
      %7093 = vrot.lane.b32.xlu0 %v6463, 124
      %v7094 = vpop.permute.xlu0 %7093
      %7095 = vrot.lane.b32.xlu0 %v6465, 124
      %v7096 = vpop.permute.xlu0 %7095
      %7097 = vrot.lane.b32.xlu0 %v6468, 124
      %v7098 = vpop.permute.xlu0 %7097
      %7099 = vrot.lane.b32.xlu0 %v6470, 124
      %v7100 = vpop.permute.xlu0 %7099
      %7101 = vrot.lane.b32.xlu0 %v6473, 124
      %v7102 = vpop.permute.xlu0 %7101
      %7103 = vrot.lane.b32.xlu0 %v6475, 124
      %v7104 = vpop.permute.xlu0 %7103
      %7105 = vrot.lane.b32.xlu0 %v6478, 124
      %v7106 = vpop.permute.xlu0 %7105
      %7107 = vrot.lane.b32.xlu0 %v6480, 124
      %v7108 = vpop.permute.xlu0 %7107
      %v7117 = vcombine.low %v7094, %v7102
      %v7118 = vcombine.high %v7094, %v7102
      %v7120 = vunpack.c.l.s4 1983009808
      %v7121 = vunpack.c.0.s8 %v7120
      %v7122 = vlaneseq
      %v7123 = vshrl.u32 %v7122, 7
      %v7124 = vsub.s32 %v7121, %v7123
      %v7125 = vrot.slane %v7117, %v7124
      %v7127 = vunpack.c.l.s4 1983009808
      %v7128 = vunpack.c.0.s8 %v7127
      %v7129 = vlaneseq
      %v7130 = vshrl.u32 %v7129, 7
      %v7131 = vsub.s32 %v7128, %v7130
      %v7132 = vrot.slane %v7118, %v7131
      %v7133 = vcombine.low %v7098, %v7106
      %v7134 = vcombine.high %v7098, %v7106
      %v7136 = vunpack.c.l.s4 1983009808
      %v7137 = vunpack.c.0.s8 %v7136
      %v7138 = vlaneseq
      %v7139 = vshrl.u32 %v7138, 7
      %v7140 = vsub.s32 %v7137, %v7139
      %v7141 = vrot.slane %v7133, %v7140
      %v7143 = vunpack.c.l.s4 1983009808
      %v7144 = vunpack.c.0.s8 %v7143
      %v7145 = vlaneseq
      %v7146 = vshrl.u32 %v7145, 7
      %v7147 = vsub.s32 %v7144, %v7146
      %v7148 = vrot.slane %v7134, %v7147
      %v7149 = vcombine.low %v7125, %v7141
      %v7150 = vcombine.high %v7125, %v7141
      %v7152 = vunpack.c.l.s4 1934713408
      %v7153 = vunpack.c.0.s8 %v7152
      %v7154 = vlaneseq
      %v7155 = vshrl.u32 %v7154, 7
      %v7156 = vsub.s32 %v7153, %v7155
      %v7157 = vrot.slane %v7149, %v7156
      %v7159 = vunpack.c.l.s4 1934713408
      %v7160 = vunpack.c.0.s8 %v7159
      %v7161 = vlaneseq
      %v7162 = vshrl.u32 %v7161, 7
      %v7163 = vsub.s32 %v7160, %v7162
      %v7164 = vrot.slane %v7150, %v7163
      %v7165 = vcombine.low %v7132, %v7148
      %v7166 = vcombine.high %v7132, %v7148
      %v7168 = vunpack.c.l.s4 1934713408
      %v7169 = vunpack.c.0.s8 %v7168
      %v7170 = vlaneseq
      %v7171 = vshrl.u32 %v7170, 7
      %v7172 = vsub.s32 %v7169, %v7171
      %v7173 = vrot.slane %v7165, %v7172
      %v7175 = vunpack.c.l.s4 1934713408
      %v7176 = vunpack.c.0.s8 %v7175
      %v7177 = vlaneseq
      %v7178 = vshrl.u32 %v7177, 7
      %v7179 = vsub.s32 %v7176, %v7178
      %v7180 = vrot.slane %v7166, %v7179
      %v7181 = vcombine.high %v7157, 0.0
      %v7182 = vcombine.high %v7164, 0.0
      %v7183 = vcombine.high %v7173, 0.0
      %v7184 = vcombine.high %v7180, 0.0
      %v7185 = vcombine.low %v7096, %v7104
      %v7186 = vcombine.high %v7096, %v7104
      %v7188 = vunpack.c.l.s4 1983009808
      %v7189 = vunpack.c.0.s8 %v7188
      %v7190 = vlaneseq
      %v7191 = vshrl.u32 %v7190, 7
      %v7192 = vsub.s32 %v7189, %v7191
      %v7193 = vrot.slane %v7185, %v7192
      %v7195 = vunpack.c.l.s4 1983009808
      %v7196 = vunpack.c.0.s8 %v7195
      %v7197 = vlaneseq
      %v7198 = vshrl.u32 %v7197, 7
      %v7199 = vsub.s32 %v7196, %v7198
      %v7200 = vrot.slane %v7186, %v7199
      %v7201 = vcombine.low %v7100, %v7108
      %v7202 = vcombine.high %v7100, %v7108
      %v7204 = vunpack.c.l.s4 1983009808
      %v7205 = vunpack.c.0.s8 %v7204
      %v7206 = vlaneseq
      %v7207 = vshrl.u32 %v7206, 7
      %v7208 = vsub.s32 %v7205, %v7207
      %v7209 = vrot.slane %v7201, %v7208
      %v7211 = vunpack.c.l.s4 1983009808
      %v7212 = vunpack.c.0.s8 %v7211
      %v7213 = vlaneseq
      %v7214 = vshrl.u32 %v7213, 7
      %v7215 = vsub.s32 %v7212, %v7214
      %v7216 = vrot.slane %v7202, %v7215
      %v7217 = vcombine.low %v7193, %v7209
      %v7218 = vcombine.high %v7193, %v7209
      %v7220 = vunpack.c.l.s4 1934713408
      %v7221 = vunpack.c.0.s8 %v7220
      %v7222 = vlaneseq
      %v7223 = vshrl.u32 %v7222, 7
      %v7224 = vsub.s32 %v7221, %v7223
      %v7225 = vrot.slane %v7217, %v7224
      %v7227 = vunpack.c.l.s4 1934713408
      %v7228 = vunpack.c.0.s8 %v7227
      %v7229 = vlaneseq
      %v7230 = vshrl.u32 %v7229, 7
      %v7231 = vsub.s32 %v7228, %v7230
      %v7232 = vrot.slane %v7218, %v7231
      %v7233 = vcombine.low %v7200, %v7216
      %v7234 = vcombine.high %v7200, %v7216
      %v7236 = vunpack.c.l.s4 1934713408
      %v7237 = vunpack.c.0.s8 %v7236
      %v7238 = vlaneseq
      %v7239 = vshrl.u32 %v7238, 7
      %v7240 = vsub.s32 %v7237, %v7239
      %v7241 = vrot.slane %v7233, %v7240
      %v7243 = vunpack.c.l.s4 1934713408
      %v7244 = vunpack.c.0.s8 %v7243
      %v7245 = vlaneseq
      %v7246 = vshrl.u32 %v7245, 7
      %v7247 = vsub.s32 %v7244, %v7246
      %v7248 = vrot.slane %v7234, %v7247
      %v7249 = vcombine.high %v7225, 0.0
      %v7250 = vcombine.high %v7232, 0.0
      %v7251 = vcombine.high %v7241, 0.0
      %v7252 = vcombine.high %v7248, 0.0
      %7254 = vrot.lane.b32.xlu0 %v7181, 16
      %v7255 = vpop.permute.xlu0 %7254
      %7258 = vrot.lane.b32.xlu0 %v7164, 32
      %v7259 = vpop.permute.xlu0 %7258
      %7262 = vrot.lane.b32.xlu0 %v7182, 48
      %v7263 = vpop.permute.xlu0 %7262
      %7266 = vrot.lane.b32.xlu0 %v7173, 64
      %v7267 = vpop.permute.xlu0 %7266
      %7270 = vrot.lane.b32.xlu0 %v7183, 80
      %v7271 = vpop.permute.xlu0 %7270
      %7274 = vrot.lane.b32.xlu0 %v7180, 96
      %v7275 = vpop.permute.xlu0 %7274
      %7278 = vrot.lane.b32.xlu0 %v7184, 112
      %v7279 = vpop.permute.xlu0 %7278
      %7282 = vrot.lane.b32.xlu0 %v7249, 16
      %v7283 = vpop.permute.xlu0 %7282
      %7286 = vrot.lane.b32.xlu0 %v7232, 32
      %v7287 = vpop.permute.xlu0 %7286
      %7290 = vrot.lane.b32.xlu0 %v7250, 48
      %v7291 = vpop.permute.xlu0 %7290
      %7294 = vrot.lane.b32.xlu0 %v7241, 64
      %v7295 = vpop.permute.xlu0 %7294
      %7298 = vrot.lane.b32.xlu0 %v7251, 80
      %v7299 = vpop.permute.xlu0 %7298
      %7302 = vrot.lane.b32.xlu0 %v7248, 96
      %v7303 = vpop.permute.xlu0 %7302
      %7306 = vrot.lane.b32.xlu0 %v7252, 112
      %v7307 = vpop.permute.xlu0 %7306
      %v7309 = vsel %vm1530, %v7157, %v7255
      %v7310 = vsel %vm1532, %v7309, %v7259
      %v7311 = vsel %vm1534, %v7310, %v7263
      %v7312 = vsel %vm1536, %v7311, %v7267
      %v7313 = vsel %vm1538, %v7312, %v7271
      %v7314 = vsel %vm1540, %v7313, %v7275
      %v7315 = vsel %vm1542, %v7314, %v7279
      %v7316 = vsel %vm1530, %v7225, %v7283
      %v7317 = vsel %vm1532, %v7316, %v7287
      %v7318 = vsel %vm1534, %v7317, %v7291
      %v7319 = vsel %vm1536, %v7318, %v7295
      %v7320 = vsel %vm1538, %v7319, %v7299
      %v7321 = vsel %vm1540, %v7320, %v7303
      %v7322 = vsel %vm1542, %v7321, %v7307
      %s7323 = scalar_lea.vmem %s896, 32
      %v7324 = vld [vmem:[%s7323] sm:$0xf]
      %v7326 = vsel %vm932, %v7324, 0
      %v7329 = vsel %vm939, %v7315, 0
      %v7332 = vsel %vm939, %v7322, 0
      %7334 = vmatprep.subr.mxu0 0.0
      %7335 = vmatpush1.msra.mxu0 0.0
      %7336 = vmatprep.subr.mxu0 0.0
      %7337 = vmatpush1.msra.mxu0 0.0
      %7338 = vmatprep.subr.mxu0 0.0
      %7339 = vmatpush1.msra.mxu0 0.0
      %7340 = vmatprep.subr.mxu0 0.0
      %7341 = vmatpush1.msra.mxu0 0.0
      %7342 = vmatprep.subr.mxu0 0.0
      %7343 = vmatpush1.msra.mxu0 0.0
      %7344 = vmatprep.subr.mxu0 0.0
      %7345 = vmatpush1.msra.mxu0 0.0
      %7346 = vmatprep.subr.mxu0 0.0
      %7347 = vmatpush1.msra.mxu0 0.0
      %7348 = vmatprep.subr.mxu0 0.0
      %7349 = vmatpush1.msra.mxu0 0.0
      %7350 = vmatprep.subr.mxu0 0.0
      %7351 = vmatpush1.msra.mxu0 0.0
      %7352 = vmatprep.subr.mxu0 0.0
      %7353 = vmatpush1.msra.mxu0 0.0
      %7354 = vmatprep.subr.mxu0 0.0
      %7355 = vmatpush1.msra.mxu0 0.0
      %7356 = vmatprep.subr.mxu0 0.0
      %7357 = vmatpush1.msra.mxu0 0.0
      %7358 = vmatprep.subr.mxu0 0.0
      %7359 = vmatpush1.msra.mxu0 0.0
      %7360 = vmatprep.subr.mxu0 0.0
      %7361 = vmatpush1.msra.mxu0 0.0
      %7362 = vmatprep.subr.mxu0 0.0
      %7363 = vmatpush1.msra.mxu0 0.0
      %7364 = vmatprep.subr.mxu0 %v7332
      %7365 = vmatpush1.msra.mxu0 %v7329
      %7366 = vmatprep.subr.mxu0 0.0
      %7367 = vmatpush2.msra.mxu0 0.0
      %7368 = vmatprep.subr.mxu0 0.0
      %7369 = vmatpush2.msra.mxu0 0.0
      %7370 = vmatprep.subr.mxu0 0.0
      %7371 = vmatpush2.msra.mxu0 0.0
      %7372 = vmatprep.subr.mxu0 0.0
      %7373 = vmatpush2.msra.mxu0 0.0
      %7374 = vmatprep.subr.mxu0 0.0
      %7375 = vmatpush2.msra.mxu0 0.0
      %7376 = vmatprep.subr.mxu0 0.0
      %7377 = vmatpush2.msra.mxu0 0.0
      %7378 = vmatprep.subr.mxu0 0.0
      %7379 = vmatpush2.msra.mxu0 0.0
      %7380 = vmatprep.subr.mxu0 0.0
      %7381 = vmatpush2.msra.mxu0 0.0
      %7382 = vmatprep.subr.mxu0 0.0
      %7383 = vmatpush2.msra.mxu0 0.0
      %7384 = vmatprep.subr.mxu0 0.0
      %7385 = vmatpush2.msra.mxu0 0.0
      %7386 = vmatprep.subr.mxu0 0.0
      %7387 = vmatpush2.msra.mxu0 0.0
      %7388 = vmatprep.subr.mxu0 0.0
      %7389 = vmatpush2.msra.mxu0 0.0
      %7390 = vmatprep.subr.mxu0 0.0
      %7391 = vmatpush2.msra.mxu0 0.0
      %7392 = vmatprep.subr.mxu0 0.0
      %7393 = vmatpush2.msra.mxu0 0.0
      %7394 = vmatprep.subr.mxu0 0.0
      %7395 = vmatpush2.msra.mxu0 0.0
      %7396 = vmatprep.subr.mxu0 0.0
      %7397 = vmatpush2.msra.mxu0 0.0
      %7398 = vmatprep.mubr.f32.mxu0 0.0
      %7399 = vmatmul.mubr.f32.gmra.mxu0 %v7326
      %v7400 = vpop.f32.mrf.mxu0
      %v7401 = vadd.f32 0.0, %v7400
      %v7402 = vpop.f32.mrf.mxu0
      %v7403 = vadd.f32 0.0, %v7402
      %7404 = vdwg.mxu0
      %v7405 = vadd.f32 %v7091, %v7401
      %v7406 = vadd.f32 %v7092, %v7403
      %v7407 = vld [vmem:[%s900] sm:$0xf]
      %7409 = vset.pattern.permute.xlu0 0
      %7410 = vperm.xlu0 %7409, %v7407
      %v7411 = vpop.permute.xlu0 %7410
      %v7413 = vadd.f32 %v7405, %v7411
      %v7414 = vadd.f32 %v7406, %v7411
      %v7415 = vld [vmem:[%s904] sm:$0xf]
      %v7416 = vld [vmem:[%s908] sm:$0xf]
      %v7417 = vsel %vm939, %v7413, 0.0
      %v7418 = vsel %vm939, %v7414, 0.0
      %v7419 = vadd.f32 %v7417, %v7418
      %7420 = vadd.xlane.f32.xlu0 %v7419
      %v7421 = vpop.xlane.xlu0 %7420
      %v7422 = vmul.f32 %v7421, 0.00390625
      %v7423 = vmul.f32 %v7413, %v7413
      %v7424 = vmul.f32 %v7414, %v7414
      %v7425 = vsel %vm939, %v7423, 0.0
      %v7426 = vsel %vm939, %v7424, 0.0
      %v7427 = vadd.f32 %v7425, %v7426
      %7428 = vadd.xlane.f32.xlu0 %v7427
      %v7429 = vpop.xlane.xlu0 %7428
      %v7430 = vmul.f32 %v7429, 0.00390625
      %v7431 = vmul.f32 %v7422, %v7422
      %v7432 = vsub.f32 %v7430, %v7431
      %v7433 = vadd.f32 %v7432, 1e-05
      %v7434 = vrsqrt.pop %v7433
      %v7435 = vmul.f32 %v7415, %v7434
      %v7436 = vmul.f32 %v7422, %v7435
      %v7437 = vsub.f32 %v7416, %v7436
      %7439 = vset.pattern.permute.xlu0 0
      %7440 = vperm.xlu0 %7439, %v7435
      %v7441 = vpop.permute.xlu0 %7440
      %v7443 = vmul.f32 %v7413, %v7441
      %v7444 = vmul.f32 %v7414, %v7441
      %7446 = vset.pattern.permute.xlu0 0
      %7447 = vperm.xlu0 %7446, %v7437
      %v7448 = vpop.permute.xlu0 %7447
      %v7450 = vadd.f32 %v7443, %v7448
      %v7451 = vadd.f32 %v7444, %v7448
      %v7452 = vmax.f32 %v7450, 0.0
      %v7453 = vmax.f32 %v7451, 0.0
      %v7454 = vld [vmem:[%s913] sm:$0xf]
      %s7455 = scalar_lea.vmem %s913, 4
      %v7456 = vld [vmem:[%s7455] sm:$0xf]
      %v7458 = vsel %vm932, %v7456, 0
      %v7461 = vsel %vm939, %v4341, 0
      %v7464 = vsel %vm939, %v4342, 0
      %7466 = vmatprep.subr.mxu0 0.0
      %7467 = vmatpush1.msra.mxu0 0.0
      %7468 = vmatprep.subr.mxu0 0.0
      %7469 = vmatpush1.msra.mxu0 0.0
      %7470 = vmatprep.subr.mxu0 0.0
      %7471 = vmatpush1.msra.mxu0 0.0
      %7472 = vmatprep.subr.mxu0 0.0
      %7473 = vmatpush1.msra.mxu0 0.0
      %7474 = vmatprep.subr.mxu0 0.0
      %7475 = vmatpush1.msra.mxu0 0.0
      %7476 = vmatprep.subr.mxu0 0.0
      %7477 = vmatpush1.msra.mxu0 0.0
      %7478 = vmatprep.subr.mxu0 0.0
      %7479 = vmatpush1.msra.mxu0 0.0
      %7480 = vmatprep.subr.mxu0 0.0
      %7481 = vmatpush1.msra.mxu0 0.0
      %7482 = vmatprep.subr.mxu0 0.0
      %7483 = vmatpush1.msra.mxu0 0.0
      %7484 = vmatprep.subr.mxu0 0.0
      %7485 = vmatpush1.msra.mxu0 0.0
      %7486 = vmatprep.subr.mxu0 0.0
      %7487 = vmatpush1.msra.mxu0 0.0
      %7488 = vmatprep.subr.mxu0 0.0
      %7489 = vmatpush1.msra.mxu0 0.0
      %7490 = vmatprep.subr.mxu0 0.0
      %7491 = vmatpush1.msra.mxu0 0.0
      %7492 = vmatprep.subr.mxu0 0.0
      %7493 = vmatpush1.msra.mxu0 0.0
      %7494 = vmatprep.subr.mxu0 0.0
      %7495 = vmatpush1.msra.mxu0 0.0
      %7496 = vmatprep.subr.mxu0 %v7464
      %7497 = vmatpush1.msra.mxu0 %v7461
      %7498 = vmatprep.subr.mxu0 0.0
      %7499 = vmatpush2.msra.mxu0 0.0
      %7500 = vmatprep.subr.mxu0 0.0
      %7501 = vmatpush2.msra.mxu0 0.0
      %7502 = vmatprep.subr.mxu0 0.0
      %7503 = vmatpush2.msra.mxu0 0.0
      %7504 = vmatprep.subr.mxu0 0.0
      %7505 = vmatpush2.msra.mxu0 0.0
      %7506 = vmatprep.subr.mxu0 0.0
      %7507 = vmatpush2.msra.mxu0 0.0
      %7508 = vmatprep.subr.mxu0 0.0
      %7509 = vmatpush2.msra.mxu0 0.0
      %7510 = vmatprep.subr.mxu0 0.0
      %7511 = vmatpush2.msra.mxu0 0.0
      %7512 = vmatprep.subr.mxu0 0.0
      %7513 = vmatpush2.msra.mxu0 0.0
      %7514 = vmatprep.subr.mxu0 0.0
      %7515 = vmatpush2.msra.mxu0 0.0
      %7516 = vmatprep.subr.mxu0 0.0
      %7517 = vmatpush2.msra.mxu0 0.0
      %7518 = vmatprep.subr.mxu0 0.0
      %7519 = vmatpush2.msra.mxu0 0.0
      %7520 = vmatprep.subr.mxu0 0.0
      %7521 = vmatpush2.msra.mxu0 0.0
      %7522 = vmatprep.subr.mxu0 0.0
      %7523 = vmatpush2.msra.mxu0 0.0
      %7524 = vmatprep.subr.mxu0 0.0
      %7525 = vmatpush2.msra.mxu0 0.0
      %7526 = vmatprep.subr.mxu0 0.0
      %7527 = vmatpush2.msra.mxu0 0.0
      %7528 = vmatprep.subr.mxu0 0.0
      %7529 = vmatpush2.msra.mxu0 0.0
      %7530 = vmatprep.mubr.f32.mxu0 0.0
      %7531 = vmatmul.mubr.f32.gmra.mxu0 %v7458
      %v7532 = vpop.f32.mrf.mxu0
      %v7533 = vadd.f32 0.0, %v7532
      %v7534 = vpop.f32.mrf.mxu0
      %v7535 = vadd.f32 0.0, %v7534
      %7536 = vdwg.mxu0
      %v7538 = vsel %vm932, %v7454, 0
      %v7541 = vsel %vm939, %v4209, 0
      %v7544 = vsel %vm939, %v4210, 0
      %7546 = vmatprep.subr.mxu0 0.0
      %7547 = vmatpush1.msra.mxu0 0.0
      %7548 = vmatprep.subr.mxu0 0.0
      %7549 = vmatpush1.msra.mxu0 0.0
      %7550 = vmatprep.subr.mxu0 0.0
      %7551 = vmatpush1.msra.mxu0 0.0
      %7552 = vmatprep.subr.mxu0 0.0
      %7553 = vmatpush1.msra.mxu0 0.0
      %7554 = vmatprep.subr.mxu0 0.0
      %7555 = vmatpush1.msra.mxu0 0.0
      %7556 = vmatprep.subr.mxu0 0.0
      %7557 = vmatpush1.msra.mxu0 0.0
      %7558 = vmatprep.subr.mxu0 0.0
      %7559 = vmatpush1.msra.mxu0 0.0
      %7560 = vmatprep.subr.mxu0 0.0
      %7561 = vmatpush1.msra.mxu0 0.0
      %7562 = vmatprep.subr.mxu0 0.0
      %7563 = vmatpush1.msra.mxu0 0.0
      %7564 = vmatprep.subr.mxu0 0.0
      %7565 = vmatpush1.msra.mxu0 0.0
      %7566 = vmatprep.subr.mxu0 0.0
      %7567 = vmatpush1.msra.mxu0 0.0
      %7568 = vmatprep.subr.mxu0 0.0
      %7569 = vmatpush1.msra.mxu0 0.0
      %7570 = vmatprep.subr.mxu0 0.0
      %7571 = vmatpush1.msra.mxu0 0.0
      %7572 = vmatprep.subr.mxu0 0.0
      %7573 = vmatpush1.msra.mxu0 0.0
      %7574 = vmatprep.subr.mxu0 0.0
      %7575 = vmatpush1.msra.mxu0 0.0
      %7576 = vmatprep.subr.mxu0 %v7544
      %7577 = vmatpush1.msra.mxu0 %v7541
      %7578 = vmatprep.subr.mxu0 0.0
      %7579 = vmatpush2.msra.mxu0 0.0
      %7580 = vmatprep.subr.mxu0 0.0
      %7581 = vmatpush2.msra.mxu0 0.0
      %7582 = vmatprep.subr.mxu0 0.0
      %7583 = vmatpush2.msra.mxu0 0.0
      %7584 = vmatprep.subr.mxu0 0.0
      %7585 = vmatpush2.msra.mxu0 0.0
      %7586 = vmatprep.subr.mxu0 0.0
      %7587 = vmatpush2.msra.mxu0 0.0
      %7588 = vmatprep.subr.mxu0 0.0
      %7589 = vmatpush2.msra.mxu0 0.0
      %7590 = vmatprep.subr.mxu0 0.0
      %7591 = vmatpush2.msra.mxu0 0.0
      %7592 = vmatprep.subr.mxu0 0.0
      %7593 = vmatpush2.msra.mxu0 0.0
      %7594 = vmatprep.subr.mxu0 0.0
      %7595 = vmatpush2.msra.mxu0 0.0
      %7596 = vmatprep.subr.mxu0 0.0
      %7597 = vmatpush2.msra.mxu0 0.0
      %7598 = vmatprep.subr.mxu0 0.0
      %7599 = vmatpush2.msra.mxu0 0.0
      %7600 = vmatprep.subr.mxu0 0.0
      %7601 = vmatpush2.msra.mxu0 0.0
      %7602 = vmatprep.subr.mxu0 0.0
      %7603 = vmatpush2.msra.mxu0 0.0
      %7604 = vmatprep.subr.mxu0 0.0
      %7605 = vmatpush2.msra.mxu0 0.0
      %7606 = vmatprep.subr.mxu0 0.0
      %7607 = vmatpush2.msra.mxu0 0.0
      %7608 = vmatprep.subr.mxu0 0.0
      %7609 = vmatpush2.msra.mxu0 0.0
      %7610 = vmatprep.mubr.f32.mxu0 0.0
      %7611 = vmatmul.mubr.f32.gmra.mxu0 %v7538
      %v7612 = vpop.f32.mrf.mxu0
      %v7613 = vadd.f32 %v7533, %v7612
      %v7614 = vpop.f32.mrf.mxu0
      %v7615 = vadd.f32 %v7535, %v7614
      %7616 = vdwg.mxu0
      %s7617 = scalar_lea.vmem %s913, 8
      %v7618 = vld [vmem:[%s7617] sm:$0xf]
      %v7620 = vsel %vm932, %v7618, 0
      %v7623 = vsel %vm939, %v7452, 0
      %v7626 = vsel %vm939, %v7453, 0
      %7628 = vmatprep.subr.mxu0 0.0
      %7629 = vmatpush1.msra.mxu0 0.0
      %7630 = vmatprep.subr.mxu0 0.0
      %7631 = vmatpush1.msra.mxu0 0.0
      %7632 = vmatprep.subr.mxu0 0.0
      %7633 = vmatpush1.msra.mxu0 0.0
      %7634 = vmatprep.subr.mxu0 0.0
      %7635 = vmatpush1.msra.mxu0 0.0
      %7636 = vmatprep.subr.mxu0 0.0
      %7637 = vmatpush1.msra.mxu0 0.0
      %7638 = vmatprep.subr.mxu0 0.0
      %7639 = vmatpush1.msra.mxu0 0.0
      %7640 = vmatprep.subr.mxu0 0.0
      %7641 = vmatpush1.msra.mxu0 0.0
      %7642 = vmatprep.subr.mxu0 0.0
      %7643 = vmatpush1.msra.mxu0 0.0
      %7644 = vmatprep.subr.mxu0 0.0
      %7645 = vmatpush1.msra.mxu0 0.0
      %7646 = vmatprep.subr.mxu0 0.0
      %7647 = vmatpush1.msra.mxu0 0.0
      %7648 = vmatprep.subr.mxu0 0.0
      %7649 = vmatpush1.msra.mxu0 0.0
      %7650 = vmatprep.subr.mxu0 0.0
      %7651 = vmatpush1.msra.mxu0 0.0
      %7652 = vmatprep.subr.mxu0 0.0
      %7653 = vmatpush1.msra.mxu0 0.0
      %7654 = vmatprep.subr.mxu0 0.0
      %7655 = vmatpush1.msra.mxu0 0.0
      %7656 = vmatprep.subr.mxu0 0.0
      %7657 = vmatpush1.msra.mxu0 0.0
      %7658 = vmatprep.subr.mxu0 %v7626
      %7659 = vmatpush1.msra.mxu0 %v7623
      %7660 = vmatprep.subr.mxu0 0.0
      %7661 = vmatpush2.msra.mxu0 0.0
      %7662 = vmatprep.subr.mxu0 0.0
      %7663 = vmatpush2.msra.mxu0 0.0
      %7664 = vmatprep.subr.mxu0 0.0
      %7665 = vmatpush2.msra.mxu0 0.0
      %7666 = vmatprep.subr.mxu0 0.0
      %7667 = vmatpush2.msra.mxu0 0.0
      %7668 = vmatprep.subr.mxu0 0.0
      %7669 = vmatpush2.msra.mxu0 0.0
      %7670 = vmatprep.subr.mxu0 0.0
      %7671 = vmatpush2.msra.mxu0 0.0
      %7672 = vmatprep.subr.mxu0 0.0
      %7673 = vmatpush2.msra.mxu0 0.0
      %7674 = vmatprep.subr.mxu0 0.0
      %7675 = vmatpush2.msra.mxu0 0.0
      %7676 = vmatprep.subr.mxu0 0.0
      %7677 = vmatpush2.msra.mxu0 0.0
      %7678 = vmatprep.subr.mxu0 0.0
      %7679 = vmatpush2.msra.mxu0 0.0
      %7680 = vmatprep.subr.mxu0 0.0
      %7681 = vmatpush2.msra.mxu0 0.0
      %7682 = vmatprep.subr.mxu0 0.0
      %7683 = vmatpush2.msra.mxu0 0.0
      %7684 = vmatprep.subr.mxu0 0.0
      %7685 = vmatpush2.msra.mxu0 0.0
      %7686 = vmatprep.subr.mxu0 0.0
      %7687 = vmatpush2.msra.mxu0 0.0
      %7688 = vmatprep.subr.mxu0 0.0
      %7689 = vmatpush2.msra.mxu0 0.0
      %7690 = vmatprep.subr.mxu0 0.0
      %7691 = vmatpush2.msra.mxu0 0.0
      %7692 = vmatprep.mubr.f32.mxu0 0.0
      %7693 = vmatmul.mubr.f32.gmra.mxu0 %v7620
      %v7694 = vpop.f32.mrf.mxu0
      %v7695 = vadd.f32 0.0, %v7694
      %v7696 = vpop.f32.mrf.mxu0
      %v7697 = vadd.f32 0.0, %v7696
      %7698 = vdwg.mxu0
      %v7699 = vadd.f32 %v7613, %v7695
      %v7700 = vadd.f32 %v7615, %v7697
      %s7701 = scalar_lea.vmem %s913, 12
      %v7702 = vld [vmem:[%s7701] sm:$0xf]
      %v7705 = vrot.slane %v1089, 4
      %v7706 = vrot.slane %v1090, 4
      %v7708 = vsel %vm932, %v7702, 0
      %v7710 = vsel %vm939, %v7705, 0
      %v7712 = vsel %vm939, %v7706, 0
      %7714 = vmatprep.subr.mxu0 0.0
      %7715 = vmatpush1.msra.mxu0 0.0
      %7716 = vmatprep.subr.mxu0 0.0
      %7717 = vmatpush1.msra.mxu0 0.0
      %7718 = vmatprep.subr.mxu0 0.0
      %7719 = vmatpush1.msra.mxu0 0.0
      %7720 = vmatprep.subr.mxu0 0.0
      %7721 = vmatpush1.msra.mxu0 0.0
      %7722 = vmatprep.subr.mxu0 0.0
      %7723 = vmatpush1.msra.mxu0 0.0
      %7724 = vmatprep.subr.mxu0 0.0
      %7725 = vmatpush1.msra.mxu0 0.0
      %7726 = vmatprep.subr.mxu0 0.0
      %7727 = vmatpush1.msra.mxu0 0.0
      %7728 = vmatprep.subr.mxu0 0.0
      %7729 = vmatpush1.msra.mxu0 0.0
      %7730 = vmatprep.subr.mxu0 0.0
      %7731 = vmatpush1.msra.mxu0 0.0
      %7732 = vmatprep.subr.mxu0 0.0
      %7733 = vmatpush1.msra.mxu0 0.0
      %7734 = vmatprep.subr.mxu0 0.0
      %7735 = vmatpush1.msra.mxu0 0.0
      %7736 = vmatprep.subr.mxu0 0.0
      %7737 = vmatpush1.msra.mxu0 0.0
      %7738 = vmatprep.subr.mxu0 0.0
      %7739 = vmatpush1.msra.mxu0 0.0
      %7740 = vmatprep.subr.mxu0 0.0
      %7741 = vmatpush1.msra.mxu0 0.0
      %7742 = vmatprep.subr.mxu0 0.0
      %7743 = vmatpush1.msra.mxu0 0.0
      %7744 = vmatprep.subr.mxu0 %v7712
      %7745 = vmatpush1.msra.mxu0 %v7710
      %7746 = vmatprep.subr.mxu0 0.0
      %7747 = vmatpush2.msra.mxu0 0.0
      %7748 = vmatprep.subr.mxu0 0.0
      %7749 = vmatpush2.msra.mxu0 0.0
      %7750 = vmatprep.subr.mxu0 0.0
      %7751 = vmatpush2.msra.mxu0 0.0
      %7752 = vmatprep.subr.mxu0 0.0
      %7753 = vmatpush2.msra.mxu0 0.0
      %7754 = vmatprep.subr.mxu0 0.0
      %7755 = vmatpush2.msra.mxu0 0.0
      %7756 = vmatprep.subr.mxu0 0.0
      %7757 = vmatpush2.msra.mxu0 0.0
      %7758 = vmatprep.subr.mxu0 0.0
      %7759 = vmatpush2.msra.mxu0 0.0
      %7760 = vmatprep.subr.mxu0 0.0
      %7761 = vmatpush2.msra.mxu0 0.0
      %7762 = vmatprep.subr.mxu0 0.0
      %7763 = vmatpush2.msra.mxu0 0.0
      %7764 = vmatprep.subr.mxu0 0.0
      %7765 = vmatpush2.msra.mxu0 0.0
      %7766 = vmatprep.subr.mxu0 0.0
      %7767 = vmatpush2.msra.mxu0 0.0
      %7768 = vmatprep.subr.mxu0 0.0
      %7769 = vmatpush2.msra.mxu0 0.0
      %7770 = vmatprep.subr.mxu0 0.0
      %7771 = vmatpush2.msra.mxu0 0.0
      %7772 = vmatprep.subr.mxu0 0.0
      %7773 = vmatpush2.msra.mxu0 0.0
      %7774 = vmatprep.subr.mxu0 0.0
      %7775 = vmatpush2.msra.mxu0 0.0
      %7776 = vmatprep.subr.mxu0 0.0
      %7777 = vmatpush2.msra.mxu0 0.0
      %7778 = vmatprep.mubr.f32.mxu0 0.0
      %7779 = vmatmul.mubr.f32.gmra.mxu0 %v7708
      %v7780 = vpop.f32.mrf.mxu0
      %v7781 = vadd.f32 0.0, %v7780
      %v7782 = vpop.f32.mrf.mxu0
      %v7783 = vadd.f32 0.0, %v7782
      %7784 = vdwg.mxu0
      %v7785 = vadd.f32 %v7699, %v7781
      %v7786 = vadd.f32 %v7700, %v7783
      %v7787 = vld [vmem:[%s917] sm:$0xf]
      %v7788 = vld [vmem:[%s921] sm:$0xf]
      %v7789 = vsel %vm939, %v7785, 0.0
      %v7790 = vsel %vm939, %v7786, 0.0
      %v7791 = vadd.f32 %v7789, %v7790
      %7792 = vadd.xlane.f32.xlu0 %v7791
      %v7793 = vpop.xlane.xlu0 %7792
      %v7794 = vmul.f32 %v7793, 0.00390625
      %v7795 = vmul.f32 %v7785, %v7785
      %v7796 = vmul.f32 %v7786, %v7786
      %v7797 = vsel %vm939, %v7795, 0.0
      %v7798 = vsel %vm939, %v7796, 0.0
      %v7799 = vadd.f32 %v7797, %v7798
      %7800 = vadd.xlane.f32.xlu0 %v7799
      %v7801 = vpop.xlane.xlu0 %7800
      %v7802 = vmul.f32 %v7801, 0.00390625
      %v7803 = vmul.f32 %v7794, %v7794
      %v7804 = vsub.f32 %v7802, %v7803
      %v7805 = vadd.f32 %v7804, 1e-05
      %v7806 = vrsqrt.pop %v7805
      %v7807 = vmul.f32 %v7787, %v7806
      %v7808 = vmul.f32 %v7794, %v7807
      %v7809 = vsub.f32 %v7788, %v7808
      %7811 = vset.pattern.permute.xlu0 0
      %7812 = vperm.xlu0 %7811, %v7807
      %v7813 = vpop.permute.xlu0 %7812
      %v7815 = vmul.f32 %v7785, %v7813
      %v7816 = vmul.f32 %v7786, %v7813
      %7818 = vset.pattern.permute.xlu0 0
      %7819 = vperm.xlu0 %7818, %v7809
      %v7820 = vpop.permute.xlu0 %7819
      %v7822 = vadd.f32 %v7815, %v7820
      %v7823 = vadd.f32 %v7816, %v7820
      %v7826 = vcombine.low %v7822, %v7823
      %7828 = vst [vmem:[%s926] sm:$0xff] %v7826
      %p7829 = scmp.lt.s32.totalorder %s30, 1
      %s7830 = scalar_select %p7829, %s30, 1
      %s7831 = smul.addr %s7830, 2
      %s7832 = smul.addr %s7831, 4
      %s7833 = scalar_lea.vmem %s19, %s7832
      // Predicated region
      $region97: #{_lambda_.1} parent=95 // pred_check
        %p7834 = pneg %p542
      $region98: #{_lambda_.1} parent=95 // pred_check_branch
        %7836 = sbr.rel (%p7834) target = $region100
      $region99: #{_lambda_.1} parent=95 // pred_region
        _
      $region100: #{_lambda_.1} parent=95 // pred_fallthru
        _
    $region96: #{_lambda_.1} parent=5 // pred_fallthru
      _
    %p7837 = scmp.le.s32.totalorder 2, %s25
    // Predicated region
    $region101: #{_lambda_.1} parent=5 // pred_check
      %p7838 = pneg %p7837
    $region102: #{_lambda_.1} parent=5 // pred_check_branch
      %7840 = sbr.rel (%p7838) target = $region104
    $region103: #{_lambda_.1} parent=5 // pred_region
      %s7841 = ssub.s32 %s25, 2
      // Predicated region
      $region105: #{_lambda_.1} parent=103 // pred_check
        %p7842 = pneg %p548
      $region106: #{_lambda_.1} parent=103 // pred_check_branch
        %7844 = sbr.rel (%p7842) target = $region108
      $region107: #{_lambda_.1} parent=103 // pred_region
        %p7845 = scmp.lt.s32.totalorder %s31, 1
        %s7846 = scalar_select %p7845, %s31, 1
        %s7847 = smul.addr %s7846, 2
        %s7848 = smul.addr %s7847, 4
        %s7849 = scalar_lea.vmem %s19, %s7848
      $region108: #{_lambda_.1} parent=103 // pred_fallthru
        _
    $region104: #{_lambda_.1} parent=5 // pred_fallthru
      _
  $region6: #{_lambda_.1} parent=0 // loop_footer
    %s29 = sadd.s32 1, %s25
  $region7: #{_lambda_.1} parent=0 // loop_footer_branch
    %24 = sbr.rel target = $region3
  $region8: #{_lambda_.1} parent=0 // loop_exit
    _

</llo_original>
